<compile_context>
chip_gen: v7x
topology: tpu7x:2x2x1
jax: 0.10.0
libtpu: 0.0.40
codegen_flags: <defaults>
</compile_context>

<pallas_src>
import functools

import jax
import jax.numpy as jnp
from jax.experimental import pallas as pl
from jax.experimental.pallas import tpu as pltpu


# ----------------------------------------------------------------------------
# Exact-style (erf-based) GELU matching torch.nn.functional.gelu default.
# Eigen f32 rational erf; the divide uses the EUP reciprocal slot.
# ----------------------------------------------------------------------------
_ERF_ALPHA = (-2.72614225801306e-10, 2.77068142495902e-08, -2.10102402082508e-06,
              -5.69250639462346e-05, -7.34990630326855e-04, -2.95459980854025e-03,
              -1.60960333262415e-02)
_ERF_BETA = (-1.45660718464996e-05, -2.13374055278905e-04, -1.68282697438203e-03,
             -7.37332916720468e-03, -1.42647390514189e-02)


def _erf(x):
  x = jnp.clip(x, -4.0, 4.0)
  z = x * x
  num = jnp.float32(_ERF_ALPHA[0])
  for c in _ERF_ALPHA[1:]:
    num = num * z + jnp.float32(c)
  den = jnp.float32(_ERF_BETA[0])
  for c in _ERF_BETA[1:]:
    den = den * z + jnp.float32(c)
  return x * num * pl.reciprocal(den, approx=True)


def _gelu(x):
  return 0.5 * x * (1.0 + _erf(x * 0.7071067811865476))


# ----------------------------------------------------------------------------
# Row-tiling: prefer divisor tiles (no padding, no output slice copy), tile a
# multiple of 8, and >= 2 grid steps so both TensorCores get work on v7x.
# ----------------------------------------------------------------------------
def _plan_rows(m_rows, cap):
  limit = min(cap, m_rows)
  divs = [t for t in range(8, limit + 1, 8) if m_rows % t == 0]
  if divs:
    multi = [t for t in divs if m_rows // t >= 2]
    tm = max(multi) if multi else max(divs)
    return tm, m_rows
  if m_rows <= cap:
    return m_rows, m_rows                       # single full-extent block
  tm = max((cap // 8) * 8, 8)                   # rare fallback: pad
  m_pad = ((m_rows + tm - 1) // tm) * tm
  return tm, m_pad


def _pad_rows(x, m_pad):
  if x.shape[0] == m_pad:
    return x
  return jnp.pad(x, ((0, m_pad - x.shape[0]), (0, 0)))


_CPARAMS = pltpu.CompilerParams(
    dimension_semantics=("parallel",), vmem_limit_bytes=32 * 1024 * 1024)


# ----------------------------------------------------------------------------
# fc0: packed [Mp, 3*pack] @ block-diag [3*pack, width*pack] + bias.
# ----------------------------------------------------------------------------
def _fc0_kernel(x_ref, w_ref, b_ref, o_ref):
  y = jnp.dot(x_ref[...], w_ref[...], preferred_element_type=jnp.float32)
  o_ref[...] = (y + b_ref[...]).astype(o_ref.dtype)


def fc0_pallas(x2d, w, b, *, cap=2048):
  M, K = x2d.shape
  N = w.shape[1]
  tm, m_pad = _plan_rows(M, cap)
  xp = _pad_rows(x2d, m_pad)
  out = pl.pallas_call(
      _fc0_kernel,
      out_shape=jax.ShapeDtypeStruct((m_pad, N), jnp.float32),
      grid=(m_pad // tm,),
      in_specs=[pl.BlockSpec((tm, K), lambda i: (i, 0)),
                pl.BlockSpec((K, N), lambda i: (0, 0)),
                pl.BlockSpec((1, N), lambda i: (0, 0))],
      out_specs=pl.BlockSpec((tm, N), lambda i: (i, 0)),
      compiler_params=_CPARAMS,
  )(xp, w, b)
  return out if m_pad == M else out[:M]


# ----------------------------------------------------------------------------
# Per-layer fused op: packed 1x1 conv (block-diag matmul) + bias + spectral
# residual add + optional GELU, all lane-dense.
# ----------------------------------------------------------------------------
def _conv_res_kernel(x_ref, w_ref, b_ref, r_ref, o_ref, *, apply_gelu):
  y = jnp.dot(x_ref[...], w_ref[...], preferred_element_type=jnp.float32)
  y = y + b_ref[...] + r_ref[...]
  if apply_gelu:
    y = _gelu(y)
  o_ref[...] = y.astype(o_ref.dtype)


def conv_res_pallas(x2d, w, b, residual, apply_gelu, *, cap=2048):
  M, K = x2d.shape
  N = w.shape[1]
  tm, m_pad = _plan_rows(M, cap)
  xp = _pad_rows(x2d, m_pad)
  rp = _pad_rows(residual, m_pad)
  kernel = functools.partial(_conv_res_kernel, apply_gelu=apply_gelu)
  out = pl.pallas_call(
      kernel,
      out_shape=jax.ShapeDtypeStruct((m_pad, N), jnp.float32),
      grid=(m_pad // tm,),
      in_specs=[pl.BlockSpec((tm, K), lambda i: (i, 0)),
                pl.BlockSpec((K, N), lambda i: (0, 0)),
                pl.BlockSpec((1, N), lambda i: (0, 0)),
                pl.BlockSpec((tm, N), lambda i: (i, 0))],
      out_specs=pl.BlockSpec((tm, N), lambda i: (i, 0)),
      compiler_params=_CPARAMS,
  )(xp, w, b, rp)
  return out if m_pad == M else out[:M]


# ----------------------------------------------------------------------------
# Fused fc1 + GELU + fc2 on packed rows: the [tm, 128*pack] hidden never
# touches HBM; fc2 is a block-structured [128*pack, pack] dot so the output
# block is [tm, pack] (pack-lane stores instead of 1-lane stores).
# ----------------------------------------------------------------------------
def _fc12_kernel(x_ref, w1_ref, b1_ref, w2_ref, b2_ref, o_ref):
  h = jnp.dot(x_ref[...], w1_ref[...], preferred_element_type=jnp.float32)
  h = _gelu(h + b1_ref[...])
  y = jnp.dot(h, w2_ref[...], preferred_element_type=jnp.float32) + b2_ref[...]
  o_ref[...] = y.astype(o_ref.dtype)


def fc12_pallas(x2d, w1, b1, w2, b2, *, cap=1024):
  M, K = x2d.shape
  Nh = w1.shape[1]
  P = w2.shape[1]
  tm, m_pad = _plan_rows(M, cap)
  xp = _pad_rows(x2d, m_pad)
  out = pl.pallas_call(
      _fc12_kernel,
      out_shape=jax.ShapeDtypeStruct((m_pad, P), jnp.float32),
      grid=(m_pad // tm,),
      in_specs=[pl.BlockSpec((tm, K), lambda i: (i, 0)),
                pl.BlockSpec((K, Nh), lambda i: (0, 0)),
                pl.BlockSpec((1, Nh), lambda i: (0, 0)),
                pl.BlockSpec((Nh, P), lambda i: (0, 0)),
                pl.BlockSpec((1, P), lambda i: (0, 0))],
      out_specs=pl.BlockSpec((tm, P), lambda i: (i, 0)),
      compiler_params=_CPARAMS,
  )(xp, w1, b1, w2, b2)
  return out if m_pad == M else out[:M]


# ----------------------------------------------------------------------------
# Spectral mode mixing: einsum('bixy,ioxy->boxy') over retained modes, complex
# multiply folded into one real matmul per mode via operand stacking
# ([xr|xi] @ [[wr,wi],[-wi,wr]]).  Mode-chunked grid -> pipelined DMA.
# ----------------------------------------------------------------------------
def _spectral_mix_kernel(x_ref, w_ref, o_ref):
  for m in range(x_ref.shape[0]):   # small static unroll (<=16 modes/chunk)
    o_ref[m] = jnp.dot(x_ref[m], w_ref[m], preferred_element_type=jnp.float32)


def _choose_mode_chunk(nm, cap=16):
  divs = [g for g in range(1, min(cap, nm) + 1) if nm % g == 0]
  multi = [g for g in divs if nm // g >= 2]
  return max(multi) if multi else max(divs)


def spectral_mix_pallas(x_st, w_st):
  nm, B, two_cin = x_st.shape
  two_cout = w_st.shape[2]
  gm = _choose_mode_chunk(nm)
  return pl.pallas_call(
      _spectral_mix_kernel,
      out_shape=jax.ShapeDtypeStruct((nm, B, two_cout), jnp.float32),
      grid=(nm // gm,),
      in_specs=[pl.BlockSpec((gm, B, two_cin), lambda i: (i, 0, 0)),
                pl.BlockSpec((gm, two_cin, two_cout), lambda i: (i, 0, 0))],
      out_specs=pl.BlockSpec((gm, B, two_cout), lambda i: (i, 0, 0)),
      compiler_params=_CPARAMS,
  )(x_st, w_st)


def spectral_conv2d(x, w_st, modes1, modes2):
  """x: [B,H,W,Cin] f32, w_st: [nm, 2*Cin, 2*Cout] f32 -> [B,H,W,Cout] f32."""
  B, H, W, cin = x.shape
  nm, _, two_cout = w_st.shape
  cout = two_cout // 2
  wf = W // 2 + 1

  # TODO(synk): rfft2/irfft2 have no Pallas TPU equivalent; done in plain JAX.
  x_ft = jnp.fft.rfft2(x, axes=(1, 2))                       # [B,H,wf,Cin] c64
  top = x_ft[:, :modes1, :modes2, :]
  bot = x_ft[:, H - modes1:, :modes2, :]
  xm = jnp.concatenate([top, bot], axis=1)                   # [B,2m1,m2,Cin]
  xm = jnp.transpose(xm, (1, 2, 0, 3)).reshape(nm, B, cin)
  x_st = jnp.concatenate([jnp.real(xm), jnp.imag(xm)], axis=-1).astype(jnp.float32)

  out_st = spectral_mix_pallas(x_st, w_st)                   # [nm,B,2Cout]

  out = (out_st[..., :cout] + 1j * out_st[..., cout:]).astype(jnp.complex64)
  out = out.reshape(2 * modes1, modes2, B, cout).transpose(2, 0, 1, 3)
  out = jnp.pad(out, ((0, 0), (0, 0), (0, wf - modes2), (0, 0)))
  mid = jnp.zeros((B, H - 2 * modes1, wf, cout), dtype=jnp.complex64)
  out_ft = jnp.concatenate([out[:, :modes1], mid, out[:, modes1:]], axis=1)
  return jnp.fft.irfft2(out_ft, s=(H, W), axes=(1, 2)).astype(jnp.float32)


# ----------------------------------------------------------------------------
# Parameters: raw (torch-like) init + one-time packing into block-diagonal /
# lane-tiled form.
# ----------------------------------------------------------------------------
def _stack_complex_weights(w1, w2):
  """[Cin,Cout,m1,m2] complex x2 -> [nm, 2*Cin, 2*Cout] f32 stacked real form."""
  w_modes = jnp.concatenate([w1, w2], axis=2)                # [Cin,Cout,2m1,m2]
  cin, cout = w_modes.shape[0], w_modes.shape[1]
  nm = w_modes.shape[2] * w_modes.shape[3]
  wt = jnp.transpose(w_modes, (2, 3, 0, 1)).reshape(nm, cin, cout)
  wr = jnp.real(wt).astype(jnp.float32)
  wi = jnp.imag(wt).astype(jnp.float32)
  top = jnp.concatenate([wr, wi], axis=2)                    # [nm, Cin, 2Cout]
  bot = jnp.concatenate([-wi, wr], axis=2)                   # [nm, Cin, 2Cout]
  return jnp.concatenate([top, bot], axis=1)                 # [nm, 2Cin, 2Cout]


def init_params(key, modes1, modes2, width, layers):
  keys = iter(jax.random.split(key, 3 + 2 * layers))

  def lin(k, fan_in, fan_out):
    kw, kb = jax.random.split(k)
    bound = fan_in ** -0.5
    w = jax.random.uniform(kw, (fan_in, fan_out), jnp.float32, -bound, bound)
    b = jax.random.uniform(kb, (fan_out,), jnp.float32, -bound, bound)
    return w, b

  def complex_w(k, shape, scale):
    kr, ki = jax.random.split(k)
    re = scale * jax.random.uniform(kr, shape, jnp.float32)
    im = scale * jax.random.uniform(ki, shape, jnp.float32)
    return (re + 1j * im).astype(jnp.complex64)

  p = {}
  p["fc0_w"], p["fc0_b"] = lin(next(keys), 3, width)
  scale = 1.0 / (width * width)
  for i in range(layers):
    k1, k2 = jax.random.split(next(keys))
    w1 = complex_w(k1, (width, width, modes1, modes2), scale)
    w2 = complex_w(k2, (width, width, modes1, modes2), scale)
    p[f"spec{i}_wst"] = _stack_complex_weights(w1, w2)
    p[f"w{i}_w"], p[f"w{i}_b"] = lin(next(keys), width, width)   # 1x1 conv
  p["fc1_w"], p["fc1_b"] = lin(next(keys), width, 128)
  p["fc2_w"], p["fc2_b"] = lin(next(keys), 128, 1)
  return p


def choose_pack(M):
  for p in (8, 4, 2, 1):
    if M % p == 0:
      return p
  return 1


def pack_params(params, layers, pack):
  """Build block-diagonal (kron(I_pack, W)) weights and lane-tiled biases once."""
  eye = jnp.eye(pack, dtype=jnp.float32)
  bd = lambda w: jnp.kron(eye, w.astype(jnp.float32))
  tile = lambda b: jnp.tile(b.reshape(1, -1).astype(jnp.float32), (1, pack))
  pp = {"fc0_w": bd(params["fc0_w"]), "fc0_b": tile(params["fc0_b"]),
        "fc1_w": bd(params["fc1_w"]), "fc1_b": tile(params["fc1_b"]),
        "fc2_w": bd(params["fc2_w"]), "fc2_b": tile(params["fc2_b"])}
  for i in range(layers):
    pp[f"spec{i}_wst"] = params[f"spec{i}_wst"]
    pp[f"w{i}_w"] = bd(params[f"w{i}_w"])
    pp[f"w{i}_b"] = tile(params[f"w{i}_b"])
  return pp


# ----------------------------------------------------------------------------
# FNO2d forward (matches FNO2d.forward of the PyTorch spec).
# ----------------------------------------------------------------------------
def fno2d_forward(pp, x, *, modes1, modes2, width, layers, pack):
  """x: [B, H, W, 3] f32 -> [B, H, W] f32."""
  B, H, W, _ = x.shape
  M = B * H * W
  Mp = M // pack

  h = fc0_pallas(x.reshape(Mp, 3 * pack), pp["fc0_w"], pp["fc0_b"])   # fc0
  for i in range(layers):
    x1 = spectral_conv2d(h.reshape(B, H, W, width), pp[f"spec{i}_wst"],
                         modes1, modes2)
    h = conv_res_pallas(h, pp[f"w{i}_w"], pp[f"w{i}_b"],
                        x1.reshape(Mp, width * pack),
                        apply_gelu=(i < layers - 1))
  y = fc12_pallas(h, pp["fc1_w"], pp["fc1_b"], pp["fc2_w"], pp["fc2_b"])
  return y.reshape(B, H, W)                                            # squeeze(-1)


if __name__ == "__main__":
  B, H, W = 2, 16, 16
  modes1, modes2, width, layers = 4, 4, 32, 4

  key = jax.random.PRNGKey(0)
  kx, kp = jax.random.split(key)
  x = jax.random.normal(kx, (B, H, W, 3), dtype=jnp.float32)
  params = init_params(kp, modes1, modes2, width, layers)

  pack = choose_pack(B * H * W)
  pp = pack_params(params, layers, pack)

  fwd = jax.jit(functools.partial(fno2d_forward, modes1=modes1, modes2=modes2,
                                  width=width, layers=layers, pack=pack))
  out = fwd(pp, x)
  jax.block_until_ready(out)
  assert out.shape == (B, H, W), out.shape
  assert bool(jnp.all(jnp.isfinite(out)))
  print("KERNEL_OK")
</pallas_src>

<mosaic_0001>
module attributes {stable_mosaic.version = 11 : i64} {
  func.func @_fc0_kernel(%arg0: i32, %arg1: memref<32x24xf32, #tpu.memory_space<vmem>>, %arg2: memref<24x256xf32, #tpu.memory_space<vmem>>, %arg3: memref<1x256xf32, #tpu.memory_space<vmem>>, %arg4: memref<32x256xf32, #tpu.memory_space<vmem>>) attributes {dimension_semantics = [#tpu.dimension_semantics<parallel>], iteration_bounds = array<i64: 2>, scalar_prefetch = 0 : i64, scratch_operands = 0 : i64, tpu.core_type = #tpu.core_type<tc>, window_params = [{transform_indices = @transform_0, window_bounds = array<i64: 32, 24>}, {pipeline_mode = #tpu.pipeline_mode<synchronous>, transform_indices = @transform_1, window_bounds = array<i64: 24, 256>}, {pipeline_mode = #tpu.pipeline_mode<synchronous>, transform_indices = @transform_2, window_bounds = array<i64: 1, 256>}, {transform_indices = @transform_3, window_bounds = array<i64: 32, 256>}]} {
    %c0 = arith.constant 0 : index
    %c0_0 = arith.constant 0 : index
    %0 = vector.load %arg1[%c0, %c0_0] : memref<32x24xf32, #tpu.memory_space<vmem>>, vector<32x24xf32>
    %c0_1 = arith.constant 0 : index
    %c0_2 = arith.constant 0 : index
    %1 = vector.load %arg2[%c0_1, %c0_2] : memref<24x256xf32, #tpu.memory_space<vmem>>, vector<24x256xf32>
    %cst = arith.constant dense<0.000000e+00> : vector<32x256xf32>
    %2 = tpu.matmul %0, %1, %cst {dimension_numbers = #tpu.dot_dimension_numbers<[1], [0], [0], [1], [0, 0, 1, 1], [], []>} : vector<32x24xf32>, vector<24x256xf32>, vector<32x256xf32> -> vector<32x256xf32>
    %c0_3 = arith.constant 0 : index
    %c0_4 = arith.constant 0 : index
    %3 = vector.load %arg3[%c0_3, %c0_4] : memref<1x256xf32, #tpu.memory_space<vmem>>, vector<1x256xf32>
    %4 = vector.broadcast %3 : vector<1x256xf32> to vector<32x256xf32>
    %5 = arith.addf %2, %4 : vector<32x256xf32>
    %c0_5 = arith.constant 0 : index
    %c0_6 = arith.constant 0 : index
    %6 = vector.load %arg4[%c0_5, %c0_6] : memref<32x256xf32, #tpu.memory_space<vmem>>, vector<32x256xf32>
    tpu.vector_store %arg4[%c0_5, %c0_6], %5 {strides = array<i32>} : memref<32x256xf32, #tpu.memory_space<vmem>>, vector<32x256xf32>,
    return
  }
  func.func @transform_0(%arg0: i32) -> (i32, i32) {
    %c0_i32 = arith.constant 0 : i32
    %c0_i32_0 = arith.constant 0 : i32
    return %arg0, %c0_i32 : i32, i32
  }
  func.func @transform_1(%arg0: i32) -> (i32, i32) {
    %c0_i32 = arith.constant 0 : i32
    %c0_i32_0 = arith.constant 0 : i32
    %c0_i32_1 = arith.constant 0 : i32
    return %c0_i32, %c0_i32_0 : i32, i32
  }
  func.func @transform_2(%arg0: i32) -> (i32, i32) {
    %c0_i32 = arith.constant 0 : i32
    %c0_i32_0 = arith.constant 0 : i32
    %c0_i32_1 = arith.constant 0 : i32
    return %c0_i32, %c0_i32_0 : i32, i32
  }
  func.func @transform_3(%arg0: i32) -> (i32, i32) {
    %c0_i32 = arith.constant 0 : i32
    %c0_i32_0 = arith.constant 0 : i32
    return %arg0, %c0_i32 : i32, i32
  }
}

module attributes {stable_mosaic.version = 11 : i64} {
  func.func @_spectral_mix_kernel(%arg0: i32, %arg1: memref<16x2x64xf32, #tpu.memory_space<vmem>>, %arg2: memref<16x64x64xf32, #tpu.memory_space<vmem>>, %arg3: memref<16x2x64xf32, #tpu.memory_space<vmem>>) attributes {dimension_semantics = [#tpu.dimension_semantics<parallel>], iteration_bounds = array<i64: 2>, scalar_prefetch = 0 : i64, scratch_operands = 0 : i64, tpu.core_type = #tpu.core_type<tc>, window_params = [{transform_indices = @transform_0, window_bounds = array<i64: 16, 2, 64>}, {transform_indices = @transform_1, window_bounds = array<i64: 16, 64, 64>}, {transform_indices = @transform_2, window_bounds = array<i64: 16, 2, 64>}]} {
    %c0 = arith.constant 0 : index
    %c0_0 = arith.constant 0 : index
    %c0_1 = arith.constant 0 : index
    %0 = vector.load %arg1[%c0, %c0_0, %c0_1] : memref<16x2x64xf32, #tpu.memory_space<vmem>>, vector<1x2x64xf32>
    %1 = vector.shape_cast %0 : vector<1x2x64xf32> to vector<2x64xf32>
    %c0_2 = arith.constant 0 : index
    %c0_3 = arith.constant 0 : index
    %c0_4 = arith.constant 0 : index
    %2 = vector.load %arg2[%c0_2, %c0_3, %c0_4] : memref<16x64x64xf32, #tpu.memory_space<vmem>>, vector<1x64x64xf32>
    %3 = vector.shape_cast %2 : vector<1x64x64xf32> to vector<64x64xf32>
    %cst = arith.constant dense<0.000000e+00> : vector<2x64xf32>
    %4 = tpu.matmul %1, %3, %cst {dimension_numbers = #tpu.dot_dimension_numbers<[1], [0], [0], [1], [0, 0, 1, 1], [], []>} : vector<2x64xf32>, vector<64x64xf32>, vector<2x64xf32> -> vector<2x64xf32>
    %c0_5 = arith.constant 0 : index
    %c0_6 = arith.constant 0 : index
    %c0_7 = arith.constant 0 : index
    %5 = vector.load %arg3[%c0_5, %c0_6, %c0_7] : memref<16x2x64xf32, #tpu.memory_space<vmem>>, vector<1x2x64xf32>
    %6 = vector.shape_cast %5 : vector<1x2x64xf32> to vector<2x64xf32>
    %7 = vector.shape_cast %4 : vector<2x64xf32> to vector<1x2x64xf32>
    tpu.vector_store %arg3[%c0_5, %c0_6, %c0_7], %7 {strides = array<i32>} : memref<16x2x64xf32, #tpu.memory_space<vmem>>, vector<1x2x64xf32>,
    %c1 = arith.constant 1 : index
    %c0_8 = arith.constant 0 : index
    %c0_9 = arith.constant 0 : index
    %8 = vector.load %arg1[%c1, %c0_8, %c0_9] : memref<16x2x64xf32, #tpu.memory_space<vmem>>, vector<1x2x64xf32>
    %9 = vector.shape_cast %8 : vector<1x2x64xf32> to vector<2x64xf32>
    %c1_10 = arith.constant 1 : index
    %c0_11 = arith.constant 0 : index
    %c0_12 = arith.constant 0 : index
    %10 = vector.load %arg2[%c1_10, %c0_11, %c0_12] : memref<16x64x64xf32, #tpu.memory_space<vmem>>, vector<1x64x64xf32>
    %11 = vector.shape_cast %10 : vector<1x64x64xf32> to vector<64x64xf32>
    %cst_13 = arith.constant dense<0.000000e+00> : vector<2x64xf32>
    %12 = tpu.matmul %9, %11, %cst_13 {dimension_numbers = #tpu.dot_dimension_numbers<[1], [0], [0], [1], [0, 0, 1, 1], [], []>} : vector<2x64xf32>, vector<64x64xf32>, vector<2x64xf32> -> vector<2x64xf32>
    %c1_14 = arith.constant 1 : index
    %c0_15 = arith.constant 0 : index
    %c0_16 = arith.constant 0 : index
    %13 = vector.load %arg3[%c1_14, %c0_15, %c0_16] : memref<16x2x64xf32, #tpu.memory_space<vmem>>, vector<1x2x64xf32>
    %14 = vector.shape_cast %13 : vector<1x2x64xf32> to vector<2x64xf32>
    %15 = vector.shape_cast %12 : vector<2x64xf32> to vector<1x2x64xf32>
    tpu.vector_store %arg3[%c1_14, %c0_15, %c0_16], %15 {strides = array<i32>} : memref<16x2x64xf32, #tpu.memory_space<vmem>>, vector<1x2x64xf32>,
    %c2 = arith.constant 2 : index
    %c0_17 = arith.constant 0 : index
    %c0_18 = arith.constant 0 : index
    %16 = vector.load %arg1[%c2, %c0_17, %c0_18] : memref<16x2x64xf32, #tpu.memory_space<vmem>>, vector<1x2x64xf32>
    %17 = vector.shape_cast %16 : vector<1x2x64xf32> to vector<2x64xf32>
    %c2_19 = arith.constant 2 : index
    %c0_20 = arith.constant 0 : index
    %c0_21 = arith.constant 0 : index
    %18 = vector.load %arg2[%c2_19, %c0_20, %c0_21] : memref<16x64x64xf32, #tpu.memory_space<vmem>>, vector<1x64x64xf32>
    %19 = vector.shape_cast %18 : vector<1x64x64xf32> to vector<64x64xf32>
    %cst_22 = arith.constant dense<0.000000e+00> : vector<2x64xf32>
    %20 = tpu.matmul %17, %19, %cst_22 {dimension_numbers = #tpu.dot_dimension_numbers<[1], [0], [0], [1], [0, 0, 1, 1], [], []>} : vector<2x64xf32>, vector<64x64xf32>, vector<2x64xf32> -> vector<2x64xf32>
    %c2_23 = arith.constant 2 : index
    %c0_24 = arith.constant 0 : index
    %c0_25 = arith.constant 0 : index
    %21 = vector.load %arg3[%c2_23, %c0_24, %c0_25] : memref<16x2x64xf32, #tpu.memory_space<vmem>>, vector<1x2x64xf32>
    %22 = vector.shape_cast %21 : vector<1x2x64xf32> to vector<2x64xf32>
    %23 = vector.shape_cast %20 : vector<2x64xf32> to vector<1x2x64xf32>
    tpu.vector_store %arg3[%c2_23, %c0_24, %c0_25], %23 {strides = array<i32>} : memref<16x2x64xf32, #tpu.memory_space<vmem>>, vector<1x2x64xf32>,
    %c3 = arith.constant 3 : index
    %c0_26 = arith.constant 0 : index
    %c0_27 = arith.constant 0 : index
    %24 = vector.load %arg1[%c3, %c0_26, %c0_27] : memref<16x2x64xf32, #tpu.memory_space<vmem>>, vector<1x2x64xf32>
    %25 = vector.shape_cast %24 : vector<1x2x64xf32> to vector<2x64xf32>
    %c3_28 = arith.constant 3 : index
    %c0_29 = arith.constant 0 : index
    %c0_30 = arith.constant 0 : index
    %26 = vector.load %arg2[%c3_28, %c0_29, %c0_30] : memref<16x64x64xf32, #tpu.memory_space<vmem>>, vector<1x64x64xf32>
    %27 = vector.shape_cast %26 : vector<1x64x64xf32> to vector<64x64xf32>
    %cst_31 = arith.constant dense<0.000000e+00> : vector<2x64xf32>
    %28 = tpu.matmul %25, %27, %cst_31 {dimension_numbers = #tpu.dot_dimension_numbers<[1], [0], [0], [1], [0, 0, 1, 1], [], []>} : vector<2x64xf32>, vector<64x64xf32>, vector<2x64xf32> -> vector<2x64xf32>
    %c3_32 = arith.constant 3 : index
    %c0_33 = arith.constant 0 : index
    %c0_34 = arith.constant 0 : index
    %29 = vector.load %arg3[%c3_32, %c0_33, %c0_34] : memref<16x2x64xf32, #tpu.memory_space<vmem>>, vector<1x2x64xf32>
    %30 = vector.shape_cast %29 : vector<1x2x64xf32> to vector<2x64xf32>
    %31 = vector.shape_cast %28 : vector<2x64xf32> to vector<1x2x64xf32>
    tpu.vector_store %arg3[%c3_32, %c0_33, %c0_34], %31 {strides = array<i32>} : memref<16x2x64xf32, #tpu.memory_space<vmem>>, vector<1x2x64xf32>,
    %c4 = arith.constant 4 : index
    %c0_35 = arith.constant 0 : index
    %c0_36 = arith.constant 0 : index
    %32 = vector.load %arg1[%c4, %c0_35, %c0_36] : memref<16x2x64xf32, #tpu.memory_space<vmem>>, vector<1x2x64xf32>
    %33 = vector.shape_cast %32 : vector<1x2x64xf32> to vector<2x64xf32>
    %c4_37 = arith.constant 4 : index
    %c0_38 = arith.constant 0 : index
    %c0_39 = arith.constant 0 : index
    %34 = vector.load %arg2[%c4_37, %c0_38, %c0_39] : memref<16x64x64xf32, #tpu.memory_space<vmem>>, vector<1x64x64xf32>
    %35 = vector.shape_cast %34 : vector<1x64x64xf32> to vector<64x64xf32>
    %cst_40 = arith.constant dense<0.000000e+00> : vector<2x64xf32>
    %36 = tpu.matmul %33, %35, %cst_40 {dimension_numbers = #tpu.dot_dimension_numbers<[1], [0], [0], [1], [0, 0, 1, 1], [], []>} : vector<2x64xf32>, vector<64x64xf32>, vector<2x64xf32> -> vector<2x64xf32>
    %c4_41 = arith.constant 4 : index
    %c0_42 = arith.constant 0 : index
    %c0_43 = arith.constant 0 : index
    %37 = vector.load %arg3[%c4_41, %c0_42, %c0_43] : memref<16x2x64xf32, #tpu.memory_space<vmem>>, vector<1x2x64xf32>
    %38 = vector.shape_cast %37 : vector<1x2x64xf32> to vector<2x64xf32>
    %39 = vector.shape_cast %36 : vector<2x64xf32> to vector<1x2x64xf32>
    tpu.vector_store %arg3[%c4_41, %c0_42, %c0_43], %39 {strides = array<i32>} : memref<16x2x64xf32, #tpu.memory_space<vmem>>, vector<1x2x64xf32>,
    %c5 = arith.constant 5 : index
    %c0_44 = arith.constant 0 : index
    %c0_45 = arith.constant 0 : index
    %40 = vector.load %arg1[%c5, %c0_44, %c0_45] : memref<16x2x64xf32, #tpu.memory_space<vmem>>, vector<1x2x64xf32>
    %41 = vector.shape_cast %40 : vector<1x2x64xf32> to vector<2x64xf32>
    %c5_46 = arith.constant 5 : index
    %c0_47 = arith.constant 0 : index
    %c0_48 = arith.constant 0 : index
    %42 = vector.load %arg2[%c5_46, %c0_47, %c0_48] : memref<16x64x64xf32, #tpu.memory_space<vmem>>, vector<1x64x64xf32>
    %43 = vector.shape_cast %42 : vector<1x64x64xf32> to vector<64x64xf32>
    %cst_49 = arith.constant dense<0.000000e+00> : vector<2x64xf32>
    %44 = tpu.matmul %41, %43, %cst_49 {dimension_numbers = #tpu.dot_dimension_numbers<[1], [0], [0], [1], [0, 0, 1, 1], [], []>} : vector<2x64xf32>, vector<64x64xf32>, vector<2x64xf32> -> vector<2x64xf32>
    %c5_50 = arith.constant 5 : index
    %c0_51 = arith.constant 0 : index
    %c0_52 = arith.constant 0 : index
    %45 = vector.load %arg3[%c5_50, %c0_51, %c0_52] : memref<16x2x64xf32, #tpu.memory_space<vmem>>, vector<1x2x64xf32>
    %46 = vector.shape_cast %45 : vector<1x2x64xf32> to vector<2x64xf32>
    %47 = vector.shape_cast %44 : vector<2x64xf32> to vector<1x2x64xf32>
    tpu.vector_store %arg3[%c5_50, %c0_51, %c0_52], %47 {strides = array<i32>} : memref<16x2x64xf32, #tpu.memory_space<vmem>>, vector<1x2x64xf32>,
    %c6 = arith.constant 6 : index
    %c0_53 = arith.constant 0 : index
    %c0_54 = arith.constant 0 : index
    %48 = vector.load %arg1[%c6, %c0_53, %c0_54] : memref<16x2x64xf32, #tpu.memory_space<vmem>>, vector<1x2x64xf32>
    %49 = vector.shape_cast %48 : vector<1x2x64xf32> to vector<2x64xf32>
    %c6_55 = arith.constant 6 : index
    %c0_56 = arith.constant 0 : index
    %c0_57 = arith.constant 0 : index
    %50 = vector.load %arg2[%c6_55, %c0_56, %c0_57] : memref<16x64x64xf32, #tpu.memory_space<vmem>>, vector<1x64x64xf32>
    %51 = vector.shape_cast %50 : vector<1x64x64xf32> to vector<64x64xf32>
    %cst_58 = arith.constant dense<0.000000e+00> : vector<2x64xf32>
    %52 = tpu.matmul %49, %51, %cst_58 {dimension_numbers = #tpu.dot_dimension_numbers<[1], [0], [0], [1], [0, 0, 1, 1], [], []>} : vector<2x64xf32>, vector<64x64xf32>, vector<2x64xf32> -> vector<2x64xf32>
    %c6_59 = arith.constant 6 : index
    %c0_60 = arith.constant 0 : index
    %c0_61 = arith.constant 0 : index
    %53 = vector.load %arg3[%c6_59, %c0_60, %c0_61] : memref<16x2x64xf32, #tpu.memory_space<vmem>>, vector<1x2x64xf32>
    %54 = vector.shape_cast %53 : vector<1x2x64xf32> to vector<2x64xf32>
    %55 = vector.shape_cast %52 : vector<2x64xf32> to vector<1x2x64xf32>
    tpu.vector_store %arg3[%c6_59, %c0_60, %c0_61], %55 {strides = array<i32>} : memref<16x2x64xf32, #tpu.memory_space<vmem>>, vector<1x2x64xf32>,
    %c7 = arith.constant 7 : index
    %c0_62 = arith.constant 0 : index
    %c0_63 = arith.constant 0 : index
    %56 = vector.load %arg1[%c7, %c0_62, %c0_63] : memref<16x2x64xf32, #tpu.memory_space<vmem>>, vector<1x2x64xf32>
    %57 = vector.shape_cast %56 : vector<1x2x64xf32> to vector<2x64xf32>
    %c7_64 = arith.constant 7 : index
    %c0_65 = arith.constant 0 : index
    %c0_66 = arith.constant 0 : index
    %58 = vector.load %arg2[%c7_64, %c0_65, %c0_66] : memref<16x64x64xf32, #tpu.memory_space<vmem>>, vector<1x64x64xf32>
    %59 = vector.shape_cast %58 : vector<1x64x64xf32> to vector<64x64xf32>
    %cst_67 = arith.constant dense<0.000000e+00> : vector<2x64xf32>
    %60 = tpu.matmul %57, %59, %cst_67 {dimension_numbers = #tpu.dot_dimension_numbers<[1], [0], [0], [1], [0, 0, 1, 1], [], []>} : vector<2x64xf32>, vector<64x64xf32>, vector<2x64xf32> -> vector<2x64xf32>
    %c7_68 = arith.constant 7 : index
    %c0_69 = arith.constant 0 : index
    %c0_70 = arith.constant 0 : index
    %61 = vector.load %arg3[%c7_68, %c0_69, %c0_70] : memref<16x2x64xf32, #tpu.memory_space<vmem>>, vector<1x2x64xf32>
    %62 = vector.shape_cast %61 : vector<1x2x64xf32> to vector<2x64xf32>
    %63 = vector.shape_cast %60 : vector<2x64xf32> to vector<1x2x64xf32>
    tpu.vector_store %arg3[%c7_68, %c0_69, %c0_70], %63 {strides = array<i32>} : memref<16x2x64xf32, #tpu.memory_space<vmem>>, vector<1x2x64xf32>,
    %c8 = arith.constant 8 : index
    %c0_71 = arith.constant 0 : index
    %c0_72 = arith.constant 0 : index
    %64 = vector.load %arg1[%c8, %c0_71, %c0_72] : memref<16x2x64xf32, #tpu.memory_space<vmem>>, vector<1x2x64xf32>
    %65 = vector.shape_cast %64 : vector<1x2x64xf32> to vector<2x64xf32>
    %c8_73 = arith.constant 8 : index
    %c0_74 = arith.constant 0 : index
    %c0_75 = arith.constant 0 : index
    %66 = vector.load %arg2[%c8_73, %c0_74, %c0_75] : memref<16x64x64xf32, #tpu.memory_space<vmem>>, vector<1x64x64xf32>
    %67 = vector.shape_cast %66 : vector<1x64x64xf32> to vector<64x64xf32>
    %cst_76 = arith.constant dense<0.000000e+00> : vector<2x64xf32>
    %68 = tpu.matmul %65, %67, %cst_76 {dimension_numbers = #tpu.dot_dimension_numbers<[1], [0], [0], [1], [0, 0, 1, 1], [], []>} : vector<2x64xf32>, vector<64x64xf32>, vector<2x64xf32> -> vector<2x64xf32>
    %c8_77 = arith.constant 8 : index
    %c0_78 = arith.constant 0 : index
    %c0_79 = arith.constant 0 : index
    %69 = vector.load %arg3[%c8_77, %c0_78, %c0_79] : memref<16x2x64xf32, #tpu.memory_space<vmem>>, vector<1x2x64xf32>
    %70 = vector.shape_cast %69 : vector<1x2x64xf32> to vector<2x64xf32>
    %71 = vector.shape_cast %68 : vector<2x64xf32> to vector<1x2x64xf32>
    tpu.vector_store %arg3[%c8_77, %c0_78, %c0_79], %71 {strides = array<i32>} : memref<16x2x64xf32, #tpu.memory_space<vmem>>, vector<1x2x64xf32>,
    %c9 = arith.constant 9 : index
    %c0_80 = arith.constant 0 : index
    %c0_81 = arith.constant 0 : index
    %72 = vector.load %arg1[%c9, %c0_80, %c0_81] : memref<16x2x64xf32, #tpu.memory_space<vmem>>, vector<1x2x64xf32>
    %73 = vector.shape_cast %72 : vector<1x2x64xf32> to vector<2x64xf32>
    %c9_82 = arith.constant 9 : index
    %c0_83 = arith.constant 0 : index
    %c0_84 = arith.constant 0 : index
    %74 = vector.load %arg2[%c9_82, %c0_83, %c0_84] : memref<16x64x64xf32, #tpu.memory_space<vmem>>, vector<1x64x64xf32>
    %75 = vector.shape_cast %74 : vector<1x64x64xf32> to vector<64x64xf32>
    %cst_85 = arith.constant dense<0.000000e+00> : vector<2x64xf32>
    %76 = tpu.matmul %73, %75, %cst_85 {dimension_numbers = #tpu.dot_dimension_numbers<[1], [0], [0], [1], [0, 0, 1, 1], [], []>} : vector<2x64xf32>, vector<64x64xf32>, vector<2x64xf32> -> vector<2x64xf32>
    %c9_86 = arith.constant 9 : index
    %c0_87 = arith.constant 0 : index
    %c0_88 = arith.constant 0 : index
    %77 = vector.load %arg3[%c9_86, %c0_87, %c0_88] : memref<16x2x64xf32, #tpu.memory_space<vmem>>, vector<1x2x64xf32>
    %78 = vector.shape_cast %77 : vector<1x2x64xf32> to vector<2x64xf32>
    %79 = vector.shape_cast %76 : vector<2x64xf32> to vector<1x2x64xf32>
    tpu.vector_store %arg3[%c9_86, %c0_87, %c0_88], %79 {strides = array<i32>} : memref<16x2x64xf32, #tpu.memory_space<vmem>>, vector<1x2x64xf32>,
    %c10 = arith.constant 10 : index
    %c0_89 = arith.constant 0 : index
    %c0_90 = arith.constant 0 : index
    %80 = vector.load %arg1[%c10, %c0_89, %c0_90] : memref<16x2x64xf32, #tpu.memory_space<vmem>>, vector<1x2x64xf32>
    %81 = vector.shape_cast %80 : vector<1x2x64xf32> to vector<2x64xf32>
    %c10_91 = arith.constant 10 : index
    %c0_92 = arith.constant 0 : index
    %c0_93 = arith.constant 0 : index
    %82 = vector.load %arg2[%c10_91, %c0_92, %c0_93] : memref<16x64x64xf32, #tpu.memory_space<vmem>>, vector<1x64x64xf32>
    %83 = vector.shape_cast %82 : vector<1x64x64xf32> to vector<64x64xf32>
    %cst_94 = arith.constant dense<0.000000e+00> : vector<2x64xf32>
    %84 = tpu.matmul %81, %83, %cst_94 {dimension_numbers = #tpu.dot_dimension_numbers<[1], [0], [0], [1], [0, 0, 1, 1], [], []>} : vector<2x64xf32>, vector<64x64xf32>, vector<2x64xf32> -> vector<2x64xf32>
    %c10_95 = arith.constant 10 : index
    %c0_96 = arith.constant 0 : index
    %c0_97 = arith.constant 0 : index
    %85 = vector.load %arg3[%c10_95, %c0_96, %c0_97] : memref<16x2x64xf32, #tpu.memory_space<vmem>>, vector<1x2x64xf32>
    %86 = vector.shape_cast %85 : vector<1x2x64xf32> to vector<2x64xf32>
    %87 = vector.shape_cast %84 : vector<2x64xf32> to vector<1x2x64xf32>
    tpu.vector_store %arg3[%c10_95, %c0_96, %c0_97], %87 {strides = array<i32>} : memref<16x2x64xf32, #tpu.memory_space<vmem>>, vector<1x2x64xf32>,
    %c11 = arith.constant 11 : index
    %c0_98 = arith.constant 0 : index
    %c0_99 = arith.constant 0 : index
    %88 = vector.load %arg1[%c11, %c0_98, %c0_99] : memref<16x2x64xf32, #tpu.memory_space<vmem>>, vector<1x2x64xf32>
    %89 = vector.shape_cast %88 : vector<1x2x64xf32> to vector<2x64xf32>
    %c11_100 = arith.constant 11 : index
    %c0_101 = arith.constant 0 : index
    %c0_102 = arith.constant 0 : index
    %90 = vector.load %arg2[%c11_100, %c0_101, %c0_102] : memref<16x64x64xf32, #tpu.memory_space<vmem>>, vector<1x64x64xf32>
    %91 = vector.shape_cast %90 : vector<1x64x64xf32> to vector<64x64xf32>
    %cst_103 = arith.constant dense<0.000000e+00> : vector<2x64xf32>
    %92 = tpu.matmul %89, %91, %cst_103 {dimension_numbers = #tpu.dot_dimension_numbers<[1], [0], [0], [1], [0, 0, 1, 1], [], []>} : vector<2x64xf32>, vector<64x64xf32>, vector<2x64xf32> -> vector<2x64xf32>
    %c11_104 = arith.constant 11 : index
    %c0_105 = arith.constant 0 : index
    %c0_106 = arith.constant 0 : index
    %93 = vector.load %arg3[%c11_104, %c0_105, %c0_106] : memref<16x2x64xf32, #tpu.memory_space<vmem>>, vector<1x2x64xf32>
    %94 = vector.shape_cast %93 : vector<1x2x64xf32> to vector<2x64xf32>
    %95 = vector.shape_cast %92 : vector<2x64xf32> to vector<1x2x64xf32>
    tpu.vector_store %arg3[%c11_104, %c0_105, %c0_106], %95 {strides = array<i32>} : memref<16x2x64xf32, #tpu.memory_space<vmem>>, vector<1x2x64xf32>,
    %c12 = arith.constant 12 : index
    %c0_107 = arith.constant 0 : index
    %c0_108 = arith.constant 0 : index
    %96 = vector.load %arg1[%c12, %c0_107, %c0_108] : memref<16x2x64xf32, #tpu.memory_space<vmem>>, vector<1x2x64xf32>
    %97 = vector.shape_cast %96 : vector<1x2x64xf32> to vector<2x64xf32>
    %c12_109 = arith.constant 12 : index
    %c0_110 = arith.constant 0 : index
    %c0_111 = arith.constant 0 : index
    %98 = vector.load %arg2[%c12_109, %c0_110, %c0_111] : memref<16x64x64xf32, #tpu.memory_space<vmem>>, vector<1x64x64xf32>
    %99 = vector.shape_cast %98 : vector<1x64x64xf32> to vector<64x64xf32>
    %cst_112 = arith.constant dense<0.000000e+00> : vector<2x64xf32>
    %100 = tpu.matmul %97, %99, %cst_112 {dimension_numbers = #tpu.dot_dimension_numbers<[1], [0], [0], [1], [0, 0, 1, 1], [], []>} : vector<2x64xf32>, vector<64x64xf32>, vector<2x64xf32> -> vector<2x64xf32>
    %c12_113 = arith.constant 12 : index
    %c0_114 = arith.constant 0 : index
    %c0_115 = arith.constant 0 : index
    %101 = vector.load %arg3[%c12_113, %c0_114, %c0_115] : memref<16x2x64xf32, #tpu.memory_space<vmem>>, vector<1x2x64xf32>
    %102 = vector.shape_cast %101 : vector<1x2x64xf32> to vector<2x64xf32>
    %103 = vector.shape_cast %100 : vector<2x64xf32> to vector<1x2x64xf32>
    tpu.vector_store %arg3[%c12_113, %c0_114, %c0_115], %103 {strides = array<i32>} : memref<16x2x64xf32, #tpu.memory_space<vmem>>, vector<1x2x64xf32>,
    %c13 = arith.constant 13 : index
    %c0_116 = arith.constant 0 : index
    %c0_117 = arith.constant 0 : index
    %104 = vector.load %arg1[%c13, %c0_116, %c0_117] : memref<16x2x64xf32, #tpu.memory_space<vmem>>, vector<1x2x64xf32>
    %105 = vector.shape_cast %104 : vector<1x2x64xf32> to vector<2x64xf32>
    %c13_118 = arith.constant 13 : index
    %c0_119 = arith.constant 0 : index
    %c0_120 = arith.constant 0 : index
    %106 = vector.load %arg2[%c13_118, %c0_119, %c0_120] : memref<16x64x64xf32, #tpu.memory_space<vmem>>, vector<1x64x64xf32>
    %107 = vector.shape_cast %106 : vector<1x64x64xf32> to vector<64x64xf32>
    %cst_121 = arith.constant dense<0.000000e+00> : vector<2x64xf32>
    %108 = tpu.matmul %105, %107, %cst_121 {dimension_numbers = #tpu.dot_dimension_numbers<[1], [0], [0], [1], [0, 0, 1, 1], [], []>} : vector<2x64xf32>, vector<64x64xf32>, vector<2x64xf32> -> vector<2x64xf32>
    %c13_122 = arith.constant 13 : index
    %c0_123 = arith.constant 0 : index
    %c0_124 = arith.constant 0 : index
    %109 = vector.load %arg3[%c13_122, %c0_123, %c0_124] : memref<16x2x64xf32, #tpu.memory_space<vmem>>, vector<1x2x64xf32>
    %110 = vector.shape_cast %109 : vector<1x2x64xf32> to vector<2x64xf32>
    %111 = vector.shape_cast %108 : vector<2x64xf32> to vector<1x2x64xf32>
    tpu.vector_store %arg3[%c13_122, %c0_123, %c0_124], %111 {strides = array<i32>} : memref<16x2x64xf32, #tpu.memory_space<vmem>>, vector<1x2x64xf32>,
    %c14 = arith.constant 14 : index
    %c0_125 = arith.constant 0 : index
    %c0_126 = arith.constant 0 : index
    %112 = vector.load %arg1[%c14, %c0_125, %c0_126] : memref<16x2x64xf32, #tpu.memory_space<vmem>>, vector<1x2x64xf32>
    %113 = vector.shape_cast %112 : vector<1x2x64xf32> to vector<2x64xf32>
    %c14_127 = arith.constant 14 : index
    %c0_128 = arith.constant 0 : index
    %c0_129 = arith.constant 0 : index
    %114 = vector.load %arg2[%c14_127, %c0_128, %c0_129] : memref<16x64x64xf32, #tpu.memory_space<vmem>>, vector<1x64x64xf32>
    %115 = vector.shape_cast %114 : vector<1x64x64xf32> to vector<64x64xf32>
    %cst_130 = arith.constant dense<0.000000e+00> : vector<2x64xf32>
    %116 = tpu.matmul %113, %115, %cst_130 {dimension_numbers = #tpu.dot_dimension_numbers<[1], [0], [0], [1], [0, 0, 1, 1], [], []>} : vector<2x64xf32>, vector<64x64xf32>, vector<2x64xf32> -> vector<2x64xf32>
    %c14_131 = arith.constant 14 : index
    %c0_132 = arith.constant 0 : index
    %c0_133 = arith.constant 0 : index
    %117 = vector.load %arg3[%c14_131, %c0_132, %c0_133] : memref<16x2x64xf32, #tpu.memory_space<vmem>>, vector<1x2x64xf32>
    %118 = vector.shape_cast %117 : vector<1x2x64xf32> to vector<2x64xf32>
    %119 = vector.shape_cast %116 : vector<2x64xf32> to vector<1x2x64xf32>
    tpu.vector_store %arg3[%c14_131, %c0_132, %c0_133], %119 {strides = array<i32>} : memref<16x2x64xf32, #tpu.memory_space<vmem>>, vector<1x2x64xf32>,
    %c15 = arith.constant 15 : index
    %c0_134 = arith.constant 0 : index
    %c0_135 = arith.constant 0 : index
    %120 = vector.load %arg1[%c15, %c0_134, %c0_135] : memref<16x2x64xf32, #tpu.memory_space<vmem>>, vector<1x2x64xf32>
    %121 = vector.shape_cast %120 : vector<1x2x64xf32> to vector<2x64xf32>
    %c15_136 = arith.constant 15 : index
    %c0_137 = arith.constant 0 : index
    %c0_138 = arith.constant 0 : index
    %122 = vector.load %arg2[%c15_136, %c0_137, %c0_138] : memref<16x64x64xf32, #tpu.memory_space<vmem>>, vector<1x64x64xf32>
    %123 = vector.shape_cast %122 : vector<1x64x64xf32> to vector<64x64xf32>
    %cst_139 = arith.constant dense<0.000000e+00> : vector<2x64xf32>
    %124 = tpu.matmul %121, %123, %cst_139 {dimension_numbers = #tpu.dot_dimension_numbers<[1], [0], [0], [1], [0, 0, 1, 1], [], []>} : vector<2x64xf32>, vector<64x64xf32>, vector<2x64xf32> -> vector<2x64xf32>
    %c15_140 = arith.constant 15 : index
    %c0_141 = arith.constant 0 : index
    %c0_142 = arith.constant 0 : index
    %125 = vector.load %arg3[%c15_140, %c0_141, %c0_142] : memref<16x2x64xf32, #tpu.memory_space<vmem>>, vector<1x2x64xf32>
    %126 = vector.shape_cast %125 : vector<1x2x64xf32> to vector<2x64xf32>
    %127 = vector.shape_cast %124 : vector<2x64xf32> to vector<1x2x64xf32>
    tpu.vector_store %arg3[%c15_140, %c0_141, %c0_142], %127 {strides = array<i32>} : memref<16x2x64xf32, #tpu.memory_space<vmem>>, vector<1x2x64xf32>,
    return
  }
  func.func @transform_0(%arg0: i32) -> (i32, i32, i32) {
    %c0_i32 = arith.constant 0 : i32
    %c0_i32_0 = arith.constant 0 : i32
    %c0_i32_1 = arith.constant 0 : i32
    return %arg0, %c0_i32, %c0_i32_0 : i32, i32, i32
  }
  func.func @transform_1(%arg0: i32) -> (i32, i32, i32) {
    %c0_i32 = arith.constant 0 : i32
    %c0_i32_0 = arith.constant 0 : i32
    %c0_i32_1 = arith.constant 0 : i32
    return %arg0, %c0_i32, %c0_i32_0 : i32, i32, i32
  }
  func.func @transform_2(%arg0: i32) -> (i32, i32, i32) {
    %c0_i32 = arith.constant 0 : i32
    %c0_i32_0 = arith.constant 0 : i32
    %c0_i32_1 = arith.constant 0 : i32
    return %arg0, %c0_i32, %c0_i32_0 : i32, i32, i32
  }
}

module attributes {stable_mosaic.version = 11 : i64} {
  func.func @_conv_res_kernel(%arg0: i32, %arg1: memref<32x256xf32, #tpu.memory_space<vmem>>, %arg2: memref<256x256xf32, #tpu.memory_space<vmem>>, %arg3: memref<1x256xf32, #tpu.memory_space<vmem>>, %arg4: memref<32x256xf32, #tpu.memory_space<vmem>>, %arg5: memref<32x256xf32, #tpu.memory_space<vmem>>) attributes {dimension_semantics = [#tpu.dimension_semantics<parallel>], iteration_bounds = array<i64: 2>, scalar_prefetch = 0 : i64, scratch_operands = 0 : i64, tpu.core_type = #tpu.core_type<tc>, window_params = [{transform_indices = @transform_0, window_bounds = array<i64: 32, 256>}, {pipeline_mode = #tpu.pipeline_mode<synchronous>, transform_indices = @transform_1, window_bounds = array<i64: 256, 256>}, {pipeline_mode = #tpu.pipeline_mode<synchronous>, transform_indices = @transform_2, window_bounds = array<i64: 1, 256>}, {transform_indices = @transform_3, window_bounds = array<i64: 32, 256>}, {transform_indices = @transform_4, window_bounds = array<i64: 32, 256>}]} {
    %c0 = arith.constant 0 : index
    %c0_0 = arith.constant 0 : index
    %0 = vector.load %arg1[%c0, %c0_0] : memref<32x256xf32, #tpu.memory_space<vmem>>, vector<32x256xf32>
    %c0_1 = arith.constant 0 : index
    %c0_2 = arith.constant 0 : index
    %1 = vector.load %arg2[%c0_1, %c0_2] : memref<256x256xf32, #tpu.memory_space<vmem>>, vector<256x256xf32>
    %cst = arith.constant dense<0.000000e+00> : vector<32x256xf32>
    %2 = tpu.matmul %0, %1, %cst {dimension_numbers = #tpu.dot_dimension_numbers<[1], [0], [0], [1], [0, 0, 1, 1], [], []>} : vector<32x256xf32>, vector<256x256xf32>, vector<32x256xf32> -> vector<32x256xf32>
    %c0_3 = arith.constant 0 : index
    %c0_4 = arith.constant 0 : index
    %3 = vector.load %arg3[%c0_3, %c0_4] : memref<1x256xf32, #tpu.memory_space<vmem>>, vector<1x256xf32>
    %4 = vector.broadcast %3 : vector<1x256xf32> to vector<32x256xf32>
    %5 = arith.addf %2, %4 : vector<32x256xf32>
    %c0_5 = arith.constant 0 : index
    %c0_6 = arith.constant 0 : index
    %6 = vector.load %arg4[%c0_5, %c0_6] : memref<32x256xf32, #tpu.memory_space<vmem>>, vector<32x256xf32>
    %7 = arith.addf %5, %6 : vector<32x256xf32>
    %cst_7 = arith.constant 5.000000e-01 : f32
    %8 = vector.broadcast %cst_7 : f32 to vector<32x256xf32>
    %9 = arith.mulf %8, %7 : vector<32x256xf32>
    %cst_8 = arith.constant 0.707106769 : f32
    %10 = vector.broadcast %cst_8 : f32 to vector<32x256xf32>
    %11 = arith.mulf %7, %10 : vector<32x256xf32>
    %cst_9 = arith.constant -4.000000e+00 : f32
    %cst_10 = arith.constant 4.000000e+00 : f32
    %12 = vector.broadcast %cst_9 : f32 to vector<32x256xf32>
    %13 = arith.maximumf %12, %11 : vector<32x256xf32>
    %14 = vector.broadcast %cst_10 : f32 to vector<32x256xf32>
    %15 = arith.minimumf %14, %13 : vector<32x256xf32>
    %16 = arith.mulf %15, %15 : vector<32x256xf32>
    %cst_11 = arith.constant -2.72614237E-10 : f32
    %17 = vector.broadcast %cst_11 : f32 to vector<32x256xf32>
    %18 = arith.mulf %17, %16 : vector<32x256xf32>
    %cst_12 = arith.constant 2.77068146E-8 : f32
    %19 = vector.broadcast %cst_12 : f32 to vector<32x256xf32>
    %20 = arith.addf %18, %19 : vector<32x256xf32>
    %21 = arith.mulf %20, %16 : vector<32x256xf32>
    %cst_13 = arith.constant -2.10102394E-6 : f32
    %22 = vector.broadcast %cst_13 : f32 to vector<32x256xf32>
    %23 = arith.addf %21, %22 : vector<32x256xf32>
    %24 = arith.mulf %23, %16 : vector<32x256xf32>
    %cst_14 = arith.constant -5.69250624E-5 : f32
    %25 = vector.broadcast %cst_14 : f32 to vector<32x256xf32>
    %26 = arith.addf %24, %25 : vector<32x256xf32>
    %27 = arith.mulf %26, %16 : vector<32x256xf32>
    %cst_15 = arith.constant -7.34990637E-4 : f32
    %28 = vector.broadcast %cst_15 : f32 to vector<32x256xf32>
    %29 = arith.addf %27, %28 : vector<32x256xf32>
    %30 = arith.mulf %29, %16 : vector<32x256xf32>
    %cst_16 = arith.constant -2.954600e-03 : f32
    %31 = vector.broadcast %cst_16 : f32 to vector<32x256xf32>
    %32 = arith.addf %30, %31 : vector<32x256xf32>
    %33 = arith.mulf %32, %16 : vector<32x256xf32>
    %cst_17 = arith.constant -0.0160960332 : f32
    %34 = vector.broadcast %cst_17 : f32 to vector<32x256xf32>
    %35 = arith.addf %33, %34 : vector<32x256xf32>
    %cst_18 = arith.constant -1.45660715E-5 : f32
    %36 = vector.broadcast %cst_18 : f32 to vector<32x256xf32>
    %37 = arith.mulf %36, %16 : vector<32x256xf32>
    %cst_19 = arith.constant -2.13374049E-4 : f32
    %38 = vector.broadcast %cst_19 : f32 to vector<32x256xf32>
    %39 = arith.addf %37, %38 : vector<32x256xf32>
    %40 = arith.mulf %39, %16 : vector<32x256xf32>
    %cst_20 = arith.constant -0.00168282702 : f32
    %41 = vector.broadcast %cst_20 : f32 to vector<32x256xf32>
    %42 = arith.addf %40, %41 : vector<32x256xf32>
    %43 = arith.mulf %42, %16 : vector<32x256xf32>
    %cst_21 = arith.constant -0.00737332925 : f32
    %44 = vector.broadcast %cst_21 : f32 to vector<32x256xf32>
    %45 = arith.addf %43, %44 : vector<32x256xf32>
    %46 = arith.mulf %45, %16 : vector<32x256xf32>
    %cst_22 = arith.constant -0.0142647391 : f32
    %47 = vector.broadcast %cst_22 : f32 to vector<32x256xf32>
    %48 = arith.addf %46, %47 : vector<32x256xf32>
    %49 = arith.mulf %15, %35 : vector<32x256xf32>
    %50 = tpu.reciprocal %48 {approx = true} : vector<32x256xf32> -> vector<32x256xf32>
    %51 = arith.mulf %49, %50 : vector<32x256xf32>
    %cst_23 = arith.constant 1.000000e+00 : f32
    %52 = vector.broadcast %cst_23 : f32 to vector<32x256xf32>
    %53 = arith.addf %52, %51 : vector<32x256xf32>
    %54 = arith.mulf %9, %53 : vector<32x256xf32>
    %c0_24 = arith.constant 0 : index
    %c0_25 = arith.constant 0 : index
    %55 = vector.load %arg5[%c0_24, %c0_25] : memref<32x256xf32, #tpu.memory_space<vmem>>, vector<32x256xf32>
    tpu.vector_store %arg5[%c0_24, %c0_25], %54 {strides = array<i32>} : memref<32x256xf32, #tpu.memory_space<vmem>>, vector<32x256xf32>,
    return
  }
  func.func @transform_0(%arg0: i32) -> (i32, i32) {
    %c0_i32 = arith.constant 0 : i32
    %c0_i32_0 = arith.constant 0 : i32
    return %arg0, %c0_i32 : i32, i32
  }
  func.func @transform_1(%arg0: i32) -> (i32, i32) {
    %c0_i32 = arith.constant 0 : i32
    %c0_i32_0 = arith.constant 0 : i32
    %c0_i32_1 = arith.constant 0 : i32
    return %c0_i32, %c0_i32_0 : i32, i32
  }
  func.func @transform_2(%arg0: i32) -> (i32, i32) {
    %c0_i32 = arith.constant 0 : i32
    %c0_i32_0 = arith.constant 0 : i32
    %c0_i32_1 = arith.constant 0 : i32
    return %c0_i32, %c0_i32_0 : i32, i32
  }
  func.func @transform_3(%arg0: i32) -> (i32, i32) {
    %c0_i32 = arith.constant 0 : i32
    %c0_i32_0 = arith.constant 0 : i32
    return %arg0, %c0_i32 : i32, i32
  }
  func.func @transform_4(%arg0: i32) -> (i32, i32) {
    %c0_i32 = arith.constant 0 : i32
    %c0_i32_0 = arith.constant 0 : i32
    return %arg0, %c0_i32 : i32, i32
  }
}

module attributes {stable_mosaic.version = 11 : i64} {
  func.func @_conv_res_kernel(%arg0: i32, %arg1: memref<32x256xf32, #tpu.memory_space<vmem>>, %arg2: memref<256x256xf32, #tpu.memory_space<vmem>>, %arg3: memref<1x256xf32, #tpu.memory_space<vmem>>, %arg4: memref<32x256xf32, #tpu.memory_space<vmem>>, %arg5: memref<32x256xf32, #tpu.memory_space<vmem>>) attributes {dimension_semantics = [#tpu.dimension_semantics<parallel>], iteration_bounds = array<i64: 2>, scalar_prefetch = 0 : i64, scratch_operands = 0 : i64, tpu.core_type = #tpu.core_type<tc>, window_params = [{transform_indices = @transform_0, window_bounds = array<i64: 32, 256>}, {pipeline_mode = #tpu.pipeline_mode<synchronous>, transform_indices = @transform_1, window_bounds = array<i64: 256, 256>}, {pipeline_mode = #tpu.pipeline_mode<synchronous>, transform_indices = @transform_2, window_bounds = array<i64: 1, 256>}, {transform_indices = @transform_3, window_bounds = array<i64: 32, 256>}, {transform_indices = @transform_4, window_bounds = array<i64: 32, 256>}]} {
    %c0 = arith.constant 0 : index
    %c0_0 = arith.constant 0 : index
    %0 = vector.load %arg1[%c0, %c0_0] : memref<32x256xf32, #tpu.memory_space<vmem>>, vector<32x256xf32>
    %c0_1 = arith.constant 0 : index
    %c0_2 = arith.constant 0 : index
    %1 = vector.load %arg2[%c0_1, %c0_2] : memref<256x256xf32, #tpu.memory_space<vmem>>, vector<256x256xf32>
    %cst = arith.constant dense<0.000000e+00> : vector<32x256xf32>
    %2 = tpu.matmul %0, %1, %cst {dimension_numbers = #tpu.dot_dimension_numbers<[1], [0], [0], [1], [0, 0, 1, 1], [], []>} : vector<32x256xf32>, vector<256x256xf32>, vector<32x256xf32> -> vector<32x256xf32>
    %c0_3 = arith.constant 0 : index
    %c0_4 = arith.constant 0 : index
    %3 = vector.load %arg3[%c0_3, %c0_4] : memref<1x256xf32, #tpu.memory_space<vmem>>, vector<1x256xf32>
    %4 = vector.broadcast %3 : vector<1x256xf32> to vector<32x256xf32>
    %5 = arith.addf %2, %4 : vector<32x256xf32>
    %c0_5 = arith.constant 0 : index
    %c0_6 = arith.constant 0 : index
    %6 = vector.load %arg4[%c0_5, %c0_6] : memref<32x256xf32, #tpu.memory_space<vmem>>, vector<32x256xf32>
    %7 = arith.addf %5, %6 : vector<32x256xf32>
    %c0_7 = arith.constant 0 : index
    %c0_8 = arith.constant 0 : index
    %8 = vector.load %arg5[%c0_7, %c0_8] : memref<32x256xf32, #tpu.memory_space<vmem>>, vector<32x256xf32>
    tpu.vector_store %arg5[%c0_7, %c0_8], %7 {strides = array<i32>} : memref<32x256xf32, #tpu.memory_space<vmem>>, vector<32x256xf32>,
    return
  }
  func.func @transform_0(%arg0: i32) -> (i32, i32) {
    %c0_i32 = arith.constant 0 : i32
    %c0_i32_0 = arith.constant 0 : i32
    return %arg0, %c0_i32 : i32, i32
  }
  func.func @transform_1(%arg0: i32) -> (i32, i32) {
    %c0_i32 = arith.constant 0 : i32
    %c0_i32_0 = arith.constant 0 : i32
    %c0_i32_1 = arith.constant 0 : i32
    return %c0_i32, %c0_i32_0 : i32, i32
  }
  func.func @transform_2(%arg0: i32) -> (i32, i32) {
    %c0_i32 = arith.constant 0 : i32
    %c0_i32_0 = arith.constant 0 : i32
    %c0_i32_1 = arith.constant 0 : i32
    return %c0_i32, %c0_i32_0 : i32, i32
  }
  func.func @transform_3(%arg0: i32) -> (i32, i32) {
    %c0_i32 = arith.constant 0 : i32
    %c0_i32_0 = arith.constant 0 : i32
    return %arg0, %c0_i32 : i32, i32
  }
  func.func @transform_4(%arg0: i32) -> (i32, i32) {
    %c0_i32 = arith.constant 0 : i32
    %c0_i32_0 = arith.constant 0 : i32
    return %arg0, %c0_i32 : i32, i32
  }
}

module attributes {stable_mosaic.version = 11 : i64} {
  func.func @_fc12_kernel(%arg0: i32, %arg1: memref<32x256xf32, #tpu.memory_space<vmem>>, %arg2: memref<256x1024xf32, #tpu.memory_space<vmem>>, %arg3: memref<1x1024xf32, #tpu.memory_space<vmem>>, %arg4: memref<1024x8xf32, #tpu.memory_space<vmem>>, %arg5: memref<1x8xf32, #tpu.memory_space<vmem>>, %arg6: memref<32x8xf32, #tpu.memory_space<vmem>>) attributes {dimension_semantics = [#tpu.dimension_semantics<parallel>], iteration_bounds = array<i64: 2>, scalar_prefetch = 0 : i64, scratch_operands = 0 : i64, tpu.core_type = #tpu.core_type<tc>, window_params = [{transform_indices = @transform_0, window_bounds = array<i64: 32, 256>}, {pipeline_mode = #tpu.pipeline_mode<synchronous>, transform_indices = @transform_1, window_bounds = array<i64: 256, 1024>}, {pipeline_mode = #tpu.pipeline_mode<synchronous>, transform_indices = @transform_2, window_bounds = array<i64: 1, 1024>}, {pipeline_mode = #tpu.pipeline_mode<synchronous>, transform_indices = @transform_3, window_bounds = array<i64: 1024, 8>}, {pipeline_mode = #tpu.pipeline_mode<synchronous>, transform_indices = @transform_4, window_bounds = array<i64: 1, 8>}, {transform_indices = @transform_5, window_bounds = array<i64: 32, 8>}]} {
    %c0 = arith.constant 0 : index
    %c0_0 = arith.constant 0 : index
    %0 = vector.load %arg1[%c0, %c0_0] : memref<32x256xf32, #tpu.memory_space<vmem>>, vector<32x256xf32>
    %c0_1 = arith.constant 0 : index
    %c0_2 = arith.constant 0 : index
    %1 = vector.load %arg2[%c0_1, %c0_2] : memref<256x1024xf32, #tpu.memory_space<vmem>>, vector<256x1024xf32>
    %cst = arith.constant dense<0.000000e+00> : vector<32x1024xf32>
    %2 = tpu.matmul %0, %1, %cst {dimension_numbers = #tpu.dot_dimension_numbers<[1], [0], [0], [1], [0, 0, 1, 1], [], []>} : vector<32x256xf32>, vector<256x1024xf32>, vector<32x1024xf32> -> vector<32x1024xf32>
    %c0_3 = arith.constant 0 : index
    %c0_4 = arith.constant 0 : index
    %3 = vector.load %arg3[%c0_3, %c0_4] : memref<1x1024xf32, #tpu.memory_space<vmem>>, vector<1x1024xf32>
    %4 = vector.broadcast %3 : vector<1x1024xf32> to vector<32x1024xf32>
    %5 = arith.addf %2, %4 : vector<32x1024xf32>
    %cst_5 = arith.constant 5.000000e-01 : f32
    %6 = vector.broadcast %cst_5 : f32 to vector<32x1024xf32>
    %7 = arith.mulf %6, %5 : vector<32x1024xf32>
    %cst_6 = arith.constant 0.707106769 : f32
    %8 = vector.broadcast %cst_6 : f32 to vector<32x1024xf32>
    %9 = arith.mulf %5, %8 : vector<32x1024xf32>
    %cst_7 = arith.constant -4.000000e+00 : f32
    %cst_8 = arith.constant 4.000000e+00 : f32
    %10 = vector.broadcast %cst_7 : f32 to vector<32x1024xf32>
    %11 = arith.maximumf %10, %9 : vector<32x1024xf32>
    %12 = vector.broadcast %cst_8 : f32 to vector<32x1024xf32>
    %13 = arith.minimumf %12, %11 : vector<32x1024xf32>
    %14 = arith.mulf %13, %13 : vector<32x1024xf32>
    %cst_9 = arith.constant -2.72614237E-10 : f32
    %15 = vector.broadcast %cst_9 : f32 to vector<32x1024xf32>
    %16 = arith.mulf %15, %14 : vector<32x1024xf32>
    %cst_10 = arith.constant 2.77068146E-8 : f32
    %17 = vector.broadcast %cst_10 : f32 to vector<32x1024xf32>
    %18 = arith.addf %16, %17 : vector<32x1024xf32>
    %19 = arith.mulf %18, %14 : vector<32x1024xf32>
    %cst_11 = arith.constant -2.10102394E-6 : f32
    %20 = vector.broadcast %cst_11 : f32 to vector<32x1024xf32>
    %21 = arith.addf %19, %20 : vector<32x1024xf32>
    %22 = arith.mulf %21, %14 : vector<32x1024xf32>
    %cst_12 = arith.constant -5.69250624E-5 : f32
    %23 = vector.broadcast %cst_12 : f32 to vector<32x1024xf32>
    %24 = arith.addf %22, %23 : vector<32x1024xf32>
    %25 = arith.mulf %24, %14 : vector<32x1024xf32>
    %cst_13 = arith.constant -7.34990637E-4 : f32
    %26 = vector.broadcast %cst_13 : f32 to vector<32x1024xf32>
    %27 = arith.addf %25, %26 : vector<32x1024xf32>
    %28 = arith.mulf %27, %14 : vector<32x1024xf32>
    %cst_14 = arith.constant -2.954600e-03 : f32
    %29 = vector.broadcast %cst_14 : f32 to vector<32x1024xf32>
    %30 = arith.addf %28, %29 : vector<32x1024xf32>
    %31 = arith.mulf %30, %14 : vector<32x1024xf32>
    %cst_15 = arith.constant -0.0160960332 : f32
    %32 = vector.broadcast %cst_15 : f32 to vector<32x1024xf32>
    %33 = arith.addf %31, %32 : vector<32x1024xf32>
    %cst_16 = arith.constant -1.45660715E-5 : f32
    %34 = vector.broadcast %cst_16 : f32 to vector<32x1024xf32>
    %35 = arith.mulf %34, %14 : vector<32x1024xf32>
    %cst_17 = arith.constant -2.13374049E-4 : f32
    %36 = vector.broadcast %cst_17 : f32 to vector<32x1024xf32>
    %37 = arith.addf %35, %36 : vector<32x1024xf32>
    %38 = arith.mulf %37, %14 : vector<32x1024xf32>
    %cst_18 = arith.constant -0.00168282702 : f32
    %39 = vector.broadcast %cst_18 : f32 to vector<32x1024xf32>
    %40 = arith.addf %38, %39 : vector<32x1024xf32>
    %41 = arith.mulf %40, %14 : vector<32x1024xf32>
    %cst_19 = arith.constant -0.00737332925 : f32
    %42 = vector.broadcast %cst_19 : f32 to vector<32x1024xf32>
    %43 = arith.addf %41, %42 : vector<32x1024xf32>
    %44 = arith.mulf %43, %14 : vector<32x1024xf32>
    %cst_20 = arith.constant -0.0142647391 : f32
    %45 = vector.broadcast %cst_20 : f32 to vector<32x1024xf32>
    %46 = arith.addf %44, %45 : vector<32x1024xf32>
    %47 = arith.mulf %13, %33 : vector<32x1024xf32>
    %48 = tpu.reciprocal %46 {approx = true} : vector<32x1024xf32> -> vector<32x1024xf32>
    %49 = arith.mulf %47, %48 : vector<32x1024xf32>
    %cst_21 = arith.constant 1.000000e+00 : f32
    %50 = vector.broadcast %cst_21 : f32 to vector<32x1024xf32>
    %51 = arith.addf %50, %49 : vector<32x1024xf32>
    %52 = arith.mulf %7, %51 : vector<32x1024xf32>
    %c0_22 = arith.constant 0 : index
    %c0_23 = arith.constant 0 : index
    %53 = vector.load %arg4[%c0_22, %c0_23] : memref<1024x8xf32, #tpu.memory_space<vmem>>, vector<1024x8xf32>
    %cst_24 = arith.constant dense<0.000000e+00> : vector<32x8xf32>
    %54 = tpu.matmul %52, %53, %cst_24 {dimension_numbers = #tpu.dot_dimension_numbers<[1], [0], [0], [1], [0, 0, 1, 1], [], []>} : vector<32x1024xf32>, vector<1024x8xf32>, vector<32x8xf32> -> vector<32x8xf32>
    %c0_25 = arith.constant 0 : index
    %c0_26 = arith.constant 0 : index
    %55 = vector.load %arg5[%c0_25, %c0_26] : memref<1x8xf32, #tpu.memory_space<vmem>>, vector<1x8xf32>
    %56 = vector.broadcast %55 : vector<1x8xf32> to vector<32x8xf32>
    %57 = arith.addf %54, %56 : vector<32x8xf32>
    %c0_27 = arith.constant 0 : index
    %c0_28 = arith.constant 0 : index
    %58 = vector.load %arg6[%c0_27, %c0_28] : memref<32x8xf32, #tpu.memory_space<vmem>>, vector<32x8xf32>
    tpu.vector_store %arg6[%c0_27, %c0_28], %57 {strides = array<i32>} : memref<32x8xf32, #tpu.memory_space<vmem>>, vector<32x8xf32>,
    return
  }
  func.func @transform_0(%arg0: i32) -> (i32, i32) {
    %c0_i32 = arith.constant 0 : i32
    %c0_i32_0 = arith.constant 0 : i32
    return %arg0, %c0_i32 : i32, i32
  }
  func.func @transform_1(%arg0: i32) -> (i32, i32) {
    %c0_i32 = arith.constant 0 : i32
    %c0_i32_0 = arith.constant 0 : i32
    %c0_i32_1 = arith.constant 0 : i32
    return %c0_i32, %c0_i32_0 : i32, i32
  }
  func.func @transform_2(%arg0: i32) -> (i32, i32) {
    %c0_i32 = arith.constant 0 : i32
    %c0_i32_0 = arith.constant 0 : i32
    %c0_i32_1 = arith.constant 0 : i32
    return %c0_i32, %c0_i32_0 : i32, i32
  }
  func.func @transform_3(%arg0: i32) -> (i32, i32) {
    %c0_i32 = arith.constant 0 : i32
    %c0_i32_0 = arith.constant 0 : i32
    %c0_i32_1 = arith.constant 0 : i32
    return %c0_i32, %c0_i32_0 : i32, i32
  }
  func.func @transform_4(%arg0: i32) -> (i32, i32) {
    %c0_i32 = arith.constant 0 : i32
    %c0_i32_0 = arith.constant 0 : i32
    %c0_i32_1 = arith.constant 0 : i32
    return %c0_i32, %c0_i32_0 : i32, i32
  }
  func.func @transform_5(%arg0: i32) -> (i32, i32) {
    %c0_i32 = arith.constant 0 : i32
    %c0_i32_0 = arith.constant 0 : i32
    return %arg0, %c0_i32 : i32, i32
  }
}

</mosaic_0001>

<llo_original>
// kernel: fno2d_forward.10
$region0: #{fno2d_forward.10}
  #allocation0 [shape = 'u32[]', space=smem, size = 0x4, offset = 0x4, fixed_abs, tag = 'smem constant byte address 0x4 - core index']
  #allocation1 [shape = 'u32[144,128]{1,0:T(1,128)}', space=vmem, size = 0x12000, scoped, tag = 'internal scratch']
  %s0 = inlined_call_operand.vmem [shape: f32[64,24], index: 0, kind: input, shape index: {}]
  %s1 = inlined_call_operand.vmem [shape: f32[24,256], index: 1, kind: input, shape index: {}]
  %s2 = inlined_call_operand.vmem [shape: f32[1,256], index: 2, kind: input, shape index: {}]
  %s3 = inlined_call_operand.vmem [shape: f32[64,256], index: 3, kind: output, shape index: {}]
  %s4 = sld [smem:[#allocation0]]
  $region45: #{fno2d_forward.10} parent=0
    _
  %s6 = ssub.s32 1, %s4
  %s7 = scalar_select 0, %s6, %s4
  loop: start=0, step=1, limit=4
  $region2: #{fno2d_forward.10} parent=0 // loop_pre_header
    _
  $region3: #{fno2d_forward.10} parent=0 // loop_header
    %s9 = sphi 0, %s13
    %p10 = scmp.ge.s32.totalorder %s9, 4
    %s19 = sphi 0, %s21
    %s22 = sphi 0, %s19
    %s23 = sphi 0, %s22
    %s39 = sphi 0, %s23
    %s43 = sphi 0, %s43
    %s45 = sphi 0, %s43
    %s46 = sphi 0, %s45
    %s60 = sphi 0, %s46
    %s64 = sphi 0, %s64
    %s66 = sphi 0, %s64
    %s67 = sphi 0, %s66
    %s81 = sphi 0, %s67
    %s87 = sphi 0, %s89
    %s90 = sphi 0, %s87
    %s91 = sphi 0, %s90
    %s107 = sphi 0, %s91
  $region4: #{fno2d_forward.10} parent=0 // loop_header_branch
    %12 = sbr.rel (%p10) target = $region8
  $region5: #{fno2d_forward.10} parent=0 // loop_body
    %s14 = ssub.s32 %s9, 1
    %s15 = ssub.s32 %s9, 2
    %s16 = sadd.s32 %s9, 1
    %s17 = ssub.s32 %s9, %s16
    %p18 = scmp.eq.s32.totalorder %s17, 0
    %s20 = sadd.s32 %s19, 1
    %s21 = scalar_select %p18, %s19, %s20
    %p24 = pneg %p18
    %p25 = scmp.eq.s32.totalorder %s9, 1
    %p26 = por %p24, %p25
    %p27 = scmp.ne.s32.totalorder %s19, %s22
    %p28 = scmp.eq.s32.totalorder %s9, 0
    %p29 = por %p27, %p28
    %p30 = scmp.ne.s32.totalorder %s19, %s22
    %p31 = scmp.eq.s32.totalorder %s14, 1
    %p32 = por %p30, %p31
    %p33 = scmp.ne.s32.totalorder %s22, %s23
    %p34 = scmp.eq.s32.totalorder %s14, 0
    %p35 = por %p33, %p34
    %p36 = scmp.ne.s32.totalorder %s22, %s23
    %p37 = scmp.eq.s32.totalorder %s15, 1
    %p38 = por %p36, %p37
    %p40 = scmp.ne.s32.totalorder %s23, %s39
    %p41 = scmp.eq.s32.totalorder %s15, 0
    %p42 = por %p40, %p41
    %s44 = sadd.s32 %s43, 1
    %p47 = scmp.eq.s32.totalorder %s9, 1
    %p48 = scmp.ne.s32.totalorder %s43, %s45
    %p49 = scmp.eq.s32.totalorder %s9, 0
    %p50 = por %p48, %p49
    %p51 = scmp.ne.s32.totalorder %s43, %s45
    %p52 = scmp.eq.s32.totalorder %s14, 1
    %p53 = por %p51, %p52
    %p54 = scmp.ne.s32.totalorder %s45, %s46
    %p55 = scmp.eq.s32.totalorder %s14, 0
    %p56 = por %p54, %p55
    %p57 = scmp.ne.s32.totalorder %s45, %s46
    %p58 = scmp.eq.s32.totalorder %s15, 1
    %p59 = por %p57, %p58
    %p61 = scmp.ne.s32.totalorder %s46, %s60
    %p62 = scmp.eq.s32.totalorder %s15, 0
    %p63 = por %p61, %p62
    %s65 = sadd.s32 %s64, 1
    %p68 = scmp.eq.s32.totalorder %s9, 1
    %p69 = scmp.ne.s32.totalorder %s64, %s66
    %p70 = scmp.eq.s32.totalorder %s9, 0
    %p71 = por %p69, %p70
    %p72 = scmp.ne.s32.totalorder %s64, %s66
    %p73 = scmp.eq.s32.totalorder %s14, 1
    %p74 = por %p72, %p73
    %p75 = scmp.ne.s32.totalorder %s66, %s67
    %p76 = scmp.eq.s32.totalorder %s14, 0
    %p77 = por %p75, %p76
    %p78 = scmp.ne.s32.totalorder %s66, %s67
    %p79 = scmp.eq.s32.totalorder %s15, 1
    %p80 = por %p78, %p79
    %p82 = scmp.ne.s32.totalorder %s67, %s81
    %p83 = scmp.eq.s32.totalorder %s15, 0
    %p84 = por %p82, %p83
    %s85 = ssub.s32 %s9, %s16
    %p86 = scmp.eq.s32.totalorder %s85, 0
    %s88 = sadd.s32 %s87, 1
    %s89 = scalar_select %p86, %s87, %s88
    %p92 = pneg %p86
    %p93 = scmp.eq.s32.totalorder %s9, 1
    %p94 = por %p92, %p93
    %p95 = scmp.ne.s32.totalorder %s87, %s90
    %p96 = scmp.eq.s32.totalorder %s9, 0
    %p97 = por %p95, %p96
    %p98 = scmp.ne.s32.totalorder %s87, %s90
    %p99 = scmp.eq.s32.totalorder %s14, 1
    %p100 = por %p98, %p99
    %p101 = scmp.ne.s32.totalorder %s90, %s91
    %p102 = scmp.eq.s32.totalorder %s14, 0
    %p103 = por %p101, %p102
    %p104 = scmp.ne.s32.totalorder %s90, %s91
    %p105 = scmp.eq.s32.totalorder %s15, 1
    %p106 = por %p104, %p105
    %p108 = scmp.ne.s32.totalorder %s91, %s107
    %p109 = scmp.eq.s32.totalorder %s15, 0
    %p110 = por %p108, %p109
    %p111 = scmp.le.s32.totalorder 1, %s9
    %p112 = scmp.lt.s32.totalorder %s9, 3
    %p113 = pnand %p111, %p112
    %p114 = pneg %p113
    // Predicated region
    $region9: #{fno2d_forward.10} parent=5 // pred_check
      _
    $region10: #{fno2d_forward.10} parent=5 // pred_check_branch
      %116 = sbr.rel (%p113) target = $region12
    $region11: #{fno2d_forward.10} parent=5 // pred_region
      %s117 = ssub.s32 %s9, 1
      // Predicated region
      $region13: #{fno2d_forward.10} parent=11 // pred_check
        %p118 = pneg %p56
      $region14: #{fno2d_forward.10} parent=11 // pred_check_branch
        %120 = sbr.rel (%p118) target = $region16
      $region15: #{fno2d_forward.10} parent=11 // pred_region
        _
      $region16: #{fno2d_forward.10} parent=11 // pred_fallthru
        _
      // Predicated region
      $region17: #{fno2d_forward.10} parent=11 // pred_check
        %p121 = pneg %p77
      $region18: #{fno2d_forward.10} parent=11 // pred_check_branch
        %123 = sbr.rel (%p121) target = $region20
      $region19: #{fno2d_forward.10} parent=11 // pred_region
        _
      $region20: #{fno2d_forward.10} parent=11 // pred_fallthru
        _
    $region12: #{fno2d_forward.10} parent=5 // pred_fallthru
      _
    %p124 = scmp.lt.s32.totalorder %s9, 2
    // Predicated region
    $region21: #{fno2d_forward.10} parent=5 // pred_check
      %p125 = pneg %p124
    $region22: #{fno2d_forward.10} parent=5 // pred_check_branch
      %127 = sbr.rel (%p125) target = $region24
    $region23: #{fno2d_forward.10} parent=5 // pred_region
      // Predicated region
      $region25: #{fno2d_forward.10} parent=23 // pred_check
        %p128 = pneg %p29
      $region26: #{fno2d_forward.10} parent=23 // pred_check_branch
        %130 = sbr.rel (%p128) target = $region28
      $region27: #{fno2d_forward.10} parent=23 // pred_region
        %s131 = smul.u32 4, %s9
        %p132 = scmp.lt.s32.totalorder %s131, 7
        %s133 = scalar_select %p132, %s131, 7
        %s134 = smul.addr %s133, 8
        %s135 = scalar_lea.vmem %s0, %s134
        %s136 = smul.u32 4, %s9
      $region28: #{fno2d_forward.10} parent=23 // pred_fallthru
        _
    $region24: #{fno2d_forward.10} parent=5 // pred_fallthru
      _
    %p137 = scmp.le.s32.totalorder 1, %s9
    %p138 = scmp.lt.s32.totalorder %s9, 3
    %p139 = pnand %p137, %p138
    %p140 = pneg %p139
    // Predicated region
    $region29: #{fno2d_forward.10} parent=5 // pred_check
      _
    $region30: #{fno2d_forward.10} parent=5 // pred_check_branch
      %142 = sbr.rel (%p139) target = $region32
    $region31: #{fno2d_forward.10} parent=5 // pred_region
      %s143 = ssub.s32 %s9, 1
      %s144 = smul.u32 4, %s14
      %p145 = scmp.lt.s32.totalorder %s144, 7
      %s146 = scalar_select %p145, %s144, 7
      %s147 = smul.addr %s146, 8
      %s148 = scalar_lea.vmem %s0, %s147
      %p149 = pneg %p35
      %p150 = pneg %p32
      %p151 = pneg %p56
      %p152 = pneg %p53
      %p153 = pneg %p77
      %p154 = pneg %p74
      %p155 = pneg %p103
      %p156 = pneg %p100
      %s157 = smul.u32 4, %s14
      %p158 = scmp.lt.s32.totalorder %s157, 7
      %s159 = scalar_select %p158, %s157, 7
      %s160 = smul.addr %s159, 2
      %s161 = smul.addr %s160, 8
      %s162 = scalar_lea.vmem %s3, %s161
      %s163 = smul.u32 4, %s14
      %p164 = scmp.lt.s32.totalorder %s163, 7
      %s165 = scalar_select %p164, %s163, 7
      %s166 = smul.addr %s165, 8
      %s167 = scalar_lea.vmem %s0, %s166
      %s168 = smul.u32 4, %s14
      %s169 = smul.u32 4, %s14
      %p170 = scmp.lt.s32.totalorder %s169, 7
      %s171 = scalar_select %p170, %s169, 7
      %s172 = smul.addr %s171, 2
      %s173 = smul.addr %s172, 8
      %s174 = scalar_lea.vmem %s3, %s173
      %s175 = smul.u32 4, %s14
      %v176 = vld [vmem:[%s167] sm:$0xff]
      %v177 = vld [vmem:[%s167 + $0x8] sm:$0xff]
      %v178 = vld [vmem:[%s167 + $0x10] sm:$0xff]
      %v179 = vld [vmem:[%s167 + $0x18] sm:$0xff]
      %v180 = vld [vmem:[%s1] sm:$0xff]
      %v181 = vld [vmem:[%s1 + $0x8] sm:$0xff]
      %v182 = vld [vmem:[%s1 + $0x10] sm:$0xff]
      %v183 = vld [vmem:[%s1 + $0x18] sm:$0xff]
      %v184 = vld [vmem:[%s1 + $0x20] sm:$0xff]
      %v185 = vld [vmem:[%s1 + $0x28] sm:$0xff]
      %v186 = vld [vmem:[%s2] sm:$0x3]
      %v188 = vlaneseq
      %v189 = vshrl.u32 %v188, 7
      %v190 = vsub.s32 0, %v189
      %v191 = vrot.slane %v186, %v190
      %v192 = vlaneseq
      %v193 = vshrl.u32 %v192, 7
      %v194 = vsub.s32 1, %v193
      %v195 = vrot.slane %v186, %v194
      %vm198 = vcmask 195584
      %v200 = vsel %vm198, %v176, 0
      %v203 = vsel %vm198, %v177, 0
      %v206 = vsel %vm198, %v178, 0
      %v209 = vsel %vm198, %v179, 0
      %211 = vmatprep.subr.mxu0 %v181
      %212 = vmatpush1.msra.mxu0 %v180
      %213 = vmatprep.subr.mxu0 %v183
      %214 = vmatpush1.msra.mxu0 %v182
      %215 = vmatprep.subr.mxu0 %v185
      %216 = vmatpush1.msra.mxu0 %v184
      %217 = vmatprep.subr.mxu0 0.0
      %218 = vmatpush1.msra.mxu0 0.0
      %219 = vmatprep.subr.mxu0 0.0
      %220 = vmatpush1.msra.mxu0 0.0
      %221 = vmatprep.subr.mxu0 0.0
      %222 = vmatpush1.msra.mxu0 0.0
      %223 = vmatprep.subr.mxu0 0.0
      %224 = vmatpush1.msra.mxu0 0.0
      %225 = vmatprep.subr.mxu0 0.0
      %226 = vmatpush1.msra.mxu0 0.0
      %227 = vmatprep.subr.mxu0 0.0
      %228 = vmatpush1.msra.mxu0 0.0
      %229 = vmatprep.subr.mxu0 0.0
      %230 = vmatpush1.msra.mxu0 0.0
      %231 = vmatprep.subr.mxu0 0.0
      %232 = vmatpush1.msra.mxu0 0.0
      %233 = vmatprep.subr.mxu0 0.0
      %234 = vmatpush1.msra.mxu0 0.0
      %235 = vmatprep.subr.mxu0 0.0
      %236 = vmatpush1.msra.mxu0 0.0
      %237 = vmatprep.subr.mxu0 0.0
      %238 = vmatpush1.msra.mxu0 0.0
      %239 = vmatprep.subr.mxu0 0.0
      %240 = vmatpush1.msra.mxu0 0.0
      %241 = vmatprep.subr.mxu0 0.0
      %242 = vmatpush1.msra.mxu0 0.0
      %243 = vmatprep.subr.mxu0 0.0
      %244 = vmatpush1.msra.mxu0 0.0
      %245 = vmatprep.subr.mxu0 0.0
      %246 = vmatpush1.msra.mxu0 0.0
      %247 = vmatprep.subr.mxu0 0.0
      %248 = vmatpush1.msra.mxu0 0.0
      %249 = vmatprep.subr.mxu0 0.0
      %250 = vmatpush1.msra.mxu0 0.0
      %251 = vmatprep.subr.mxu0 0.0
      %252 = vmatpush1.msra.mxu0 0.0
      %253 = vmatprep.subr.mxu0 0.0
      %254 = vmatpush1.msra.mxu0 0.0
      %255 = vmatprep.subr.mxu0 0.0
      %256 = vmatpush1.msra.mxu0 0.0
      %257 = vmatprep.subr.mxu0 0.0
      %258 = vmatpush1.msra.mxu0 0.0
      %259 = vmatprep.subr.mxu0 0.0
      %260 = vmatpush1.msra.mxu0 0.0
      %261 = vmatprep.subr.mxu0 0.0
      %262 = vmatpush1.msra.mxu0 0.0
      %263 = vmatprep.subr.mxu0 0.0
      %264 = vmatpush1.msra.mxu0 0.0
      %265 = vmatprep.subr.mxu0 0.0
      %266 = vmatpush1.msra.mxu0 0.0
      %267 = vmatprep.subr.mxu0 0.0
      %268 = vmatpush1.msra.mxu0 0.0
      %269 = vmatprep.subr.mxu0 0.0
      %270 = vmatpush1.msra.mxu0 0.0
      %271 = vmatprep.subr.mxu0 0.0
      %272 = vmatpush1.msra.mxu0 0.0
      %273 = vmatprep.subr.mxu0 0.0
      %274 = vmatpush1.msra.mxu0 0.0
      %275 = vmatprep.mubr.f32.mxu0 0.0
      %276 = vmatmul.mubr.f32.gmra.mrb[0].mxu0 %v200
      %v277 = vpop.f32.mrb[0].mxu0
      %v278 = vadd.f32 %v191, %v277
      %v279 = vpop.f32.mrb[0].mxu0
      %v280 = vadd.f32 %v195, %v279
      %281 = vmatprep.mubr.f32.mxu0 0.0
      %282 = vmatmul.mubr.f32.gmra.mrb[0].mxu0 %v203
      %v283 = vpop.f32.mrb[0].mxu0
      %v284 = vadd.f32 %v191, %v283
      %v285 = vpop.f32.mrb[0].mxu0
      %v286 = vadd.f32 %v195, %v285
      %287 = vmatprep.mubr.f32.mxu0 0.0
      %288 = vmatmul.mubr.f32.gmra.mrb[0].mxu0 %v206
      %v289 = vpop.f32.mrb[0].mxu0
      %v290 = vadd.f32 %v191, %v289
      %v291 = vpop.f32.mrb[0].mxu0
      %v292 = vadd.f32 %v195, %v291
      %293 = vmatprep.mubr.f32.mxu0 0.0
      %294 = vmatmul.mubr.f32.gmra.mrb[0].mxu0 %v209
      %v295 = vpop.f32.mrb[0].mxu0
      %v296 = vadd.f32 %v191, %v295
      %v297 = vpop.f32.mrb[0].mxu0
      %v298 = vadd.f32 %v195, %v297
      %299 = vdwg.mxu0
      %300 = vst [vmem:[%s174] sm:$0xff] %v278
      %301 = vst [vmem:[%s174 + $0x8] sm:$0xff] %v280
      %302 = vst [vmem:[%s174 + $0x10] sm:$0xff] %v284
      %303 = vst [vmem:[%s174 + $0x18] sm:$0xff] %v286
      %304 = vst [vmem:[%s174 + $0x20] sm:$0xff] %v290
      %305 = vst [vmem:[%s174 + $0x28] sm:$0xff] %v292
      %306 = vst [vmem:[%s174 + $0x30] sm:$0xff] %v296
      %307 = vst [vmem:[%s174 + $0x38] sm:$0xff] %v298
      %s308 = smul.u32 4, %s14
      %p309 = scmp.lt.s32.totalorder %s308, 7
      %s310 = scalar_select %p309, %s308, 7
      %s311 = smul.addr %s310, 2
      %s312 = smul.addr %s311, 8
      %s313 = scalar_lea.vmem %s3, %s312
      // Predicated region
      $region33: #{fno2d_forward.10} parent=31 // pred_check
        %p314 = pneg %p100
      $region34: #{fno2d_forward.10} parent=31 // pred_check_branch
        %316 = sbr.rel (%p314) target = $region36
      $region35: #{fno2d_forward.10} parent=31 // pred_region
        %s317 = smul.u32 4, %s14
      $region36: #{fno2d_forward.10} parent=31 // pred_fallthru
        _
    $region32: #{fno2d_forward.10} parent=5 // pred_fallthru
      _
    %p318 = scmp.le.s32.totalorder 2, %s9
    // Predicated region
    $region37: #{fno2d_forward.10} parent=5 // pred_check
      %p319 = pneg %p318
    $region38: #{fno2d_forward.10} parent=5 // pred_check_branch
      %321 = sbr.rel (%p319) target = $region40
    $region39: #{fno2d_forward.10} parent=5 // pred_region
      %s322 = ssub.s32 %s9, 2
      // Predicated region
      $region41: #{fno2d_forward.10} parent=39 // pred_check
        %p323 = pneg %p106
      $region42: #{fno2d_forward.10} parent=39 // pred_check_branch
        %325 = sbr.rel (%p323) target = $region44
      $region43: #{fno2d_forward.10} parent=39 // pred_region
        %s326 = smul.u32 4, %s15
        %p327 = scmp.lt.s32.totalorder %s326, 7
        %s328 = scalar_select %p327, %s326, 7
        %s329 = smul.addr %s328, 2
        %s330 = smul.addr %s329, 8
        %s331 = scalar_lea.vmem %s3, %s330
      $region44: #{fno2d_forward.10} parent=39 // pred_fallthru
        _
    $region40: #{fno2d_forward.10} parent=5 // pred_fallthru
      _
  $region6: #{fno2d_forward.10} parent=0 // loop_footer
    %s13 = sadd.s32 1, %s9
  $region7: #{fno2d_forward.10} parent=0 // loop_footer_branch
    %8 = sbr.rel target = $region3
  $region8: #{fno2d_forward.10} parent=0 // loop_exit
    _

// kernel: fno2d_forward.11
$region0: #{fno2d_forward.11}
  #allocation0 [shape = 'u32[]', space=smem, size = 0x4, offset = 0x4, fixed_abs, tag = 'smem constant byte address 0x4 - core index']
  #allocation1 [shape = 'u32[144,128]{1,0:T(1,128)}', space=vmem, size = 0x12000, scoped, tag = 'internal scratch']
  %s0 = inlined_call_operand.vmem [shape: f32[32,2,64], index: 0, kind: input, shape index: {}]
  %s1 = inlined_call_operand.vmem [shape: f32[32,64,64], index: 1, kind: input, shape index: {}]
  %s2 = inlined_call_operand.vmem [shape: f32[32,2,64], index: 2, kind: output, shape index: {}]
  %s3 = sld [smem:[#allocation0]]
  $region41: #{fno2d_forward.11} parent=0
    _
  %s5 = ssub.s32 1, %s3
  %s6 = scalar_select 0, %s5, %s3
  loop: start=0, step=1, limit=4
  $region2: #{fno2d_forward.11} parent=0 // loop_pre_header
    _
  $region3: #{fno2d_forward.11} parent=0 // loop_header
    %s8 = sphi 0, %s12
    %p9 = scmp.ge.s32.totalorder %s8, 4
    %s18 = sphi 0, %s20
    %s21 = sphi 0, %s18
    %s22 = sphi 0, %s21
    %s38 = sphi 0, %s22
    %s44 = sphi 0, %s46
    %s47 = sphi 0, %s44
    %s48 = sphi 0, %s47
    %s64 = sphi 0, %s48
    %s70 = sphi 0, %s72
    %s73 = sphi 0, %s70
    %s74 = sphi 0, %s73
    %s90 = sphi 0, %s74
  $region4: #{fno2d_forward.11} parent=0 // loop_header_branch
    %11 = sbr.rel (%p9) target = $region8
  $region5: #{fno2d_forward.11} parent=0 // loop_body
    %s13 = ssub.s32 %s8, 1
    %s14 = ssub.s32 %s8, 2
    %s15 = sadd.s32 %s8, 1
    %s16 = ssub.s32 %s8, %s15
    %p17 = scmp.eq.s32.totalorder %s16, 0
    %s19 = sadd.s32 %s18, 1
    %s20 = scalar_select %p17, %s18, %s19
    %p23 = pneg %p17
    %p24 = scmp.eq.s32.totalorder %s8, 1
    %p25 = por %p23, %p24
    %p26 = scmp.ne.s32.totalorder %s18, %s21
    %p27 = scmp.eq.s32.totalorder %s8, 0
    %p28 = por %p26, %p27
    %p29 = scmp.ne.s32.totalorder %s18, %s21
    %p30 = scmp.eq.s32.totalorder %s13, 1
    %p31 = por %p29, %p30
    %p32 = scmp.ne.s32.totalorder %s21, %s22
    %p33 = scmp.eq.s32.totalorder %s13, 0
    %p34 = por %p32, %p33
    %p35 = scmp.ne.s32.totalorder %s21, %s22
    %p36 = scmp.eq.s32.totalorder %s14, 1
    %p37 = por %p35, %p36
    %p39 = scmp.ne.s32.totalorder %s22, %s38
    %p40 = scmp.eq.s32.totalorder %s14, 0
    %p41 = por %p39, %p40
    %s42 = ssub.s32 %s8, %s15
    %p43 = scmp.eq.s32.totalorder %s42, 0
    %s45 = sadd.s32 %s44, 1
    %s46 = scalar_select %p43, %s44, %s45
    %p49 = pneg %p43
    %p50 = scmp.eq.s32.totalorder %s8, 1
    %p51 = por %p49, %p50
    %p52 = scmp.ne.s32.totalorder %s44, %s47
    %p53 = scmp.eq.s32.totalorder %s8, 0
    %p54 = por %p52, %p53
    %p55 = scmp.ne.s32.totalorder %s44, %s47
    %p56 = scmp.eq.s32.totalorder %s13, 1
    %p57 = por %p55, %p56
    %p58 = scmp.ne.s32.totalorder %s47, %s48
    %p59 = scmp.eq.s32.totalorder %s13, 0
    %p60 = por %p58, %p59
    %p61 = scmp.ne.s32.totalorder %s47, %s48
    %p62 = scmp.eq.s32.totalorder %s14, 1
    %p63 = por %p61, %p62
    %p65 = scmp.ne.s32.totalorder %s48, %s64
    %p66 = scmp.eq.s32.totalorder %s14, 0
    %p67 = por %p65, %p66
    %s68 = ssub.s32 %s8, %s15
    %p69 = scmp.eq.s32.totalorder %s68, 0
    %s71 = sadd.s32 %s70, 1
    %s72 = scalar_select %p69, %s70, %s71
    %p75 = pneg %p69
    %p76 = scmp.eq.s32.totalorder %s8, 1
    %p77 = por %p75, %p76
    %p78 = scmp.ne.s32.totalorder %s70, %s73
    %p79 = scmp.eq.s32.totalorder %s8, 0
    %p80 = por %p78, %p79
    %p81 = scmp.ne.s32.totalorder %s70, %s73
    %p82 = scmp.eq.s32.totalorder %s13, 1
    %p83 = por %p81, %p82
    %p84 = scmp.ne.s32.totalorder %s73, %s74
    %p85 = scmp.eq.s32.totalorder %s13, 0
    %p86 = por %p84, %p85
    %p87 = scmp.ne.s32.totalorder %s73, %s74
    %p88 = scmp.eq.s32.totalorder %s14, 1
    %p89 = por %p87, %p88
    %p91 = scmp.ne.s32.totalorder %s74, %s90
    %p92 = scmp.eq.s32.totalorder %s14, 0
    %p93 = por %p91, %p92
    %p94 = scmp.le.s32.totalorder 1, %s8
    %p95 = scmp.lt.s32.totalorder %s8, 3
    %p96 = pnand %p94, %p95
    %p97 = pneg %p96
    // Predicated region
    $region9: #{fno2d_forward.11} parent=5 // pred_check
      _
    $region10: #{fno2d_forward.11} parent=5 // pred_check_branch
      %99 = sbr.rel (%p96) target = $region12
    $region11: #{fno2d_forward.11} parent=5 // pred_region
      %s100 = ssub.s32 %s8, 1
    $region12: #{fno2d_forward.11} parent=5 // pred_fallthru
      _
    %p101 = scmp.lt.s32.totalorder %s8, 2
    // Predicated region
    $region13: #{fno2d_forward.11} parent=5 // pred_check
      %p102 = pneg %p101
    $region14: #{fno2d_forward.11} parent=5 // pred_check_branch
      %104 = sbr.rel (%p102) target = $region16
    $region15: #{fno2d_forward.11} parent=5 // pred_region
      // Predicated region
      $region17: #{fno2d_forward.11} parent=15 // pred_check
        %p105 = pneg %p28
      $region18: #{fno2d_forward.11} parent=15 // pred_check_branch
        %107 = sbr.rel (%p105) target = $region20
      $region19: #{fno2d_forward.11} parent=15 // pred_region
        %s108 = smul.u32 16, %s8
        %p109 = scmp.lt.s32.totalorder %s108, 31
        %s110 = scalar_select %p109, %s108, 31
        %s111 = smul.addr %s110, 2
        %s112 = scalar_lea.vmem %s0, %s111
        %s113 = smul.u32 16, %s8
      $region20: #{fno2d_forward.11} parent=15 // pred_fallthru
        _
      // Predicated region
      $region21: #{fno2d_forward.11} parent=15 // pred_check
        %p114 = pneg %p54
      $region22: #{fno2d_forward.11} parent=15 // pred_check_branch
        %116 = sbr.rel (%p114) target = $region24
      $region23: #{fno2d_forward.11} parent=15 // pred_region
        %s117 = smul.u32 16, %s8
        %p118 = scmp.lt.s32.totalorder %s117, 31
        %s119 = scalar_select %p118, %s117, 31
        %s120 = smul.addr %s119, 8
        %s121 = smul.addr %s120, 8
        %s122 = scalar_lea.vmem %s1, %s121
        %s123 = smul.u32 16, %s8
      $region24: #{fno2d_forward.11} parent=15 // pred_fallthru
        _
    $region16: #{fno2d_forward.11} parent=5 // pred_fallthru
      _
    %p124 = scmp.le.s32.totalorder 1, %s8
    %p125 = scmp.lt.s32.totalorder %s8, 3
    %p126 = pnand %p124, %p125
    %p127 = pneg %p126
    // Predicated region
    $region25: #{fno2d_forward.11} parent=5 // pred_check
      _
    $region26: #{fno2d_forward.11} parent=5 // pred_check_branch
      %129 = sbr.rel (%p126) target = $region28
    $region27: #{fno2d_forward.11} parent=5 // pred_region
      %s130 = ssub.s32 %s8, 1
      %s131 = smul.u32 16, %s13
      %p132 = scmp.lt.s32.totalorder %s131, 31
      %s133 = scalar_select %p132, %s131, 31
      %s134 = smul.addr %s133, 2
      %s135 = scalar_lea.vmem %s0, %s134
      %p136 = pneg %p34
      %p137 = pneg %p31
      %s138 = smul.u32 16, %s13
      %p139 = scmp.lt.s32.totalorder %s138, 31
      %s140 = scalar_select %p139, %s138, 31
      %s141 = smul.addr %s140, 8
      %s142 = smul.addr %s141, 8
      %s143 = scalar_lea.vmem %s1, %s142
      %p144 = pneg %p60
      %p145 = pneg %p57
      %p146 = pneg %p86
      %p147 = pneg %p83
      %s148 = smul.u32 16, %s13
      %p149 = scmp.lt.s32.totalorder %s148, 31
      %s150 = scalar_select %p149, %s148, 31
      %s151 = smul.addr %s150, 2
      %s152 = scalar_lea.vmem %s2, %s151
      %s153 = smul.u32 16, %s13
      %p154 = scmp.lt.s32.totalorder %s153, 31
      %s155 = scalar_select %p154, %s153, 31
      %s156 = smul.addr %s155, 2
      %s157 = scalar_lea.vmem %s0, %s156
      %s158 = smul.u32 16, %s13
      %s159 = smul.u32 16, %s13
      %p160 = scmp.lt.s32.totalorder %s159, 31
      %s161 = scalar_select %p160, %s159, 31
      %s162 = smul.addr %s161, 8
      %s163 = smul.addr %s162, 8
      %s164 = scalar_lea.vmem %s1, %s163
      %s165 = smul.u32 16, %s13
      %s166 = smul.u32 16, %s13
      %p167 = scmp.lt.s32.totalorder %s166, 31
      %s168 = scalar_select %p167, %s166, 31
      %s169 = smul.addr %s168, 2
      %s170 = scalar_lea.vmem %s2, %s169
      %s171 = smul.u32 16, %s13
      %v172 = vld [vmem:[%s157] sm:$0x3]
      %v173 = vld [vmem:[%s164] sm:$0xff]
      %v174 = vld [vmem:[%s164 + $0x8] sm:$0xff]
      %v175 = vld [vmem:[%s164 + $0x10] sm:$0xff]
      %v176 = vld [vmem:[%s164 + $0x18] sm:$0xff]
      %v177 = vld [vmem:[%s164 + $0x20] sm:$0xff]
      %v178 = vld [vmem:[%s164 + $0x28] sm:$0xff]
      %v179 = vld [vmem:[%s164 + $0x30] sm:$0xff]
      %v180 = vld [vmem:[%s164 + $0x38] sm:$0xff]
      %vm181 = vcmask 523264
      %v183 = vsel %vm181, %v172, 0
      %185 = vmatprep.subr.mxu0 0.0
      %186 = vmatpush1.msra.mxu0 %v173
      %187 = vmatprep.subr.mxu0 0.0
      %188 = vmatpush1.msra.mxu0 %v174
      %189 = vmatprep.subr.mxu0 0.0
      %190 = vmatpush1.msra.mxu0 %v175
      %191 = vmatprep.subr.mxu0 0.0
      %192 = vmatpush1.msra.mxu0 %v176
      %193 = vmatprep.subr.mxu0 0.0
      %194 = vmatpush1.msra.mxu0 %v177
      %195 = vmatprep.subr.mxu0 0.0
      %196 = vmatpush1.msra.mxu0 %v178
      %197 = vmatprep.subr.mxu0 0.0
      %198 = vmatpush1.msra.mxu0 %v179
      %199 = vmatprep.subr.mxu0 0.0
      %200 = vmatpush1.msra.mxu0 %v180
      %201 = vmatprep.subr.mxu0 0.0
      %202 = vmatpush1.msra.mxu0 0.0
      %203 = vmatprep.subr.mxu0 0.0
      %204 = vmatpush1.msra.mxu0 0.0
      %205 = vmatprep.subr.mxu0 0.0
      %206 = vmatpush1.msra.mxu0 0.0
      %207 = vmatprep.subr.mxu0 0.0
      %208 = vmatpush1.msra.mxu0 0.0
      %209 = vmatprep.subr.mxu0 0.0
      %210 = vmatpush1.msra.mxu0 0.0
      %211 = vmatprep.subr.mxu0 0.0
      %212 = vmatpush1.msra.mxu0 0.0
      %213 = vmatprep.subr.mxu0 0.0
      %214 = vmatpush1.msra.mxu0 0.0
      %215 = vmatprep.subr.mxu0 0.0
      %216 = vmatpush1.msra.mxu0 0.0
      %217 = vmatprep.subr.mxu0 0.0
      %218 = vmatpush1.msra.mxu0 0.0
      %219 = vmatprep.subr.mxu0 0.0
      %220 = vmatpush1.msra.mxu0 0.0
      %221 = vmatprep.subr.mxu0 0.0
      %222 = vmatpush1.msra.mxu0 0.0
      %223 = vmatprep.subr.mxu0 0.0
      %224 = vmatpush1.msra.mxu0 0.0
      %225 = vmatprep.subr.mxu0 0.0
      %226 = vmatpush1.msra.mxu0 0.0
      %227 = vmatprep.subr.mxu0 0.0
      %228 = vmatpush1.msra.mxu0 0.0
      %229 = vmatprep.subr.mxu0 0.0
      %230 = vmatpush1.msra.mxu0 0.0
      %231 = vmatprep.subr.mxu0 0.0
      %232 = vmatpush1.msra.mxu0 0.0
      %233 = vmatprep.subr.mxu0 0.0
      %234 = vmatpush1.msra.mxu0 0.0
      %235 = vmatprep.subr.mxu0 0.0
      %236 = vmatpush1.msra.mxu0 0.0
      %237 = vmatprep.subr.mxu0 0.0
      %238 = vmatpush1.msra.mxu0 0.0
      %239 = vmatprep.subr.mxu0 0.0
      %240 = vmatpush1.msra.mxu0 0.0
      %241 = vmatprep.subr.mxu0 0.0
      %242 = vmatpush1.msra.mxu0 0.0
      %243 = vmatprep.subr.mxu0 0.0
      %244 = vmatpush1.msra.mxu0 0.0
      %245 = vmatprep.subr.mxu0 0.0
      %246 = vmatpush1.msra.mxu0 0.0
      %247 = vmatprep.subr.mxu0 0.0
      %248 = vmatpush1.msra.mxu0 0.0
      %249 = vmatprep.mubr.f32.mxu0 0.0
      %250 = vmatmul.mubr.f32.gmra.mrb[0].mxu0 %v183
      %v251 = vpop.f32.mrb[0].mxu0
      %v252 = vadd.f32 0.0, %v251
      %v253 = vpop.f32.mrb[0].mxu0
      %254 = vdwg.mxu0
      %vm255 = vcmask 517120
      %256 = vst.msk [vmem:[%s170] sm:$0x3] %vm255, %v252
      %s257 = scalar_lea.vmem %s157, 2
      %v258 = vld [vmem:[%s257] sm:$0x3]
      %s259 = scalar_lea.vmem %s164, 64
      %v260 = vld [vmem:[%s259] sm:$0xff]
      %v261 = vld [vmem:[%s259 + $0x8] sm:$0xff]
      %v262 = vld [vmem:[%s259 + $0x10] sm:$0xff]
      %v263 = vld [vmem:[%s259 + $0x18] sm:$0xff]
      %v264 = vld [vmem:[%s259 + $0x20] sm:$0xff]
      %v265 = vld [vmem:[%s259 + $0x28] sm:$0xff]
      %v266 = vld [vmem:[%s259 + $0x30] sm:$0xff]
      %v267 = vld [vmem:[%s259 + $0x38] sm:$0xff]
      %v269 = vsel %vm181, %v258, 0
      %271 = vmatprep.subr.mxu0 0.0
      %272 = vmatpush1.msra.mxu0 %v260
      %273 = vmatprep.subr.mxu0 0.0
      %274 = vmatpush1.msra.mxu0 %v261
      %275 = vmatprep.subr.mxu0 0.0
      %276 = vmatpush1.msra.mxu0 %v262
      %277 = vmatprep.subr.mxu0 0.0
      %278 = vmatpush1.msra.mxu0 %v263
      %279 = vmatprep.subr.mxu0 0.0
      %280 = vmatpush1.msra.mxu0 %v264
      %281 = vmatprep.subr.mxu0 0.0
      %282 = vmatpush1.msra.mxu0 %v265
      %283 = vmatprep.subr.mxu0 0.0
      %284 = vmatpush1.msra.mxu0 %v266
      %285 = vmatprep.subr.mxu0 0.0
      %286 = vmatpush1.msra.mxu0 %v267
      %287 = vmatprep.subr.mxu0 0.0
      %288 = vmatpush1.msra.mxu0 0.0
      %289 = vmatprep.subr.mxu0 0.0
      %290 = vmatpush1.msra.mxu0 0.0
      %291 = vmatprep.subr.mxu0 0.0
      %292 = vmatpush1.msra.mxu0 0.0
      %293 = vmatprep.subr.mxu0 0.0
      %294 = vmatpush1.msra.mxu0 0.0
      %295 = vmatprep.subr.mxu0 0.0
      %296 = vmatpush1.msra.mxu0 0.0
      %297 = vmatprep.subr.mxu0 0.0
      %298 = vmatpush1.msra.mxu0 0.0
      %299 = vmatprep.subr.mxu0 0.0
      %300 = vmatpush1.msra.mxu0 0.0
      %301 = vmatprep.subr.mxu0 0.0
      %302 = vmatpush1.msra.mxu0 0.0
      %303 = vmatprep.subr.mxu0 0.0
      %304 = vmatpush1.msra.mxu0 0.0
      %305 = vmatprep.subr.mxu0 0.0
      %306 = vmatpush1.msra.mxu0 0.0
      %307 = vmatprep.subr.mxu0 0.0
      %308 = vmatpush1.msra.mxu0 0.0
      %309 = vmatprep.subr.mxu0 0.0
      %310 = vmatpush1.msra.mxu0 0.0
      %311 = vmatprep.subr.mxu0 0.0
      %312 = vmatpush1.msra.mxu0 0.0
      %313 = vmatprep.subr.mxu0 0.0
      %314 = vmatpush1.msra.mxu0 0.0
      %315 = vmatprep.subr.mxu0 0.0
      %316 = vmatpush1.msra.mxu0 0.0
      %317 = vmatprep.subr.mxu0 0.0
      %318 = vmatpush1.msra.mxu0 0.0
      %319 = vmatprep.subr.mxu0 0.0
      %320 = vmatpush1.msra.mxu0 0.0
      %321 = vmatprep.subr.mxu0 0.0
      %322 = vmatpush1.msra.mxu0 0.0
      %323 = vmatprep.subr.mxu0 0.0
      %324 = vmatpush1.msra.mxu0 0.0
      %325 = vmatprep.subr.mxu0 0.0
      %326 = vmatpush1.msra.mxu0 0.0
      %327 = vmatprep.subr.mxu0 0.0
      %328 = vmatpush1.msra.mxu0 0.0
      %329 = vmatprep.subr.mxu0 0.0
      %330 = vmatpush1.msra.mxu0 0.0
      %331 = vmatprep.subr.mxu0 0.0
      %332 = vmatpush1.msra.mxu0 0.0
      %333 = vmatprep.subr.mxu0 0.0
      %334 = vmatpush1.msra.mxu0 0.0
      %335 = vmatprep.mubr.f32.mxu0 0.0
      %336 = vmatmul.mubr.f32.gmra.mrb[0].mxu0 %v269
      %v337 = vpop.f32.mrb[0].mxu0
      %v338 = vadd.f32 0.0, %v337
      %v339 = vpop.f32.mrb[0].mxu0
      %340 = vdwg.mxu0
      %s341 = scalar_lea.vmem %s170, 2
      %342 = vst.msk [vmem:[%s341] sm:$0x3] %vm255, %v338
      %s343 = scalar_lea.vmem %s157, 4
      %v344 = vld [vmem:[%s343] sm:$0x3]
      %s345 = scalar_lea.vmem %s164, 128
      %v346 = vld [vmem:[%s345] sm:$0xff]
      %v347 = vld [vmem:[%s345 + $0x8] sm:$0xff]
      %v348 = vld [vmem:[%s345 + $0x10] sm:$0xff]
      %v349 = vld [vmem:[%s345 + $0x18] sm:$0xff]
      %v350 = vld [vmem:[%s345 + $0x20] sm:$0xff]
      %v351 = vld [vmem:[%s345 + $0x28] sm:$0xff]
      %v352 = vld [vmem:[%s345 + $0x30] sm:$0xff]
      %v353 = vld [vmem:[%s345 + $0x38] sm:$0xff]
      %v355 = vsel %vm181, %v344, 0
      %357 = vmatprep.subr.mxu0 0.0
      %358 = vmatpush1.msra.mxu0 %v346
      %359 = vmatprep.subr.mxu0 0.0
      %360 = vmatpush1.msra.mxu0 %v347
      %361 = vmatprep.subr.mxu0 0.0
      %362 = vmatpush1.msra.mxu0 %v348
      %363 = vmatprep.subr.mxu0 0.0
      %364 = vmatpush1.msra.mxu0 %v349
      %365 = vmatprep.subr.mxu0 0.0
      %366 = vmatpush1.msra.mxu0 %v350
      %367 = vmatprep.subr.mxu0 0.0
      %368 = vmatpush1.msra.mxu0 %v351
      %369 = vmatprep.subr.mxu0 0.0
      %370 = vmatpush1.msra.mxu0 %v352
      %371 = vmatprep.subr.mxu0 0.0
      %372 = vmatpush1.msra.mxu0 %v353
      %373 = vmatprep.subr.mxu0 0.0
      %374 = vmatpush1.msra.mxu0 0.0
      %375 = vmatprep.subr.mxu0 0.0
      %376 = vmatpush1.msra.mxu0 0.0
      %377 = vmatprep.subr.mxu0 0.0
      %378 = vmatpush1.msra.mxu0 0.0
      %379 = vmatprep.subr.mxu0 0.0
      %380 = vmatpush1.msra.mxu0 0.0
      %381 = vmatprep.subr.mxu0 0.0
      %382 = vmatpush1.msra.mxu0 0.0
      %383 = vmatprep.subr.mxu0 0.0
      %384 = vmatpush1.msra.mxu0 0.0
      %385 = vmatprep.subr.mxu0 0.0
      %386 = vmatpush1.msra.mxu0 0.0
      %387 = vmatprep.subr.mxu0 0.0
      %388 = vmatpush1.msra.mxu0 0.0
      %389 = vmatprep.subr.mxu0 0.0
      %390 = vmatpush1.msra.mxu0 0.0
      %391 = vmatprep.subr.mxu0 0.0
      %392 = vmatpush1.msra.mxu0 0.0
      %393 = vmatprep.subr.mxu0 0.0
      %394 = vmatpush1.msra.mxu0 0.0
      %395 = vmatprep.subr.mxu0 0.0
      %396 = vmatpush1.msra.mxu0 0.0
      %397 = vmatprep.subr.mxu0 0.0
      %398 = vmatpush1.msra.mxu0 0.0
      %399 = vmatprep.subr.mxu0 0.0
      %400 = vmatpush1.msra.mxu0 0.0
      %401 = vmatprep.subr.mxu0 0.0
      %402 = vmatpush1.msra.mxu0 0.0
      %403 = vmatprep.subr.mxu0 0.0
      %404 = vmatpush1.msra.mxu0 0.0
      %405 = vmatprep.subr.mxu0 0.0
      %406 = vmatpush1.msra.mxu0 0.0
      %407 = vmatprep.subr.mxu0 0.0
      %408 = vmatpush1.msra.mxu0 0.0
      %409 = vmatprep.subr.mxu0 0.0
      %410 = vmatpush1.msra.mxu0 0.0
      %411 = vmatprep.subr.mxu0 0.0
      %412 = vmatpush1.msra.mxu0 0.0
      %413 = vmatprep.subr.mxu0 0.0
      %414 = vmatpush1.msra.mxu0 0.0
      %415 = vmatprep.subr.mxu0 0.0
      %416 = vmatpush1.msra.mxu0 0.0
      %417 = vmatprep.subr.mxu0 0.0
      %418 = vmatpush1.msra.mxu0 0.0
      %419 = vmatprep.subr.mxu0 0.0
      %420 = vmatpush1.msra.mxu0 0.0
      %421 = vmatprep.mubr.f32.mxu0 0.0
      %422 = vmatmul.mubr.f32.gmra.mrb[0].mxu0 %v355
      %v423 = vpop.f32.mrb[0].mxu0
      %v424 = vadd.f32 0.0, %v423
      %v425 = vpop.f32.mrb[0].mxu0
      %426 = vdwg.mxu0
      %s427 = scalar_lea.vmem %s170, 4
      %428 = vst.msk [vmem:[%s427] sm:$0x3] %vm255, %v424
      %s429 = scalar_lea.vmem %s157, 6
      %v430 = vld [vmem:[%s429] sm:$0x3]
      %s431 = scalar_lea.vmem %s164, 192
      %v432 = vld [vmem:[%s431] sm:$0xff]
      %v433 = vld [vmem:[%s431 + $0x8] sm:$0xff]
      %v434 = vld [vmem:[%s431 + $0x10] sm:$0xff]
      %v435 = vld [vmem:[%s431 + $0x18] sm:$0xff]
      %v436 = vld [vmem:[%s431 + $0x20] sm:$0xff]
      %v437 = vld [vmem:[%s431 + $0x28] sm:$0xff]
      %v438 = vld [vmem:[%s431 + $0x30] sm:$0xff]
      %v439 = vld [vmem:[%s431 + $0x38] sm:$0xff]
      %v441 = vsel %vm181, %v430, 0
      %443 = vmatprep.subr.mxu0 0.0
      %444 = vmatpush1.msra.mxu0 %v432
      %445 = vmatprep.subr.mxu0 0.0
      %446 = vmatpush1.msra.mxu0 %v433
      %447 = vmatprep.subr.mxu0 0.0
      %448 = vmatpush1.msra.mxu0 %v434
      %449 = vmatprep.subr.mxu0 0.0
      %450 = vmatpush1.msra.mxu0 %v435
      %451 = vmatprep.subr.mxu0 0.0
      %452 = vmatpush1.msra.mxu0 %v436
      %453 = vmatprep.subr.mxu0 0.0
      %454 = vmatpush1.msra.mxu0 %v437
      %455 = vmatprep.subr.mxu0 0.0
      %456 = vmatpush1.msra.mxu0 %v438
      %457 = vmatprep.subr.mxu0 0.0
      %458 = vmatpush1.msra.mxu0 %v439
      %459 = vmatprep.subr.mxu0 0.0
      %460 = vmatpush1.msra.mxu0 0.0
      %461 = vmatprep.subr.mxu0 0.0
      %462 = vmatpush1.msra.mxu0 0.0
      %463 = vmatprep.subr.mxu0 0.0
      %464 = vmatpush1.msra.mxu0 0.0
      %465 = vmatprep.subr.mxu0 0.0
      %466 = vmatpush1.msra.mxu0 0.0
      %467 = vmatprep.subr.mxu0 0.0
      %468 = vmatpush1.msra.mxu0 0.0
      %469 = vmatprep.subr.mxu0 0.0
      %470 = vmatpush1.msra.mxu0 0.0
      %471 = vmatprep.subr.mxu0 0.0
      %472 = vmatpush1.msra.mxu0 0.0
      %473 = vmatprep.subr.mxu0 0.0
      %474 = vmatpush1.msra.mxu0 0.0
      %475 = vmatprep.subr.mxu0 0.0
      %476 = vmatpush1.msra.mxu0 0.0
      %477 = vmatprep.subr.mxu0 0.0
      %478 = vmatpush1.msra.mxu0 0.0
      %479 = vmatprep.subr.mxu0 0.0
      %480 = vmatpush1.msra.mxu0 0.0
      %481 = vmatprep.subr.mxu0 0.0
      %482 = vmatpush1.msra.mxu0 0.0
      %483 = vmatprep.subr.mxu0 0.0
      %484 = vmatpush1.msra.mxu0 0.0
      %485 = vmatprep.subr.mxu0 0.0
      %486 = vmatpush1.msra.mxu0 0.0
      %487 = vmatprep.subr.mxu0 0.0
      %488 = vmatpush1.msra.mxu0 0.0
      %489 = vmatprep.subr.mxu0 0.0
      %490 = vmatpush1.msra.mxu0 0.0
      %491 = vmatprep.subr.mxu0 0.0
      %492 = vmatpush1.msra.mxu0 0.0
      %493 = vmatprep.subr.mxu0 0.0
      %494 = vmatpush1.msra.mxu0 0.0
      %495 = vmatprep.subr.mxu0 0.0
      %496 = vmatpush1.msra.mxu0 0.0
      %497 = vmatprep.subr.mxu0 0.0
      %498 = vmatpush1.msra.mxu0 0.0
      %499 = vmatprep.subr.mxu0 0.0
      %500 = vmatpush1.msra.mxu0 0.0
      %501 = vmatprep.subr.mxu0 0.0
      %502 = vmatpush1.msra.mxu0 0.0
      %503 = vmatprep.subr.mxu0 0.0
      %504 = vmatpush1.msra.mxu0 0.0
      %505 = vmatprep.subr.mxu0 0.0
      %506 = vmatpush1.msra.mxu0 0.0
      %507 = vmatprep.mubr.f32.mxu0 0.0
      %508 = vmatmul.mubr.f32.gmra.mrb[0].mxu0 %v441
      %v509 = vpop.f32.mrb[0].mxu0
      %v510 = vadd.f32 0.0, %v509
      %v511 = vpop.f32.mrb[0].mxu0
      %512 = vdwg.mxu0
      %s513 = scalar_lea.vmem %s170, 6
      %514 = vst.msk [vmem:[%s513] sm:$0x3] %vm255, %v510
      %s515 = scalar_lea.vmem %s157, 8
      %v516 = vld [vmem:[%s515] sm:$0x3]
      %s517 = scalar_lea.vmem %s164, 256
      %v518 = vld [vmem:[%s517] sm:$0xff]
      %v519 = vld [vmem:[%s517 + $0x8] sm:$0xff]
      %v520 = vld [vmem:[%s517 + $0x10] sm:$0xff]
      %v521 = vld [vmem:[%s517 + $0x18] sm:$0xff]
      %v522 = vld [vmem:[%s517 + $0x20] sm:$0xff]
      %v523 = vld [vmem:[%s517 + $0x28] sm:$0xff]
      %v524 = vld [vmem:[%s517 + $0x30] sm:$0xff]
      %v525 = vld [vmem:[%s517 + $0x38] sm:$0xff]
      %v527 = vsel %vm181, %v516, 0
      %529 = vmatprep.subr.mxu0 0.0
      %530 = vmatpush1.msra.mxu0 %v518
      %531 = vmatprep.subr.mxu0 0.0
      %532 = vmatpush1.msra.mxu0 %v519
      %533 = vmatprep.subr.mxu0 0.0
      %534 = vmatpush1.msra.mxu0 %v520
      %535 = vmatprep.subr.mxu0 0.0
      %536 = vmatpush1.msra.mxu0 %v521
      %537 = vmatprep.subr.mxu0 0.0
      %538 = vmatpush1.msra.mxu0 %v522
      %539 = vmatprep.subr.mxu0 0.0
      %540 = vmatpush1.msra.mxu0 %v523
      %541 = vmatprep.subr.mxu0 0.0
      %542 = vmatpush1.msra.mxu0 %v524
      %543 = vmatprep.subr.mxu0 0.0
      %544 = vmatpush1.msra.mxu0 %v525
      %545 = vmatprep.subr.mxu0 0.0
      %546 = vmatpush1.msra.mxu0 0.0
      %547 = vmatprep.subr.mxu0 0.0
      %548 = vmatpush1.msra.mxu0 0.0
      %549 = vmatprep.subr.mxu0 0.0
      %550 = vmatpush1.msra.mxu0 0.0
      %551 = vmatprep.subr.mxu0 0.0
      %552 = vmatpush1.msra.mxu0 0.0
      %553 = vmatprep.subr.mxu0 0.0
      %554 = vmatpush1.msra.mxu0 0.0
      %555 = vmatprep.subr.mxu0 0.0
      %556 = vmatpush1.msra.mxu0 0.0
      %557 = vmatprep.subr.mxu0 0.0
      %558 = vmatpush1.msra.mxu0 0.0
      %559 = vmatprep.subr.mxu0 0.0
      %560 = vmatpush1.msra.mxu0 0.0
      %561 = vmatprep.subr.mxu0 0.0
      %562 = vmatpush1.msra.mxu0 0.0
      %563 = vmatprep.subr.mxu0 0.0
      %564 = vmatpush1.msra.mxu0 0.0
      %565 = vmatprep.subr.mxu0 0.0
      %566 = vmatpush1.msra.mxu0 0.0
      %567 = vmatprep.subr.mxu0 0.0
      %568 = vmatpush1.msra.mxu0 0.0
      %569 = vmatprep.subr.mxu0 0.0
      %570 = vmatpush1.msra.mxu0 0.0
      %571 = vmatprep.subr.mxu0 0.0
      %572 = vmatpush1.msra.mxu0 0.0
      %573 = vmatprep.subr.mxu0 0.0
      %574 = vmatpush1.msra.mxu0 0.0
      %575 = vmatprep.subr.mxu0 0.0
      %576 = vmatpush1.msra.mxu0 0.0
      %577 = vmatprep.subr.mxu0 0.0
      %578 = vmatpush1.msra.mxu0 0.0
      %579 = vmatprep.subr.mxu0 0.0
      %580 = vmatpush1.msra.mxu0 0.0
      %581 = vmatprep.subr.mxu0 0.0
      %582 = vmatpush1.msra.mxu0 0.0
      %583 = vmatprep.subr.mxu0 0.0
      %584 = vmatpush1.msra.mxu0 0.0
      %585 = vmatprep.subr.mxu0 0.0
      %586 = vmatpush1.msra.mxu0 0.0
      %587 = vmatprep.subr.mxu0 0.0
      %588 = vmatpush1.msra.mxu0 0.0
      %589 = vmatprep.subr.mxu0 0.0
      %590 = vmatpush1.msra.mxu0 0.0
      %591 = vmatprep.subr.mxu0 0.0
      %592 = vmatpush1.msra.mxu0 0.0
      %593 = vmatprep.mubr.f32.mxu0 0.0
      %594 = vmatmul.mubr.f32.gmra.mrb[0].mxu0 %v527
      %v595 = vpop.f32.mrb[0].mxu0
      %v596 = vadd.f32 0.0, %v595
      %v597 = vpop.f32.mrb[0].mxu0
      %598 = vdwg.mxu0
      %s599 = scalar_lea.vmem %s170, 8
      %600 = vst.msk [vmem:[%s599] sm:$0x3] %vm255, %v596
      %s601 = scalar_lea.vmem %s157, 10
      %v602 = vld [vmem:[%s601] sm:$0x3]
      %s603 = scalar_lea.vmem %s164, 320
      %v604 = vld [vmem:[%s603] sm:$0xff]
      %v605 = vld [vmem:[%s603 + $0x8] sm:$0xff]
      %v606 = vld [vmem:[%s603 + $0x10] sm:$0xff]
      %v607 = vld [vmem:[%s603 + $0x18] sm:$0xff]
      %v608 = vld [vmem:[%s603 + $0x20] sm:$0xff]
      %v609 = vld [vmem:[%s603 + $0x28] sm:$0xff]
      %v610 = vld [vmem:[%s603 + $0x30] sm:$0xff]
      %v611 = vld [vmem:[%s603 + $0x38] sm:$0xff]
      %v613 = vsel %vm181, %v602, 0
      %615 = vmatprep.subr.mxu0 0.0
      %616 = vmatpush1.msra.mxu0 %v604
      %617 = vmatprep.subr.mxu0 0.0
      %618 = vmatpush1.msra.mxu0 %v605
      %619 = vmatprep.subr.mxu0 0.0
      %620 = vmatpush1.msra.mxu0 %v606
      %621 = vmatprep.subr.mxu0 0.0
      %622 = vmatpush1.msra.mxu0 %v607
      %623 = vmatprep.subr.mxu0 0.0
      %624 = vmatpush1.msra.mxu0 %v608
      %625 = vmatprep.subr.mxu0 0.0
      %626 = vmatpush1.msra.mxu0 %v609
      %627 = vmatprep.subr.mxu0 0.0
      %628 = vmatpush1.msra.mxu0 %v610
      %629 = vmatprep.subr.mxu0 0.0
      %630 = vmatpush1.msra.mxu0 %v611
      %631 = vmatprep.subr.mxu0 0.0
      %632 = vmatpush1.msra.mxu0 0.0
      %633 = vmatprep.subr.mxu0 0.0
      %634 = vmatpush1.msra.mxu0 0.0
      %635 = vmatprep.subr.mxu0 0.0
      %636 = vmatpush1.msra.mxu0 0.0
      %637 = vmatprep.subr.mxu0 0.0
      %638 = vmatpush1.msra.mxu0 0.0
      %639 = vmatprep.subr.mxu0 0.0
      %640 = vmatpush1.msra.mxu0 0.0
      %641 = vmatprep.subr.mxu0 0.0
      %642 = vmatpush1.msra.mxu0 0.0
      %643 = vmatprep.subr.mxu0 0.0
      %644 = vmatpush1.msra.mxu0 0.0
      %645 = vmatprep.subr.mxu0 0.0
      %646 = vmatpush1.msra.mxu0 0.0
      %647 = vmatprep.subr.mxu0 0.0
      %648 = vmatpush1.msra.mxu0 0.0
      %649 = vmatprep.subr.mxu0 0.0
      %650 = vmatpush1.msra.mxu0 0.0
      %651 = vmatprep.subr.mxu0 0.0
      %652 = vmatpush1.msra.mxu0 0.0
      %653 = vmatprep.subr.mxu0 0.0
      %654 = vmatpush1.msra.mxu0 0.0
      %655 = vmatprep.subr.mxu0 0.0
      %656 = vmatpush1.msra.mxu0 0.0
      %657 = vmatprep.subr.mxu0 0.0
      %658 = vmatpush1.msra.mxu0 0.0
      %659 = vmatprep.subr.mxu0 0.0
      %660 = vmatpush1.msra.mxu0 0.0
      %661 = vmatprep.subr.mxu0 0.0
      %662 = vmatpush1.msra.mxu0 0.0
      %663 = vmatprep.subr.mxu0 0.0
      %664 = vmatpush1.msra.mxu0 0.0
      %665 = vmatprep.subr.mxu0 0.0
      %666 = vmatpush1.msra.mxu0 0.0
      %667 = vmatprep.subr.mxu0 0.0
      %668 = vmatpush1.msra.mxu0 0.0
      %669 = vmatprep.subr.mxu0 0.0
      %670 = vmatpush1.msra.mxu0 0.0
      %671 = vmatprep.subr.mxu0 0.0
      %672 = vmatpush1.msra.mxu0 0.0
      %673 = vmatprep.subr.mxu0 0.0
      %674 = vmatpush1.msra.mxu0 0.0
      %675 = vmatprep.subr.mxu0 0.0
      %676 = vmatpush1.msra.mxu0 0.0
      %677 = vmatprep.subr.mxu0 0.0
      %678 = vmatpush1.msra.mxu0 0.0
      %679 = vmatprep.mubr.f32.mxu0 0.0
      %680 = vmatmul.mubr.f32.gmra.mrb[0].mxu0 %v613
      %v681 = vpop.f32.mrb[0].mxu0
      %v682 = vadd.f32 0.0, %v681
      %v683 = vpop.f32.mrb[0].mxu0
      %684 = vdwg.mxu0
      %s685 = scalar_lea.vmem %s170, 10
      %686 = vst.msk [vmem:[%s685] sm:$0x3] %vm255, %v682
      %s687 = scalar_lea.vmem %s157, 12
      %v688 = vld [vmem:[%s687] sm:$0x3]
      %s689 = scalar_lea.vmem %s164, 384
      %v690 = vld [vmem:[%s689] sm:$0xff]
      %v691 = vld [vmem:[%s689 + $0x8] sm:$0xff]
      %v692 = vld [vmem:[%s689 + $0x10] sm:$0xff]
      %v693 = vld [vmem:[%s689 + $0x18] sm:$0xff]
      %v694 = vld [vmem:[%s689 + $0x20] sm:$0xff]
      %v695 = vld [vmem:[%s689 + $0x28] sm:$0xff]
      %v696 = vld [vmem:[%s689 + $0x30] sm:$0xff]
      %v697 = vld [vmem:[%s689 + $0x38] sm:$0xff]
      %v699 = vsel %vm181, %v688, 0
      %701 = vmatprep.subr.mxu0 0.0
      %702 = vmatpush1.msra.mxu0 %v690
      %703 = vmatprep.subr.mxu0 0.0
      %704 = vmatpush1.msra.mxu0 %v691
      %705 = vmatprep.subr.mxu0 0.0
      %706 = vmatpush1.msra.mxu0 %v692
      %707 = vmatprep.subr.mxu0 0.0
      %708 = vmatpush1.msra.mxu0 %v693
      %709 = vmatprep.subr.mxu0 0.0
      %710 = vmatpush1.msra.mxu0 %v694
      %711 = vmatprep.subr.mxu0 0.0
      %712 = vmatpush1.msra.mxu0 %v695
      %713 = vmatprep.subr.mxu0 0.0
      %714 = vmatpush1.msra.mxu0 %v696
      %715 = vmatprep.subr.mxu0 0.0
      %716 = vmatpush1.msra.mxu0 %v697
      %717 = vmatprep.subr.mxu0 0.0
      %718 = vmatpush1.msra.mxu0 0.0
      %719 = vmatprep.subr.mxu0 0.0
      %720 = vmatpush1.msra.mxu0 0.0
      %721 = vmatprep.subr.mxu0 0.0
      %722 = vmatpush1.msra.mxu0 0.0
      %723 = vmatprep.subr.mxu0 0.0
      %724 = vmatpush1.msra.mxu0 0.0
      %725 = vmatprep.subr.mxu0 0.0
      %726 = vmatpush1.msra.mxu0 0.0
      %727 = vmatprep.subr.mxu0 0.0
      %728 = vmatpush1.msra.mxu0 0.0
      %729 = vmatprep.subr.mxu0 0.0
      %730 = vmatpush1.msra.mxu0 0.0
      %731 = vmatprep.subr.mxu0 0.0
      %732 = vmatpush1.msra.mxu0 0.0
      %733 = vmatprep.subr.mxu0 0.0
      %734 = vmatpush1.msra.mxu0 0.0
      %735 = vmatprep.subr.mxu0 0.0
      %736 = vmatpush1.msra.mxu0 0.0
      %737 = vmatprep.subr.mxu0 0.0
      %738 = vmatpush1.msra.mxu0 0.0
      %739 = vmatprep.subr.mxu0 0.0
      %740 = vmatpush1.msra.mxu0 0.0
      %741 = vmatprep.subr.mxu0 0.0
      %742 = vmatpush1.msra.mxu0 0.0
      %743 = vmatprep.subr.mxu0 0.0
      %744 = vmatpush1.msra.mxu0 0.0
      %745 = vmatprep.subr.mxu0 0.0
      %746 = vmatpush1.msra.mxu0 0.0
      %747 = vmatprep.subr.mxu0 0.0
      %748 = vmatpush1.msra.mxu0 0.0
      %749 = vmatprep.subr.mxu0 0.0
      %750 = vmatpush1.msra.mxu0 0.0
      %751 = vmatprep.subr.mxu0 0.0
      %752 = vmatpush1.msra.mxu0 0.0
      %753 = vmatprep.subr.mxu0 0.0
      %754 = vmatpush1.msra.mxu0 0.0
      %755 = vmatprep.subr.mxu0 0.0
      %756 = vmatpush1.msra.mxu0 0.0
      %757 = vmatprep.subr.mxu0 0.0
      %758 = vmatpush1.msra.mxu0 0.0
      %759 = vmatprep.subr.mxu0 0.0
      %760 = vmatpush1.msra.mxu0 0.0
      %761 = vmatprep.subr.mxu0 0.0
      %762 = vmatpush1.msra.mxu0 0.0
      %763 = vmatprep.subr.mxu0 0.0
      %764 = vmatpush1.msra.mxu0 0.0
      %765 = vmatprep.mubr.f32.mxu0 0.0
      %766 = vmatmul.mubr.f32.gmra.mrb[0].mxu0 %v699
      %v767 = vpop.f32.mrb[0].mxu0
      %v768 = vadd.f32 0.0, %v767
      %v769 = vpop.f32.mrb[0].mxu0
      %770 = vdwg.mxu0
      %s771 = scalar_lea.vmem %s170, 12
      %772 = vst.msk [vmem:[%s771] sm:$0x3] %vm255, %v768
      %s773 = scalar_lea.vmem %s157, 14
      %v774 = vld [vmem:[%s773] sm:$0x3]
      %s775 = scalar_lea.vmem %s164, 448
      %v776 = vld [vmem:[%s775] sm:$0xff]
      %v777 = vld [vmem:[%s775 + $0x8] sm:$0xff]
      %v778 = vld [vmem:[%s775 + $0x10] sm:$0xff]
      %v779 = vld [vmem:[%s775 + $0x18] sm:$0xff]
      %v780 = vld [vmem:[%s775 + $0x20] sm:$0xff]
      %v781 = vld [vmem:[%s775 + $0x28] sm:$0xff]
      %v782 = vld [vmem:[%s775 + $0x30] sm:$0xff]
      %v783 = vld [vmem:[%s775 + $0x38] sm:$0xff]
      %v785 = vsel %vm181, %v774, 0
      %787 = vmatprep.subr.mxu0 0.0
      %788 = vmatpush1.msra.mxu0 %v776
      %789 = vmatprep.subr.mxu0 0.0
      %790 = vmatpush1.msra.mxu0 %v777
      %791 = vmatprep.subr.mxu0 0.0
      %792 = vmatpush1.msra.mxu0 %v778
      %793 = vmatprep.subr.mxu0 0.0
      %794 = vmatpush1.msra.mxu0 %v779
      %795 = vmatprep.subr.mxu0 0.0
      %796 = vmatpush1.msra.mxu0 %v780
      %797 = vmatprep.subr.mxu0 0.0
      %798 = vmatpush1.msra.mxu0 %v781
      %799 = vmatprep.subr.mxu0 0.0
      %800 = vmatpush1.msra.mxu0 %v782
      %801 = vmatprep.subr.mxu0 0.0
      %802 = vmatpush1.msra.mxu0 %v783
      %803 = vmatprep.subr.mxu0 0.0
      %804 = vmatpush1.msra.mxu0 0.0
      %805 = vmatprep.subr.mxu0 0.0
      %806 = vmatpush1.msra.mxu0 0.0
      %807 = vmatprep.subr.mxu0 0.0
      %808 = vmatpush1.msra.mxu0 0.0
      %809 = vmatprep.subr.mxu0 0.0
      %810 = vmatpush1.msra.mxu0 0.0
      %811 = vmatprep.subr.mxu0 0.0
      %812 = vmatpush1.msra.mxu0 0.0
      %813 = vmatprep.subr.mxu0 0.0
      %814 = vmatpush1.msra.mxu0 0.0
      %815 = vmatprep.subr.mxu0 0.0
      %816 = vmatpush1.msra.mxu0 0.0
      %817 = vmatprep.subr.mxu0 0.0
      %818 = vmatpush1.msra.mxu0 0.0
      %819 = vmatprep.subr.mxu0 0.0
      %820 = vmatpush1.msra.mxu0 0.0
      %821 = vmatprep.subr.mxu0 0.0
      %822 = vmatpush1.msra.mxu0 0.0
      %823 = vmatprep.subr.mxu0 0.0
      %824 = vmatpush1.msra.mxu0 0.0
      %825 = vmatprep.subr.mxu0 0.0
      %826 = vmatpush1.msra.mxu0 0.0
      %827 = vmatprep.subr.mxu0 0.0
      %828 = vmatpush1.msra.mxu0 0.0
      %829 = vmatprep.subr.mxu0 0.0
      %830 = vmatpush1.msra.mxu0 0.0
      %831 = vmatprep.subr.mxu0 0.0
      %832 = vmatpush1.msra.mxu0 0.0
      %833 = vmatprep.subr.mxu0 0.0
      %834 = vmatpush1.msra.mxu0 0.0
      %835 = vmatprep.subr.mxu0 0.0
      %836 = vmatpush1.msra.mxu0 0.0
      %837 = vmatprep.subr.mxu0 0.0
      %838 = vmatpush1.msra.mxu0 0.0
      %839 = vmatprep.subr.mxu0 0.0
      %840 = vmatpush1.msra.mxu0 0.0
      %841 = vmatprep.subr.mxu0 0.0
      %842 = vmatpush1.msra.mxu0 0.0
      %843 = vmatprep.subr.mxu0 0.0
      %844 = vmatpush1.msra.mxu0 0.0
      %845 = vmatprep.subr.mxu0 0.0
      %846 = vmatpush1.msra.mxu0 0.0
      %847 = vmatprep.subr.mxu0 0.0
      %848 = vmatpush1.msra.mxu0 0.0
      %849 = vmatprep.subr.mxu0 0.0
      %850 = vmatpush1.msra.mxu0 0.0
      %851 = vmatprep.mubr.f32.mxu0 0.0
      %852 = vmatmul.mubr.f32.gmra.mrb[0].mxu0 %v785
      %v853 = vpop.f32.mrb[0].mxu0
      %v854 = vadd.f32 0.0, %v853
      %v855 = vpop.f32.mrb[0].mxu0
      %856 = vdwg.mxu0
      %s857 = scalar_lea.vmem %s170, 14
      %858 = vst.msk [vmem:[%s857] sm:$0x3] %vm255, %v854
      %s859 = scalar_lea.vmem %s157, 16
      %v860 = vld [vmem:[%s859] sm:$0x3]
      %s861 = scalar_lea.vmem %s164, 512
      %v862 = vld [vmem:[%s861] sm:$0xff]
      %v863 = vld [vmem:[%s861 + $0x8] sm:$0xff]
      %v864 = vld [vmem:[%s861 + $0x10] sm:$0xff]
      %v865 = vld [vmem:[%s861 + $0x18] sm:$0xff]
      %v866 = vld [vmem:[%s861 + $0x20] sm:$0xff]
      %v867 = vld [vmem:[%s861 + $0x28] sm:$0xff]
      %v868 = vld [vmem:[%s861 + $0x30] sm:$0xff]
      %v869 = vld [vmem:[%s861 + $0x38] sm:$0xff]
      %v871 = vsel %vm181, %v860, 0
      %873 = vmatprep.subr.mxu0 0.0
      %874 = vmatpush1.msra.mxu0 %v862
      %875 = vmatprep.subr.mxu0 0.0
      %876 = vmatpush1.msra.mxu0 %v863
      %877 = vmatprep.subr.mxu0 0.0
      %878 = vmatpush1.msra.mxu0 %v864
      %879 = vmatprep.subr.mxu0 0.0
      %880 = vmatpush1.msra.mxu0 %v865
      %881 = vmatprep.subr.mxu0 0.0
      %882 = vmatpush1.msra.mxu0 %v866
      %883 = vmatprep.subr.mxu0 0.0
      %884 = vmatpush1.msra.mxu0 %v867
      %885 = vmatprep.subr.mxu0 0.0
      %886 = vmatpush1.msra.mxu0 %v868
      %887 = vmatprep.subr.mxu0 0.0
      %888 = vmatpush1.msra.mxu0 %v869
      %889 = vmatprep.subr.mxu0 0.0
      %890 = vmatpush1.msra.mxu0 0.0
      %891 = vmatprep.subr.mxu0 0.0
      %892 = vmatpush1.msra.mxu0 0.0
      %893 = vmatprep.subr.mxu0 0.0
      %894 = vmatpush1.msra.mxu0 0.0
      %895 = vmatprep.subr.mxu0 0.0
      %896 = vmatpush1.msra.mxu0 0.0
      %897 = vmatprep.subr.mxu0 0.0
      %898 = vmatpush1.msra.mxu0 0.0
      %899 = vmatprep.subr.mxu0 0.0
      %900 = vmatpush1.msra.mxu0 0.0
      %901 = vmatprep.subr.mxu0 0.0
      %902 = vmatpush1.msra.mxu0 0.0
      %903 = vmatprep.subr.mxu0 0.0
      %904 = vmatpush1.msra.mxu0 0.0
      %905 = vmatprep.subr.mxu0 0.0
      %906 = vmatpush1.msra.mxu0 0.0
      %907 = vmatprep.subr.mxu0 0.0
      %908 = vmatpush1.msra.mxu0 0.0
      %909 = vmatprep.subr.mxu0 0.0
      %910 = vmatpush1.msra.mxu0 0.0
      %911 = vmatprep.subr.mxu0 0.0
      %912 = vmatpush1.msra.mxu0 0.0
      %913 = vmatprep.subr.mxu0 0.0
      %914 = vmatpush1.msra.mxu0 0.0
      %915 = vmatprep.subr.mxu0 0.0
      %916 = vmatpush1.msra.mxu0 0.0
      %917 = vmatprep.subr.mxu0 0.0
      %918 = vmatpush1.msra.mxu0 0.0
      %919 = vmatprep.subr.mxu0 0.0
      %920 = vmatpush1.msra.mxu0 0.0
      %921 = vmatprep.subr.mxu0 0.0
      %922 = vmatpush1.msra.mxu0 0.0
      %923 = vmatprep.subr.mxu0 0.0
      %924 = vmatpush1.msra.mxu0 0.0
      %925 = vmatprep.subr.mxu0 0.0
      %926 = vmatpush1.msra.mxu0 0.0
      %927 = vmatprep.subr.mxu0 0.0
      %928 = vmatpush1.msra.mxu0 0.0
      %929 = vmatprep.subr.mxu0 0.0
      %930 = vmatpush1.msra.mxu0 0.0
      %931 = vmatprep.subr.mxu0 0.0
      %932 = vmatpush1.msra.mxu0 0.0
      %933 = vmatprep.subr.mxu0 0.0
      %934 = vmatpush1.msra.mxu0 0.0
      %935 = vmatprep.subr.mxu0 0.0
      %936 = vmatpush1.msra.mxu0 0.0
      %937 = vmatprep.mubr.f32.mxu0 0.0
      %938 = vmatmul.mubr.f32.gmra.mrb[0].mxu0 %v871
      %v939 = vpop.f32.mrb[0].mxu0
      %v940 = vadd.f32 0.0, %v939
      %v941 = vpop.f32.mrb[0].mxu0
      %942 = vdwg.mxu0
      %s943 = scalar_lea.vmem %s170, 16
      %944 = vst.msk [vmem:[%s943] sm:$0x3] %vm255, %v940
      %s945 = scalar_lea.vmem %s157, 18
      %v946 = vld [vmem:[%s945] sm:$0x3]
      %s947 = scalar_lea.vmem %s164, 576
      %v948 = vld [vmem:[%s947] sm:$0xff]
      %v949 = vld [vmem:[%s947 + $0x8] sm:$0xff]
      %v950 = vld [vmem:[%s947 + $0x10] sm:$0xff]
      %v951 = vld [vmem:[%s947 + $0x18] sm:$0xff]
      %v952 = vld [vmem:[%s947 + $0x20] sm:$0xff]
      %v953 = vld [vmem:[%s947 + $0x28] sm:$0xff]
      %v954 = vld [vmem:[%s947 + $0x30] sm:$0xff]
      %v955 = vld [vmem:[%s947 + $0x38] sm:$0xff]
      %v957 = vsel %vm181, %v946, 0
      %959 = vmatprep.subr.mxu0 0.0
      %960 = vmatpush1.msra.mxu0 %v948
      %961 = vmatprep.subr.mxu0 0.0
      %962 = vmatpush1.msra.mxu0 %v949
      %963 = vmatprep.subr.mxu0 0.0
      %964 = vmatpush1.msra.mxu0 %v950
      %965 = vmatprep.subr.mxu0 0.0
      %966 = vmatpush1.msra.mxu0 %v951
      %967 = vmatprep.subr.mxu0 0.0
      %968 = vmatpush1.msra.mxu0 %v952
      %969 = vmatprep.subr.mxu0 0.0
      %970 = vmatpush1.msra.mxu0 %v953
      %971 = vmatprep.subr.mxu0 0.0
      %972 = vmatpush1.msra.mxu0 %v954
      %973 = vmatprep.subr.mxu0 0.0
      %974 = vmatpush1.msra.mxu0 %v955
      %975 = vmatprep.subr.mxu0 0.0
      %976 = vmatpush1.msra.mxu0 0.0
      %977 = vmatprep.subr.mxu0 0.0
      %978 = vmatpush1.msra.mxu0 0.0
      %979 = vmatprep.subr.mxu0 0.0
      %980 = vmatpush1.msra.mxu0 0.0
      %981 = vmatprep.subr.mxu0 0.0
      %982 = vmatpush1.msra.mxu0 0.0
      %983 = vmatprep.subr.mxu0 0.0
      %984 = vmatpush1.msra.mxu0 0.0
      %985 = vmatprep.subr.mxu0 0.0
      %986 = vmatpush1.msra.mxu0 0.0
      %987 = vmatprep.subr.mxu0 0.0
      %988 = vmatpush1.msra.mxu0 0.0
      %989 = vmatprep.subr.mxu0 0.0
      %990 = vmatpush1.msra.mxu0 0.0
      %991 = vmatprep.subr.mxu0 0.0
      %992 = vmatpush1.msra.mxu0 0.0
      %993 = vmatprep.subr.mxu0 0.0
      %994 = vmatpush1.msra.mxu0 0.0
      %995 = vmatprep.subr.mxu0 0.0
      %996 = vmatpush1.msra.mxu0 0.0
      %997 = vmatprep.subr.mxu0 0.0
      %998 = vmatpush1.msra.mxu0 0.0
      %999 = vmatprep.subr.mxu0 0.0
      %1000 = vmatpush1.msra.mxu0 0.0
      %1001 = vmatprep.subr.mxu0 0.0
      %1002 = vmatpush1.msra.mxu0 0.0
      %1003 = vmatprep.subr.mxu0 0.0
      %1004 = vmatpush1.msra.mxu0 0.0
      %1005 = vmatprep.subr.mxu0 0.0
      %1006 = vmatpush1.msra.mxu0 0.0
      %1007 = vmatprep.subr.mxu0 0.0
      %1008 = vmatpush1.msra.mxu0 0.0
      %1009 = vmatprep.subr.mxu0 0.0
      %1010 = vmatpush1.msra.mxu0 0.0
      %1011 = vmatprep.subr.mxu0 0.0
      %1012 = vmatpush1.msra.mxu0 0.0
      %1013 = vmatprep.subr.mxu0 0.0
      %1014 = vmatpush1.msra.mxu0 0.0
      %1015 = vmatprep.subr.mxu0 0.0
      %1016 = vmatpush1.msra.mxu0 0.0
      %1017 = vmatprep.subr.mxu0 0.0
      %1018 = vmatpush1.msra.mxu0 0.0
      %1019 = vmatprep.subr.mxu0 0.0
      %1020 = vmatpush1.msra.mxu0 0.0
      %1021 = vmatprep.subr.mxu0 0.0
      %1022 = vmatpush1.msra.mxu0 0.0
      %1023 = vmatprep.mubr.f32.mxu0 0.0
      %1024 = vmatmul.mubr.f32.gmra.mrb[0].mxu0 %v957
      %v1025 = vpop.f32.mrb[0].mxu0
      %v1026 = vadd.f32 0.0, %v1025
      %v1027 = vpop.f32.mrb[0].mxu0
      %1028 = vdwg.mxu0
      %s1029 = scalar_lea.vmem %s170, 18
      %1030 = vst.msk [vmem:[%s1029] sm:$0x3] %vm255, %v1026
      %s1031 = scalar_lea.vmem %s157, 20
      %v1032 = vld [vmem:[%s1031] sm:$0x3]
      %s1033 = scalar_lea.vmem %s164, 640
      %v1034 = vld [vmem:[%s1033] sm:$0xff]
      %v1035 = vld [vmem:[%s1033 + $0x8] sm:$0xff]
      %v1036 = vld [vmem:[%s1033 + $0x10] sm:$0xff]
      %v1037 = vld [vmem:[%s1033 + $0x18] sm:$0xff]
      %v1038 = vld [vmem:[%s1033 + $0x20] sm:$0xff]
      %v1039 = vld [vmem:[%s1033 + $0x28] sm:$0xff]
      %v1040 = vld [vmem:[%s1033 + $0x30] sm:$0xff]
      %v1041 = vld [vmem:[%s1033 + $0x38] sm:$0xff]
      %v1043 = vsel %vm181, %v1032, 0
      %1045 = vmatprep.subr.mxu0 0.0
      %1046 = vmatpush1.msra.mxu0 %v1034
      %1047 = vmatprep.subr.mxu0 0.0
      %1048 = vmatpush1.msra.mxu0 %v1035
      %1049 = vmatprep.subr.mxu0 0.0
      %1050 = vmatpush1.msra.mxu0 %v1036
      %1051 = vmatprep.subr.mxu0 0.0
      %1052 = vmatpush1.msra.mxu0 %v1037
      %1053 = vmatprep.subr.mxu0 0.0
      %1054 = vmatpush1.msra.mxu0 %v1038
      %1055 = vmatprep.subr.mxu0 0.0
      %1056 = vmatpush1.msra.mxu0 %v1039
      %1057 = vmatprep.subr.mxu0 0.0
      %1058 = vmatpush1.msra.mxu0 %v1040
      %1059 = vmatprep.subr.mxu0 0.0
      %1060 = vmatpush1.msra.mxu0 %v1041
      %1061 = vmatprep.subr.mxu0 0.0
      %1062 = vmatpush1.msra.mxu0 0.0
      %1063 = vmatprep.subr.mxu0 0.0
      %1064 = vmatpush1.msra.mxu0 0.0
      %1065 = vmatprep.subr.mxu0 0.0
      %1066 = vmatpush1.msra.mxu0 0.0
      %1067 = vmatprep.subr.mxu0 0.0
      %1068 = vmatpush1.msra.mxu0 0.0
      %1069 = vmatprep.subr.mxu0 0.0
      %1070 = vmatpush1.msra.mxu0 0.0
      %1071 = vmatprep.subr.mxu0 0.0
      %1072 = vmatpush1.msra.mxu0 0.0
      %1073 = vmatprep.subr.mxu0 0.0
      %1074 = vmatpush1.msra.mxu0 0.0
      %1075 = vmatprep.subr.mxu0 0.0
      %1076 = vmatpush1.msra.mxu0 0.0
      %1077 = vmatprep.subr.mxu0 0.0
      %1078 = vmatpush1.msra.mxu0 0.0
      %1079 = vmatprep.subr.mxu0 0.0
      %1080 = vmatpush1.msra.mxu0 0.0
      %1081 = vmatprep.subr.mxu0 0.0
      %1082 = vmatpush1.msra.mxu0 0.0
      %1083 = vmatprep.subr.mxu0 0.0
      %1084 = vmatpush1.msra.mxu0 0.0
      %1085 = vmatprep.subr.mxu0 0.0
      %1086 = vmatpush1.msra.mxu0 0.0
      %1087 = vmatprep.subr.mxu0 0.0
      %1088 = vmatpush1.msra.mxu0 0.0
      %1089 = vmatprep.subr.mxu0 0.0
      %1090 = vmatpush1.msra.mxu0 0.0
      %1091 = vmatprep.subr.mxu0 0.0
      %1092 = vmatpush1.msra.mxu0 0.0
      %1093 = vmatprep.subr.mxu0 0.0
      %1094 = vmatpush1.msra.mxu0 0.0
      %1095 = vmatprep.subr.mxu0 0.0
      %1096 = vmatpush1.msra.mxu0 0.0
      %1097 = vmatprep.subr.mxu0 0.0
      %1098 = vmatpush1.msra.mxu0 0.0
      %1099 = vmatprep.subr.mxu0 0.0
      %1100 = vmatpush1.msra.mxu0 0.0
      %1101 = vmatprep.subr.mxu0 0.0
      %1102 = vmatpush1.msra.mxu0 0.0
      %1103 = vmatprep.subr.mxu0 0.0
      %1104 = vmatpush1.msra.mxu0 0.0
      %1105 = vmatprep.subr.mxu0 0.0
      %1106 = vmatpush1.msra.mxu0 0.0
      %1107 = vmatprep.subr.mxu0 0.0
      %1108 = vmatpush1.msra.mxu0 0.0
      %1109 = vmatprep.mubr.f32.mxu0 0.0
      %1110 = vmatmul.mubr.f32.gmra.mrb[0].mxu0 %v1043
      %v1111 = vpop.f32.mrb[0].mxu0
      %v1112 = vadd.f32 0.0, %v1111
      %v1113 = vpop.f32.mrb[0].mxu0
      %1114 = vdwg.mxu0
      %s1115 = scalar_lea.vmem %s170, 20
      %1116 = vst.msk [vmem:[%s1115] sm:$0x3] %vm255, %v1112
      %s1117 = scalar_lea.vmem %s157, 22
      %v1118 = vld [vmem:[%s1117] sm:$0x3]
      %s1119 = scalar_lea.vmem %s164, 704
      %v1120 = vld [vmem:[%s1119] sm:$0xff]
      %v1121 = vld [vmem:[%s1119 + $0x8] sm:$0xff]
      %v1122 = vld [vmem:[%s1119 + $0x10] sm:$0xff]
      %v1123 = vld [vmem:[%s1119 + $0x18] sm:$0xff]
      %v1124 = vld [vmem:[%s1119 + $0x20] sm:$0xff]
      %v1125 = vld [vmem:[%s1119 + $0x28] sm:$0xff]
      %v1126 = vld [vmem:[%s1119 + $0x30] sm:$0xff]
      %v1127 = vld [vmem:[%s1119 + $0x38] sm:$0xff]
      %v1129 = vsel %vm181, %v1118, 0
      %1131 = vmatprep.subr.mxu0 0.0
      %1132 = vmatpush1.msra.mxu0 %v1120
      %1133 = vmatprep.subr.mxu0 0.0
      %1134 = vmatpush1.msra.mxu0 %v1121
      %1135 = vmatprep.subr.mxu0 0.0
      %1136 = vmatpush1.msra.mxu0 %v1122
      %1137 = vmatprep.subr.mxu0 0.0
      %1138 = vmatpush1.msra.mxu0 %v1123
      %1139 = vmatprep.subr.mxu0 0.0
      %1140 = vmatpush1.msra.mxu0 %v1124
      %1141 = vmatprep.subr.mxu0 0.0
      %1142 = vmatpush1.msra.mxu0 %v1125
      %1143 = vmatprep.subr.mxu0 0.0
      %1144 = vmatpush1.msra.mxu0 %v1126
      %1145 = vmatprep.subr.mxu0 0.0
      %1146 = vmatpush1.msra.mxu0 %v1127
      %1147 = vmatprep.subr.mxu0 0.0
      %1148 = vmatpush1.msra.mxu0 0.0
      %1149 = vmatprep.subr.mxu0 0.0
      %1150 = vmatpush1.msra.mxu0 0.0
      %1151 = vmatprep.subr.mxu0 0.0
      %1152 = vmatpush1.msra.mxu0 0.0
      %1153 = vmatprep.subr.mxu0 0.0
      %1154 = vmatpush1.msra.mxu0 0.0
      %1155 = vmatprep.subr.mxu0 0.0
      %1156 = vmatpush1.msra.mxu0 0.0
      %1157 = vmatprep.subr.mxu0 0.0
      %1158 = vmatpush1.msra.mxu0 0.0
      %1159 = vmatprep.subr.mxu0 0.0
      %1160 = vmatpush1.msra.mxu0 0.0
      %1161 = vmatprep.subr.mxu0 0.0
      %1162 = vmatpush1.msra.mxu0 0.0
      %1163 = vmatprep.subr.mxu0 0.0
      %1164 = vmatpush1.msra.mxu0 0.0
      %1165 = vmatprep.subr.mxu0 0.0
      %1166 = vmatpush1.msra.mxu0 0.0
      %1167 = vmatprep.subr.mxu0 0.0
      %1168 = vmatpush1.msra.mxu0 0.0
      %1169 = vmatprep.subr.mxu0 0.0
      %1170 = vmatpush1.msra.mxu0 0.0
      %1171 = vmatprep.subr.mxu0 0.0
      %1172 = vmatpush1.msra.mxu0 0.0
      %1173 = vmatprep.subr.mxu0 0.0
      %1174 = vmatpush1.msra.mxu0 0.0
      %1175 = vmatprep.subr.mxu0 0.0
      %1176 = vmatpush1.msra.mxu0 0.0
      %1177 = vmatprep.subr.mxu0 0.0
      %1178 = vmatpush1.msra.mxu0 0.0
      %1179 = vmatprep.subr.mxu0 0.0
      %1180 = vmatpush1.msra.mxu0 0.0
      %1181 = vmatprep.subr.mxu0 0.0
      %1182 = vmatpush1.msra.mxu0 0.0
      %1183 = vmatprep.subr.mxu0 0.0
      %1184 = vmatpush1.msra.mxu0 0.0
      %1185 = vmatprep.subr.mxu0 0.0
      %1186 = vmatpush1.msra.mxu0 0.0
      %1187 = vmatprep.subr.mxu0 0.0
      %1188 = vmatpush1.msra.mxu0 0.0
      %1189 = vmatprep.subr.mxu0 0.0
      %1190 = vmatpush1.msra.mxu0 0.0
      %1191 = vmatprep.subr.mxu0 0.0
      %1192 = vmatpush1.msra.mxu0 0.0
      %1193 = vmatprep.subr.mxu0 0.0
      %1194 = vmatpush1.msra.mxu0 0.0
      %1195 = vmatprep.mubr.f32.mxu0 0.0
      %1196 = vmatmul.mubr.f32.gmra.mrb[0].mxu0 %v1129
      %v1197 = vpop.f32.mrb[0].mxu0
      %v1198 = vadd.f32 0.0, %v1197
      %v1199 = vpop.f32.mrb[0].mxu0
      %1200 = vdwg.mxu0
      %s1201 = scalar_lea.vmem %s170, 22
      %1202 = vst.msk [vmem:[%s1201] sm:$0x3] %vm255, %v1198
      %s1203 = scalar_lea.vmem %s157, 24
      %v1204 = vld [vmem:[%s1203] sm:$0x3]
      %s1205 = scalar_lea.vmem %s164, 768
      %v1206 = vld [vmem:[%s1205] sm:$0xff]
      %v1207 = vld [vmem:[%s1205 + $0x8] sm:$0xff]
      %v1208 = vld [vmem:[%s1205 + $0x10] sm:$0xff]
      %v1209 = vld [vmem:[%s1205 + $0x18] sm:$0xff]
      %v1210 = vld [vmem:[%s1205 + $0x20] sm:$0xff]
      %v1211 = vld [vmem:[%s1205 + $0x28] sm:$0xff]
      %v1212 = vld [vmem:[%s1205 + $0x30] sm:$0xff]
      %v1213 = vld [vmem:[%s1205 + $0x38] sm:$0xff]
      %v1215 = vsel %vm181, %v1204, 0
      %1217 = vmatprep.subr.mxu0 0.0
      %1218 = vmatpush1.msra.mxu0 %v1206
      %1219 = vmatprep.subr.mxu0 0.0
      %1220 = vmatpush1.msra.mxu0 %v1207
      %1221 = vmatprep.subr.mxu0 0.0
      %1222 = vmatpush1.msra.mxu0 %v1208
      %1223 = vmatprep.subr.mxu0 0.0
      %1224 = vmatpush1.msra.mxu0 %v1209
      %1225 = vmatprep.subr.mxu0 0.0
      %1226 = vmatpush1.msra.mxu0 %v1210
      %1227 = vmatprep.subr.mxu0 0.0
      %1228 = vmatpush1.msra.mxu0 %v1211
      %1229 = vmatprep.subr.mxu0 0.0
      %1230 = vmatpush1.msra.mxu0 %v1212
      %1231 = vmatprep.subr.mxu0 0.0
      %1232 = vmatpush1.msra.mxu0 %v1213
      %1233 = vmatprep.subr.mxu0 0.0
      %1234 = vmatpush1.msra.mxu0 0.0
      %1235 = vmatprep.subr.mxu0 0.0
      %1236 = vmatpush1.msra.mxu0 0.0
      %1237 = vmatprep.subr.mxu0 0.0
      %1238 = vmatpush1.msra.mxu0 0.0
      %1239 = vmatprep.subr.mxu0 0.0
      %1240 = vmatpush1.msra.mxu0 0.0
      %1241 = vmatprep.subr.mxu0 0.0
      %1242 = vmatpush1.msra.mxu0 0.0
      %1243 = vmatprep.subr.mxu0 0.0
      %1244 = vmatpush1.msra.mxu0 0.0
      %1245 = vmatprep.subr.mxu0 0.0
      %1246 = vmatpush1.msra.mxu0 0.0
      %1247 = vmatprep.subr.mxu0 0.0
      %1248 = vmatpush1.msra.mxu0 0.0
      %1249 = vmatprep.subr.mxu0 0.0
      %1250 = vmatpush1.msra.mxu0 0.0
      %1251 = vmatprep.subr.mxu0 0.0
      %1252 = vmatpush1.msra.mxu0 0.0
      %1253 = vmatprep.subr.mxu0 0.0
      %1254 = vmatpush1.msra.mxu0 0.0
      %1255 = vmatprep.subr.mxu0 0.0
      %1256 = vmatpush1.msra.mxu0 0.0
      %1257 = vmatprep.subr.mxu0 0.0
      %1258 = vmatpush1.msra.mxu0 0.0
      %1259 = vmatprep.subr.mxu0 0.0
      %1260 = vmatpush1.msra.mxu0 0.0
      %1261 = vmatprep.subr.mxu0 0.0
      %1262 = vmatpush1.msra.mxu0 0.0
      %1263 = vmatprep.subr.mxu0 0.0
      %1264 = vmatpush1.msra.mxu0 0.0
      %1265 = vmatprep.subr.mxu0 0.0
      %1266 = vmatpush1.msra.mxu0 0.0
      %1267 = vmatprep.subr.mxu0 0.0
      %1268 = vmatpush1.msra.mxu0 0.0
      %1269 = vmatprep.subr.mxu0 0.0
      %1270 = vmatpush1.msra.mxu0 0.0
      %1271 = vmatprep.subr.mxu0 0.0
      %1272 = vmatpush1.msra.mxu0 0.0
      %1273 = vmatprep.subr.mxu0 0.0
      %1274 = vmatpush1.msra.mxu0 0.0
      %1275 = vmatprep.subr.mxu0 0.0
      %1276 = vmatpush1.msra.mxu0 0.0
      %1277 = vmatprep.subr.mxu0 0.0
      %1278 = vmatpush1.msra.mxu0 0.0
      %1279 = vmatprep.subr.mxu0 0.0
      %1280 = vmatpush1.msra.mxu0 0.0
      %1281 = vmatprep.mubr.f32.mxu0 0.0
      %1282 = vmatmul.mubr.f32.gmra.mrb[0].mxu0 %v1215
      %v1283 = vpop.f32.mrb[0].mxu0
      %v1284 = vadd.f32 0.0, %v1283
      %v1285 = vpop.f32.mrb[0].mxu0
      %1286 = vdwg.mxu0
      %s1287 = scalar_lea.vmem %s170, 24
      %1288 = vst.msk [vmem:[%s1287] sm:$0x3] %vm255, %v1284
      %s1289 = scalar_lea.vmem %s157, 26
      %v1290 = vld [vmem:[%s1289] sm:$0x3]
      %s1291 = scalar_lea.vmem %s164, 832
      %v1292 = vld [vmem:[%s1291] sm:$0xff]
      %v1293 = vld [vmem:[%s1291 + $0x8] sm:$0xff]
      %v1294 = vld [vmem:[%s1291 + $0x10] sm:$0xff]
      %v1295 = vld [vmem:[%s1291 + $0x18] sm:$0xff]
      %v1296 = vld [vmem:[%s1291 + $0x20] sm:$0xff]
      %v1297 = vld [vmem:[%s1291 + $0x28] sm:$0xff]
      %v1298 = vld [vmem:[%s1291 + $0x30] sm:$0xff]
      %v1299 = vld [vmem:[%s1291 + $0x38] sm:$0xff]
      %v1301 = vsel %vm181, %v1290, 0
      %1303 = vmatprep.subr.mxu0 0.0
      %1304 = vmatpush1.msra.mxu0 %v1292
      %1305 = vmatprep.subr.mxu0 0.0
      %1306 = vmatpush1.msra.mxu0 %v1293
      %1307 = vmatprep.subr.mxu0 0.0
      %1308 = vmatpush1.msra.mxu0 %v1294
      %1309 = vmatprep.subr.mxu0 0.0
      %1310 = vmatpush1.msra.mxu0 %v1295
      %1311 = vmatprep.subr.mxu0 0.0
      %1312 = vmatpush1.msra.mxu0 %v1296
      %1313 = vmatprep.subr.mxu0 0.0
      %1314 = vmatpush1.msra.mxu0 %v1297
      %1315 = vmatprep.subr.mxu0 0.0
      %1316 = vmatpush1.msra.mxu0 %v1298
      %1317 = vmatprep.subr.mxu0 0.0
      %1318 = vmatpush1.msra.mxu0 %v1299
      %1319 = vmatprep.subr.mxu0 0.0
      %1320 = vmatpush1.msra.mxu0 0.0
      %1321 = vmatprep.subr.mxu0 0.0
      %1322 = vmatpush1.msra.mxu0 0.0
      %1323 = vmatprep.subr.mxu0 0.0
      %1324 = vmatpush1.msra.mxu0 0.0
      %1325 = vmatprep.subr.mxu0 0.0
      %1326 = vmatpush1.msra.mxu0 0.0
      %1327 = vmatprep.subr.mxu0 0.0
      %1328 = vmatpush1.msra.mxu0 0.0
      %1329 = vmatprep.subr.mxu0 0.0
      %1330 = vmatpush1.msra.mxu0 0.0
      %1331 = vmatprep.subr.mxu0 0.0
      %1332 = vmatpush1.msra.mxu0 0.0
      %1333 = vmatprep.subr.mxu0 0.0
      %1334 = vmatpush1.msra.mxu0 0.0
      %1335 = vmatprep.subr.mxu0 0.0
      %1336 = vmatpush1.msra.mxu0 0.0
      %1337 = vmatprep.subr.mxu0 0.0
      %1338 = vmatpush1.msra.mxu0 0.0
      %1339 = vmatprep.subr.mxu0 0.0
      %1340 = vmatpush1.msra.mxu0 0.0
      %1341 = vmatprep.subr.mxu0 0.0
      %1342 = vmatpush1.msra.mxu0 0.0
      %1343 = vmatprep.subr.mxu0 0.0
      %1344 = vmatpush1.msra.mxu0 0.0
      %1345 = vmatprep.subr.mxu0 0.0
      %1346 = vmatpush1.msra.mxu0 0.0
      %1347 = vmatprep.subr.mxu0 0.0
      %1348 = vmatpush1.msra.mxu0 0.0
      %1349 = vmatprep.subr.mxu0 0.0
      %1350 = vmatpush1.msra.mxu0 0.0
      %1351 = vmatprep.subr.mxu0 0.0
      %1352 = vmatpush1.msra.mxu0 0.0
      %1353 = vmatprep.subr.mxu0 0.0
      %1354 = vmatpush1.msra.mxu0 0.0
      %1355 = vmatprep.subr.mxu0 0.0
      %1356 = vmatpush1.msra.mxu0 0.0
      %1357 = vmatprep.subr.mxu0 0.0
      %1358 = vmatpush1.msra.mxu0 0.0
      %1359 = vmatprep.subr.mxu0 0.0
      %1360 = vmatpush1.msra.mxu0 0.0
      %1361 = vmatprep.subr.mxu0 0.0
      %1362 = vmatpush1.msra.mxu0 0.0
      %1363 = vmatprep.subr.mxu0 0.0
      %1364 = vmatpush1.msra.mxu0 0.0
      %1365 = vmatprep.subr.mxu0 0.0
      %1366 = vmatpush1.msra.mxu0 0.0
      %1367 = vmatprep.mubr.f32.mxu0 0.0
      %1368 = vmatmul.mubr.f32.gmra.mrb[0].mxu0 %v1301
      %v1369 = vpop.f32.mrb[0].mxu0
      %v1370 = vadd.f32 0.0, %v1369
      %v1371 = vpop.f32.mrb[0].mxu0
      %1372 = vdwg.mxu0
      %s1373 = scalar_lea.vmem %s170, 26
      %1374 = vst.msk [vmem:[%s1373] sm:$0x3] %vm255, %v1370
      %s1375 = scalar_lea.vmem %s157, 28
      %v1376 = vld [vmem:[%s1375] sm:$0x3]
      %s1377 = scalar_lea.vmem %s164, 896
      %v1378 = vld [vmem:[%s1377] sm:$0xff]
      %v1379 = vld [vmem:[%s1377 + $0x8] sm:$0xff]
      %v1380 = vld [vmem:[%s1377 + $0x10] sm:$0xff]
      %v1381 = vld [vmem:[%s1377 + $0x18] sm:$0xff]
      %v1382 = vld [vmem:[%s1377 + $0x20] sm:$0xff]
      %v1383 = vld [vmem:[%s1377 + $0x28] sm:$0xff]
      %v1384 = vld [vmem:[%s1377 + $0x30] sm:$0xff]
      %v1385 = vld [vmem:[%s1377 + $0x38] sm:$0xff]
      %v1387 = vsel %vm181, %v1376, 0
      %1389 = vmatprep.subr.mxu0 0.0
      %1390 = vmatpush1.msra.mxu0 %v1378
      %1391 = vmatprep.subr.mxu0 0.0
      %1392 = vmatpush1.msra.mxu0 %v1379
      %1393 = vmatprep.subr.mxu0 0.0
      %1394 = vmatpush1.msra.mxu0 %v1380
      %1395 = vmatprep.subr.mxu0 0.0
      %1396 = vmatpush1.msra.mxu0 %v1381
      %1397 = vmatprep.subr.mxu0 0.0
      %1398 = vmatpush1.msra.mxu0 %v1382
      %1399 = vmatprep.subr.mxu0 0.0
      %1400 = vmatpush1.msra.mxu0 %v1383
      %1401 = vmatprep.subr.mxu0 0.0
      %1402 = vmatpush1.msra.mxu0 %v1384
      %1403 = vmatprep.subr.mxu0 0.0
      %1404 = vmatpush1.msra.mxu0 %v1385
      %1405 = vmatprep.subr.mxu0 0.0
      %1406 = vmatpush1.msra.mxu0 0.0
      %1407 = vmatprep.subr.mxu0 0.0
      %1408 = vmatpush1.msra.mxu0 0.0
      %1409 = vmatprep.subr.mxu0 0.0
      %1410 = vmatpush1.msra.mxu0 0.0
      %1411 = vmatprep.subr.mxu0 0.0
      %1412 = vmatpush1.msra.mxu0 0.0
      %1413 = vmatprep.subr.mxu0 0.0
      %1414 = vmatpush1.msra.mxu0 0.0
      %1415 = vmatprep.subr.mxu0 0.0
      %1416 = vmatpush1.msra.mxu0 0.0
      %1417 = vmatprep.subr.mxu0 0.0
      %1418 = vmatpush1.msra.mxu0 0.0
      %1419 = vmatprep.subr.mxu0 0.0
      %1420 = vmatpush1.msra.mxu0 0.0
      %1421 = vmatprep.subr.mxu0 0.0
      %1422 = vmatpush1.msra.mxu0 0.0
      %1423 = vmatprep.subr.mxu0 0.0
      %1424 = vmatpush1.msra.mxu0 0.0
      %1425 = vmatprep.subr.mxu0 0.0
      %1426 = vmatpush1.msra.mxu0 0.0
      %1427 = vmatprep.subr.mxu0 0.0
      %1428 = vmatpush1.msra.mxu0 0.0
      %1429 = vmatprep.subr.mxu0 0.0
      %1430 = vmatpush1.msra.mxu0 0.0
      %1431 = vmatprep.subr.mxu0 0.0
      %1432 = vmatpush1.msra.mxu0 0.0
      %1433 = vmatprep.subr.mxu0 0.0
      %1434 = vmatpush1.msra.mxu0 0.0
      %1435 = vmatprep.subr.mxu0 0.0
      %1436 = vmatpush1.msra.mxu0 0.0
      %1437 = vmatprep.subr.mxu0 0.0
      %1438 = vmatpush1.msra.mxu0 0.0
      %1439 = vmatprep.subr.mxu0 0.0
      %1440 = vmatpush1.msra.mxu0 0.0
      %1441 = vmatprep.subr.mxu0 0.0
      %1442 = vmatpush1.msra.mxu0 0.0
      %1443 = vmatprep.subr.mxu0 0.0
      %1444 = vmatpush1.msra.mxu0 0.0
      %1445 = vmatprep.subr.mxu0 0.0
      %1446 = vmatpush1.msra.mxu0 0.0
      %1447 = vmatprep.subr.mxu0 0.0
      %1448 = vmatpush1.msra.mxu0 0.0
      %1449 = vmatprep.subr.mxu0 0.0
      %1450 = vmatpush1.msra.mxu0 0.0
      %1451 = vmatprep.subr.mxu0 0.0
      %1452 = vmatpush1.msra.mxu0 0.0
      %1453 = vmatprep.mubr.f32.mxu0 0.0
      %1454 = vmatmul.mubr.f32.gmra.mrb[0].mxu0 %v1387
      %v1455 = vpop.f32.mrb[0].mxu0
      %v1456 = vadd.f32 0.0, %v1455
      %v1457 = vpop.f32.mrb[0].mxu0
      %1458 = vdwg.mxu0
      %s1459 = scalar_lea.vmem %s170, 28
      %1460 = vst.msk [vmem:[%s1459] sm:$0x3] %vm255, %v1456
      %s1461 = scalar_lea.vmem %s157, 30
      %v1462 = vld [vmem:[%s1461] sm:$0x3]
      %s1463 = scalar_lea.vmem %s164, 960
      %v1464 = vld [vmem:[%s1463] sm:$0xff]
      %v1465 = vld [vmem:[%s1463 + $0x8] sm:$0xff]
      %v1466 = vld [vmem:[%s1463 + $0x10] sm:$0xff]
      %v1467 = vld [vmem:[%s1463 + $0x18] sm:$0xff]
      %v1468 = vld [vmem:[%s1463 + $0x20] sm:$0xff]
      %v1469 = vld [vmem:[%s1463 + $0x28] sm:$0xff]
      %v1470 = vld [vmem:[%s1463 + $0x30] sm:$0xff]
      %v1471 = vld [vmem:[%s1463 + $0x38] sm:$0xff]
      %v1473 = vsel %vm181, %v1462, 0
      %1475 = vmatprep.subr.mxu0 0.0
      %1476 = vmatpush1.msra.mxu0 %v1464
      %1477 = vmatprep.subr.mxu0 0.0
      %1478 = vmatpush1.msra.mxu0 %v1465
      %1479 = vmatprep.subr.mxu0 0.0
      %1480 = vmatpush1.msra.mxu0 %v1466
      %1481 = vmatprep.subr.mxu0 0.0
      %1482 = vmatpush1.msra.mxu0 %v1467
      %1483 = vmatprep.subr.mxu0 0.0
      %1484 = vmatpush1.msra.mxu0 %v1468
      %1485 = vmatprep.subr.mxu0 0.0
      %1486 = vmatpush1.msra.mxu0 %v1469
      %1487 = vmatprep.subr.mxu0 0.0
      %1488 = vmatpush1.msra.mxu0 %v1470
      %1489 = vmatprep.subr.mxu0 0.0
      %1490 = vmatpush1.msra.mxu0 %v1471
      %1491 = vmatprep.subr.mxu0 0.0
      %1492 = vmatpush1.msra.mxu0 0.0
      %1493 = vmatprep.subr.mxu0 0.0
      %1494 = vmatpush1.msra.mxu0 0.0
      %1495 = vmatprep.subr.mxu0 0.0
      %1496 = vmatpush1.msra.mxu0 0.0
      %1497 = vmatprep.subr.mxu0 0.0
      %1498 = vmatpush1.msra.mxu0 0.0
      %1499 = vmatprep.subr.mxu0 0.0
      %1500 = vmatpush1.msra.mxu0 0.0
      %1501 = vmatprep.subr.mxu0 0.0
      %1502 = vmatpush1.msra.mxu0 0.0
      %1503 = vmatprep.subr.mxu0 0.0
      %1504 = vmatpush1.msra.mxu0 0.0
      %1505 = vmatprep.subr.mxu0 0.0
      %1506 = vmatpush1.msra.mxu0 0.0
      %1507 = vmatprep.subr.mxu0 0.0
      %1508 = vmatpush1.msra.mxu0 0.0
      %1509 = vmatprep.subr.mxu0 0.0
      %1510 = vmatpush1.msra.mxu0 0.0
      %1511 = vmatprep.subr.mxu0 0.0
      %1512 = vmatpush1.msra.mxu0 0.0
      %1513 = vmatprep.subr.mxu0 0.0
      %1514 = vmatpush1.msra.mxu0 0.0
      %1515 = vmatprep.subr.mxu0 0.0
      %1516 = vmatpush1.msra.mxu0 0.0
      %1517 = vmatprep.subr.mxu0 0.0
      %1518 = vmatpush1.msra.mxu0 0.0
      %1519 = vmatprep.subr.mxu0 0.0
      %1520 = vmatpush1.msra.mxu0 0.0
      %1521 = vmatprep.subr.mxu0 0.0
      %1522 = vmatpush1.msra.mxu0 0.0
      %1523 = vmatprep.subr.mxu0 0.0
      %1524 = vmatpush1.msra.mxu0 0.0
      %1525 = vmatprep.subr.mxu0 0.0
      %1526 = vmatpush1.msra.mxu0 0.0
      %1527 = vmatprep.subr.mxu0 0.0
      %1528 = vmatpush1.msra.mxu0 0.0
      %1529 = vmatprep.subr.mxu0 0.0
      %1530 = vmatpush1.msra.mxu0 0.0
      %1531 = vmatprep.subr.mxu0 0.0
      %1532 = vmatpush1.msra.mxu0 0.0
      %1533 = vmatprep.subr.mxu0 0.0
      %1534 = vmatpush1.msra.mxu0 0.0
      %1535 = vmatprep.subr.mxu0 0.0
      %1536 = vmatpush1.msra.mxu0 0.0
      %1537 = vmatprep.subr.mxu0 0.0
      %1538 = vmatpush1.msra.mxu0 0.0
      %1539 = vmatprep.mubr.f32.mxu0 0.0
      %1540 = vmatmul.mubr.f32.gmra.mrb[0].mxu0 %v1473
      %v1541 = vpop.f32.mrb[0].mxu0
      %v1542 = vadd.f32 0.0, %v1541
      %v1543 = vpop.f32.mrb[0].mxu0
      %1544 = vdwg.mxu0
      %s1545 = scalar_lea.vmem %s170, 30
      %1546 = vst.msk [vmem:[%s1545] sm:$0x3] %vm255, %v1542
      %s1547 = smul.u32 16, %s13
      %p1548 = scmp.lt.s32.totalorder %s1547, 31
      %s1549 = scalar_select %p1548, %s1547, 31
      %s1550 = smul.addr %s1549, 2
      %s1551 = scalar_lea.vmem %s2, %s1550
      // Predicated region
      $region29: #{fno2d_forward.11} parent=27 // pred_check
        %p1552 = pneg %p83
      $region30: #{fno2d_forward.11} parent=27 // pred_check_branch
        %1554 = sbr.rel (%p1552) target = $region32
      $region31: #{fno2d_forward.11} parent=27 // pred_region
        %s1555 = smul.u32 16, %s13
      $region32: #{fno2d_forward.11} parent=27 // pred_fallthru
        _
    $region28: #{fno2d_forward.11} parent=5 // pred_fallthru
      _
    %p1556 = scmp.le.s32.totalorder 2, %s8
    // Predicated region
    $region33: #{fno2d_forward.11} parent=5 // pred_check
      %p1557 = pneg %p1556
    $region34: #{fno2d_forward.11} parent=5 // pred_check_branch
      %1559 = sbr.rel (%p1557) target = $region36
    $region35: #{fno2d_forward.11} parent=5 // pred_region
      %s1560 = ssub.s32 %s8, 2
      // Predicated region
      $region37: #{fno2d_forward.11} parent=35 // pred_check
        %p1561 = pneg %p89
      $region38: #{fno2d_forward.11} parent=35 // pred_check_branch
        %1563 = sbr.rel (%p1561) target = $region40
      $region39: #{fno2d_forward.11} parent=35 // pred_region
        %s1564 = smul.u32 16, %s14
        %p1565 = scmp.lt.s32.totalorder %s1564, 31
        %s1566 = scalar_select %p1565, %s1564, 31
        %s1567 = smul.addr %s1566, 2
        %s1568 = scalar_lea.vmem %s2, %s1567
      $region40: #{fno2d_forward.11} parent=35 // pred_fallthru
        _
    $region36: #{fno2d_forward.11} parent=5 // pred_fallthru
      _
  $region6: #{fno2d_forward.11} parent=0 // loop_footer
    %s12 = sadd.s32 1, %s8
  $region7: #{fno2d_forward.11} parent=0 // loop_footer_branch
    %7 = sbr.rel target = $region3
  $region8: #{fno2d_forward.11} parent=0 // loop_exit
    _

// kernel: reverse.8
$region0: #{reverse.8}
  #allocation0 [shape = 's32[1]{0}', space=sflag, size = 0x4, scoped, tag = 'scoped memory for reverse.8']
  %s0 = inlined_call_operand.vmem [shape: f32[2,32,16,7], index: 0, kind: input, shape index: {}]
  %s1 = inlined_call_operand.vmem [shape: f32[2,32,16,7], index: 1, kind: output, shape index: {}]
  %s2 = scalar_lea.vmem %s0, 96
  %v3 = vld [vmem:[%s2] sm:$0xff]
  %4 = vst [vmem:[%s1] sm:$0xff] %v3
  %s5 = scalar_lea.vmem %s0, 208
  %v6 = vld [vmem:[%s5] sm:$0xff]
  %s7 = scalar_lea.vmem %s1, 112
  %8 = vst [vmem:[%s7] sm:$0xff] %v6
  %s9 = scalar_lea.vmem %s0, 80
  %v10 = vld [vmem:[%s9] sm:$0xff]
  %s11 = scalar_lea.vmem %s1, 16
  %12 = vst [vmem:[%s11] sm:$0xff] %v10
  %s13 = scalar_lea.vmem %s0, 192
  %v14 = vld [vmem:[%s13] sm:$0xff]
  %s15 = scalar_lea.vmem %s1, 128
  %16 = vst [vmem:[%s15] sm:$0xff] %v14
  %s17 = scalar_lea.vmem %s0, 64
  %v18 = vld [vmem:[%s17] sm:$0xff]
  %s19 = scalar_lea.vmem %s1, 32
  %20 = vst [vmem:[%s19] sm:$0xff] %v18
  %s21 = scalar_lea.vmem %s0, 176
  %v22 = vld [vmem:[%s21] sm:$0xff]
  %s23 = scalar_lea.vmem %s1, 144
  %24 = vst [vmem:[%s23] sm:$0xff] %v22
  %s25 = scalar_lea.vmem %s0, 48
  %v26 = vld [vmem:[%s25] sm:$0xff]
  %s27 = scalar_lea.vmem %s1, 48
  %28 = vst [vmem:[%s27] sm:$0xff] %v26
  %s29 = scalar_lea.vmem %s0, 160
  %v30 = vld [vmem:[%s29] sm:$0xff]
  %s31 = scalar_lea.vmem %s1, 160
  %32 = vst [vmem:[%s31] sm:$0xff] %v30
  %s33 = scalar_lea.vmem %s0, 32
  %v34 = vld [vmem:[%s33] sm:$0xff]
  %s35 = scalar_lea.vmem %s1, 64
  %36 = vst [vmem:[%s35] sm:$0xff] %v34
  %s37 = scalar_lea.vmem %s0, 144
  %v38 = vld [vmem:[%s37] sm:$0xff]
  %s39 = scalar_lea.vmem %s1, 176
  %40 = vst [vmem:[%s39] sm:$0xff] %v38
  %s41 = scalar_lea.vmem %s0, 16
  %v42 = vld [vmem:[%s41] sm:$0xff]
  %s43 = scalar_lea.vmem %s1, 80
  %44 = vst [vmem:[%s43] sm:$0xff] %v42
  %s45 = scalar_lea.vmem %s0, 128
  %v46 = vld [vmem:[%s45] sm:$0xff]
  %s47 = scalar_lea.vmem %s1, 192
  %48 = vst [vmem:[%s47] sm:$0xff] %v46
  %v49 = vld [vmem:[%s0] sm:$0xff]
  %s50 = scalar_lea.vmem %s1, 96
  %51 = vst [vmem:[%s50] sm:$0xff] %v49
  %s52 = scalar_lea.vmem %s0, 112
  %v53 = vld [vmem:[%s52] sm:$0xff]
  %s54 = scalar_lea.vmem %s1, 208
  %55 = vst [vmem:[%s54] sm:$0xff] %v53
  %s56 = scalar_lea.vmem %s0, 104
  %v57 = vld [vmem:[%s56] sm:$0xff]
  %s58 = scalar_lea.vmem %s1, 8
  %59 = vst [vmem:[%s58] sm:$0xff] %v57
  %s60 = scalar_lea.vmem %s0, 216
  %v61 = vld [vmem:[%s60] sm:$0xff]
  %s62 = scalar_lea.vmem %s1, 120
  %63 = vst [vmem:[%s62] sm:$0xff] %v61
  %s64 = scalar_lea.vmem %s0, 88
  %v65 = vld [vmem:[%s64] sm:$0xff]
  %s66 = scalar_lea.vmem %s1, 24
  %67 = vst [vmem:[%s66] sm:$0xff] %v65
  %s68 = scalar_lea.vmem %s0, 200
  %v69 = vld [vmem:[%s68] sm:$0xff]
  %s70 = scalar_lea.vmem %s1, 136
  %71 = vst [vmem:[%s70] sm:$0xff] %v69
  %s72 = scalar_lea.vmem %s0, 72
  %v73 = vld [vmem:[%s72] sm:$0xff]
  %s74 = scalar_lea.vmem %s1, 40
  %75 = vst [vmem:[%s74] sm:$0xff] %v73
  %s76 = scalar_lea.vmem %s0, 184
  %v77 = vld [vmem:[%s76] sm:$0xff]
  %s78 = scalar_lea.vmem %s1, 152
  %79 = vst [vmem:[%s78] sm:$0xff] %v77
  %s80 = scalar_lea.vmem %s0, 56
  %v81 = vld [vmem:[%s80] sm:$0xff]
  %s82 = scalar_lea.vmem %s1, 56
  %83 = vst [vmem:[%s82] sm:$0xff] %v81
  %s84 = scalar_lea.vmem %s0, 168
  %v85 = vld [vmem:[%s84] sm:$0xff]
  %s86 = scalar_lea.vmem %s1, 168
  %87 = vst [vmem:[%s86] sm:$0xff] %v85
  %s88 = scalar_lea.vmem %s0, 40
  %v89 = vld [vmem:[%s88] sm:$0xff]
  %s90 = scalar_lea.vmem %s1, 72
  %91 = vst [vmem:[%s90] sm:$0xff] %v89
  %s92 = scalar_lea.vmem %s0, 152
  %v93 = vld [vmem:[%s92] sm:$0xff]
  %s94 = scalar_lea.vmem %s1, 184
  %95 = vst [vmem:[%s94] sm:$0xff] %v93
  %s96 = scalar_lea.vmem %s0, 24
  %v97 = vld [vmem:[%s96] sm:$0xff]
  %s98 = scalar_lea.vmem %s1, 88
  %99 = vst [vmem:[%s98] sm:$0xff] %v97
  %s100 = scalar_lea.vmem %s0, 136
  %v101 = vld [vmem:[%s100] sm:$0xff]
  %s102 = scalar_lea.vmem %s1, 200
  %103 = vst [vmem:[%s102] sm:$0xff] %v101
  %s104 = scalar_lea.vmem %s0, 8
  %v105 = vld [vmem:[%s104] sm:$0xff]
  %s106 = scalar_lea.vmem %s1, 104
  %107 = vst [vmem:[%s106] sm:$0xff] %v105
  %s108 = scalar_lea.vmem %s0, 120
  %v109 = vld [vmem:[%s108] sm:$0xff]
  %s110 = scalar_lea.vmem %s1, 216
  %111 = vst [vmem:[%s110] sm:$0xff] %v109

// kernel: fno2d_forward.12
$region0: #{fno2d_forward.12}
  #allocation0 [shape = 'u32[]', space=smem, size = 0x4, offset = 0x4, fixed_abs, tag = 'smem constant byte address 0x4 - core index']
  #allocation1 [shape = 'u32[144,128]{1,0:T(1,128)}', space=vmem, size = 0x12000, scoped, tag = 'internal scratch']
  %s0 = inlined_call_operand.vmem [shape: f32[64,256], index: 0, kind: input, shape index: {}]
  %s1 = inlined_call_operand.vmem [shape: f32[256,256], index: 1, kind: input, shape index: {}]
  %s2 = inlined_call_operand.vmem [shape: f32[1,256], index: 2, kind: input, shape index: {}]
  %s3 = inlined_call_operand.vmem [shape: f32[64,256], index: 3, kind: input, shape index: {}]
  %s4 = inlined_call_operand.vmem [shape: f32[64,256], index: 4, kind: output, shape index: {}]
  %s5 = sld [smem:[#allocation0]]
  $region49: #{fno2d_forward.12} parent=0
    _
  %s7 = ssub.s32 1, %s5
  %s8 = scalar_select 0, %s7, %s5
  loop: start=0, step=1, limit=4
  $region2: #{fno2d_forward.12} parent=0 // loop_pre_header
    _
  $region3: #{fno2d_forward.12} parent=0 // loop_header
    %s10 = sphi 0, %s14
    %p11 = scmp.ge.s32.totalorder %s10, 4
    %s20 = sphi 0, %s22
    %s23 = sphi 0, %s20
    %s24 = sphi 0, %s23
    %s40 = sphi 0, %s24
    %s44 = sphi 0, %s44
    %s46 = sphi 0, %s44
    %s47 = sphi 0, %s46
    %s61 = sphi 0, %s47
    %s65 = sphi 0, %s65
    %s67 = sphi 0, %s65
    %s68 = sphi 0, %s67
    %s82 = sphi 0, %s68
    %s88 = sphi 0, %s90
    %s91 = sphi 0, %s88
    %s92 = sphi 0, %s91
    %s108 = sphi 0, %s92
    %s114 = sphi 0, %s116
    %s117 = sphi 0, %s114
    %s118 = sphi 0, %s117
    %s134 = sphi 0, %s118
  $region4: #{fno2d_forward.12} parent=0 // loop_header_branch
    %13 = sbr.rel (%p11) target = $region8
  $region5: #{fno2d_forward.12} parent=0 // loop_body
    %s15 = ssub.s32 %s10, 1
    %s16 = ssub.s32 %s10, 2
    %s17 = sadd.s32 %s10, 1
    %s18 = ssub.s32 %s10, %s17
    %p19 = scmp.eq.s32.totalorder %s18, 0
    %s21 = sadd.s32 %s20, 1
    %s22 = scalar_select %p19, %s20, %s21
    %p25 = pneg %p19
    %p26 = scmp.eq.s32.totalorder %s10, 1
    %p27 = por %p25, %p26
    %p28 = scmp.ne.s32.totalorder %s20, %s23
    %p29 = scmp.eq.s32.totalorder %s10, 0
    %p30 = por %p28, %p29
    %p31 = scmp.ne.s32.totalorder %s20, %s23
    %p32 = scmp.eq.s32.totalorder %s15, 1
    %p33 = por %p31, %p32
    %p34 = scmp.ne.s32.totalorder %s23, %s24
    %p35 = scmp.eq.s32.totalorder %s15, 0
    %p36 = por %p34, %p35
    %p37 = scmp.ne.s32.totalorder %s23, %s24
    %p38 = scmp.eq.s32.totalorder %s16, 1
    %p39 = por %p37, %p38
    %p41 = scmp.ne.s32.totalorder %s24, %s40
    %p42 = scmp.eq.s32.totalorder %s16, 0
    %p43 = por %p41, %p42
    %s45 = sadd.s32 %s44, 1
    %p48 = scmp.eq.s32.totalorder %s10, 1
    %p49 = scmp.ne.s32.totalorder %s44, %s46
    %p50 = scmp.eq.s32.totalorder %s10, 0
    %p51 = por %p49, %p50
    %p52 = scmp.ne.s32.totalorder %s44, %s46
    %p53 = scmp.eq.s32.totalorder %s15, 1
    %p54 = por %p52, %p53
    %p55 = scmp.ne.s32.totalorder %s46, %s47
    %p56 = scmp.eq.s32.totalorder %s15, 0
    %p57 = por %p55, %p56
    %p58 = scmp.ne.s32.totalorder %s46, %s47
    %p59 = scmp.eq.s32.totalorder %s16, 1
    %p60 = por %p58, %p59
    %p62 = scmp.ne.s32.totalorder %s47, %s61
    %p63 = scmp.eq.s32.totalorder %s16, 0
    %p64 = por %p62, %p63
    %s66 = sadd.s32 %s65, 1
    %p69 = scmp.eq.s32.totalorder %s10, 1
    %p70 = scmp.ne.s32.totalorder %s65, %s67
    %p71 = scmp.eq.s32.totalorder %s10, 0
    %p72 = por %p70, %p71
    %p73 = scmp.ne.s32.totalorder %s65, %s67
    %p74 = scmp.eq.s32.totalorder %s15, 1
    %p75 = por %p73, %p74
    %p76 = scmp.ne.s32.totalorder %s67, %s68
    %p77 = scmp.eq.s32.totalorder %s15, 0
    %p78 = por %p76, %p77
    %p79 = scmp.ne.s32.totalorder %s67, %s68
    %p80 = scmp.eq.s32.totalorder %s16, 1
    %p81 = por %p79, %p80
    %p83 = scmp.ne.s32.totalorder %s68, %s82
    %p84 = scmp.eq.s32.totalorder %s16, 0
    %p85 = por %p83, %p84
    %s86 = ssub.s32 %s10, %s17
    %p87 = scmp.eq.s32.totalorder %s86, 0
    %s89 = sadd.s32 %s88, 1
    %s90 = scalar_select %p87, %s88, %s89
    %p93 = pneg %p87
    %p94 = scmp.eq.s32.totalorder %s10, 1
    %p95 = por %p93, %p94
    %p96 = scmp.ne.s32.totalorder %s88, %s91
    %p97 = scmp.eq.s32.totalorder %s10, 0
    %p98 = por %p96, %p97
    %p99 = scmp.ne.s32.totalorder %s88, %s91
    %p100 = scmp.eq.s32.totalorder %s15, 1
    %p101 = por %p99, %p100
    %p102 = scmp.ne.s32.totalorder %s91, %s92
    %p103 = scmp.eq.s32.totalorder %s15, 0
    %p104 = por %p102, %p103
    %p105 = scmp.ne.s32.totalorder %s91, %s92
    %p106 = scmp.eq.s32.totalorder %s16, 1
    %p107 = por %p105, %p106
    %p109 = scmp.ne.s32.totalorder %s92, %s108
    %p110 = scmp.eq.s32.totalorder %s16, 0
    %p111 = por %p109, %p110
    %s112 = ssub.s32 %s10, %s17
    %p113 = scmp.eq.s32.totalorder %s112, 0
    %s115 = sadd.s32 %s114, 1
    %s116 = scalar_select %p113, %s114, %s115
    %p119 = pneg %p113
    %p120 = scmp.eq.s32.totalorder %s10, 1
    %p121 = por %p119, %p120
    %p122 = scmp.ne.s32.totalorder %s114, %s117
    %p123 = scmp.eq.s32.totalorder %s10, 0
    %p124 = por %p122, %p123
    %p125 = scmp.ne.s32.totalorder %s114, %s117
    %p126 = scmp.eq.s32.totalorder %s15, 1
    %p127 = por %p125, %p126
    %p128 = scmp.ne.s32.totalorder %s117, %s118
    %p129 = scmp.eq.s32.totalorder %s15, 0
    %p130 = por %p128, %p129
    %p131 = scmp.ne.s32.totalorder %s117, %s118
    %p132 = scmp.eq.s32.totalorder %s16, 1
    %p133 = por %p131, %p132
    %p135 = scmp.ne.s32.totalorder %s118, %s134
    %p136 = scmp.eq.s32.totalorder %s16, 0
    %p137 = por %p135, %p136
    %p138 = scmp.le.s32.totalorder 1, %s10
    %p139 = scmp.lt.s32.totalorder %s10, 3
    %p140 = pnand %p138, %p139
    %p141 = pneg %p140
    // Predicated region
    $region9: #{fno2d_forward.12} parent=5 // pred_check
      _
    $region10: #{fno2d_forward.12} parent=5 // pred_check_branch
      %143 = sbr.rel (%p140) target = $region12
    $region11: #{fno2d_forward.12} parent=5 // pred_region
      %s144 = ssub.s32 %s10, 1
      // Predicated region
      $region13: #{fno2d_forward.12} parent=11 // pred_check
        %p145 = pneg %p57
      $region14: #{fno2d_forward.12} parent=11 // pred_check_branch
        %147 = sbr.rel (%p145) target = $region16
      $region15: #{fno2d_forward.12} parent=11 // pred_region
        _
      $region16: #{fno2d_forward.12} parent=11 // pred_fallthru
        _
      // Predicated region
      $region17: #{fno2d_forward.12} parent=11 // pred_check
        %p148 = pneg %p78
      $region18: #{fno2d_forward.12} parent=11 // pred_check_branch
        %150 = sbr.rel (%p148) target = $region20
      $region19: #{fno2d_forward.12} parent=11 // pred_region
        _
      $region20: #{fno2d_forward.12} parent=11 // pred_fallthru
        _
    $region12: #{fno2d_forward.12} parent=5 // pred_fallthru
      _
    %p151 = scmp.lt.s32.totalorder %s10, 2
    // Predicated region
    $region21: #{fno2d_forward.12} parent=5 // pred_check
      %p152 = pneg %p151
    $region22: #{fno2d_forward.12} parent=5 // pred_check_branch
      %154 = sbr.rel (%p152) target = $region24
    $region23: #{fno2d_forward.12} parent=5 // pred_region
      // Predicated region
      $region25: #{fno2d_forward.12} parent=23 // pred_check
        %p155 = pneg %p30
      $region26: #{fno2d_forward.12} parent=23 // pred_check_branch
        %157 = sbr.rel (%p155) target = $region28
      $region27: #{fno2d_forward.12} parent=23 // pred_region
        %s158 = smul.u32 4, %s10
        %p159 = scmp.lt.s32.totalorder %s158, 7
        %s160 = scalar_select %p159, %s158, 7
        %s161 = smul.addr %s160, 2
        %s162 = smul.addr %s161, 8
        %s163 = scalar_lea.vmem %s0, %s162
        %s164 = smul.u32 4, %s10
      $region28: #{fno2d_forward.12} parent=23 // pred_fallthru
        _
      // Predicated region
      $region29: #{fno2d_forward.12} parent=23 // pred_check
        %p165 = pneg %p98
      $region30: #{fno2d_forward.12} parent=23 // pred_check_branch
        %167 = sbr.rel (%p165) target = $region32
      $region31: #{fno2d_forward.12} parent=23 // pred_region
        %s168 = smul.u32 4, %s10
        %p169 = scmp.lt.s32.totalorder %s168, 7
        %s170 = scalar_select %p169, %s168, 7
        %s171 = smul.addr %s170, 2
        %s172 = smul.addr %s171, 8
        %s173 = scalar_lea.vmem %s3, %s172
        %s174 = smul.u32 4, %s10
      $region32: #{fno2d_forward.12} parent=23 // pred_fallthru
        _
    $region24: #{fno2d_forward.12} parent=5 // pred_fallthru
      _
    %p175 = scmp.le.s32.totalorder 1, %s10
    %p176 = scmp.lt.s32.totalorder %s10, 3
    %p177 = pnand %p175, %p176
    %p178 = pneg %p177
    // Predicated region
    $region33: #{fno2d_forward.12} parent=5 // pred_check
      _
    $region34: #{fno2d_forward.12} parent=5 // pred_check_branch
      %180 = sbr.rel (%p177) target = $region36
    $region35: #{fno2d_forward.12} parent=5 // pred_region
      %s181 = ssub.s32 %s10, 1
      %s182 = smul.u32 4, %s15
      %p183 = scmp.lt.s32.totalorder %s182, 7
      %s184 = scalar_select %p183, %s182, 7
      %s185 = smul.addr %s184, 2
      %s186 = smul.addr %s185, 8
      %s187 = scalar_lea.vmem %s0, %s186
      %p188 = pneg %p36
      %p189 = pneg %p33
      %p190 = pneg %p57
      %p191 = pneg %p54
      %p192 = pneg %p78
      %p193 = pneg %p75
      %s194 = smul.u32 4, %s15
      %p195 = scmp.lt.s32.totalorder %s194, 7
      %s196 = scalar_select %p195, %s194, 7
      %s197 = smul.addr %s196, 2
      %s198 = smul.addr %s197, 8
      %s199 = scalar_lea.vmem %s3, %s198
      %p200 = pneg %p104
      %p201 = pneg %p101
      %p202 = pneg %p130
      %p203 = pneg %p127
      %s204 = smul.u32 4, %s15
      %p205 = scmp.lt.s32.totalorder %s204, 7
      %s206 = scalar_select %p205, %s204, 7
      %s207 = smul.addr %s206, 2
      %s208 = smul.addr %s207, 8
      %s209 = scalar_lea.vmem %s4, %s208
      %s210 = smul.u32 4, %s15
      %p211 = scmp.lt.s32.totalorder %s210, 7
      %s212 = scalar_select %p211, %s210, 7
      %s213 = smul.addr %s212, 2
      %s214 = smul.addr %s213, 8
      %s215 = scalar_lea.vmem %s0, %s214
      %s216 = smul.u32 4, %s15
      %s217 = smul.u32 4, %s15
      %p218 = scmp.lt.s32.totalorder %s217, 7
      %s219 = scalar_select %p218, %s217, 7
      %s220 = smul.addr %s219, 2
      %s221 = smul.addr %s220, 8
      %s222 = scalar_lea.vmem %s3, %s221
      %s223 = smul.u32 4, %s15
      %s224 = smul.u32 4, %s15
      %p225 = scmp.lt.s32.totalorder %s224, 7
      %s226 = scalar_select %p225, %s224, 7
      %s227 = smul.addr %s226, 2
      %s228 = smul.addr %s227, 8
      %s229 = scalar_lea.vmem %s4, %s228
      %s230 = smul.u32 4, %s15
      %v231 = vld [vmem:[%s215] sm:$0xff]
      %v232 = vld [vmem:[%s215 + $0x8] sm:$0xff]
      %v233 = vld [vmem:[%s215 + $0x10] sm:$0xff]
      %v234 = vld [vmem:[%s215 + $0x18] sm:$0xff]
      %v235 = vld [vmem:[%s215 + $0x20] sm:$0xff]
      %v236 = vld [vmem:[%s215 + $0x28] sm:$0xff]
      %v237 = vld [vmem:[%s215 + $0x30] sm:$0xff]
      %v238 = vld [vmem:[%s215 + $0x38] sm:$0xff]
      %v239 = vld [vmem:[%s1] sm:$0xff]
      %v240 = vld [vmem:[%s1 + $0x8] sm:$0xff]
      %v241 = vld [vmem:[%s1 + $0x10] sm:$0xff]
      %v242 = vld [vmem:[%s1 + $0x18] sm:$0xff]
      %v243 = vld [vmem:[%s1 + $0x20] sm:$0xff]
      %v244 = vld [vmem:[%s1 + $0x28] sm:$0xff]
      %v245 = vld [vmem:[%s1 + $0x30] sm:$0xff]
      %v246 = vld [vmem:[%s1 + $0x38] sm:$0xff]
      %v247 = vld [vmem:[%s1 + $0x40] sm:$0xff]
      %v248 = vld [vmem:[%s1 + $0x48] sm:$0xff]
      %v249 = vld [vmem:[%s1 + $0x50] sm:$0xff]
      %v250 = vld [vmem:[%s1 + $0x58] sm:$0xff]
      %v251 = vld [vmem:[%s1 + $0x60] sm:$0xff]
      %v252 = vld [vmem:[%s1 + $0x68] sm:$0xff]
      %v253 = vld [vmem:[%s1 + $0x70] sm:$0xff]
      %v254 = vld [vmem:[%s1 + $0x78] sm:$0xff]
      %v255 = vld [vmem:[%s1 + $0x80] sm:$0xff]
      %v256 = vld [vmem:[%s1 + $0x88] sm:$0xff]
      %v257 = vld [vmem:[%s1 + $0x90] sm:$0xff]
      %v258 = vld [vmem:[%s1 + $0x98] sm:$0xff]
      %v259 = vld [vmem:[%s1 + $0xa0] sm:$0xff]
      %v260 = vld [vmem:[%s1 + $0xa8] sm:$0xff]
      %v261 = vld [vmem:[%s1 + $0xb0] sm:$0xff]
      %v262 = vld [vmem:[%s1 + $0xb8] sm:$0xff]
      %v263 = vld [vmem:[%s1 + $0xc0] sm:$0xff]
      %v264 = vld [vmem:[%s1 + $0xc8] sm:$0xff]
      %v265 = vld [vmem:[%s1 + $0xd0] sm:$0xff]
      %v266 = vld [vmem:[%s1 + $0xd8] sm:$0xff]
      %v267 = vld [vmem:[%s1 + $0xe0] sm:$0xff]
      %v268 = vld [vmem:[%s1 + $0xe8] sm:$0xff]
      %v269 = vld [vmem:[%s1 + $0xf0] sm:$0xff]
      %v270 = vld [vmem:[%s1 + $0xf8] sm:$0xff]
      %v271 = vld [vmem:[%s1 + $0x100] sm:$0xff]
      %v272 = vld [vmem:[%s1 + $0x108] sm:$0xff]
      %v273 = vld [vmem:[%s1 + $0x110] sm:$0xff]
      %v274 = vld [vmem:[%s1 + $0x118] sm:$0xff]
      %v275 = vld [vmem:[%s1 + $0x120] sm:$0xff]
      %v276 = vld [vmem:[%s1 + $0x128] sm:$0xff]
      %v277 = vld [vmem:[%s1 + $0x130] sm:$0xff]
      %v278 = vld [vmem:[%s1 + $0x138] sm:$0xff]
      %v279 = vld [vmem:[%s1 + $0x140] sm:$0xff]
      %v280 = vld [vmem:[%s1 + $0x148] sm:$0xff]
      %v281 = vld [vmem:[%s1 + $0x150] sm:$0xff]
      %v282 = vld [vmem:[%s1 + $0x158] sm:$0xff]
      %v283 = vld [vmem:[%s1 + $0x160] sm:$0xff]
      %v284 = vld [vmem:[%s1 + $0x168] sm:$0xff]
      %v285 = vld [vmem:[%s1 + $0x170] sm:$0xff]
      %v286 = vld [vmem:[%s1 + $0x178] sm:$0xff]
      %v287 = vld [vmem:[%s1 + $0x180] sm:$0xff]
      %v288 = vld [vmem:[%s1 + $0x188] sm:$0xff]
      %v289 = vld [vmem:[%s1 + $0x190] sm:$0xff]
      %v290 = vld [vmem:[%s1 + $0x198] sm:$0xff]
      %v291 = vld [vmem:[%s1 + $0x1a0] sm:$0xff]
      %v292 = vld [vmem:[%s1 + $0x1a8] sm:$0xff]
      %v293 = vld [vmem:[%s1 + $0x1b0] sm:$0xff]
      %v294 = vld [vmem:[%s1 + $0x1b8] sm:$0xff]
      %v295 = vld [vmem:[%s1 + $0x1c0] sm:$0xff]
      %v296 = vld [vmem:[%s1 + $0x1c8] sm:$0xff]
      %v297 = vld [vmem:[%s1 + $0x1d0] sm:$0xff]
      %v298 = vld [vmem:[%s1 + $0x1d8] sm:$0xff]
      %v299 = vld [vmem:[%s1 + $0x1e0] sm:$0xff]
      %v300 = vld [vmem:[%s1 + $0x1e8] sm:$0xff]
      %v301 = vld [vmem:[%s1 + $0x1f0] sm:$0xff]
      %v302 = vld [vmem:[%s1 + $0x1f8] sm:$0xff]
      %v303 = vld [vmem:[%s2] sm:$0x3]
      %v305 = vlaneseq
      %v306 = vshrl.u32 %v305, 7
      %v307 = vsub.s32 0, %v306
      %v308 = vrot.slane %v303, %v307
      %v309 = vlaneseq
      %v310 = vshrl.u32 %v309, 7
      %v311 = vsub.s32 1, %v310
      %v312 = vrot.slane %v303, %v311
      %315 = vmatprep.subr.mxu0 %v240
      %316 = vmatpush1.msra.mxu0 %v239
      %317 = vmatprep.subr.mxu0 %v242
      %318 = vmatpush1.msra.mxu0 %v241
      %319 = vmatprep.subr.mxu0 %v244
      %320 = vmatpush1.msra.mxu0 %v243
      %321 = vmatprep.subr.mxu0 %v246
      %322 = vmatpush1.msra.mxu0 %v245
      %323 = vmatprep.subr.mxu0 %v248
      %324 = vmatpush1.msra.mxu0 %v247
      %325 = vmatprep.subr.mxu0 %v250
      %326 = vmatpush1.msra.mxu0 %v249
      %327 = vmatprep.subr.mxu0 %v252
      %328 = vmatpush1.msra.mxu0 %v251
      %329 = vmatprep.subr.mxu0 %v254
      %330 = vmatpush1.msra.mxu0 %v253
      %331 = vmatprep.subr.mxu0 %v256
      %332 = vmatpush1.msra.mxu0 %v255
      %333 = vmatprep.subr.mxu0 %v258
      %334 = vmatpush1.msra.mxu0 %v257
      %335 = vmatprep.subr.mxu0 %v260
      %336 = vmatpush1.msra.mxu0 %v259
      %337 = vmatprep.subr.mxu0 %v262
      %338 = vmatpush1.msra.mxu0 %v261
      %339 = vmatprep.subr.mxu0 %v264
      %340 = vmatpush1.msra.mxu0 %v263
      %341 = vmatprep.subr.mxu0 %v266
      %342 = vmatpush1.msra.mxu0 %v265
      %343 = vmatprep.subr.mxu0 %v268
      %344 = vmatpush1.msra.mxu0 %v267
      %345 = vmatprep.subr.mxu0 %v270
      %346 = vmatpush1.msra.mxu0 %v269
      %347 = vmatprep.subr.mxu0 %v272
      %348 = vmatpush1.msra.mxu0 %v271
      %349 = vmatprep.subr.mxu0 %v274
      %350 = vmatpush1.msra.mxu0 %v273
      %351 = vmatprep.subr.mxu0 %v276
      %352 = vmatpush1.msra.mxu0 %v275
      %353 = vmatprep.subr.mxu0 %v278
      %354 = vmatpush1.msra.mxu0 %v277
      %355 = vmatprep.subr.mxu0 %v280
      %356 = vmatpush1.msra.mxu0 %v279
      %357 = vmatprep.subr.mxu0 %v282
      %358 = vmatpush1.msra.mxu0 %v281
      %359 = vmatprep.subr.mxu0 %v284
      %360 = vmatpush1.msra.mxu0 %v283
      %361 = vmatprep.subr.mxu0 %v286
      %362 = vmatpush1.msra.mxu0 %v285
      %363 = vmatprep.subr.mxu0 %v288
      %364 = vmatpush1.msra.mxu0 %v287
      %365 = vmatprep.subr.mxu0 %v290
      %366 = vmatpush1.msra.mxu0 %v289
      %367 = vmatprep.subr.mxu0 %v292
      %368 = vmatpush1.msra.mxu0 %v291
      %369 = vmatprep.subr.mxu0 %v294
      %370 = vmatpush1.msra.mxu0 %v293
      %371 = vmatprep.subr.mxu0 %v296
      %372 = vmatpush1.msra.mxu0 %v295
      %373 = vmatprep.subr.mxu0 %v298
      %374 = vmatpush1.msra.mxu0 %v297
      %375 = vmatprep.subr.mxu0 %v300
      %376 = vmatpush1.msra.mxu0 %v299
      %377 = vmatprep.subr.mxu0 %v302
      %378 = vmatpush1.msra.mxu0 %v301
      %379 = vmatprep.mubr.f32.mxu0 %v232
      %380 = vmatmul.mubr.f32.gmra.mrb[0].mxu0 %v231
      %v381 = vpop.f32.mrb[0].mxu0
      %v382 = vadd.f32 %v308, %v381
      %v383 = vpop.f32.mrb[0].mxu0
      %v384 = vadd.f32 %v312, %v383
      %385 = vmatprep.mubr.f32.mxu0 %v234
      %386 = vmatmul.mubr.f32.gmra.mrb[0].mxu0 %v233
      %v387 = vpop.f32.mrb[0].mxu0
      %v388 = vadd.f32 %v308, %v387
      %v389 = vpop.f32.mrb[0].mxu0
      %v390 = vadd.f32 %v312, %v389
      %391 = vmatprep.mubr.f32.mxu0 %v236
      %392 = vmatmul.mubr.f32.gmra.mrb[0].mxu0 %v235
      %v393 = vpop.f32.mrb[0].mxu0
      %v394 = vadd.f32 %v308, %v393
      %v395 = vpop.f32.mrb[0].mxu0
      %v396 = vadd.f32 %v312, %v395
      %397 = vmatprep.mubr.f32.mxu0 %v238
      %398 = vmatmul.mubr.f32.gmra.mrb[0].mxu0 %v237
      %v399 = vpop.f32.mrb[0].mxu0
      %v400 = vadd.f32 %v308, %v399
      %v401 = vpop.f32.mrb[0].mxu0
      %v402 = vadd.f32 %v312, %v401
      %403 = vdwg.mxu0
      %v404 = vld [vmem:[%s222] sm:$0xff]
      %v405 = vld [vmem:[%s222 + $0x8] sm:$0xff]
      %v406 = vld [vmem:[%s222 + $0x10] sm:$0xff]
      %v407 = vld [vmem:[%s222 + $0x18] sm:$0xff]
      %v408 = vld [vmem:[%s222 + $0x20] sm:$0xff]
      %v409 = vld [vmem:[%s222 + $0x28] sm:$0xff]
      %v410 = vld [vmem:[%s222 + $0x30] sm:$0xff]
      %v411 = vld [vmem:[%s222 + $0x38] sm:$0xff]
      %v412 = vadd.f32 %v382, %v404
      %v413 = vadd.f32 %v384, %v405
      %v414 = vadd.f32 %v388, %v406
      %v415 = vadd.f32 %v390, %v407
      %v416 = vadd.f32 %v394, %v408
      %v417 = vadd.f32 %v396, %v409
      %v418 = vadd.f32 %v400, %v410
      %v419 = vadd.f32 %v402, %v411
      %v420 = vmul.f32 %v412, 0.5
      %v421 = vmul.f32 %v413, 0.5
      %v422 = vmul.f32 %v414, 0.5
      %v423 = vmul.f32 %v415, 0.5
      %v424 = vmul.f32 %v416, 0.5
      %v425 = vmul.f32 %v417, 0.5
      %v426 = vmul.f32 %v418, 0.5
      %v427 = vmul.f32 %v419, 0.5
      %v428 = vmul.f32 %v412, 0.70710677
      %v429 = vmul.f32 %v413, 0.70710677
      %v430 = vmul.f32 %v414, 0.70710677
      %v431 = vmul.f32 %v415, 0.70710677
      %v432 = vmul.f32 %v416, 0.70710677
      %v433 = vmul.f32 %v417, 0.70710677
      %v434 = vmul.f32 %v418, 0.70710677
      %v435 = vmul.f32 %v419, 0.70710677
      %v436 = vmax.f32 %v428, -4.0
      %v437 = vmax.f32 %v429, -4.0
      %v438 = vmax.f32 %v430, -4.0
      %v439 = vmax.f32 %v431, -4.0
      %v440 = vmax.f32 %v432, -4.0
      %v441 = vmax.f32 %v433, -4.0
      %v442 = vmax.f32 %v434, -4.0
      %v443 = vmax.f32 %v435, -4.0
      %v444 = vmin.f32 %v436, 4.0
      %v445 = vmin.f32 %v437, 4.0
      %v446 = vmin.f32 %v438, 4.0
      %v447 = vmin.f32 %v439, 4.0
      %v448 = vmin.f32 %v440, 4.0
      %v449 = vmin.f32 %v441, 4.0
      %v450 = vmin.f32 %v442, 4.0
      %v451 = vmin.f32 %v443, 4.0
      %v452 = vmul.f32 %v444, %v444
      %v453 = vmul.f32 %v445, %v445
      %v454 = vmul.f32 %v446, %v446
      %v455 = vmul.f32 %v447, %v447
      %v456 = vmul.f32 %v448, %v448
      %v457 = vmul.f32 %v449, %v449
      %v458 = vmul.f32 %v450, %v450
      %v459 = vmul.f32 %v451, %v451
      %v460 = vmul.f32 %v452, -2.7261424e-10
      %v461 = vmul.f32 %v453, -2.7261424e-10
      %v462 = vmul.f32 %v454, -2.7261424e-10
      %v463 = vmul.f32 %v455, -2.7261424e-10
      %v464 = vmul.f32 %v456, -2.7261424e-10
      %v465 = vmul.f32 %v457, -2.7261424e-10
      %v466 = vmul.f32 %v458, -2.7261424e-10
      %v467 = vmul.f32 %v459, -2.7261424e-10
      %v468 = vadd.f32 %v460, 2.7706815e-08
      %v469 = vadd.f32 %v461, 2.7706815e-08
      %v470 = vadd.f32 %v462, 2.7706815e-08
      %v471 = vadd.f32 %v463, 2.7706815e-08
      %v472 = vadd.f32 %v464, 2.7706815e-08
      %v473 = vadd.f32 %v465, 2.7706815e-08
      %v474 = vadd.f32 %v466, 2.7706815e-08
      %v475 = vadd.f32 %v467, 2.7706815e-08
      %v476 = vmul.f32 %v468, %v452
      %v477 = vmul.f32 %v469, %v453
      %v478 = vmul.f32 %v470, %v454
      %v479 = vmul.f32 %v471, %v455
      %v480 = vmul.f32 %v472, %v456
      %v481 = vmul.f32 %v473, %v457
      %v482 = vmul.f32 %v474, %v458
      %v483 = vmul.f32 %v475, %v459
      %v484 = vadd.f32 %v476, -2.101024e-06
      %v485 = vadd.f32 %v477, -2.101024e-06
      %v486 = vadd.f32 %v478, -2.101024e-06
      %v487 = vadd.f32 %v479, -2.101024e-06
      %v488 = vadd.f32 %v480, -2.101024e-06
      %v489 = vadd.f32 %v481, -2.101024e-06
      %v490 = vadd.f32 %v482, -2.101024e-06
      %v491 = vadd.f32 %v483, -2.101024e-06
      %v492 = vmul.f32 %v484, %v452
      %v493 = vmul.f32 %v485, %v453
      %v494 = vmul.f32 %v486, %v454
      %v495 = vmul.f32 %v487, %v455
      %v496 = vmul.f32 %v488, %v456
      %v497 = vmul.f32 %v489, %v457
      %v498 = vmul.f32 %v490, %v458
      %v499 = vmul.f32 %v491, %v459
      %v500 = vadd.f32 %v492, -5.6925062e-05
      %v501 = vadd.f32 %v493, -5.6925062e-05
      %v502 = vadd.f32 %v494, -5.6925062e-05
      %v503 = vadd.f32 %v495, -5.6925062e-05
      %v504 = vadd.f32 %v496, -5.6925062e-05
      %v505 = vadd.f32 %v497, -5.6925062e-05
      %v506 = vadd.f32 %v498, -5.6925062e-05
      %v507 = vadd.f32 %v499, -5.6925062e-05
      %v508 = vmul.f32 %v500, %v452
      %v509 = vmul.f32 %v501, %v453
      %v510 = vmul.f32 %v502, %v454
      %v511 = vmul.f32 %v503, %v455
      %v512 = vmul.f32 %v504, %v456
      %v513 = vmul.f32 %v505, %v457
      %v514 = vmul.f32 %v506, %v458
      %v515 = vmul.f32 %v507, %v459
      %v516 = vadd.f32 %v508, -0.00073499064
      %v517 = vadd.f32 %v509, -0.00073499064
      %v518 = vadd.f32 %v510, -0.00073499064
      %v519 = vadd.f32 %v511, -0.00073499064
      %v520 = vadd.f32 %v512, -0.00073499064
      %v521 = vadd.f32 %v513, -0.00073499064
      %v522 = vadd.f32 %v514, -0.00073499064
      %v523 = vadd.f32 %v515, -0.00073499064
      %v524 = vmul.f32 %v516, %v452
      %v525 = vmul.f32 %v517, %v453
      %v526 = vmul.f32 %v518, %v454
      %v527 = vmul.f32 %v519, %v455
      %v528 = vmul.f32 %v520, %v456
      %v529 = vmul.f32 %v521, %v457
      %v530 = vmul.f32 %v522, %v458
      %v531 = vmul.f32 %v523, %v459
      %v532 = vadd.f32 %v524, -0.0029546
      %v533 = vadd.f32 %v525, -0.0029546
      %v534 = vadd.f32 %v526, -0.0029546
      %v535 = vadd.f32 %v527, -0.0029546
      %v536 = vadd.f32 %v528, -0.0029546
      %v537 = vadd.f32 %v529, -0.0029546
      %v538 = vadd.f32 %v530, -0.0029546
      %v539 = vadd.f32 %v531, -0.0029546
      %v540 = vmul.f32 %v532, %v452
      %v541 = vmul.f32 %v533, %v453
      %v542 = vmul.f32 %v534, %v454
      %v543 = vmul.f32 %v535, %v455
      %v544 = vmul.f32 %v536, %v456
      %v545 = vmul.f32 %v537, %v457
      %v546 = vmul.f32 %v538, %v458
      %v547 = vmul.f32 %v539, %v459
      %v548 = vadd.f32 %v540, -0.016096033
      %v549 = vadd.f32 %v541, -0.016096033
      %v550 = vadd.f32 %v542, -0.016096033
      %v551 = vadd.f32 %v543, -0.016096033
      %v552 = vadd.f32 %v544, -0.016096033
      %v553 = vadd.f32 %v545, -0.016096033
      %v554 = vadd.f32 %v546, -0.016096033
      %v555 = vadd.f32 %v547, -0.016096033
      %v556 = vmul.f32 %v452, -1.45660715e-05
      %v557 = vmul.f32 %v453, -1.45660715e-05
      %v558 = vmul.f32 %v454, -1.45660715e-05
      %v559 = vmul.f32 %v455, -1.45660715e-05
      %v560 = vmul.f32 %v456, -1.45660715e-05
      %v561 = vmul.f32 %v457, -1.45660715e-05
      %v562 = vmul.f32 %v458, -1.45660715e-05
      %v563 = vmul.f32 %v459, -1.45660715e-05
      %v564 = vadd.f32 %v556, -0.00021337405
      %v565 = vadd.f32 %v557, -0.00021337405
      %v566 = vadd.f32 %v558, -0.00021337405
      %v567 = vadd.f32 %v559, -0.00021337405
      %v568 = vadd.f32 %v560, -0.00021337405
      %v569 = vadd.f32 %v561, -0.00021337405
      %v570 = vadd.f32 %v562, -0.00021337405
      %v571 = vadd.f32 %v563, -0.00021337405
      %v572 = vmul.f32 %v564, %v452
      %v573 = vmul.f32 %v565, %v453
      %v574 = vmul.f32 %v566, %v454
      %v575 = vmul.f32 %v567, %v455
      %v576 = vmul.f32 %v568, %v456
      %v577 = vmul.f32 %v569, %v457
      %v578 = vmul.f32 %v570, %v458
      %v579 = vmul.f32 %v571, %v459
      %v580 = vadd.f32 %v572, -0.001682827
      %v581 = vadd.f32 %v573, -0.001682827
      %v582 = vadd.f32 %v574, -0.001682827
      %v583 = vadd.f32 %v575, -0.001682827
      %v584 = vadd.f32 %v576, -0.001682827
      %v585 = vadd.f32 %v577, -0.001682827
      %v586 = vadd.f32 %v578, -0.001682827
      %v587 = vadd.f32 %v579, -0.001682827
      %v588 = vmul.f32 %v580, %v452
      %v589 = vmul.f32 %v581, %v453
      %v590 = vmul.f32 %v582, %v454
      %v591 = vmul.f32 %v583, %v455
      %v592 = vmul.f32 %v584, %v456
      %v593 = vmul.f32 %v585, %v457
      %v594 = vmul.f32 %v586, %v458
      %v595 = vmul.f32 %v587, %v459
      %v596 = vadd.f32 %v588, -0.0073733293
      %v597 = vadd.f32 %v589, -0.0073733293
      %v598 = vadd.f32 %v590, -0.0073733293
      %v599 = vadd.f32 %v591, -0.0073733293
      %v600 = vadd.f32 %v592, -0.0073733293
      %v601 = vadd.f32 %v593, -0.0073733293
      %v602 = vadd.f32 %v594, -0.0073733293
      %v603 = vadd.f32 %v595, -0.0073733293
      %v604 = vmul.f32 %v596, %v452
      %v605 = vmul.f32 %v597, %v453
      %v606 = vmul.f32 %v598, %v454
      %v607 = vmul.f32 %v599, %v455
      %v608 = vmul.f32 %v600, %v456
      %v609 = vmul.f32 %v601, %v457
      %v610 = vmul.f32 %v602, %v458
      %v611 = vmul.f32 %v603, %v459
      %v612 = vadd.f32 %v604, -0.014264739
      %v613 = vadd.f32 %v605, -0.014264739
      %v614 = vadd.f32 %v606, -0.014264739
      %v615 = vadd.f32 %v607, -0.014264739
      %v616 = vadd.f32 %v608, -0.014264739
      %v617 = vadd.f32 %v609, -0.014264739
      %v618 = vadd.f32 %v610, -0.014264739
      %v619 = vadd.f32 %v611, -0.014264739
      %v620 = vmul.f32 %v444, %v548
      %v621 = vmul.f32 %v445, %v549
      %v622 = vmul.f32 %v446, %v550
      %v623 = vmul.f32 %v447, %v551
      %v624 = vmul.f32 %v448, %v552
      %v625 = vmul.f32 %v449, %v553
      %v626 = vmul.f32 %v450, %v554
      %v627 = vmul.f32 %v451, %v555
      %v628 = vrcp.pop %v612
      %v629 = vrcp.pop %v613
      %v630 = vrcp.pop %v614
      %v631 = vrcp.pop %v615
      %v632 = vrcp.pop %v616
      %v633 = vrcp.pop %v617
      %v634 = vrcp.pop %v618
      %v635 = vrcp.pop %v619
      %v636 = vmul.f32 %v620, %v628
      %v637 = vmul.f32 %v621, %v629
      %v638 = vmul.f32 %v622, %v630
      %v639 = vmul.f32 %v623, %v631
      %v640 = vmul.f32 %v624, %v632
      %v641 = vmul.f32 %v625, %v633
      %v642 = vmul.f32 %v626, %v634
      %v643 = vmul.f32 %v627, %v635
      %v644 = vadd.f32 %v636, 1.0
      %v645 = vadd.f32 %v637, 1.0
      %v646 = vadd.f32 %v638, 1.0
      %v647 = vadd.f32 %v639, 1.0
      %v648 = vadd.f32 %v640, 1.0
      %v649 = vadd.f32 %v641, 1.0
      %v650 = vadd.f32 %v642, 1.0
      %v651 = vadd.f32 %v643, 1.0
      %v652 = vmul.f32 %v420, %v644
      %v653 = vmul.f32 %v421, %v645
      %v654 = vmul.f32 %v422, %v646
      %v655 = vmul.f32 %v423, %v647
      %v656 = vmul.f32 %v424, %v648
      %v657 = vmul.f32 %v425, %v649
      %v658 = vmul.f32 %v426, %v650
      %v659 = vmul.f32 %v427, %v651
      %660 = vst [vmem:[%s229] sm:$0xff] %v652
      %661 = vst [vmem:[%s229 + $0x8] sm:$0xff] %v653
      %662 = vst [vmem:[%s229 + $0x10] sm:$0xff] %v654
      %663 = vst [vmem:[%s229 + $0x18] sm:$0xff] %v655
      %664 = vst [vmem:[%s229 + $0x20] sm:$0xff] %v656
      %665 = vst [vmem:[%s229 + $0x28] sm:$0xff] %v657
      %666 = vst [vmem:[%s229 + $0x30] sm:$0xff] %v658
      %667 = vst [vmem:[%s229 + $0x38] sm:$0xff] %v659
      %s668 = smul.u32 4, %s15
      %p669 = scmp.lt.s32.totalorder %s668, 7
      %s670 = scalar_select %p669, %s668, 7
      %s671 = smul.addr %s670, 2
      %s672 = smul.addr %s671, 8
      %s673 = scalar_lea.vmem %s4, %s672
      // Predicated region
      $region37: #{fno2d_forward.12} parent=35 // pred_check
        %p674 = pneg %p127
      $region38: #{fno2d_forward.12} parent=35 // pred_check_branch
        %676 = sbr.rel (%p674) target = $region40
      $region39: #{fno2d_forward.12} parent=35 // pred_region
        %s677 = smul.u32 4, %s15
      $region40: #{fno2d_forward.12} parent=35 // pred_fallthru
        _
    $region36: #{fno2d_forward.12} parent=5 // pred_fallthru
      _
    %p678 = scmp.le.s32.totalorder 2, %s10
    // Predicated region
    $region41: #{fno2d_forward.12} parent=5 // pred_check
      %p679 = pneg %p678
    $region42: #{fno2d_forward.12} parent=5 // pred_check_branch
      %681 = sbr.rel (%p679) target = $region44
    $region43: #{fno2d_forward.12} parent=5 // pred_region
      %s682 = ssub.s32 %s10, 2
      // Predicated region
      $region45: #{fno2d_forward.12} parent=43 // pred_check
        %p683 = pneg %p133
      $region46: #{fno2d_forward.12} parent=43 // pred_check_branch
        %685 = sbr.rel (%p683) target = $region48
      $region47: #{fno2d_forward.12} parent=43 // pred_region
        %s686 = smul.u32 4, %s16
        %p687 = scmp.lt.s32.totalorder %s686, 7
        %s688 = scalar_select %p687, %s686, 7
        %s689 = smul.addr %s688, 2
        %s690 = smul.addr %s689, 8
        %s691 = scalar_lea.vmem %s4, %s690
      $region48: #{fno2d_forward.12} parent=43 // pred_fallthru
        _
    $region44: #{fno2d_forward.12} parent=5 // pred_fallthru
      _
  $region6: #{fno2d_forward.12} parent=0 // loop_footer
    %s14 = sadd.s32 1, %s10
  $region7: #{fno2d_forward.12} parent=0 // loop_footer_branch
    %9 = sbr.rel target = $region3
  $region8: #{fno2d_forward.12} parent=0 // loop_exit
    _

// kernel: fno2d_forward.18
$region0: #{fno2d_forward.18}
  #allocation0 [shape = 'u32[]', space=smem, size = 0x4, offset = 0x4, fixed_abs, tag = 'smem constant byte address 0x4 - core index']
  #allocation1 [shape = 'u32[144,128]{1,0:T(1,128)}', space=vmem, size = 0x12000, scoped, tag = 'internal scratch']
  %s0 = inlined_call_operand.vmem [shape: f32[64,256], index: 0, kind: input, shape index: {}]
  %s1 = inlined_call_operand.vmem [shape: f32[256,256], index: 1, kind: input, shape index: {}]
  %s2 = inlined_call_operand.vmem [shape: f32[1,256], index: 2, kind: input, shape index: {}]
  %s3 = inlined_call_operand.vmem [shape: f32[64,256], index: 3, kind: input, shape index: {}]
  %s4 = inlined_call_operand.vmem [shape: f32[64,256], index: 4, kind: output, shape index: {}]
  %s5 = sld [smem:[#allocation0]]
  $region49: #{fno2d_forward.18} parent=0
    _
  %s7 = ssub.s32 1, %s5
  %s8 = scalar_select 0, %s7, %s5
  loop: start=0, step=1, limit=4
  $region2: #{fno2d_forward.18} parent=0 // loop_pre_header
    _
  $region3: #{fno2d_forward.18} parent=0 // loop_header
    %s10 = sphi 0, %s14
    %p11 = scmp.ge.s32.totalorder %s10, 4
    %s20 = sphi 0, %s22
    %s23 = sphi 0, %s20
    %s24 = sphi 0, %s23
    %s40 = sphi 0, %s24
    %s44 = sphi 0, %s44
    %s46 = sphi 0, %s44
    %s47 = sphi 0, %s46
    %s61 = sphi 0, %s47
    %s65 = sphi 0, %s65
    %s67 = sphi 0, %s65
    %s68 = sphi 0, %s67
    %s82 = sphi 0, %s68
    %s88 = sphi 0, %s90
    %s91 = sphi 0, %s88
    %s92 = sphi 0, %s91
    %s108 = sphi 0, %s92
    %s114 = sphi 0, %s116
    %s117 = sphi 0, %s114
    %s118 = sphi 0, %s117
    %s134 = sphi 0, %s118
  $region4: #{fno2d_forward.18} parent=0 // loop_header_branch
    %13 = sbr.rel (%p11) target = $region8
  $region5: #{fno2d_forward.18} parent=0 // loop_body
    %s15 = ssub.s32 %s10, 1
    %s16 = ssub.s32 %s10, 2
    %s17 = sadd.s32 %s10, 1
    %s18 = ssub.s32 %s10, %s17
    %p19 = scmp.eq.s32.totalorder %s18, 0
    %s21 = sadd.s32 %s20, 1
    %s22 = scalar_select %p19, %s20, %s21
    %p25 = pneg %p19
    %p26 = scmp.eq.s32.totalorder %s10, 1
    %p27 = por %p25, %p26
    %p28 = scmp.ne.s32.totalorder %s20, %s23
    %p29 = scmp.eq.s32.totalorder %s10, 0
    %p30 = por %p28, %p29
    %p31 = scmp.ne.s32.totalorder %s20, %s23
    %p32 = scmp.eq.s32.totalorder %s15, 1
    %p33 = por %p31, %p32
    %p34 = scmp.ne.s32.totalorder %s23, %s24
    %p35 = scmp.eq.s32.totalorder %s15, 0
    %p36 = por %p34, %p35
    %p37 = scmp.ne.s32.totalorder %s23, %s24
    %p38 = scmp.eq.s32.totalorder %s16, 1
    %p39 = por %p37, %p38
    %p41 = scmp.ne.s32.totalorder %s24, %s40
    %p42 = scmp.eq.s32.totalorder %s16, 0
    %p43 = por %p41, %p42
    %s45 = sadd.s32 %s44, 1
    %p48 = scmp.eq.s32.totalorder %s10, 1
    %p49 = scmp.ne.s32.totalorder %s44, %s46
    %p50 = scmp.eq.s32.totalorder %s10, 0
    %p51 = por %p49, %p50
    %p52 = scmp.ne.s32.totalorder %s44, %s46
    %p53 = scmp.eq.s32.totalorder %s15, 1
    %p54 = por %p52, %p53
    %p55 = scmp.ne.s32.totalorder %s46, %s47
    %p56 = scmp.eq.s32.totalorder %s15, 0
    %p57 = por %p55, %p56
    %p58 = scmp.ne.s32.totalorder %s46, %s47
    %p59 = scmp.eq.s32.totalorder %s16, 1
    %p60 = por %p58, %p59
    %p62 = scmp.ne.s32.totalorder %s47, %s61
    %p63 = scmp.eq.s32.totalorder %s16, 0
    %p64 = por %p62, %p63
    %s66 = sadd.s32 %s65, 1
    %p69 = scmp.eq.s32.totalorder %s10, 1
    %p70 = scmp.ne.s32.totalorder %s65, %s67
    %p71 = scmp.eq.s32.totalorder %s10, 0
    %p72 = por %p70, %p71
    %p73 = scmp.ne.s32.totalorder %s65, %s67
    %p74 = scmp.eq.s32.totalorder %s15, 1
    %p75 = por %p73, %p74
    %p76 = scmp.ne.s32.totalorder %s67, %s68
    %p77 = scmp.eq.s32.totalorder %s15, 0
    %p78 = por %p76, %p77
    %p79 = scmp.ne.s32.totalorder %s67, %s68
    %p80 = scmp.eq.s32.totalorder %s16, 1
    %p81 = por %p79, %p80
    %p83 = scmp.ne.s32.totalorder %s68, %s82
    %p84 = scmp.eq.s32.totalorder %s16, 0
    %p85 = por %p83, %p84
    %s86 = ssub.s32 %s10, %s17
    %p87 = scmp.eq.s32.totalorder %s86, 0
    %s89 = sadd.s32 %s88, 1
    %s90 = scalar_select %p87, %s88, %s89
    %p93 = pneg %p87
    %p94 = scmp.eq.s32.totalorder %s10, 1
    %p95 = por %p93, %p94
    %p96 = scmp.ne.s32.totalorder %s88, %s91
    %p97 = scmp.eq.s32.totalorder %s10, 0
    %p98 = por %p96, %p97
    %p99 = scmp.ne.s32.totalorder %s88, %s91
    %p100 = scmp.eq.s32.totalorder %s15, 1
    %p101 = por %p99, %p100
    %p102 = scmp.ne.s32.totalorder %s91, %s92
    %p103 = scmp.eq.s32.totalorder %s15, 0
    %p104 = por %p102, %p103
    %p105 = scmp.ne.s32.totalorder %s91, %s92
    %p106 = scmp.eq.s32.totalorder %s16, 1
    %p107 = por %p105, %p106
    %p109 = scmp.ne.s32.totalorder %s92, %s108
    %p110 = scmp.eq.s32.totalorder %s16, 0
    %p111 = por %p109, %p110
    %s112 = ssub.s32 %s10, %s17
    %p113 = scmp.eq.s32.totalorder %s112, 0
    %s115 = sadd.s32 %s114, 1
    %s116 = scalar_select %p113, %s114, %s115
    %p119 = pneg %p113
    %p120 = scmp.eq.s32.totalorder %s10, 1
    %p121 = por %p119, %p120
    %p122 = scmp.ne.s32.totalorder %s114, %s117
    %p123 = scmp.eq.s32.totalorder %s10, 0
    %p124 = por %p122, %p123
    %p125 = scmp.ne.s32.totalorder %s114, %s117
    %p126 = scmp.eq.s32.totalorder %s15, 1
    %p127 = por %p125, %p126
    %p128 = scmp.ne.s32.totalorder %s117, %s118
    %p129 = scmp.eq.s32.totalorder %s15, 0
    %p130 = por %p128, %p129
    %p131 = scmp.ne.s32.totalorder %s117, %s118
    %p132 = scmp.eq.s32.totalorder %s16, 1
    %p133 = por %p131, %p132
    %p135 = scmp.ne.s32.totalorder %s118, %s134
    %p136 = scmp.eq.s32.totalorder %s16, 0
    %p137 = por %p135, %p136
    %p138 = scmp.le.s32.totalorder 1, %s10
    %p139 = scmp.lt.s32.totalorder %s10, 3
    %p140 = pnand %p138, %p139
    %p141 = pneg %p140
    // Predicated region
    $region9: #{fno2d_forward.18} parent=5 // pred_check
      _
    $region10: #{fno2d_forward.18} parent=5 // pred_check_branch
      %143 = sbr.rel (%p140) target = $region12
    $region11: #{fno2d_forward.18} parent=5 // pred_region
      %s144 = ssub.s32 %s10, 1
      // Predicated region
      $region13: #{fno2d_forward.18} parent=11 // pred_check
        %p145 = pneg %p57
      $region14: #{fno2d_forward.18} parent=11 // pred_check_branch
        %147 = sbr.rel (%p145) target = $region16
      $region15: #{fno2d_forward.18} parent=11 // pred_region
        _
      $region16: #{fno2d_forward.18} parent=11 // pred_fallthru
        _
      // Predicated region
      $region17: #{fno2d_forward.18} parent=11 // pred_check
        %p148 = pneg %p78
      $region18: #{fno2d_forward.18} parent=11 // pred_check_branch
        %150 = sbr.rel (%p148) target = $region20
      $region19: #{fno2d_forward.18} parent=11 // pred_region
        _
      $region20: #{fno2d_forward.18} parent=11 // pred_fallthru
        _
    $region12: #{fno2d_forward.18} parent=5 // pred_fallthru
      _
    %p151 = scmp.lt.s32.totalorder %s10, 2
    // Predicated region
    $region21: #{fno2d_forward.18} parent=5 // pred_check
      %p152 = pneg %p151
    $region22: #{fno2d_forward.18} parent=5 // pred_check_branch
      %154 = sbr.rel (%p152) target = $region24
    $region23: #{fno2d_forward.18} parent=5 // pred_region
      // Predicated region
      $region25: #{fno2d_forward.18} parent=23 // pred_check
        %p155 = pneg %p30
      $region26: #{fno2d_forward.18} parent=23 // pred_check_branch
        %157 = sbr.rel (%p155) target = $region28
      $region27: #{fno2d_forward.18} parent=23 // pred_region
        %s158 = smul.u32 4, %s10
        %p159 = scmp.lt.s32.totalorder %s158, 7
        %s160 = scalar_select %p159, %s158, 7
        %s161 = smul.addr %s160, 2
        %s162 = smul.addr %s161, 8
        %s163 = scalar_lea.vmem %s0, %s162
        %s164 = smul.u32 4, %s10
      $region28: #{fno2d_forward.18} parent=23 // pred_fallthru
        _
      // Predicated region
      $region29: #{fno2d_forward.18} parent=23 // pred_check
        %p165 = pneg %p98
      $region30: #{fno2d_forward.18} parent=23 // pred_check_branch
        %167 = sbr.rel (%p165) target = $region32
      $region31: #{fno2d_forward.18} parent=23 // pred_region
        %s168 = smul.u32 4, %s10
        %p169 = scmp.lt.s32.totalorder %s168, 7
        %s170 = scalar_select %p169, %s168, 7
        %s171 = smul.addr %s170, 2
        %s172 = smul.addr %s171, 8
        %s173 = scalar_lea.vmem %s3, %s172
        %s174 = smul.u32 4, %s10
      $region32: #{fno2d_forward.18} parent=23 // pred_fallthru
        _
    $region24: #{fno2d_forward.18} parent=5 // pred_fallthru
      _
    %p175 = scmp.le.s32.totalorder 1, %s10
    %p176 = scmp.lt.s32.totalorder %s10, 3
    %p177 = pnand %p175, %p176
    %p178 = pneg %p177
    // Predicated region
    $region33: #{fno2d_forward.18} parent=5 // pred_check
      _
    $region34: #{fno2d_forward.18} parent=5 // pred_check_branch
      %180 = sbr.rel (%p177) target = $region36
    $region35: #{fno2d_forward.18} parent=5 // pred_region
      %s181 = ssub.s32 %s10, 1
      %s182 = smul.u32 4, %s15
      %p183 = scmp.lt.s32.totalorder %s182, 7
      %s184 = scalar_select %p183, %s182, 7
      %s185 = smul.addr %s184, 2
      %s186 = smul.addr %s185, 8
      %s187 = scalar_lea.vmem %s0, %s186
      %p188 = pneg %p36
      %p189 = pneg %p33
      %p190 = pneg %p57
      %p191 = pneg %p54
      %p192 = pneg %p78
      %p193 = pneg %p75
      %s194 = smul.u32 4, %s15
      %p195 = scmp.lt.s32.totalorder %s194, 7
      %s196 = scalar_select %p195, %s194, 7
      %s197 = smul.addr %s196, 2
      %s198 = smul.addr %s197, 8
      %s199 = scalar_lea.vmem %s3, %s198
      %p200 = pneg %p104
      %p201 = pneg %p101
      %p202 = pneg %p130
      %p203 = pneg %p127
      %s204 = smul.u32 4, %s15
      %p205 = scmp.lt.s32.totalorder %s204, 7
      %s206 = scalar_select %p205, %s204, 7
      %s207 = smul.addr %s206, 2
      %s208 = smul.addr %s207, 8
      %s209 = scalar_lea.vmem %s4, %s208
      %s210 = smul.u32 4, %s15
      %p211 = scmp.lt.s32.totalorder %s210, 7
      %s212 = scalar_select %p211, %s210, 7
      %s213 = smul.addr %s212, 2
      %s214 = smul.addr %s213, 8
      %s215 = scalar_lea.vmem %s0, %s214
      %s216 = smul.u32 4, %s15
      %s217 = smul.u32 4, %s15
      %p218 = scmp.lt.s32.totalorder %s217, 7
      %s219 = scalar_select %p218, %s217, 7
      %s220 = smul.addr %s219, 2
      %s221 = smul.addr %s220, 8
      %s222 = scalar_lea.vmem %s3, %s221
      %s223 = smul.u32 4, %s15
      %s224 = smul.u32 4, %s15
      %p225 = scmp.lt.s32.totalorder %s224, 7
      %s226 = scalar_select %p225, %s224, 7
      %s227 = smul.addr %s226, 2
      %s228 = smul.addr %s227, 8
      %s229 = scalar_lea.vmem %s4, %s228
      %s230 = smul.u32 4, %s15
      %v231 = vld [vmem:[%s215] sm:$0xff]
      %v232 = vld [vmem:[%s215 + $0x8] sm:$0xff]
      %v233 = vld [vmem:[%s215 + $0x10] sm:$0xff]
      %v234 = vld [vmem:[%s215 + $0x18] sm:$0xff]
      %v235 = vld [vmem:[%s215 + $0x20] sm:$0xff]
      %v236 = vld [vmem:[%s215 + $0x28] sm:$0xff]
      %v237 = vld [vmem:[%s215 + $0x30] sm:$0xff]
      %v238 = vld [vmem:[%s215 + $0x38] sm:$0xff]
      %v239 = vld [vmem:[%s1] sm:$0xff]
      %v240 = vld [vmem:[%s1 + $0x8] sm:$0xff]
      %v241 = vld [vmem:[%s1 + $0x10] sm:$0xff]
      %v242 = vld [vmem:[%s1 + $0x18] sm:$0xff]
      %v243 = vld [vmem:[%s1 + $0x20] sm:$0xff]
      %v244 = vld [vmem:[%s1 + $0x28] sm:$0xff]
      %v245 = vld [vmem:[%s1 + $0x30] sm:$0xff]
      %v246 = vld [vmem:[%s1 + $0x38] sm:$0xff]
      %v247 = vld [vmem:[%s1 + $0x40] sm:$0xff]
      %v248 = vld [vmem:[%s1 + $0x48] sm:$0xff]
      %v249 = vld [vmem:[%s1 + $0x50] sm:$0xff]
      %v250 = vld [vmem:[%s1 + $0x58] sm:$0xff]
      %v251 = vld [vmem:[%s1 + $0x60] sm:$0xff]
      %v252 = vld [vmem:[%s1 + $0x68] sm:$0xff]
      %v253 = vld [vmem:[%s1 + $0x70] sm:$0xff]
      %v254 = vld [vmem:[%s1 + $0x78] sm:$0xff]
      %v255 = vld [vmem:[%s1 + $0x80] sm:$0xff]
      %v256 = vld [vmem:[%s1 + $0x88] sm:$0xff]
      %v257 = vld [vmem:[%s1 + $0x90] sm:$0xff]
      %v258 = vld [vmem:[%s1 + $0x98] sm:$0xff]
      %v259 = vld [vmem:[%s1 + $0xa0] sm:$0xff]
      %v260 = vld [vmem:[%s1 + $0xa8] sm:$0xff]
      %v261 = vld [vmem:[%s1 + $0xb0] sm:$0xff]
      %v262 = vld [vmem:[%s1 + $0xb8] sm:$0xff]
      %v263 = vld [vmem:[%s1 + $0xc0] sm:$0xff]
      %v264 = vld [vmem:[%s1 + $0xc8] sm:$0xff]
      %v265 = vld [vmem:[%s1 + $0xd0] sm:$0xff]
      %v266 = vld [vmem:[%s1 + $0xd8] sm:$0xff]
      %v267 = vld [vmem:[%s1 + $0xe0] sm:$0xff]
      %v268 = vld [vmem:[%s1 + $0xe8] sm:$0xff]
      %v269 = vld [vmem:[%s1 + $0xf0] sm:$0xff]
      %v270 = vld [vmem:[%s1 + $0xf8] sm:$0xff]
      %v271 = vld [vmem:[%s1 + $0x100] sm:$0xff]
      %v272 = vld [vmem:[%s1 + $0x108] sm:$0xff]
      %v273 = vld [vmem:[%s1 + $0x110] sm:$0xff]
      %v274 = vld [vmem:[%s1 + $0x118] sm:$0xff]
      %v275 = vld [vmem:[%s1 + $0x120] sm:$0xff]
      %v276 = vld [vmem:[%s1 + $0x128] sm:$0xff]
      %v277 = vld [vmem:[%s1 + $0x130] sm:$0xff]
      %v278 = vld [vmem:[%s1 + $0x138] sm:$0xff]
      %v279 = vld [vmem:[%s1 + $0x140] sm:$0xff]
      %v280 = vld [vmem:[%s1 + $0x148] sm:$0xff]
      %v281 = vld [vmem:[%s1 + $0x150] sm:$0xff]
      %v282 = vld [vmem:[%s1 + $0x158] sm:$0xff]
      %v283 = vld [vmem:[%s1 + $0x160] sm:$0xff]
      %v284 = vld [vmem:[%s1 + $0x168] sm:$0xff]
      %v285 = vld [vmem:[%s1 + $0x170] sm:$0xff]
      %v286 = vld [vmem:[%s1 + $0x178] sm:$0xff]
      %v287 = vld [vmem:[%s1 + $0x180] sm:$0xff]
      %v288 = vld [vmem:[%s1 + $0x188] sm:$0xff]
      %v289 = vld [vmem:[%s1 + $0x190] sm:$0xff]
      %v290 = vld [vmem:[%s1 + $0x198] sm:$0xff]
      %v291 = vld [vmem:[%s1 + $0x1a0] sm:$0xff]
      %v292 = vld [vmem:[%s1 + $0x1a8] sm:$0xff]
      %v293 = vld [vmem:[%s1 + $0x1b0] sm:$0xff]
      %v294 = vld [vmem:[%s1 + $0x1b8] sm:$0xff]
      %v295 = vld [vmem:[%s1 + $0x1c0] sm:$0xff]
      %v296 = vld [vmem:[%s1 + $0x1c8] sm:$0xff]
      %v297 = vld [vmem:[%s1 + $0x1d0] sm:$0xff]
      %v298 = vld [vmem:[%s1 + $0x1d8] sm:$0xff]
      %v299 = vld [vmem:[%s1 + $0x1e0] sm:$0xff]
      %v300 = vld [vmem:[%s1 + $0x1e8] sm:$0xff]
      %v301 = vld [vmem:[%s1 + $0x1f0] sm:$0xff]
      %v302 = vld [vmem:[%s1 + $0x1f8] sm:$0xff]
      %v303 = vld [vmem:[%s2] sm:$0x3]
      %v305 = vlaneseq
      %v306 = vshrl.u32 %v305, 7
      %v307 = vsub.s32 0, %v306
      %v308 = vrot.slane %v303, %v307
      %v309 = vlaneseq
      %v310 = vshrl.u32 %v309, 7
      %v311 = vsub.s32 1, %v310
      %v312 = vrot.slane %v303, %v311
      %315 = vmatprep.subr.mxu0 %v240
      %316 = vmatpush1.msra.mxu0 %v239
      %317 = vmatprep.subr.mxu0 %v242
      %318 = vmatpush1.msra.mxu0 %v241
      %319 = vmatprep.subr.mxu0 %v244
      %320 = vmatpush1.msra.mxu0 %v243
      %321 = vmatprep.subr.mxu0 %v246
      %322 = vmatpush1.msra.mxu0 %v245
      %323 = vmatprep.subr.mxu0 %v248
      %324 = vmatpush1.msra.mxu0 %v247
      %325 = vmatprep.subr.mxu0 %v250
      %326 = vmatpush1.msra.mxu0 %v249
      %327 = vmatprep.subr.mxu0 %v252
      %328 = vmatpush1.msra.mxu0 %v251
      %329 = vmatprep.subr.mxu0 %v254
      %330 = vmatpush1.msra.mxu0 %v253
      %331 = vmatprep.subr.mxu0 %v256
      %332 = vmatpush1.msra.mxu0 %v255
      %333 = vmatprep.subr.mxu0 %v258
      %334 = vmatpush1.msra.mxu0 %v257
      %335 = vmatprep.subr.mxu0 %v260
      %336 = vmatpush1.msra.mxu0 %v259
      %337 = vmatprep.subr.mxu0 %v262
      %338 = vmatpush1.msra.mxu0 %v261
      %339 = vmatprep.subr.mxu0 %v264
      %340 = vmatpush1.msra.mxu0 %v263
      %341 = vmatprep.subr.mxu0 %v266
      %342 = vmatpush1.msra.mxu0 %v265
      %343 = vmatprep.subr.mxu0 %v268
      %344 = vmatpush1.msra.mxu0 %v267
      %345 = vmatprep.subr.mxu0 %v270
      %346 = vmatpush1.msra.mxu0 %v269
      %347 = vmatprep.subr.mxu0 %v272
      %348 = vmatpush1.msra.mxu0 %v271
      %349 = vmatprep.subr.mxu0 %v274
      %350 = vmatpush1.msra.mxu0 %v273
      %351 = vmatprep.subr.mxu0 %v276
      %352 = vmatpush1.msra.mxu0 %v275
      %353 = vmatprep.subr.mxu0 %v278
      %354 = vmatpush1.msra.mxu0 %v277
      %355 = vmatprep.subr.mxu0 %v280
      %356 = vmatpush1.msra.mxu0 %v279
      %357 = vmatprep.subr.mxu0 %v282
      %358 = vmatpush1.msra.mxu0 %v281
      %359 = vmatprep.subr.mxu0 %v284
      %360 = vmatpush1.msra.mxu0 %v283
      %361 = vmatprep.subr.mxu0 %v286
      %362 = vmatpush1.msra.mxu0 %v285
      %363 = vmatprep.subr.mxu0 %v288
      %364 = vmatpush1.msra.mxu0 %v287
      %365 = vmatprep.subr.mxu0 %v290
      %366 = vmatpush1.msra.mxu0 %v289
      %367 = vmatprep.subr.mxu0 %v292
      %368 = vmatpush1.msra.mxu0 %v291
      %369 = vmatprep.subr.mxu0 %v294
      %370 = vmatpush1.msra.mxu0 %v293
      %371 = vmatprep.subr.mxu0 %v296
      %372 = vmatpush1.msra.mxu0 %v295
      %373 = vmatprep.subr.mxu0 %v298
      %374 = vmatpush1.msra.mxu0 %v297
      %375 = vmatprep.subr.mxu0 %v300
      %376 = vmatpush1.msra.mxu0 %v299
      %377 = vmatprep.subr.mxu0 %v302
      %378 = vmatpush1.msra.mxu0 %v301
      %379 = vmatprep.mubr.f32.mxu0 %v232
      %380 = vmatmul.mubr.f32.gmra.mrb[0].mxu0 %v231
      %v381 = vpop.f32.mrb[0].mxu0
      %v382 = vadd.f32 %v308, %v381
      %v383 = vpop.f32.mrb[0].mxu0
      %v384 = vadd.f32 %v312, %v383
      %385 = vmatprep.mubr.f32.mxu0 %v234
      %386 = vmatmul.mubr.f32.gmra.mrb[0].mxu0 %v233
      %v387 = vpop.f32.mrb[0].mxu0
      %v388 = vadd.f32 %v308, %v387
      %v389 = vpop.f32.mrb[0].mxu0
      %v390 = vadd.f32 %v312, %v389
      %391 = vmatprep.mubr.f32.mxu0 %v236
      %392 = vmatmul.mubr.f32.gmra.mrb[0].mxu0 %v235
      %v393 = vpop.f32.mrb[0].mxu0
      %v394 = vadd.f32 %v308, %v393
      %v395 = vpop.f32.mrb[0].mxu0
      %v396 = vadd.f32 %v312, %v395
      %397 = vmatprep.mubr.f32.mxu0 %v238
      %398 = vmatmul.mubr.f32.gmra.mrb[0].mxu0 %v237
      %v399 = vpop.f32.mrb[0].mxu0
      %v400 = vadd.f32 %v308, %v399
      %v401 = vpop.f32.mrb[0].mxu0
      %v402 = vadd.f32 %v312, %v401
      %403 = vdwg.mxu0
      %v404 = vld [vmem:[%s222] sm:$0xff]
      %v405 = vld [vmem:[%s222 + $0x8] sm:$0xff]
      %v406 = vld [vmem:[%s222 + $0x10] sm:$0xff]
      %v407 = vld [vmem:[%s222 + $0x18] sm:$0xff]
      %v408 = vld [vmem:[%s222 + $0x20] sm:$0xff]
      %v409 = vld [vmem:[%s222 + $0x28] sm:$0xff]
      %v410 = vld [vmem:[%s222 + $0x30] sm:$0xff]
      %v411 = vld [vmem:[%s222 + $0x38] sm:$0xff]
      %v412 = vadd.f32 %v382, %v404
      %v413 = vadd.f32 %v384, %v405
      %v414 = vadd.f32 %v388, %v406
      %v415 = vadd.f32 %v390, %v407
      %v416 = vadd.f32 %v394, %v408
      %v417 = vadd.f32 %v396, %v409
      %v418 = vadd.f32 %v400, %v410
      %v419 = vadd.f32 %v402, %v411
      %420 = vst [vmem:[%s229] sm:$0xff] %v412
      %421 = vst [vmem:[%s229 + $0x8] sm:$0xff] %v413
      %422 = vst [vmem:[%s229 + $0x10] sm:$0xff] %v414
      %423 = vst [vmem:[%s229 + $0x18] sm:$0xff] %v415
      %424 = vst [vmem:[%s229 + $0x20] sm:$0xff] %v416
      %425 = vst [vmem:[%s229 + $0x28] sm:$0xff] %v417
      %426 = vst [vmem:[%s229 + $0x30] sm:$0xff] %v418
      %427 = vst [vmem:[%s229 + $0x38] sm:$0xff] %v419
      %s428 = smul.u32 4, %s15
      %p429 = scmp.lt.s32.totalorder %s428, 7
      %s430 = scalar_select %p429, %s428, 7
      %s431 = smul.addr %s430, 2
      %s432 = smul.addr %s431, 8
      %s433 = scalar_lea.vmem %s4, %s432
      // Predicated region
      $region37: #{fno2d_forward.18} parent=35 // pred_check
        %p434 = pneg %p127
      $region38: #{fno2d_forward.18} parent=35 // pred_check_branch
        %436 = sbr.rel (%p434) target = $region40
      $region39: #{fno2d_forward.18} parent=35 // pred_region
        %s437 = smul.u32 4, %s15
      $region40: #{fno2d_forward.18} parent=35 // pred_fallthru
        _
    $region36: #{fno2d_forward.18} parent=5 // pred_fallthru
      _
    %p438 = scmp.le.s32.totalorder 2, %s10
    // Predicated region
    $region41: #{fno2d_forward.18} parent=5 // pred_check
      %p439 = pneg %p438
    $region42: #{fno2d_forward.18} parent=5 // pred_check_branch
      %441 = sbr.rel (%p439) target = $region44
    $region43: #{fno2d_forward.18} parent=5 // pred_region
      %s442 = ssub.s32 %s10, 2
      // Predicated region
      $region45: #{fno2d_forward.18} parent=43 // pred_check
        %p443 = pneg %p133
      $region46: #{fno2d_forward.18} parent=43 // pred_check_branch
        %445 = sbr.rel (%p443) target = $region48
      $region47: #{fno2d_forward.18} parent=43 // pred_region
        %s446 = smul.u32 4, %s16
        %p447 = scmp.lt.s32.totalorder %s446, 7
        %s448 = scalar_select %p447, %s446, 7
        %s449 = smul.addr %s448, 2
        %s450 = smul.addr %s449, 8
        %s451 = scalar_lea.vmem %s4, %s450
      $region48: #{fno2d_forward.18} parent=43 // pred_fallthru
        _
    $region44: #{fno2d_forward.18} parent=5 // pred_fallthru
      _
  $region6: #{fno2d_forward.18} parent=0 // loop_footer
    %s14 = sadd.s32 1, %s10
  $region7: #{fno2d_forward.18} parent=0 // loop_footer_branch
    %9 = sbr.rel target = $region3
  $region8: #{fno2d_forward.18} parent=0 // loop_exit
    _

// kernel: fno2d_forward.19
$region0: #{fno2d_forward.19}
  #allocation0 [shape = 'u32[]', space=smem, size = 0x4, offset = 0x4, fixed_abs, tag = 'smem constant byte address 0x4 - core index']
  #allocation1 [shape = 'u32[144,128]{1,0:T(1,128)}', space=vmem, size = 0x12000, scoped, tag = 'internal scratch']
  %s0 = inlined_call_operand.vmem [shape: f32[64,256], index: 0, kind: input, shape index: {}]
  %s1 = inlined_call_operand.vmem [shape: f32[256,1024], index: 1, kind: input, shape index: {}]
  %s2 = inlined_call_operand.vmem [shape: f32[1,1024], index: 2, kind: input, shape index: {}]
  %s3 = inlined_call_operand.vmem [shape: f32[1024,8], index: 3, kind: input, shape index: {}]
  %s4 = inlined_call_operand.vmem [shape: f32[1,8], index: 4, kind: input, shape index: {}]
  %s5 = inlined_call_operand.vmem [shape: f32[64,8], index: 5, kind: output, shape index: {}]
  %s6 = sld [smem:[#allocation0]]
  $region53: #{fno2d_forward.19} parent=0
    _
  %s8 = ssub.s32 1, %s6
  %s9 = scalar_select 0, %s8, %s6
  loop: start=0, step=1, limit=4
  $region2: #{fno2d_forward.19} parent=0 // loop_pre_header
    _
  $region3: #{fno2d_forward.19} parent=0 // loop_header
    %s11 = sphi 0, %s15
    %p12 = scmp.ge.s32.totalorder %s11, 4
    %s21 = sphi 0, %s23
    %s24 = sphi 0, %s21
    %s25 = sphi 0, %s24
    %s41 = sphi 0, %s25
    %s45 = sphi 0, %s45
    %s47 = sphi 0, %s45
    %s48 = sphi 0, %s47
    %s62 = sphi 0, %s48
    %s66 = sphi 0, %s66
    %s68 = sphi 0, %s66
    %s69 = sphi 0, %s68
    %s83 = sphi 0, %s69
    %s87 = sphi 0, %s87
    %s89 = sphi 0, %s87
    %s90 = sphi 0, %s89
    %s104 = sphi 0, %s90
    %s108 = sphi 0, %s108
    %s110 = sphi 0, %s108
    %s111 = sphi 0, %s110
    %s125 = sphi 0, %s111
    %s131 = sphi 0, %s133
    %s134 = sphi 0, %s131
    %s135 = sphi 0, %s134
    %s151 = sphi 0, %s135
  $region4: #{fno2d_forward.19} parent=0 // loop_header_branch
    %14 = sbr.rel (%p12) target = $region8
  $region5: #{fno2d_forward.19} parent=0 // loop_body
    %s16 = ssub.s32 %s11, 1
    %s17 = ssub.s32 %s11, 2
    %s18 = sadd.s32 %s11, 1
    %s19 = ssub.s32 %s11, %s18
    %p20 = scmp.eq.s32.totalorder %s19, 0
    %s22 = sadd.s32 %s21, 1
    %s23 = scalar_select %p20, %s21, %s22
    %p26 = pneg %p20
    %p27 = scmp.eq.s32.totalorder %s11, 1
    %p28 = por %p26, %p27
    %p29 = scmp.ne.s32.totalorder %s21, %s24
    %p30 = scmp.eq.s32.totalorder %s11, 0
    %p31 = por %p29, %p30
    %p32 = scmp.ne.s32.totalorder %s21, %s24
    %p33 = scmp.eq.s32.totalorder %s16, 1
    %p34 = por %p32, %p33
    %p35 = scmp.ne.s32.totalorder %s24, %s25
    %p36 = scmp.eq.s32.totalorder %s16, 0
    %p37 = por %p35, %p36
    %p38 = scmp.ne.s32.totalorder %s24, %s25
    %p39 = scmp.eq.s32.totalorder %s17, 1
    %p40 = por %p38, %p39
    %p42 = scmp.ne.s32.totalorder %s25, %s41
    %p43 = scmp.eq.s32.totalorder %s17, 0
    %p44 = por %p42, %p43
    %s46 = sadd.s32 %s45, 1
    %p49 = scmp.eq.s32.totalorder %s11, 1
    %p50 = scmp.ne.s32.totalorder %s45, %s47
    %p51 = scmp.eq.s32.totalorder %s11, 0
    %p52 = por %p50, %p51
    %p53 = scmp.ne.s32.totalorder %s45, %s47
    %p54 = scmp.eq.s32.totalorder %s16, 1
    %p55 = por %p53, %p54
    %p56 = scmp.ne.s32.totalorder %s47, %s48
    %p57 = scmp.eq.s32.totalorder %s16, 0
    %p58 = por %p56, %p57
    %p59 = scmp.ne.s32.totalorder %s47, %s48
    %p60 = scmp.eq.s32.totalorder %s17, 1
    %p61 = por %p59, %p60
    %p63 = scmp.ne.s32.totalorder %s48, %s62
    %p64 = scmp.eq.s32.totalorder %s17, 0
    %p65 = por %p63, %p64
    %s67 = sadd.s32 %s66, 1
    %p70 = scmp.eq.s32.totalorder %s11, 1
    %p71 = scmp.ne.s32.totalorder %s66, %s68
    %p72 = scmp.eq.s32.totalorder %s11, 0
    %p73 = por %p71, %p72
    %p74 = scmp.ne.s32.totalorder %s66, %s68
    %p75 = scmp.eq.s32.totalorder %s16, 1
    %p76 = por %p74, %p75
    %p77 = scmp.ne.s32.totalorder %s68, %s69
    %p78 = scmp.eq.s32.totalorder %s16, 0
    %p79 = por %p77, %p78
    %p80 = scmp.ne.s32.totalorder %s68, %s69
    %p81 = scmp.eq.s32.totalorder %s17, 1
    %p82 = por %p80, %p81
    %p84 = scmp.ne.s32.totalorder %s69, %s83
    %p85 = scmp.eq.s32.totalorder %s17, 0
    %p86 = por %p84, %p85
    %s88 = sadd.s32 %s87, 1
    %p91 = scmp.eq.s32.totalorder %s11, 1
    %p92 = scmp.ne.s32.totalorder %s87, %s89
    %p93 = scmp.eq.s32.totalorder %s11, 0
    %p94 = por %p92, %p93
    %p95 = scmp.ne.s32.totalorder %s87, %s89
    %p96 = scmp.eq.s32.totalorder %s16, 1
    %p97 = por %p95, %p96
    %p98 = scmp.ne.s32.totalorder %s89, %s90
    %p99 = scmp.eq.s32.totalorder %s16, 0
    %p100 = por %p98, %p99
    %p101 = scmp.ne.s32.totalorder %s89, %s90
    %p102 = scmp.eq.s32.totalorder %s17, 1
    %p103 = por %p101, %p102
    %p105 = scmp.ne.s32.totalorder %s90, %s104
    %p106 = scmp.eq.s32.totalorder %s17, 0
    %p107 = por %p105, %p106
    %s109 = sadd.s32 %s108, 1
    %p112 = scmp.eq.s32.totalorder %s11, 1
    %p113 = scmp.ne.s32.totalorder %s108, %s110
    %p114 = scmp.eq.s32.totalorder %s11, 0
    %p115 = por %p113, %p114
    %p116 = scmp.ne.s32.totalorder %s108, %s110
    %p117 = scmp.eq.s32.totalorder %s16, 1
    %p118 = por %p116, %p117
    %p119 = scmp.ne.s32.totalorder %s110, %s111
    %p120 = scmp.eq.s32.totalorder %s16, 0
    %p121 = por %p119, %p120
    %p122 = scmp.ne.s32.totalorder %s110, %s111
    %p123 = scmp.eq.s32.totalorder %s17, 1
    %p124 = por %p122, %p123
    %p126 = scmp.ne.s32.totalorder %s111, %s125
    %p127 = scmp.eq.s32.totalorder %s17, 0
    %p128 = por %p126, %p127
    %s129 = ssub.s32 %s11, %s18
    %p130 = scmp.eq.s32.totalorder %s129, 0
    %s132 = sadd.s32 %s131, 1
    %s133 = scalar_select %p130, %s131, %s132
    %p136 = pneg %p130
    %p137 = scmp.eq.s32.totalorder %s11, 1
    %p138 = por %p136, %p137
    %p139 = scmp.ne.s32.totalorder %s131, %s134
    %p140 = scmp.eq.s32.totalorder %s11, 0
    %p141 = por %p139, %p140
    %p142 = scmp.ne.s32.totalorder %s131, %s134
    %p143 = scmp.eq.s32.totalorder %s16, 1
    %p144 = por %p142, %p143
    %p145 = scmp.ne.s32.totalorder %s134, %s135
    %p146 = scmp.eq.s32.totalorder %s16, 0
    %p147 = por %p145, %p146
    %p148 = scmp.ne.s32.totalorder %s134, %s135
    %p149 = scmp.eq.s32.totalorder %s17, 1
    %p150 = por %p148, %p149
    %p152 = scmp.ne.s32.totalorder %s135, %s151
    %p153 = scmp.eq.s32.totalorder %s17, 0
    %p154 = por %p152, %p153
    %p155 = scmp.le.s32.totalorder 1, %s11
    %p156 = scmp.lt.s32.totalorder %s11, 3
    %p157 = pnand %p155, %p156
    %p158 = pneg %p157
    // Predicated region
    $region9: #{fno2d_forward.19} parent=5 // pred_check
      _
    $region10: #{fno2d_forward.19} parent=5 // pred_check_branch
      %160 = sbr.rel (%p157) target = $region12
    $region11: #{fno2d_forward.19} parent=5 // pred_region
      %s161 = ssub.s32 %s11, 1
      // Predicated region
      $region13: #{fno2d_forward.19} parent=11 // pred_check
        %p162 = pneg %p58
      $region14: #{fno2d_forward.19} parent=11 // pred_check_branch
        %164 = sbr.rel (%p162) target = $region16
      $region15: #{fno2d_forward.19} parent=11 // pred_region
        _
      $region16: #{fno2d_forward.19} parent=11 // pred_fallthru
        _
      // Predicated region
      $region17: #{fno2d_forward.19} parent=11 // pred_check
        %p165 = pneg %p79
      $region18: #{fno2d_forward.19} parent=11 // pred_check_branch
        %167 = sbr.rel (%p165) target = $region20
      $region19: #{fno2d_forward.19} parent=11 // pred_region
        _
      $region20: #{fno2d_forward.19} parent=11 // pred_fallthru
        _
      // Predicated region
      $region21: #{fno2d_forward.19} parent=11 // pred_check
        %p168 = pneg %p100
      $region22: #{fno2d_forward.19} parent=11 // pred_check_branch
        %170 = sbr.rel (%p168) target = $region24
      $region23: #{fno2d_forward.19} parent=11 // pred_region
        _
      $region24: #{fno2d_forward.19} parent=11 // pred_fallthru
        _
      // Predicated region
      $region25: #{fno2d_forward.19} parent=11 // pred_check
        %p171 = pneg %p121
      $region26: #{fno2d_forward.19} parent=11 // pred_check_branch
        %173 = sbr.rel (%p171) target = $region28
      $region27: #{fno2d_forward.19} parent=11 // pred_region
        _
      $region28: #{fno2d_forward.19} parent=11 // pred_fallthru
        _
    $region12: #{fno2d_forward.19} parent=5 // pred_fallthru
      _
    %p174 = scmp.lt.s32.totalorder %s11, 2
    // Predicated region
    $region29: #{fno2d_forward.19} parent=5 // pred_check
      %p175 = pneg %p174
    $region30: #{fno2d_forward.19} parent=5 // pred_check_branch
      %177 = sbr.rel (%p175) target = $region32
    $region31: #{fno2d_forward.19} parent=5 // pred_region
      // Predicated region
      $region33: #{fno2d_forward.19} parent=31 // pred_check
        %p178 = pneg %p31
      $region34: #{fno2d_forward.19} parent=31 // pred_check_branch
        %180 = sbr.rel (%p178) target = $region36
      $region35: #{fno2d_forward.19} parent=31 // pred_region
        %s181 = smul.u32 4, %s11
        %p182 = scmp.lt.s32.totalorder %s181, 7
        %s183 = scalar_select %p182, %s181, 7
        %s184 = smul.addr %s183, 2
        %s185 = smul.addr %s184, 8
        %s186 = scalar_lea.vmem %s0, %s185
        %s187 = smul.u32 4, %s11
      $region36: #{fno2d_forward.19} parent=31 // pred_fallthru
        _
    $region32: #{fno2d_forward.19} parent=5 // pred_fallthru
      _
    %p188 = scmp.le.s32.totalorder 1, %s11
    %p189 = scmp.lt.s32.totalorder %s11, 3
    %p190 = pnand %p188, %p189
    %p191 = pneg %p190
    // Predicated region
    $region37: #{fno2d_forward.19} parent=5 // pred_check
      _
    $region38: #{fno2d_forward.19} parent=5 // pred_check_branch
      %193 = sbr.rel (%p190) target = $region40
    $region39: #{fno2d_forward.19} parent=5 // pred_region
      %s194 = ssub.s32 %s11, 1
      %s195 = smul.u32 4, %s16
      %p196 = scmp.lt.s32.totalorder %s195, 7
      %s197 = scalar_select %p196, %s195, 7
      %s198 = smul.addr %s197, 2
      %s199 = smul.addr %s198, 8
      %s200 = scalar_lea.vmem %s0, %s199
      %p201 = pneg %p37
      %p202 = pneg %p34
      %p203 = pneg %p58
      %p204 = pneg %p55
      %p205 = pneg %p79
      %p206 = pneg %p76
      %p207 = pneg %p100
      %p208 = pneg %p97
      %p209 = pneg %p121
      %p210 = pneg %p118
      %p211 = pneg %p147
      %p212 = pneg %p144
      %s213 = smul.u32 4, %s16
      %p214 = scmp.lt.s32.totalorder %s213, 7
      %s215 = scalar_select %p214, %s213, 7
      %s216 = smul.addr %s215, 8
      %s217 = scalar_lea.vmem %s5, %s216
      %s218 = smul.u32 4, %s16
      %p219 = scmp.lt.s32.totalorder %s218, 7
      %s220 = scalar_select %p219, %s218, 7
      %s221 = smul.addr %s220, 2
      %s222 = smul.addr %s221, 8
      %s223 = scalar_lea.vmem %s0, %s222
      %s224 = smul.u32 4, %s16
      %s225 = smul.u32 4, %s16
      %p226 = scmp.lt.s32.totalorder %s225, 7
      %s227 = scalar_select %p226, %s225, 7
      %s228 = smul.addr %s227, 8
      %s229 = scalar_lea.vmem %s5, %s228
      %s230 = smul.u32 4, %s16
      %v231 = vld [vmem:[%s223] sm:$0xff]
      %v232 = vld [vmem:[%s223 + $0x8] sm:$0xff]
      %v233 = vld [vmem:[%s223 + $0x10] sm:$0xff]
      %v234 = vld [vmem:[%s223 + $0x18] sm:$0xff]
      %v235 = vld [vmem:[%s223 + $0x20] sm:$0xff]
      %v236 = vld [vmem:[%s223 + $0x28] sm:$0xff]
      %v237 = vld [vmem:[%s223 + $0x30] sm:$0xff]
      %v238 = vld [vmem:[%s223 + $0x38] sm:$0xff]
      %v239 = vld [vmem:[%s1] sm:$0xff]
      %v240 = vld [vmem:[%s1 + $0x8] sm:$0xff]
      %v241 = vld [vmem:[%s1 + $0x10] sm:$0xff]
      %v242 = vld [vmem:[%s1 + $0x18] sm:$0xff]
      %v243 = vld [vmem:[%s1 + $0x20] sm:$0xff]
      %v244 = vld [vmem:[%s1 + $0x28] sm:$0xff]
      %v245 = vld [vmem:[%s1 + $0x30] sm:$0xff]
      %v246 = vld [vmem:[%s1 + $0x38] sm:$0xff]
      %v247 = vld [vmem:[%s1 + $0x40] sm:$0xff]
      %v248 = vld [vmem:[%s1 + $0x48] sm:$0xff]
      %v249 = vld [vmem:[%s1 + $0x50] sm:$0xff]
      %v250 = vld [vmem:[%s1 + $0x58] sm:$0xff]
      %v251 = vld [vmem:[%s1 + $0x60] sm:$0xff]
      %v252 = vld [vmem:[%s1 + $0x68] sm:$0xff]
      %v253 = vld [vmem:[%s1 + $0x70] sm:$0xff]
      %v254 = vld [vmem:[%s1 + $0x78] sm:$0xff]
      %v255 = vld [vmem:[%s1 + $0x80] sm:$0xff]
      %v256 = vld [vmem:[%s1 + $0x88] sm:$0xff]
      %v257 = vld [vmem:[%s1 + $0x90] sm:$0xff]
      %v258 = vld [vmem:[%s1 + $0x98] sm:$0xff]
      %v259 = vld [vmem:[%s1 + $0xa0] sm:$0xff]
      %v260 = vld [vmem:[%s1 + $0xa8] sm:$0xff]
      %v261 = vld [vmem:[%s1 + $0xb0] sm:$0xff]
      %v262 = vld [vmem:[%s1 + $0xb8] sm:$0xff]
      %v263 = vld [vmem:[%s1 + $0xc0] sm:$0xff]
      %v264 = vld [vmem:[%s1 + $0xc8] sm:$0xff]
      %v265 = vld [vmem:[%s1 + $0xd0] sm:$0xff]
      %v266 = vld [vmem:[%s1 + $0xd8] sm:$0xff]
      %v267 = vld [vmem:[%s1 + $0xe0] sm:$0xff]
      %v268 = vld [vmem:[%s1 + $0xe8] sm:$0xff]
      %v269 = vld [vmem:[%s1 + $0xf0] sm:$0xff]
      %v270 = vld [vmem:[%s1 + $0xf8] sm:$0xff]
      %v271 = vld [vmem:[%s1 + $0x100] sm:$0xff]
      %v272 = vld [vmem:[%s1 + $0x108] sm:$0xff]
      %v273 = vld [vmem:[%s1 + $0x110] sm:$0xff]
      %v274 = vld [vmem:[%s1 + $0x118] sm:$0xff]
      %v275 = vld [vmem:[%s1 + $0x120] sm:$0xff]
      %v276 = vld [vmem:[%s1 + $0x128] sm:$0xff]
      %v277 = vld [vmem:[%s1 + $0x130] sm:$0xff]
      %v278 = vld [vmem:[%s1 + $0x138] sm:$0xff]
      %v279 = vld [vmem:[%s1 + $0x140] sm:$0xff]
      %v280 = vld [vmem:[%s1 + $0x148] sm:$0xff]
      %v281 = vld [vmem:[%s1 + $0x150] sm:$0xff]
      %v282 = vld [vmem:[%s1 + $0x158] sm:$0xff]
      %v283 = vld [vmem:[%s1 + $0x160] sm:$0xff]
      %v284 = vld [vmem:[%s1 + $0x168] sm:$0xff]
      %v285 = vld [vmem:[%s1 + $0x170] sm:$0xff]
      %v286 = vld [vmem:[%s1 + $0x178] sm:$0xff]
      %v287 = vld [vmem:[%s1 + $0x180] sm:$0xff]
      %v288 = vld [vmem:[%s1 + $0x188] sm:$0xff]
      %v289 = vld [vmem:[%s1 + $0x190] sm:$0xff]
      %v290 = vld [vmem:[%s1 + $0x198] sm:$0xff]
      %v291 = vld [vmem:[%s1 + $0x1a0] sm:$0xff]
      %v292 = vld [vmem:[%s1 + $0x1a8] sm:$0xff]
      %v293 = vld [vmem:[%s1 + $0x1b0] sm:$0xff]
      %v294 = vld [vmem:[%s1 + $0x1b8] sm:$0xff]
      %v295 = vld [vmem:[%s1 + $0x1c0] sm:$0xff]
      %v296 = vld [vmem:[%s1 + $0x1c8] sm:$0xff]
      %v297 = vld [vmem:[%s1 + $0x1d0] sm:$0xff]
      %v298 = vld [vmem:[%s1 + $0x1d8] sm:$0xff]
      %v299 = vld [vmem:[%s1 + $0x1e0] sm:$0xff]
      %v300 = vld [vmem:[%s1 + $0x1e8] sm:$0xff]
      %v301 = vld [vmem:[%s1 + $0x1f0] sm:$0xff]
      %v302 = vld [vmem:[%s1 + $0x1f8] sm:$0xff]
      %v303 = vld [vmem:[%s1 + $0x200] sm:$0xff]
      %v304 = vld [vmem:[%s1 + $0x208] sm:$0xff]
      %v305 = vld [vmem:[%s1 + $0x210] sm:$0xff]
      %v306 = vld [vmem:[%s1 + $0x218] sm:$0xff]
      %v307 = vld [vmem:[%s1 + $0x220] sm:$0xff]
      %v308 = vld [vmem:[%s1 + $0x228] sm:$0xff]
      %v309 = vld [vmem:[%s1 + $0x230] sm:$0xff]
      %v310 = vld [vmem:[%s1 + $0x238] sm:$0xff]
      %v311 = vld [vmem:[%s1 + $0x240] sm:$0xff]
      %v312 = vld [vmem:[%s1 + $0x248] sm:$0xff]
      %v313 = vld [vmem:[%s1 + $0x250] sm:$0xff]
      %v314 = vld [vmem:[%s1 + $0x258] sm:$0xff]
      %v315 = vld [vmem:[%s1 + $0x260] sm:$0xff]
      %v316 = vld [vmem:[%s1 + $0x268] sm:$0xff]
      %v317 = vld [vmem:[%s1 + $0x270] sm:$0xff]
      %v318 = vld [vmem:[%s1 + $0x278] sm:$0xff]
      %v319 = vld [vmem:[%s1 + $0x280] sm:$0xff]
      %v320 = vld [vmem:[%s1 + $0x288] sm:$0xff]
      %v321 = vld [vmem:[%s1 + $0x290] sm:$0xff]
      %v322 = vld [vmem:[%s1 + $0x298] sm:$0xff]
      %v323 = vld [vmem:[%s1 + $0x2a0] sm:$0xff]
      %v324 = vld [vmem:[%s1 + $0x2a8] sm:$0xff]
      %v325 = vld [vmem:[%s1 + $0x2b0] sm:$0xff]
      %v326 = vld [vmem:[%s1 + $0x2b8] sm:$0xff]
      %v327 = vld [vmem:[%s1 + $0x2c0] sm:$0xff]
      %v328 = vld [vmem:[%s1 + $0x2c8] sm:$0xff]
      %v329 = vld [vmem:[%s1 + $0x2d0] sm:$0xff]
      %v330 = vld [vmem:[%s1 + $0x2d8] sm:$0xff]
      %v331 = vld [vmem:[%s1 + $0x2e0] sm:$0xff]
      %v332 = vld [vmem:[%s1 + $0x2e8] sm:$0xff]
      %v333 = vld [vmem:[%s1 + $0x2f0] sm:$0xff]
      %v334 = vld [vmem:[%s1 + $0x2f8] sm:$0xff]
      %v335 = vld [vmem:[%s1 + $0x300] sm:$0xff]
      %v336 = vld [vmem:[%s1 + $0x308] sm:$0xff]
      %v337 = vld [vmem:[%s1 + $0x310] sm:$0xff]
      %v338 = vld [vmem:[%s1 + $0x318] sm:$0xff]
      %v339 = vld [vmem:[%s1 + $0x320] sm:$0xff]
      %v340 = vld [vmem:[%s1 + $0x328] sm:$0xff]
      %v341 = vld [vmem:[%s1 + $0x330] sm:$0xff]
      %v342 = vld [vmem:[%s1 + $0x338] sm:$0xff]
      %v343 = vld [vmem:[%s1 + $0x340] sm:$0xff]
      %v344 = vld [vmem:[%s1 + $0x348] sm:$0xff]
      %v345 = vld [vmem:[%s1 + $0x350] sm:$0xff]
      %v346 = vld [vmem:[%s1 + $0x358] sm:$0xff]
      %v347 = vld [vmem:[%s1 + $0x360] sm:$0xff]
      %v348 = vld [vmem:[%s1 + $0x368] sm:$0xff]
      %v349 = vld [vmem:[%s1 + $0x370] sm:$0xff]
      %v350 = vld [vmem:[%s1 + $0x378] sm:$0xff]
      %v351 = vld [vmem:[%s1 + $0x380] sm:$0xff]
      %v352 = vld [vmem:[%s1 + $0x388] sm:$0xff]
      %v353 = vld [vmem:[%s1 + $0x390] sm:$0xff]
      %v354 = vld [vmem:[%s1 + $0x398] sm:$0xff]
      %v355 = vld [vmem:[%s1 + $0x3a0] sm:$0xff]
      %v356 = vld [vmem:[%s1 + $0x3a8] sm:$0xff]
      %v357 = vld [vmem:[%s1 + $0x3b0] sm:$0xff]
      %v358 = vld [vmem:[%s1 + $0x3b8] sm:$0xff]
      %v359 = vld [vmem:[%s1 + $0x3c0] sm:$0xff]
      %v360 = vld [vmem:[%s1 + $0x3c8] sm:$0xff]
      %v361 = vld [vmem:[%s1 + $0x3d0] sm:$0xff]
      %v362 = vld [vmem:[%s1 + $0x3d8] sm:$0xff]
      %v363 = vld [vmem:[%s1 + $0x3e0] sm:$0xff]
      %v364 = vld [vmem:[%s1 + $0x3e8] sm:$0xff]
      %v365 = vld [vmem:[%s1 + $0x3f0] sm:$0xff]
      %v366 = vld [vmem:[%s1 + $0x3f8] sm:$0xff]
      %v367 = vld [vmem:[%s1 + $0x400] sm:$0xff]
      %v368 = vld [vmem:[%s1 + $0x408] sm:$0xff]
      %v369 = vld [vmem:[%s1 + $0x410] sm:$0xff]
      %v370 = vld [vmem:[%s1 + $0x418] sm:$0xff]
      %v371 = vld [vmem:[%s1 + $0x420] sm:$0xff]
      %v372 = vld [vmem:[%s1 + $0x428] sm:$0xff]
      %v373 = vld [vmem:[%s1 + $0x430] sm:$0xff]
      %v374 = vld [vmem:[%s1 + $0x438] sm:$0xff]
      %v375 = vld [vmem:[%s1 + $0x440] sm:$0xff]
      %v376 = vld [vmem:[%s1 + $0x448] sm:$0xff]
      %v377 = vld [vmem:[%s1 + $0x450] sm:$0xff]
      %v378 = vld [vmem:[%s1 + $0x458] sm:$0xff]
      %v379 = vld [vmem:[%s1 + $0x460] sm:$0xff]
      %v380 = vld [vmem:[%s1 + $0x468] sm:$0xff]
      %v381 = vld [vmem:[%s1 + $0x470] sm:$0xff]
      %v382 = vld [vmem:[%s1 + $0x478] sm:$0xff]
      %v383 = vld [vmem:[%s1 + $0x480] sm:$0xff]
      %v384 = vld [vmem:[%s1 + $0x488] sm:$0xff]
      %v385 = vld [vmem:[%s1 + $0x490] sm:$0xff]
      %v386 = vld [vmem:[%s1 + $0x498] sm:$0xff]
      %v387 = vld [vmem:[%s1 + $0x4a0] sm:$0xff]
      %v388 = vld [vmem:[%s1 + $0x4a8] sm:$0xff]
      %v389 = vld [vmem:[%s1 + $0x4b0] sm:$0xff]
      %v390 = vld [vmem:[%s1 + $0x4b8] sm:$0xff]
      %v391 = vld [vmem:[%s1 + $0x4c0] sm:$0xff]
      %v392 = vld [vmem:[%s1 + $0x4c8] sm:$0xff]
      %v393 = vld [vmem:[%s1 + $0x4d0] sm:$0xff]
      %v394 = vld [vmem:[%s1 + $0x4d8] sm:$0xff]
      %v395 = vld [vmem:[%s1 + $0x4e0] sm:$0xff]
      %v396 = vld [vmem:[%s1 + $0x4e8] sm:$0xff]
      %v397 = vld [vmem:[%s1 + $0x4f0] sm:$0xff]
      %v398 = vld [vmem:[%s1 + $0x4f8] sm:$0xff]
      %v399 = vld [vmem:[%s1 + $0x500] sm:$0xff]
      %v400 = vld [vmem:[%s1 + $0x508] sm:$0xff]
      %v401 = vld [vmem:[%s1 + $0x510] sm:$0xff]
      %v402 = vld [vmem:[%s1 + $0x518] sm:$0xff]
      %v403 = vld [vmem:[%s1 + $0x520] sm:$0xff]
      %v404 = vld [vmem:[%s1 + $0x528] sm:$0xff]
      %v405 = vld [vmem:[%s1 + $0x530] sm:$0xff]
      %v406 = vld [vmem:[%s1 + $0x538] sm:$0xff]
      %v407 = vld [vmem:[%s1 + $0x540] sm:$0xff]
      %v408 = vld [vmem:[%s1 + $0x548] sm:$0xff]
      %v409 = vld [vmem:[%s1 + $0x550] sm:$0xff]
      %v410 = vld [vmem:[%s1 + $0x558] sm:$0xff]
      %v411 = vld [vmem:[%s1 + $0x560] sm:$0xff]
      %v412 = vld [vmem:[%s1 + $0x568] sm:$0xff]
      %v413 = vld [vmem:[%s1 + $0x570] sm:$0xff]
      %v414 = vld [vmem:[%s1 + $0x578] sm:$0xff]
      %v415 = vld [vmem:[%s1 + $0x580] sm:$0xff]
      %v416 = vld [vmem:[%s1 + $0x588] sm:$0xff]
      %v417 = vld [vmem:[%s1 + $0x590] sm:$0xff]
      %v418 = vld [vmem:[%s1 + $0x598] sm:$0xff]
      %v419 = vld [vmem:[%s1 + $0x5a0] sm:$0xff]
      %v420 = vld [vmem:[%s1 + $0x5a8] sm:$0xff]
      %v421 = vld [vmem:[%s1 + $0x5b0] sm:$0xff]
      %v422 = vld [vmem:[%s1 + $0x5b8] sm:$0xff]
      %v423 = vld [vmem:[%s1 + $0x5c0] sm:$0xff]
      %v424 = vld [vmem:[%s1 + $0x5c8] sm:$0xff]
      %v425 = vld [vmem:[%s1 + $0x5d0] sm:$0xff]
      %v426 = vld [vmem:[%s1 + $0x5d8] sm:$0xff]
      %v427 = vld [vmem:[%s1 + $0x5e0] sm:$0xff]
      %v428 = vld [vmem:[%s1 + $0x5e8] sm:$0xff]
      %v429 = vld [vmem:[%s1 + $0x5f0] sm:$0xff]
      %v430 = vld [vmem:[%s1 + $0x5f8] sm:$0xff]
      %v431 = vld [vmem:[%s1 + $0x600] sm:$0xff]
      %v432 = vld [vmem:[%s1 + $0x608] sm:$0xff]
      %v433 = vld [vmem:[%s1 + $0x610] sm:$0xff]
      %v434 = vld [vmem:[%s1 + $0x618] sm:$0xff]
      %v435 = vld [vmem:[%s1 + $0x620] sm:$0xff]
      %v436 = vld [vmem:[%s1 + $0x628] sm:$0xff]
      %v437 = vld [vmem:[%s1 + $0x630] sm:$0xff]
      %v438 = vld [vmem:[%s1 + $0x638] sm:$0xff]
      %v439 = vld [vmem:[%s1 + $0x640] sm:$0xff]
      %v440 = vld [vmem:[%s1 + $0x648] sm:$0xff]
      %v441 = vld [vmem:[%s1 + $0x650] sm:$0xff]
      %v442 = vld [vmem:[%s1 + $0x658] sm:$0xff]
      %v443 = vld [vmem:[%s1 + $0x660] sm:$0xff]
      %v444 = vld [vmem:[%s1 + $0x668] sm:$0xff]
      %v445 = vld [vmem:[%s1 + $0x670] sm:$0xff]
      %v446 = vld [vmem:[%s1 + $0x678] sm:$0xff]
      %v447 = vld [vmem:[%s1 + $0x680] sm:$0xff]
      %v448 = vld [vmem:[%s1 + $0x688] sm:$0xff]
      %v449 = vld [vmem:[%s1 + $0x690] sm:$0xff]
      %v450 = vld [vmem:[%s1 + $0x698] sm:$0xff]
      %v451 = vld [vmem:[%s1 + $0x6a0] sm:$0xff]
      %v452 = vld [vmem:[%s1 + $0x6a8] sm:$0xff]
      %v453 = vld [vmem:[%s1 + $0x6b0] sm:$0xff]
      %v454 = vld [vmem:[%s1 + $0x6b8] sm:$0xff]
      %v455 = vld [vmem:[%s1 + $0x6c0] sm:$0xff]
      %v456 = vld [vmem:[%s1 + $0x6c8] sm:$0xff]
      %v457 = vld [vmem:[%s1 + $0x6d0] sm:$0xff]
      %v458 = vld [vmem:[%s1 + $0x6d8] sm:$0xff]
      %v459 = vld [vmem:[%s1 + $0x6e0] sm:$0xff]
      %v460 = vld [vmem:[%s1 + $0x6e8] sm:$0xff]
      %v461 = vld [vmem:[%s1 + $0x6f0] sm:$0xff]
      %v462 = vld [vmem:[%s1 + $0x6f8] sm:$0xff]
      %v463 = vld [vmem:[%s1 + $0x700] sm:$0xff]
      %v464 = vld [vmem:[%s1 + $0x708] sm:$0xff]
      %v465 = vld [vmem:[%s1 + $0x710] sm:$0xff]
      %v466 = vld [vmem:[%s1 + $0x718] sm:$0xff]
      %v467 = vld [vmem:[%s1 + $0x720] sm:$0xff]
      %v468 = vld [vmem:[%s1 + $0x728] sm:$0xff]
      %v469 = vld [vmem:[%s1 + $0x730] sm:$0xff]
      %v470 = vld [vmem:[%s1 + $0x738] sm:$0xff]
      %v471 = vld [vmem:[%s1 + $0x740] sm:$0xff]
      %v472 = vld [vmem:[%s1 + $0x748] sm:$0xff]
      %v473 = vld [vmem:[%s1 + $0x750] sm:$0xff]
      %v474 = vld [vmem:[%s1 + $0x758] sm:$0xff]
      %v475 = vld [vmem:[%s1 + $0x760] sm:$0xff]
      %v476 = vld [vmem:[%s1 + $0x768] sm:$0xff]
      %v477 = vld [vmem:[%s1 + $0x770] sm:$0xff]
      %v478 = vld [vmem:[%s1 + $0x778] sm:$0xff]
      %v479 = vld [vmem:[%s1 + $0x780] sm:$0xff]
      %v480 = vld [vmem:[%s1 + $0x788] sm:$0xff]
      %v481 = vld [vmem:[%s1 + $0x790] sm:$0xff]
      %v482 = vld [vmem:[%s1 + $0x798] sm:$0xff]
      %v483 = vld [vmem:[%s1 + $0x7a0] sm:$0xff]
      %v484 = vld [vmem:[%s1 + $0x7a8] sm:$0xff]
      %v485 = vld [vmem:[%s1 + $0x7b0] sm:$0xff]
      %v486 = vld [vmem:[%s1 + $0x7b8] sm:$0xff]
      %v487 = vld [vmem:[%s1 + $0x7c0] sm:$0xff]
      %v488 = vld [vmem:[%s1 + $0x7c8] sm:$0xff]
      %v489 = vld [vmem:[%s1 + $0x7d0] sm:$0xff]
      %v490 = vld [vmem:[%s1 + $0x7d8] sm:$0xff]
      %v491 = vld [vmem:[%s1 + $0x7e0] sm:$0xff]
      %v492 = vld [vmem:[%s1 + $0x7e8] sm:$0xff]
      %v493 = vld [vmem:[%s1 + $0x7f0] sm:$0xff]
      %v494 = vld [vmem:[%s1 + $0x7f8] sm:$0xff]
      %v495 = vld [vmem:[%s2] sm:$0xff]
      %v497 = vlaneseq
      %v498 = vshrl.u32 %v497, 7
      %v499 = vsub.s32 0, %v498
      %v500 = vrot.slane %v495, %v499
      %v501 = vlaneseq
      %v502 = vshrl.u32 %v501, 7
      %v503 = vsub.s32 1, %v502
      %v504 = vrot.slane %v495, %v503
      %v505 = vlaneseq
      %v506 = vshrl.u32 %v505, 7
      %v507 = vsub.s32 2, %v506
      %v508 = vrot.slane %v495, %v507
      %v509 = vlaneseq
      %v510 = vshrl.u32 %v509, 7
      %v511 = vsub.s32 3, %v510
      %v512 = vrot.slane %v495, %v511
      %v513 = vlaneseq
      %v514 = vshrl.u32 %v513, 7
      %v515 = vsub.s32 4, %v514
      %v516 = vrot.slane %v495, %v515
      %v517 = vlaneseq
      %v518 = vshrl.u32 %v517, 7
      %v519 = vsub.s32 5, %v518
      %v520 = vrot.slane %v495, %v519
      %v521 = vlaneseq
      %v522 = vshrl.u32 %v521, 7
      %v523 = vsub.s32 6, %v522
      %v524 = vrot.slane %v495, %v523
      %v525 = vlaneseq
      %v526 = vshrl.u32 %v525, 7
      %v527 = vsub.s32 7, %v526
      %v528 = vrot.slane %v495, %v527
      %537 = vmatprep.subr.mxu0 %v240
      %538 = vmatpush1.msra.mxu0 %v239
      %539 = vmatprep.subr.mxu0 %v248
      %540 = vmatpush1.msra.mxu0 %v247
      %541 = vmatprep.subr.mxu0 %v256
      %542 = vmatpush1.msra.mxu0 %v255
      %543 = vmatprep.subr.mxu0 %v264
      %544 = vmatpush1.msra.mxu0 %v263
      %545 = vmatprep.subr.mxu0 %v272
      %546 = vmatpush1.msra.mxu0 %v271
      %547 = vmatprep.subr.mxu0 %v280
      %548 = vmatpush1.msra.mxu0 %v279
      %549 = vmatprep.subr.mxu0 %v288
      %550 = vmatpush1.msra.mxu0 %v287
      %551 = vmatprep.subr.mxu0 %v296
      %552 = vmatpush1.msra.mxu0 %v295
      %553 = vmatprep.subr.mxu0 %v304
      %554 = vmatpush1.msra.mxu0 %v303
      %555 = vmatprep.subr.mxu0 %v312
      %556 = vmatpush1.msra.mxu0 %v311
      %557 = vmatprep.subr.mxu0 %v320
      %558 = vmatpush1.msra.mxu0 %v319
      %559 = vmatprep.subr.mxu0 %v328
      %560 = vmatpush1.msra.mxu0 %v327
      %561 = vmatprep.subr.mxu0 %v336
      %562 = vmatpush1.msra.mxu0 %v335
      %563 = vmatprep.subr.mxu0 %v344
      %564 = vmatpush1.msra.mxu0 %v343
      %565 = vmatprep.subr.mxu0 %v352
      %566 = vmatpush1.msra.mxu0 %v351
      %567 = vmatprep.subr.mxu0 %v360
      %568 = vmatpush1.msra.mxu0 %v359
      %569 = vmatprep.subr.mxu0 %v368
      %570 = vmatpush1.msra.mxu0 %v367
      %571 = vmatprep.subr.mxu0 %v376
      %572 = vmatpush1.msra.mxu0 %v375
      %573 = vmatprep.subr.mxu0 %v384
      %574 = vmatpush1.msra.mxu0 %v383
      %575 = vmatprep.subr.mxu0 %v392
      %576 = vmatpush1.msra.mxu0 %v391
      %577 = vmatprep.subr.mxu0 %v400
      %578 = vmatpush1.msra.mxu0 %v399
      %579 = vmatprep.subr.mxu0 %v408
      %580 = vmatpush1.msra.mxu0 %v407
      %581 = vmatprep.subr.mxu0 %v416
      %582 = vmatpush1.msra.mxu0 %v415
      %583 = vmatprep.subr.mxu0 %v424
      %584 = vmatpush1.msra.mxu0 %v423
      %585 = vmatprep.subr.mxu0 %v432
      %586 = vmatpush1.msra.mxu0 %v431
      %587 = vmatprep.subr.mxu0 %v440
      %588 = vmatpush1.msra.mxu0 %v439
      %589 = vmatprep.subr.mxu0 %v448
      %590 = vmatpush1.msra.mxu0 %v447
      %591 = vmatprep.subr.mxu0 %v456
      %592 = vmatpush1.msra.mxu0 %v455
      %593 = vmatprep.subr.mxu0 %v464
      %594 = vmatpush1.msra.mxu0 %v463
      %595 = vmatprep.subr.mxu0 %v472
      %596 = vmatpush1.msra.mxu0 %v471
      %597 = vmatprep.subr.mxu0 %v480
      %598 = vmatpush1.msra.mxu0 %v479
      %599 = vmatprep.subr.mxu0 %v488
      %600 = vmatpush1.msra.mxu0 %v487
      %601 = vmatprep.mubr.f32.mxu0 %v232
      %602 = vmatmul.mubr.f32.gmra.mrb[0].mxu0 %v231
      %v603 = vpop.f32.mrb[0].mxu0
      %v604 = vadd.f32 %v500, %v603
      %v605 = vpop.f32.mrb[0].mxu0
      %v606 = vadd.f32 %v504, %v605
      %607 = vmatprep.mubr.f32.mxu0 %v234
      %608 = vmatmul.mubr.f32.gmra.mrb[0].mxu0 %v233
      %v609 = vpop.f32.mrb[0].mxu0
      %v610 = vadd.f32 %v500, %v609
      %v611 = vpop.f32.mrb[0].mxu0
      %v612 = vadd.f32 %v504, %v611
      %613 = vmatprep.mubr.f32.mxu0 %v236
      %614 = vmatmul.mubr.f32.gmra.mrb[0].mxu0 %v235
      %v615 = vpop.f32.mrb[0].mxu0
      %v616 = vadd.f32 %v500, %v615
      %v617 = vpop.f32.mrb[0].mxu0
      %v618 = vadd.f32 %v504, %v617
      %619 = vmatprep.mubr.f32.mxu0 %v238
      %620 = vmatmul.mubr.f32.gmra.mrb[0].mxu0 %v237
      %v621 = vpop.f32.mrb[0].mxu0
      %v622 = vadd.f32 %v500, %v621
      %v623 = vpop.f32.mrb[0].mxu0
      %v624 = vadd.f32 %v504, %v623
      %625 = vdwg.mxu0
      %626 = vmatprep.subr.mxu0 %v242
      %627 = vmatpush1.msra.mxu0 %v241
      %628 = vmatprep.subr.mxu0 %v250
      %629 = vmatpush1.msra.mxu0 %v249
      %630 = vmatprep.subr.mxu0 %v258
      %631 = vmatpush1.msra.mxu0 %v257
      %632 = vmatprep.subr.mxu0 %v266
      %633 = vmatpush1.msra.mxu0 %v265
      %634 = vmatprep.subr.mxu0 %v274
      %635 = vmatpush1.msra.mxu0 %v273
      %636 = vmatprep.subr.mxu0 %v282
      %637 = vmatpush1.msra.mxu0 %v281
      %638 = vmatprep.subr.mxu0 %v290
      %639 = vmatpush1.msra.mxu0 %v289
      %640 = vmatprep.subr.mxu0 %v298
      %641 = vmatpush1.msra.mxu0 %v297
      %642 = vmatprep.subr.mxu0 %v306
      %643 = vmatpush1.msra.mxu0 %v305
      %644 = vmatprep.subr.mxu0 %v314
      %645 = vmatpush1.msra.mxu0 %v313
      %646 = vmatprep.subr.mxu0 %v322
      %647 = vmatpush1.msra.mxu0 %v321
      %648 = vmatprep.subr.mxu0 %v330
      %649 = vmatpush1.msra.mxu0 %v329
      %650 = vmatprep.subr.mxu0 %v338
      %651 = vmatpush1.msra.mxu0 %v337
      %652 = vmatprep.subr.mxu0 %v346
      %653 = vmatpush1.msra.mxu0 %v345
      %654 = vmatprep.subr.mxu0 %v354
      %655 = vmatpush1.msra.mxu0 %v353
      %656 = vmatprep.subr.mxu0 %v362
      %657 = vmatpush1.msra.mxu0 %v361
      %658 = vmatprep.subr.mxu0 %v370
      %659 = vmatpush1.msra.mxu0 %v369
      %660 = vmatprep.subr.mxu0 %v378
      %661 = vmatpush1.msra.mxu0 %v377
      %662 = vmatprep.subr.mxu0 %v386
      %663 = vmatpush1.msra.mxu0 %v385
      %664 = vmatprep.subr.mxu0 %v394
      %665 = vmatpush1.msra.mxu0 %v393
      %666 = vmatprep.subr.mxu0 %v402
      %667 = vmatpush1.msra.mxu0 %v401
      %668 = vmatprep.subr.mxu0 %v410
      %669 = vmatpush1.msra.mxu0 %v409
      %670 = vmatprep.subr.mxu0 %v418
      %671 = vmatpush1.msra.mxu0 %v417
      %672 = vmatprep.subr.mxu0 %v426
      %673 = vmatpush1.msra.mxu0 %v425
      %674 = vmatprep.subr.mxu0 %v434
      %675 = vmatpush1.msra.mxu0 %v433
      %676 = vmatprep.subr.mxu0 %v442
      %677 = vmatpush1.msra.mxu0 %v441
      %678 = vmatprep.subr.mxu0 %v450
      %679 = vmatpush1.msra.mxu0 %v449
      %680 = vmatprep.subr.mxu0 %v458
      %681 = vmatpush1.msra.mxu0 %v457
      %682 = vmatprep.subr.mxu0 %v466
      %683 = vmatpush1.msra.mxu0 %v465
      %684 = vmatprep.subr.mxu0 %v474
      %685 = vmatpush1.msra.mxu0 %v473
      %686 = vmatprep.subr.mxu0 %v482
      %687 = vmatpush1.msra.mxu0 %v481
      %688 = vmatprep.subr.mxu0 %v490
      %689 = vmatpush1.msra.mxu0 %v489
      %690 = vmatprep.mubr.f32.mxu0 %v232
      %691 = vmatmul.mubr.f32.gmra.mrb[0].mxu0 %v231
      %v692 = vpop.f32.mrb[0].mxu0
      %v693 = vadd.f32 %v508, %v692
      %v694 = vpop.f32.mrb[0].mxu0
      %v695 = vadd.f32 %v512, %v694
      %696 = vmatprep.mubr.f32.mxu0 %v234
      %697 = vmatmul.mubr.f32.gmra.mrb[0].mxu0 %v233
      %v698 = vpop.f32.mrb[0].mxu0
      %v699 = vadd.f32 %v508, %v698
      %v700 = vpop.f32.mrb[0].mxu0
      %v701 = vadd.f32 %v512, %v700
      %702 = vmatprep.mubr.f32.mxu0 %v236
      %703 = vmatmul.mubr.f32.gmra.mrb[0].mxu0 %v235
      %v704 = vpop.f32.mrb[0].mxu0
      %v705 = vadd.f32 %v508, %v704
      %v706 = vpop.f32.mrb[0].mxu0
      %v707 = vadd.f32 %v512, %v706
      %708 = vmatprep.mubr.f32.mxu0 %v238
      %709 = vmatmul.mubr.f32.gmra.mrb[0].mxu0 %v237
      %v710 = vpop.f32.mrb[0].mxu0
      %v711 = vadd.f32 %v508, %v710
      %v712 = vpop.f32.mrb[0].mxu0
      %v713 = vadd.f32 %v512, %v712
      %714 = vdwg.mxu0
      %715 = vmatprep.subr.mxu0 %v244
      %716 = vmatpush1.msra.mxu0 %v243
      %717 = vmatprep.subr.mxu0 %v252
      %718 = vmatpush1.msra.mxu0 %v251
      %719 = vmatprep.subr.mxu0 %v260
      %720 = vmatpush1.msra.mxu0 %v259
      %721 = vmatprep.subr.mxu0 %v268
      %722 = vmatpush1.msra.mxu0 %v267
      %723 = vmatprep.subr.mxu0 %v276
      %724 = vmatpush1.msra.mxu0 %v275
      %725 = vmatprep.subr.mxu0 %v284
      %726 = vmatpush1.msra.mxu0 %v283
      %727 = vmatprep.subr.mxu0 %v292
      %728 = vmatpush1.msra.mxu0 %v291
      %729 = vmatprep.subr.mxu0 %v300
      %730 = vmatpush1.msra.mxu0 %v299
      %731 = vmatprep.subr.mxu0 %v308
      %732 = vmatpush1.msra.mxu0 %v307
      %733 = vmatprep.subr.mxu0 %v316
      %734 = vmatpush1.msra.mxu0 %v315
      %735 = vmatprep.subr.mxu0 %v324
      %736 = vmatpush1.msra.mxu0 %v323
      %737 = vmatprep.subr.mxu0 %v332
      %738 = vmatpush1.msra.mxu0 %v331
      %739 = vmatprep.subr.mxu0 %v340
      %740 = vmatpush1.msra.mxu0 %v339
      %741 = vmatprep.subr.mxu0 %v348
      %742 = vmatpush1.msra.mxu0 %v347
      %743 = vmatprep.subr.mxu0 %v356
      %744 = vmatpush1.msra.mxu0 %v355
      %745 = vmatprep.subr.mxu0 %v364
      %746 = vmatpush1.msra.mxu0 %v363
      %747 = vmatprep.subr.mxu0 %v372
      %748 = vmatpush1.msra.mxu0 %v371
      %749 = vmatprep.subr.mxu0 %v380
      %750 = vmatpush1.msra.mxu0 %v379
      %751 = vmatprep.subr.mxu0 %v388
      %752 = vmatpush1.msra.mxu0 %v387
      %753 = vmatprep.subr.mxu0 %v396
      %754 = vmatpush1.msra.mxu0 %v395
      %755 = vmatprep.subr.mxu0 %v404
      %756 = vmatpush1.msra.mxu0 %v403
      %757 = vmatprep.subr.mxu0 %v412
      %758 = vmatpush1.msra.mxu0 %v411
      %759 = vmatprep.subr.mxu0 %v420
      %760 = vmatpush1.msra.mxu0 %v419
      %761 = vmatprep.subr.mxu0 %v428
      %762 = vmatpush1.msra.mxu0 %v427
      %763 = vmatprep.subr.mxu0 %v436
      %764 = vmatpush1.msra.mxu0 %v435
      %765 = vmatprep.subr.mxu0 %v444
      %766 = vmatpush1.msra.mxu0 %v443
      %767 = vmatprep.subr.mxu0 %v452
      %768 = vmatpush1.msra.mxu0 %v451
      %769 = vmatprep.subr.mxu0 %v460
      %770 = vmatpush1.msra.mxu0 %v459
      %771 = vmatprep.subr.mxu0 %v468
      %772 = vmatpush1.msra.mxu0 %v467
      %773 = vmatprep.subr.mxu0 %v476
      %774 = vmatpush1.msra.mxu0 %v475
      %775 = vmatprep.subr.mxu0 %v484
      %776 = vmatpush1.msra.mxu0 %v483
      %777 = vmatprep.subr.mxu0 %v492
      %778 = vmatpush1.msra.mxu0 %v491
      %779 = vmatprep.mubr.f32.mxu0 %v232
      %780 = vmatmul.mubr.f32.gmra.mrb[0].mxu0 %v231
      %v781 = vpop.f32.mrb[0].mxu0
      %v782 = vadd.f32 %v516, %v781
      %v783 = vpop.f32.mrb[0].mxu0
      %v784 = vadd.f32 %v520, %v783
      %785 = vmatprep.mubr.f32.mxu0 %v234
      %786 = vmatmul.mubr.f32.gmra.mrb[0].mxu0 %v233
      %v787 = vpop.f32.mrb[0].mxu0
      %v788 = vadd.f32 %v516, %v787
      %v789 = vpop.f32.mrb[0].mxu0
      %v790 = vadd.f32 %v520, %v789
      %791 = vmatprep.mubr.f32.mxu0 %v236
      %792 = vmatmul.mubr.f32.gmra.mrb[0].mxu0 %v235
      %v793 = vpop.f32.mrb[0].mxu0
      %v794 = vadd.f32 %v516, %v793
      %v795 = vpop.f32.mrb[0].mxu0
      %v796 = vadd.f32 %v520, %v795
      %797 = vmatprep.mubr.f32.mxu0 %v238
      %798 = vmatmul.mubr.f32.gmra.mrb[0].mxu0 %v237
      %v799 = vpop.f32.mrb[0].mxu0
      %v800 = vadd.f32 %v516, %v799
      %v801 = vpop.f32.mrb[0].mxu0
      %v802 = vadd.f32 %v520, %v801
      %803 = vdwg.mxu0
      %804 = vmatprep.subr.mxu0 %v246
      %805 = vmatpush1.msra.mxu0 %v245
      %806 = vmatprep.subr.mxu0 %v254
      %807 = vmatpush1.msra.mxu0 %v253
      %808 = vmatprep.subr.mxu0 %v262
      %809 = vmatpush1.msra.mxu0 %v261
      %810 = vmatprep.subr.mxu0 %v270
      %811 = vmatpush1.msra.mxu0 %v269
      %812 = vmatprep.subr.mxu0 %v278
      %813 = vmatpush1.msra.mxu0 %v277
      %814 = vmatprep.subr.mxu0 %v286
      %815 = vmatpush1.msra.mxu0 %v285
      %816 = vmatprep.subr.mxu0 %v294
      %817 = vmatpush1.msra.mxu0 %v293
      %818 = vmatprep.subr.mxu0 %v302
      %819 = vmatpush1.msra.mxu0 %v301
      %820 = vmatprep.subr.mxu0 %v310
      %821 = vmatpush1.msra.mxu0 %v309
      %822 = vmatprep.subr.mxu0 %v318
      %823 = vmatpush1.msra.mxu0 %v317
      %824 = vmatprep.subr.mxu0 %v326
      %825 = vmatpush1.msra.mxu0 %v325
      %826 = vmatprep.subr.mxu0 %v334
      %827 = vmatpush1.msra.mxu0 %v333
      %828 = vmatprep.subr.mxu0 %v342
      %829 = vmatpush1.msra.mxu0 %v341
      %830 = vmatprep.subr.mxu0 %v350
      %831 = vmatpush1.msra.mxu0 %v349
      %832 = vmatprep.subr.mxu0 %v358
      %833 = vmatpush1.msra.mxu0 %v357
      %834 = vmatprep.subr.mxu0 %v366
      %835 = vmatpush1.msra.mxu0 %v365
      %836 = vmatprep.subr.mxu0 %v374
      %837 = vmatpush1.msra.mxu0 %v373
      %838 = vmatprep.subr.mxu0 %v382
      %839 = vmatpush1.msra.mxu0 %v381
      %840 = vmatprep.subr.mxu0 %v390
      %841 = vmatpush1.msra.mxu0 %v389
      %842 = vmatprep.subr.mxu0 %v398
      %843 = vmatpush1.msra.mxu0 %v397
      %844 = vmatprep.subr.mxu0 %v406
      %845 = vmatpush1.msra.mxu0 %v405
      %846 = vmatprep.subr.mxu0 %v414
      %847 = vmatpush1.msra.mxu0 %v413
      %848 = vmatprep.subr.mxu0 %v422
      %849 = vmatpush1.msra.mxu0 %v421
      %850 = vmatprep.subr.mxu0 %v430
      %851 = vmatpush1.msra.mxu0 %v429
      %852 = vmatprep.subr.mxu0 %v438
      %853 = vmatpush1.msra.mxu0 %v437
      %854 = vmatprep.subr.mxu0 %v446
      %855 = vmatpush1.msra.mxu0 %v445
      %856 = vmatprep.subr.mxu0 %v454
      %857 = vmatpush1.msra.mxu0 %v453
      %858 = vmatprep.subr.mxu0 %v462
      %859 = vmatpush1.msra.mxu0 %v461
      %860 = vmatprep.subr.mxu0 %v470
      %861 = vmatpush1.msra.mxu0 %v469
      %862 = vmatprep.subr.mxu0 %v478
      %863 = vmatpush1.msra.mxu0 %v477
      %864 = vmatprep.subr.mxu0 %v486
      %865 = vmatpush1.msra.mxu0 %v485
      %866 = vmatprep.subr.mxu0 %v494
      %867 = vmatpush1.msra.mxu0 %v493
      %868 = vmatprep.mubr.f32.mxu0 %v232
      %869 = vmatmul.mubr.f32.gmra.mrb[0].mxu0 %v231
      %v870 = vpop.f32.mrb[0].mxu0
      %v871 = vadd.f32 %v524, %v870
      %v872 = vpop.f32.mrb[0].mxu0
      %v873 = vadd.f32 %v528, %v872
      %874 = vmatprep.mubr.f32.mxu0 %v234
      %875 = vmatmul.mubr.f32.gmra.mrb[0].mxu0 %v233
      %v876 = vpop.f32.mrb[0].mxu0
      %v877 = vadd.f32 %v524, %v876
      %v878 = vpop.f32.mrb[0].mxu0
      %v879 = vadd.f32 %v528, %v878
      %880 = vmatprep.mubr.f32.mxu0 %v236
      %881 = vmatmul.mubr.f32.gmra.mrb[0].mxu0 %v235
      %v882 = vpop.f32.mrb[0].mxu0
      %v883 = vadd.f32 %v524, %v882
      %v884 = vpop.f32.mrb[0].mxu0
      %v885 = vadd.f32 %v528, %v884
      %886 = vmatprep.mubr.f32.mxu0 %v238
      %887 = vmatmul.mubr.f32.gmra.mrb[0].mxu0 %v237
      %v888 = vpop.f32.mrb[0].mxu0
      %v889 = vadd.f32 %v524, %v888
      %v890 = vpop.f32.mrb[0].mxu0
      %v891 = vadd.f32 %v528, %v890
      %892 = vdwg.mxu0
      %v893 = vmul.f32 %v604, 0.5
      %v894 = vmul.f32 %v606, 0.5
      %v895 = vmul.f32 %v693, 0.5
      %v896 = vmul.f32 %v695, 0.5
      %v897 = vmul.f32 %v782, 0.5
      %v898 = vmul.f32 %v784, 0.5
      %v899 = vmul.f32 %v871, 0.5
      %v900 = vmul.f32 %v873, 0.5
      %v901 = vmul.f32 %v610, 0.5
      %v902 = vmul.f32 %v612, 0.5
      %v903 = vmul.f32 %v699, 0.5
      %v904 = vmul.f32 %v701, 0.5
      %v905 = vmul.f32 %v788, 0.5
      %v906 = vmul.f32 %v790, 0.5
      %v907 = vmul.f32 %v877, 0.5
      %v908 = vmul.f32 %v879, 0.5
      %v909 = vmul.f32 %v616, 0.5
      %v910 = vmul.f32 %v618, 0.5
      %v911 = vmul.f32 %v705, 0.5
      %v912 = vmul.f32 %v707, 0.5
      %v913 = vmul.f32 %v794, 0.5
      %v914 = vmul.f32 %v796, 0.5
      %v915 = vmul.f32 %v883, 0.5
      %v916 = vmul.f32 %v885, 0.5
      %v917 = vmul.f32 %v622, 0.5
      %v918 = vmul.f32 %v624, 0.5
      %v919 = vmul.f32 %v711, 0.5
      %v920 = vmul.f32 %v713, 0.5
      %v921 = vmul.f32 %v800, 0.5
      %v922 = vmul.f32 %v802, 0.5
      %v923 = vmul.f32 %v889, 0.5
      %v924 = vmul.f32 %v891, 0.5
      %v925 = vmul.f32 %v604, 0.70710677
      %v926 = vmul.f32 %v606, 0.70710677
      %v927 = vmul.f32 %v693, 0.70710677
      %v928 = vmul.f32 %v695, 0.70710677
      %v929 = vmul.f32 %v782, 0.70710677
      %v930 = vmul.f32 %v784, 0.70710677
      %v931 = vmul.f32 %v871, 0.70710677
      %v932 = vmul.f32 %v873, 0.70710677
      %v933 = vmul.f32 %v610, 0.70710677
      %v934 = vmul.f32 %v612, 0.70710677
      %v935 = vmul.f32 %v699, 0.70710677
      %v936 = vmul.f32 %v701, 0.70710677
      %v937 = vmul.f32 %v788, 0.70710677
      %v938 = vmul.f32 %v790, 0.70710677
      %v939 = vmul.f32 %v877, 0.70710677
      %v940 = vmul.f32 %v879, 0.70710677
      %v941 = vmul.f32 %v616, 0.70710677
      %v942 = vmul.f32 %v618, 0.70710677
      %v943 = vmul.f32 %v705, 0.70710677
      %v944 = vmul.f32 %v707, 0.70710677
      %v945 = vmul.f32 %v794, 0.70710677
      %v946 = vmul.f32 %v796, 0.70710677
      %v947 = vmul.f32 %v883, 0.70710677
      %v948 = vmul.f32 %v885, 0.70710677
      %v949 = vmul.f32 %v622, 0.70710677
      %v950 = vmul.f32 %v624, 0.70710677
      %v951 = vmul.f32 %v711, 0.70710677
      %v952 = vmul.f32 %v713, 0.70710677
      %v953 = vmul.f32 %v800, 0.70710677
      %v954 = vmul.f32 %v802, 0.70710677
      %v955 = vmul.f32 %v889, 0.70710677
      %v956 = vmul.f32 %v891, 0.70710677
      %v957 = vmax.f32 %v925, -4.0
      %v958 = vmax.f32 %v926, -4.0
      %v959 = vmax.f32 %v927, -4.0
      %v960 = vmax.f32 %v928, -4.0
      %v961 = vmax.f32 %v929, -4.0
      %v962 = vmax.f32 %v930, -4.0
      %v963 = vmax.f32 %v931, -4.0
      %v964 = vmax.f32 %v932, -4.0
      %v965 = vmax.f32 %v933, -4.0
      %v966 = vmax.f32 %v934, -4.0
      %v967 = vmax.f32 %v935, -4.0
      %v968 = vmax.f32 %v936, -4.0
      %v969 = vmax.f32 %v937, -4.0
      %v970 = vmax.f32 %v938, -4.0
      %v971 = vmax.f32 %v939, -4.0
      %v972 = vmax.f32 %v940, -4.0
      %v973 = vmax.f32 %v941, -4.0
      %v974 = vmax.f32 %v942, -4.0
      %v975 = vmax.f32 %v943, -4.0
      %v976 = vmax.f32 %v944, -4.0
      %v977 = vmax.f32 %v945, -4.0
      %v978 = vmax.f32 %v946, -4.0
      %v979 = vmax.f32 %v947, -4.0
      %v980 = vmax.f32 %v948, -4.0
      %v981 = vmax.f32 %v949, -4.0
      %v982 = vmax.f32 %v950, -4.0
      %v983 = vmax.f32 %v951, -4.0
      %v984 = vmax.f32 %v952, -4.0
      %v985 = vmax.f32 %v953, -4.0
      %v986 = vmax.f32 %v954, -4.0
      %v987 = vmax.f32 %v955, -4.0
      %v988 = vmax.f32 %v956, -4.0
      %v989 = vmin.f32 %v957, 4.0
      %v990 = vmin.f32 %v958, 4.0
      %v991 = vmin.f32 %v959, 4.0
      %v992 = vmin.f32 %v960, 4.0
      %v993 = vmin.f32 %v961, 4.0
      %v994 = vmin.f32 %v962, 4.0
      %v995 = vmin.f32 %v963, 4.0
      %v996 = vmin.f32 %v964, 4.0
      %v997 = vmin.f32 %v965, 4.0
      %v998 = vmin.f32 %v966, 4.0
      %v999 = vmin.f32 %v967, 4.0
      %v1000 = vmin.f32 %v968, 4.0
      %v1001 = vmin.f32 %v969, 4.0
      %v1002 = vmin.f32 %v970, 4.0
      %v1003 = vmin.f32 %v971, 4.0
      %v1004 = vmin.f32 %v972, 4.0
      %v1005 = vmin.f32 %v973, 4.0
      %v1006 = vmin.f32 %v974, 4.0
      %v1007 = vmin.f32 %v975, 4.0
      %v1008 = vmin.f32 %v976, 4.0
      %v1009 = vmin.f32 %v977, 4.0
      %v1010 = vmin.f32 %v978, 4.0
      %v1011 = vmin.f32 %v979, 4.0
      %v1012 = vmin.f32 %v980, 4.0
      %v1013 = vmin.f32 %v981, 4.0
      %v1014 = vmin.f32 %v982, 4.0
      %v1015 = vmin.f32 %v983, 4.0
      %v1016 = vmin.f32 %v984, 4.0
      %v1017 = vmin.f32 %v985, 4.0
      %v1018 = vmin.f32 %v986, 4.0
      %v1019 = vmin.f32 %v987, 4.0
      %v1020 = vmin.f32 %v988, 4.0
      %v1021 = vmul.f32 %v989, %v989
      %v1022 = vmul.f32 %v990, %v990
      %v1023 = vmul.f32 %v991, %v991
      %v1024 = vmul.f32 %v992, %v992
      %v1025 = vmul.f32 %v993, %v993
      %v1026 = vmul.f32 %v994, %v994
      %v1027 = vmul.f32 %v995, %v995
      %v1028 = vmul.f32 %v996, %v996
      %v1029 = vmul.f32 %v997, %v997
      %v1030 = vmul.f32 %v998, %v998
      %v1031 = vmul.f32 %v999, %v999
      %v1032 = vmul.f32 %v1000, %v1000
      %v1033 = vmul.f32 %v1001, %v1001
      %v1034 = vmul.f32 %v1002, %v1002
      %v1035 = vmul.f32 %v1003, %v1003
      %v1036 = vmul.f32 %v1004, %v1004
      %v1037 = vmul.f32 %v1005, %v1005
      %v1038 = vmul.f32 %v1006, %v1006
      %v1039 = vmul.f32 %v1007, %v1007
      %v1040 = vmul.f32 %v1008, %v1008
      %v1041 = vmul.f32 %v1009, %v1009
      %v1042 = vmul.f32 %v1010, %v1010
      %v1043 = vmul.f32 %v1011, %v1011
      %v1044 = vmul.f32 %v1012, %v1012
      %v1045 = vmul.f32 %v1013, %v1013
      %v1046 = vmul.f32 %v1014, %v1014
      %v1047 = vmul.f32 %v1015, %v1015
      %v1048 = vmul.f32 %v1016, %v1016
      %v1049 = vmul.f32 %v1017, %v1017
      %v1050 = vmul.f32 %v1018, %v1018
      %v1051 = vmul.f32 %v1019, %v1019
      %v1052 = vmul.f32 %v1020, %v1020
      %v1053 = vmul.f32 %v1021, -2.7261424e-10
      %v1054 = vmul.f32 %v1022, -2.7261424e-10
      %v1055 = vmul.f32 %v1023, -2.7261424e-10
      %v1056 = vmul.f32 %v1024, -2.7261424e-10
      %v1057 = vmul.f32 %v1025, -2.7261424e-10
      %v1058 = vmul.f32 %v1026, -2.7261424e-10
      %v1059 = vmul.f32 %v1027, -2.7261424e-10
      %v1060 = vmul.f32 %v1028, -2.7261424e-10
      %v1061 = vmul.f32 %v1029, -2.7261424e-10
      %v1062 = vmul.f32 %v1030, -2.7261424e-10
      %v1063 = vmul.f32 %v1031, -2.7261424e-10
      %v1064 = vmul.f32 %v1032, -2.7261424e-10
      %v1065 = vmul.f32 %v1033, -2.7261424e-10
      %v1066 = vmul.f32 %v1034, -2.7261424e-10
      %v1067 = vmul.f32 %v1035, -2.7261424e-10
      %v1068 = vmul.f32 %v1036, -2.7261424e-10
      %v1069 = vmul.f32 %v1037, -2.7261424e-10
      %v1070 = vmul.f32 %v1038, -2.7261424e-10
      %v1071 = vmul.f32 %v1039, -2.7261424e-10
      %v1072 = vmul.f32 %v1040, -2.7261424e-10
      %v1073 = vmul.f32 %v1041, -2.7261424e-10
      %v1074 = vmul.f32 %v1042, -2.7261424e-10
      %v1075 = vmul.f32 %v1043, -2.7261424e-10
      %v1076 = vmul.f32 %v1044, -2.7261424e-10
      %v1077 = vmul.f32 %v1045, -2.7261424e-10
      %v1078 = vmul.f32 %v1046, -2.7261424e-10
      %v1079 = vmul.f32 %v1047, -2.7261424e-10
      %v1080 = vmul.f32 %v1048, -2.7261424e-10
      %v1081 = vmul.f32 %v1049, -2.7261424e-10
      %v1082 = vmul.f32 %v1050, -2.7261424e-10
      %v1083 = vmul.f32 %v1051, -2.7261424e-10
      %v1084 = vmul.f32 %v1052, -2.7261424e-10
      %v1085 = vadd.f32 %v1053, 2.7706815e-08
      %v1086 = vadd.f32 %v1054, 2.7706815e-08
      %v1087 = vadd.f32 %v1055, 2.7706815e-08
      %v1088 = vadd.f32 %v1056, 2.7706815e-08
      %v1089 = vadd.f32 %v1057, 2.7706815e-08
      %v1090 = vadd.f32 %v1058, 2.7706815e-08
      %v1091 = vadd.f32 %v1059, 2.7706815e-08
      %v1092 = vadd.f32 %v1060, 2.7706815e-08
      %v1093 = vadd.f32 %v1061, 2.7706815e-08
      %v1094 = vadd.f32 %v1062, 2.7706815e-08
      %v1095 = vadd.f32 %v1063, 2.7706815e-08
      %v1096 = vadd.f32 %v1064, 2.7706815e-08
      %v1097 = vadd.f32 %v1065, 2.7706815e-08
      %v1098 = vadd.f32 %v1066, 2.7706815e-08
      %v1099 = vadd.f32 %v1067, 2.7706815e-08
      %v1100 = vadd.f32 %v1068, 2.7706815e-08
      %v1101 = vadd.f32 %v1069, 2.7706815e-08
      %v1102 = vadd.f32 %v1070, 2.7706815e-08
      %v1103 = vadd.f32 %v1071, 2.7706815e-08
      %v1104 = vadd.f32 %v1072, 2.7706815e-08
      %v1105 = vadd.f32 %v1073, 2.7706815e-08
      %v1106 = vadd.f32 %v1074, 2.7706815e-08
      %v1107 = vadd.f32 %v1075, 2.7706815e-08
      %v1108 = vadd.f32 %v1076, 2.7706815e-08
      %v1109 = vadd.f32 %v1077, 2.7706815e-08
      %v1110 = vadd.f32 %v1078, 2.7706815e-08
      %v1111 = vadd.f32 %v1079, 2.7706815e-08
      %v1112 = vadd.f32 %v1080, 2.7706815e-08
      %v1113 = vadd.f32 %v1081, 2.7706815e-08
      %v1114 = vadd.f32 %v1082, 2.7706815e-08
      %v1115 = vadd.f32 %v1083, 2.7706815e-08
      %v1116 = vadd.f32 %v1084, 2.7706815e-08
      %v1117 = vmul.f32 %v1085, %v1021
      %v1118 = vmul.f32 %v1086, %v1022
      %v1119 = vmul.f32 %v1087, %v1023
      %v1120 = vmul.f32 %v1088, %v1024
      %v1121 = vmul.f32 %v1089, %v1025
      %v1122 = vmul.f32 %v1090, %v1026
      %v1123 = vmul.f32 %v1091, %v1027
      %v1124 = vmul.f32 %v1092, %v1028
      %v1125 = vmul.f32 %v1093, %v1029
      %v1126 = vmul.f32 %v1094, %v1030
      %v1127 = vmul.f32 %v1095, %v1031
      %v1128 = vmul.f32 %v1096, %v1032
      %v1129 = vmul.f32 %v1097, %v1033
      %v1130 = vmul.f32 %v1098, %v1034
      %v1131 = vmul.f32 %v1099, %v1035
      %v1132 = vmul.f32 %v1100, %v1036
      %v1133 = vmul.f32 %v1101, %v1037
      %v1134 = vmul.f32 %v1102, %v1038
      %v1135 = vmul.f32 %v1103, %v1039
      %v1136 = vmul.f32 %v1104, %v1040
      %v1137 = vmul.f32 %v1105, %v1041
      %v1138 = vmul.f32 %v1106, %v1042
      %v1139 = vmul.f32 %v1107, %v1043
      %v1140 = vmul.f32 %v1108, %v1044
      %v1141 = vmul.f32 %v1109, %v1045
      %v1142 = vmul.f32 %v1110, %v1046
      %v1143 = vmul.f32 %v1111, %v1047
      %v1144 = vmul.f32 %v1112, %v1048
      %v1145 = vmul.f32 %v1113, %v1049
      %v1146 = vmul.f32 %v1114, %v1050
      %v1147 = vmul.f32 %v1115, %v1051
      %v1148 = vmul.f32 %v1116, %v1052
      %v1149 = vadd.f32 %v1117, -2.101024e-06
      %v1150 = vadd.f32 %v1118, -2.101024e-06
      %v1151 = vadd.f32 %v1119, -2.101024e-06
      %v1152 = vadd.f32 %v1120, -2.101024e-06
      %v1153 = vadd.f32 %v1121, -2.101024e-06
      %v1154 = vadd.f32 %v1122, -2.101024e-06
      %v1155 = vadd.f32 %v1123, -2.101024e-06
      %v1156 = vadd.f32 %v1124, -2.101024e-06
      %v1157 = vadd.f32 %v1125, -2.101024e-06
      %v1158 = vadd.f32 %v1126, -2.101024e-06
      %v1159 = vadd.f32 %v1127, -2.101024e-06
      %v1160 = vadd.f32 %v1128, -2.101024e-06
      %v1161 = vadd.f32 %v1129, -2.101024e-06
      %v1162 = vadd.f32 %v1130, -2.101024e-06
      %v1163 = vadd.f32 %v1131, -2.101024e-06
      %v1164 = vadd.f32 %v1132, -2.101024e-06
      %v1165 = vadd.f32 %v1133, -2.101024e-06
      %v1166 = vadd.f32 %v1134, -2.101024e-06
      %v1167 = vadd.f32 %v1135, -2.101024e-06
      %v1168 = vadd.f32 %v1136, -2.101024e-06
      %v1169 = vadd.f32 %v1137, -2.101024e-06
      %v1170 = vadd.f32 %v1138, -2.101024e-06
      %v1171 = vadd.f32 %v1139, -2.101024e-06
      %v1172 = vadd.f32 %v1140, -2.101024e-06
      %v1173 = vadd.f32 %v1141, -2.101024e-06
      %v1174 = vadd.f32 %v1142, -2.101024e-06
      %v1175 = vadd.f32 %v1143, -2.101024e-06
      %v1176 = vadd.f32 %v1144, -2.101024e-06
      %v1177 = vadd.f32 %v1145, -2.101024e-06
      %v1178 = vadd.f32 %v1146, -2.101024e-06
      %v1179 = vadd.f32 %v1147, -2.101024e-06
      %v1180 = vadd.f32 %v1148, -2.101024e-06
      %v1181 = vmul.f32 %v1149, %v1021
      %v1182 = vmul.f32 %v1150, %v1022
      %v1183 = vmul.f32 %v1151, %v1023
      %v1184 = vmul.f32 %v1152, %v1024
      %v1185 = vmul.f32 %v1153, %v1025
      %v1186 = vmul.f32 %v1154, %v1026
      %v1187 = vmul.f32 %v1155, %v1027
      %v1188 = vmul.f32 %v1156, %v1028
      %v1189 = vmul.f32 %v1157, %v1029
      %v1190 = vmul.f32 %v1158, %v1030
      %v1191 = vmul.f32 %v1159, %v1031
      %v1192 = vmul.f32 %v1160, %v1032
      %v1193 = vmul.f32 %v1161, %v1033
      %v1194 = vmul.f32 %v1162, %v1034
      %v1195 = vmul.f32 %v1163, %v1035
      %v1196 = vmul.f32 %v1164, %v1036
      %v1197 = vmul.f32 %v1165, %v1037
      %v1198 = vmul.f32 %v1166, %v1038
      %v1199 = vmul.f32 %v1167, %v1039
      %v1200 = vmul.f32 %v1168, %v1040
      %v1201 = vmul.f32 %v1169, %v1041
      %v1202 = vmul.f32 %v1170, %v1042
      %v1203 = vmul.f32 %v1171, %v1043
      %v1204 = vmul.f32 %v1172, %v1044
      %v1205 = vmul.f32 %v1173, %v1045
      %v1206 = vmul.f32 %v1174, %v1046
      %v1207 = vmul.f32 %v1175, %v1047
      %v1208 = vmul.f32 %v1176, %v1048
      %v1209 = vmul.f32 %v1177, %v1049
      %v1210 = vmul.f32 %v1178, %v1050
      %v1211 = vmul.f32 %v1179, %v1051
      %v1212 = vmul.f32 %v1180, %v1052
      %v1213 = vadd.f32 %v1181, -5.6925062e-05
      %v1214 = vadd.f32 %v1182, -5.6925062e-05
      %v1215 = vadd.f32 %v1183, -5.6925062e-05
      %v1216 = vadd.f32 %v1184, -5.6925062e-05
      %v1217 = vadd.f32 %v1185, -5.6925062e-05
      %v1218 = vadd.f32 %v1186, -5.6925062e-05
      %v1219 = vadd.f32 %v1187, -5.6925062e-05
      %v1220 = vadd.f32 %v1188, -5.6925062e-05
      %v1221 = vadd.f32 %v1189, -5.6925062e-05
      %v1222 = vadd.f32 %v1190, -5.6925062e-05
      %v1223 = vadd.f32 %v1191, -5.6925062e-05
      %v1224 = vadd.f32 %v1192, -5.6925062e-05
      %v1225 = vadd.f32 %v1193, -5.6925062e-05
      %v1226 = vadd.f32 %v1194, -5.6925062e-05
      %v1227 = vadd.f32 %v1195, -5.6925062e-05
      %v1228 = vadd.f32 %v1196, -5.6925062e-05
      %v1229 = vadd.f32 %v1197, -5.6925062e-05
      %v1230 = vadd.f32 %v1198, -5.6925062e-05
      %v1231 = vadd.f32 %v1199, -5.6925062e-05
      %v1232 = vadd.f32 %v1200, -5.6925062e-05
      %v1233 = vadd.f32 %v1201, -5.6925062e-05
      %v1234 = vadd.f32 %v1202, -5.6925062e-05
      %v1235 = vadd.f32 %v1203, -5.6925062e-05
      %v1236 = vadd.f32 %v1204, -5.6925062e-05
      %v1237 = vadd.f32 %v1205, -5.6925062e-05
      %v1238 = vadd.f32 %v1206, -5.6925062e-05
      %v1239 = vadd.f32 %v1207, -5.6925062e-05
      %v1240 = vadd.f32 %v1208, -5.6925062e-05
      %v1241 = vadd.f32 %v1209, -5.6925062e-05
      %v1242 = vadd.f32 %v1210, -5.6925062e-05
      %v1243 = vadd.f32 %v1211, -5.6925062e-05
      %v1244 = vadd.f32 %v1212, -5.6925062e-05
      %v1245 = vmul.f32 %v1213, %v1021
      %v1246 = vmul.f32 %v1214, %v1022
      %v1247 = vmul.f32 %v1215, %v1023
      %v1248 = vmul.f32 %v1216, %v1024
      %v1249 = vmul.f32 %v1217, %v1025
      %v1250 = vmul.f32 %v1218, %v1026
      %v1251 = vmul.f32 %v1219, %v1027
      %v1252 = vmul.f32 %v1220, %v1028
      %v1253 = vmul.f32 %v1221, %v1029
      %v1254 = vmul.f32 %v1222, %v1030
      %v1255 = vmul.f32 %v1223, %v1031
      %v1256 = vmul.f32 %v1224, %v1032
      %v1257 = vmul.f32 %v1225, %v1033
      %v1258 = vmul.f32 %v1226, %v1034
      %v1259 = vmul.f32 %v1227, %v1035
      %v1260 = vmul.f32 %v1228, %v1036
      %v1261 = vmul.f32 %v1229, %v1037
      %v1262 = vmul.f32 %v1230, %v1038
      %v1263 = vmul.f32 %v1231, %v1039
      %v1264 = vmul.f32 %v1232, %v1040
      %v1265 = vmul.f32 %v1233, %v1041
      %v1266 = vmul.f32 %v1234, %v1042
      %v1267 = vmul.f32 %v1235, %v1043
      %v1268 = vmul.f32 %v1236, %v1044
      %v1269 = vmul.f32 %v1237, %v1045
      %v1270 = vmul.f32 %v1238, %v1046
      %v1271 = vmul.f32 %v1239, %v1047
      %v1272 = vmul.f32 %v1240, %v1048
      %v1273 = vmul.f32 %v1241, %v1049
      %v1274 = vmul.f32 %v1242, %v1050
      %v1275 = vmul.f32 %v1243, %v1051
      %v1276 = vmul.f32 %v1244, %v1052
      %v1277 = vadd.f32 %v1245, -0.00073499064
      %v1278 = vadd.f32 %v1246, -0.00073499064
      %v1279 = vadd.f32 %v1247, -0.00073499064
      %v1280 = vadd.f32 %v1248, -0.00073499064
      %v1281 = vadd.f32 %v1249, -0.00073499064
      %v1282 = vadd.f32 %v1250, -0.00073499064
      %v1283 = vadd.f32 %v1251, -0.00073499064
      %v1284 = vadd.f32 %v1252, -0.00073499064
      %v1285 = vadd.f32 %v1253, -0.00073499064
      %v1286 = vadd.f32 %v1254, -0.00073499064
      %v1287 = vadd.f32 %v1255, -0.00073499064
      %v1288 = vadd.f32 %v1256, -0.00073499064
      %v1289 = vadd.f32 %v1257, -0.00073499064
      %v1290 = vadd.f32 %v1258, -0.00073499064
      %v1291 = vadd.f32 %v1259, -0.00073499064
      %v1292 = vadd.f32 %v1260, -0.00073499064
      %v1293 = vadd.f32 %v1261, -0.00073499064
      %v1294 = vadd.f32 %v1262, -0.00073499064
      %v1295 = vadd.f32 %v1263, -0.00073499064
      %v1296 = vadd.f32 %v1264, -0.00073499064
      %v1297 = vadd.f32 %v1265, -0.00073499064
      %v1298 = vadd.f32 %v1266, -0.00073499064
      %v1299 = vadd.f32 %v1267, -0.00073499064
      %v1300 = vadd.f32 %v1268, -0.00073499064
      %v1301 = vadd.f32 %v1269, -0.00073499064
      %v1302 = vadd.f32 %v1270, -0.00073499064
      %v1303 = vadd.f32 %v1271, -0.00073499064
      %v1304 = vadd.f32 %v1272, -0.00073499064
      %v1305 = vadd.f32 %v1273, -0.00073499064
      %v1306 = vadd.f32 %v1274, -0.00073499064
      %v1307 = vadd.f32 %v1275, -0.00073499064
      %v1308 = vadd.f32 %v1276, -0.00073499064
      %v1309 = vmul.f32 %v1277, %v1021
      %v1310 = vmul.f32 %v1278, %v1022
      %v1311 = vmul.f32 %v1279, %v1023
      %v1312 = vmul.f32 %v1280, %v1024
      %v1313 = vmul.f32 %v1281, %v1025
      %v1314 = vmul.f32 %v1282, %v1026
      %v1315 = vmul.f32 %v1283, %v1027
      %v1316 = vmul.f32 %v1284, %v1028
      %v1317 = vmul.f32 %v1285, %v1029
      %v1318 = vmul.f32 %v1286, %v1030
      %v1319 = vmul.f32 %v1287, %v1031
      %v1320 = vmul.f32 %v1288, %v1032
      %v1321 = vmul.f32 %v1289, %v1033
      %v1322 = vmul.f32 %v1290, %v1034
      %v1323 = vmul.f32 %v1291, %v1035
      %v1324 = vmul.f32 %v1292, %v1036
      %v1325 = vmul.f32 %v1293, %v1037
      %v1326 = vmul.f32 %v1294, %v1038
      %v1327 = vmul.f32 %v1295, %v1039
      %v1328 = vmul.f32 %v1296, %v1040
      %v1329 = vmul.f32 %v1297, %v1041
      %v1330 = vmul.f32 %v1298, %v1042
      %v1331 = vmul.f32 %v1299, %v1043
      %v1332 = vmul.f32 %v1300, %v1044
      %v1333 = vmul.f32 %v1301, %v1045
      %v1334 = vmul.f32 %v1302, %v1046
      %v1335 = vmul.f32 %v1303, %v1047
      %v1336 = vmul.f32 %v1304, %v1048
      %v1337 = vmul.f32 %v1305, %v1049
      %v1338 = vmul.f32 %v1306, %v1050
      %v1339 = vmul.f32 %v1307, %v1051
      %v1340 = vmul.f32 %v1308, %v1052
      %v1341 = vadd.f32 %v1309, -0.0029546
      %v1342 = vadd.f32 %v1310, -0.0029546
      %v1343 = vadd.f32 %v1311, -0.0029546
      %v1344 = vadd.f32 %v1312, -0.0029546
      %v1345 = vadd.f32 %v1313, -0.0029546
      %v1346 = vadd.f32 %v1314, -0.0029546
      %v1347 = vadd.f32 %v1315, -0.0029546
      %v1348 = vadd.f32 %v1316, -0.0029546
      %v1349 = vadd.f32 %v1317, -0.0029546
      %v1350 = vadd.f32 %v1318, -0.0029546
      %v1351 = vadd.f32 %v1319, -0.0029546
      %v1352 = vadd.f32 %v1320, -0.0029546
      %v1353 = vadd.f32 %v1321, -0.0029546
      %v1354 = vadd.f32 %v1322, -0.0029546
      %v1355 = vadd.f32 %v1323, -0.0029546
      %v1356 = vadd.f32 %v1324, -0.0029546
      %v1357 = vadd.f32 %v1325, -0.0029546
      %v1358 = vadd.f32 %v1326, -0.0029546
      %v1359 = vadd.f32 %v1327, -0.0029546
      %v1360 = vadd.f32 %v1328, -0.0029546
      %v1361 = vadd.f32 %v1329, -0.0029546
      %v1362 = vadd.f32 %v1330, -0.0029546
      %v1363 = vadd.f32 %v1331, -0.0029546
      %v1364 = vadd.f32 %v1332, -0.0029546
      %v1365 = vadd.f32 %v1333, -0.0029546
      %v1366 = vadd.f32 %v1334, -0.0029546
      %v1367 = vadd.f32 %v1335, -0.0029546
      %v1368 = vadd.f32 %v1336, -0.0029546
      %v1369 = vadd.f32 %v1337, -0.0029546
      %v1370 = vadd.f32 %v1338, -0.0029546
      %v1371 = vadd.f32 %v1339, -0.0029546
      %v1372 = vadd.f32 %v1340, -0.0029546
      %v1373 = vmul.f32 %v1341, %v1021
      %v1374 = vmul.f32 %v1342, %v1022
      %v1375 = vmul.f32 %v1343, %v1023
      %v1376 = vmul.f32 %v1344, %v1024
      %v1377 = vmul.f32 %v1345, %v1025
      %v1378 = vmul.f32 %v1346, %v1026
      %v1379 = vmul.f32 %v1347, %v1027
      %v1380 = vmul.f32 %v1348, %v1028
      %v1381 = vmul.f32 %v1349, %v1029
      %v1382 = vmul.f32 %v1350, %v1030
      %v1383 = vmul.f32 %v1351, %v1031
      %v1384 = vmul.f32 %v1352, %v1032
      %v1385 = vmul.f32 %v1353, %v1033
      %v1386 = vmul.f32 %v1354, %v1034
      %v1387 = vmul.f32 %v1355, %v1035
      %v1388 = vmul.f32 %v1356, %v1036
      %v1389 = vmul.f32 %v1357, %v1037
      %v1390 = vmul.f32 %v1358, %v1038
      %v1391 = vmul.f32 %v1359, %v1039
      %v1392 = vmul.f32 %v1360, %v1040
      %v1393 = vmul.f32 %v1361, %v1041
      %v1394 = vmul.f32 %v1362, %v1042
      %v1395 = vmul.f32 %v1363, %v1043
      %v1396 = vmul.f32 %v1364, %v1044
      %v1397 = vmul.f32 %v1365, %v1045
      %v1398 = vmul.f32 %v1366, %v1046
      %v1399 = vmul.f32 %v1367, %v1047
      %v1400 = vmul.f32 %v1368, %v1048
      %v1401 = vmul.f32 %v1369, %v1049
      %v1402 = vmul.f32 %v1370, %v1050
      %v1403 = vmul.f32 %v1371, %v1051
      %v1404 = vmul.f32 %v1372, %v1052
      %v1405 = vadd.f32 %v1373, -0.016096033
      %v1406 = vadd.f32 %v1374, -0.016096033
      %v1407 = vadd.f32 %v1375, -0.016096033
      %v1408 = vadd.f32 %v1376, -0.016096033
      %v1409 = vadd.f32 %v1377, -0.016096033
      %v1410 = vadd.f32 %v1378, -0.016096033
      %v1411 = vadd.f32 %v1379, -0.016096033
      %v1412 = vadd.f32 %v1380, -0.016096033
      %v1413 = vadd.f32 %v1381, -0.016096033
      %v1414 = vadd.f32 %v1382, -0.016096033
      %v1415 = vadd.f32 %v1383, -0.016096033
      %v1416 = vadd.f32 %v1384, -0.016096033
      %v1417 = vadd.f32 %v1385, -0.016096033
      %v1418 = vadd.f32 %v1386, -0.016096033
      %v1419 = vadd.f32 %v1387, -0.016096033
      %v1420 = vadd.f32 %v1388, -0.016096033
      %v1421 = vadd.f32 %v1389, -0.016096033
      %v1422 = vadd.f32 %v1390, -0.016096033
      %v1423 = vadd.f32 %v1391, -0.016096033
      %v1424 = vadd.f32 %v1392, -0.016096033
      %v1425 = vadd.f32 %v1393, -0.016096033
      %v1426 = vadd.f32 %v1394, -0.016096033
      %v1427 = vadd.f32 %v1395, -0.016096033
      %v1428 = vadd.f32 %v1396, -0.016096033
      %v1429 = vadd.f32 %v1397, -0.016096033
      %v1430 = vadd.f32 %v1398, -0.016096033
      %v1431 = vadd.f32 %v1399, -0.016096033
      %v1432 = vadd.f32 %v1400, -0.016096033
      %v1433 = vadd.f32 %v1401, -0.016096033
      %v1434 = vadd.f32 %v1402, -0.016096033
      %v1435 = vadd.f32 %v1403, -0.016096033
      %v1436 = vadd.f32 %v1404, -0.016096033
      %v1437 = vmul.f32 %v1021, -1.45660715e-05
      %v1438 = vmul.f32 %v1022, -1.45660715e-05
      %v1439 = vmul.f32 %v1023, -1.45660715e-05
      %v1440 = vmul.f32 %v1024, -1.45660715e-05
      %v1441 = vmul.f32 %v1025, -1.45660715e-05
      %v1442 = vmul.f32 %v1026, -1.45660715e-05
      %v1443 = vmul.f32 %v1027, -1.45660715e-05
      %v1444 = vmul.f32 %v1028, -1.45660715e-05
      %v1445 = vmul.f32 %v1029, -1.45660715e-05
      %v1446 = vmul.f32 %v1030, -1.45660715e-05
      %v1447 = vmul.f32 %v1031, -1.45660715e-05
      %v1448 = vmul.f32 %v1032, -1.45660715e-05
      %v1449 = vmul.f32 %v1033, -1.45660715e-05
      %v1450 = vmul.f32 %v1034, -1.45660715e-05
      %v1451 = vmul.f32 %v1035, -1.45660715e-05
      %v1452 = vmul.f32 %v1036, -1.45660715e-05
      %v1453 = vmul.f32 %v1037, -1.45660715e-05
      %v1454 = vmul.f32 %v1038, -1.45660715e-05
      %v1455 = vmul.f32 %v1039, -1.45660715e-05
      %v1456 = vmul.f32 %v1040, -1.45660715e-05
      %v1457 = vmul.f32 %v1041, -1.45660715e-05
      %v1458 = vmul.f32 %v1042, -1.45660715e-05
      %v1459 = vmul.f32 %v1043, -1.45660715e-05
      %v1460 = vmul.f32 %v1044, -1.45660715e-05
      %v1461 = vmul.f32 %v1045, -1.45660715e-05
      %v1462 = vmul.f32 %v1046, -1.45660715e-05
      %v1463 = vmul.f32 %v1047, -1.45660715e-05
      %v1464 = vmul.f32 %v1048, -1.45660715e-05
      %v1465 = vmul.f32 %v1049, -1.45660715e-05
      %v1466 = vmul.f32 %v1050, -1.45660715e-05
      %v1467 = vmul.f32 %v1051, -1.45660715e-05
      %v1468 = vmul.f32 %v1052, -1.45660715e-05
      %v1469 = vadd.f32 %v1437, -0.00021337405
      %v1470 = vadd.f32 %v1438, -0.00021337405
      %v1471 = vadd.f32 %v1439, -0.00021337405
      %v1472 = vadd.f32 %v1440, -0.00021337405
      %v1473 = vadd.f32 %v1441, -0.00021337405
      %v1474 = vadd.f32 %v1442, -0.00021337405
      %v1475 = vadd.f32 %v1443, -0.00021337405
      %v1476 = vadd.f32 %v1444, -0.00021337405
      %v1477 = vadd.f32 %v1445, -0.00021337405
      %v1478 = vadd.f32 %v1446, -0.00021337405
      %v1479 = vadd.f32 %v1447, -0.00021337405
      %v1480 = vadd.f32 %v1448, -0.00021337405
      %v1481 = vadd.f32 %v1449, -0.00021337405
      %v1482 = vadd.f32 %v1450, -0.00021337405
      %v1483 = vadd.f32 %v1451, -0.00021337405
      %v1484 = vadd.f32 %v1452, -0.00021337405
      %v1485 = vadd.f32 %v1453, -0.00021337405
      %v1486 = vadd.f32 %v1454, -0.00021337405
      %v1487 = vadd.f32 %v1455, -0.00021337405
      %v1488 = vadd.f32 %v1456, -0.00021337405
      %v1489 = vadd.f32 %v1457, -0.00021337405
      %v1490 = vadd.f32 %v1458, -0.00021337405
      %v1491 = vadd.f32 %v1459, -0.00021337405
      %v1492 = vadd.f32 %v1460, -0.00021337405
      %v1493 = vadd.f32 %v1461, -0.00021337405
      %v1494 = vadd.f32 %v1462, -0.00021337405
      %v1495 = vadd.f32 %v1463, -0.00021337405
      %v1496 = vadd.f32 %v1464, -0.00021337405
      %v1497 = vadd.f32 %v1465, -0.00021337405
      %v1498 = vadd.f32 %v1466, -0.00021337405
      %v1499 = vadd.f32 %v1467, -0.00021337405
      %v1500 = vadd.f32 %v1468, -0.00021337405
      %v1501 = vmul.f32 %v1469, %v1021
      %v1502 = vmul.f32 %v1470, %v1022
      %v1503 = vmul.f32 %v1471, %v1023
      %v1504 = vmul.f32 %v1472, %v1024
      %v1505 = vmul.f32 %v1473, %v1025
      %v1506 = vmul.f32 %v1474, %v1026
      %v1507 = vmul.f32 %v1475, %v1027
      %v1508 = vmul.f32 %v1476, %v1028
      %v1509 = vmul.f32 %v1477, %v1029
      %v1510 = vmul.f32 %v1478, %v1030
      %v1511 = vmul.f32 %v1479, %v1031
      %v1512 = vmul.f32 %v1480, %v1032
      %v1513 = vmul.f32 %v1481, %v1033
      %v1514 = vmul.f32 %v1482, %v1034
      %v1515 = vmul.f32 %v1483, %v1035
      %v1516 = vmul.f32 %v1484, %v1036
      %v1517 = vmul.f32 %v1485, %v1037
      %v1518 = vmul.f32 %v1486, %v1038
      %v1519 = vmul.f32 %v1487, %v1039
      %v1520 = vmul.f32 %v1488, %v1040
      %v1521 = vmul.f32 %v1489, %v1041
      %v1522 = vmul.f32 %v1490, %v1042
      %v1523 = vmul.f32 %v1491, %v1043
      %v1524 = vmul.f32 %v1492, %v1044
      %v1525 = vmul.f32 %v1493, %v1045
      %v1526 = vmul.f32 %v1494, %v1046
      %v1527 = vmul.f32 %v1495, %v1047
      %v1528 = vmul.f32 %v1496, %v1048
      %v1529 = vmul.f32 %v1497, %v1049
      %v1530 = vmul.f32 %v1498, %v1050
      %v1531 = vmul.f32 %v1499, %v1051
      %v1532 = vmul.f32 %v1500, %v1052
      %v1533 = vadd.f32 %v1501, -0.001682827
      %v1534 = vadd.f32 %v1502, -0.001682827
      %v1535 = vadd.f32 %v1503, -0.001682827
      %v1536 = vadd.f32 %v1504, -0.001682827
      %v1537 = vadd.f32 %v1505, -0.001682827
      %v1538 = vadd.f32 %v1506, -0.001682827
      %v1539 = vadd.f32 %v1507, -0.001682827
      %v1540 = vadd.f32 %v1508, -0.001682827
      %v1541 = vadd.f32 %v1509, -0.001682827
      %v1542 = vadd.f32 %v1510, -0.001682827
      %v1543 = vadd.f32 %v1511, -0.001682827
      %v1544 = vadd.f32 %v1512, -0.001682827
      %v1545 = vadd.f32 %v1513, -0.001682827
      %v1546 = vadd.f32 %v1514, -0.001682827
      %v1547 = vadd.f32 %v1515, -0.001682827
      %v1548 = vadd.f32 %v1516, -0.001682827
      %v1549 = vadd.f32 %v1517, -0.001682827
      %v1550 = vadd.f32 %v1518, -0.001682827
      %v1551 = vadd.f32 %v1519, -0.001682827
      %v1552 = vadd.f32 %v1520, -0.001682827
      %v1553 = vadd.f32 %v1521, -0.001682827
      %v1554 = vadd.f32 %v1522, -0.001682827
      %v1555 = vadd.f32 %v1523, -0.001682827
      %v1556 = vadd.f32 %v1524, -0.001682827
      %v1557 = vadd.f32 %v1525, -0.001682827
      %v1558 = vadd.f32 %v1526, -0.001682827
      %v1559 = vadd.f32 %v1527, -0.001682827
      %v1560 = vadd.f32 %v1528, -0.001682827
      %v1561 = vadd.f32 %v1529, -0.001682827
      %v1562 = vadd.f32 %v1530, -0.001682827
      %v1563 = vadd.f32 %v1531, -0.001682827
      %v1564 = vadd.f32 %v1532, -0.001682827
      %v1565 = vmul.f32 %v1533, %v1021
      %v1566 = vmul.f32 %v1534, %v1022
      %v1567 = vmul.f32 %v1535, %v1023
      %v1568 = vmul.f32 %v1536, %v1024
      %v1569 = vmul.f32 %v1537, %v1025
      %v1570 = vmul.f32 %v1538, %v1026
      %v1571 = vmul.f32 %v1539, %v1027
      %v1572 = vmul.f32 %v1540, %v1028
      %v1573 = vmul.f32 %v1541, %v1029
      %v1574 = vmul.f32 %v1542, %v1030
      %v1575 = vmul.f32 %v1543, %v1031
      %v1576 = vmul.f32 %v1544, %v1032
      %v1577 = vmul.f32 %v1545, %v1033
      %v1578 = vmul.f32 %v1546, %v1034
      %v1579 = vmul.f32 %v1547, %v1035
      %v1580 = vmul.f32 %v1548, %v1036
      %v1581 = vmul.f32 %v1549, %v1037
      %v1582 = vmul.f32 %v1550, %v1038
      %v1583 = vmul.f32 %v1551, %v1039
      %v1584 = vmul.f32 %v1552, %v1040
      %v1585 = vmul.f32 %v1553, %v1041
      %v1586 = vmul.f32 %v1554, %v1042
      %v1587 = vmul.f32 %v1555, %v1043
      %v1588 = vmul.f32 %v1556, %v1044
      %v1589 = vmul.f32 %v1557, %v1045
      %v1590 = vmul.f32 %v1558, %v1046
      %v1591 = vmul.f32 %v1559, %v1047
      %v1592 = vmul.f32 %v1560, %v1048
      %v1593 = vmul.f32 %v1561, %v1049
      %v1594 = vmul.f32 %v1562, %v1050
      %v1595 = vmul.f32 %v1563, %v1051
      %v1596 = vmul.f32 %v1564, %v1052
      %v1597 = vadd.f32 %v1565, -0.0073733293
      %v1598 = vadd.f32 %v1566, -0.0073733293
      %v1599 = vadd.f32 %v1567, -0.0073733293
      %v1600 = vadd.f32 %v1568, -0.0073733293
      %v1601 = vadd.f32 %v1569, -0.0073733293
      %v1602 = vadd.f32 %v1570, -0.0073733293
      %v1603 = vadd.f32 %v1571, -0.0073733293
      %v1604 = vadd.f32 %v1572, -0.0073733293
      %v1605 = vadd.f32 %v1573, -0.0073733293
      %v1606 = vadd.f32 %v1574, -0.0073733293
      %v1607 = vadd.f32 %v1575, -0.0073733293
      %v1608 = vadd.f32 %v1576, -0.0073733293
      %v1609 = vadd.f32 %v1577, -0.0073733293
      %v1610 = vadd.f32 %v1578, -0.0073733293
      %v1611 = vadd.f32 %v1579, -0.0073733293
      %v1612 = vadd.f32 %v1580, -0.0073733293
      %v1613 = vadd.f32 %v1581, -0.0073733293
      %v1614 = vadd.f32 %v1582, -0.0073733293
      %v1615 = vadd.f32 %v1583, -0.0073733293
      %v1616 = vadd.f32 %v1584, -0.0073733293
      %v1617 = vadd.f32 %v1585, -0.0073733293
      %v1618 = vadd.f32 %v1586, -0.0073733293
      %v1619 = vadd.f32 %v1587, -0.0073733293
      %v1620 = vadd.f32 %v1588, -0.0073733293
      %v1621 = vadd.f32 %v1589, -0.0073733293
      %v1622 = vadd.f32 %v1590, -0.0073733293
      %v1623 = vadd.f32 %v1591, -0.0073733293
      %v1624 = vadd.f32 %v1592, -0.0073733293
      %v1625 = vadd.f32 %v1593, -0.0073733293
      %v1626 = vadd.f32 %v1594, -0.0073733293
      %v1627 = vadd.f32 %v1595, -0.0073733293
      %v1628 = vadd.f32 %v1596, -0.0073733293
      %v1629 = vmul.f32 %v1597, %v1021
      %v1630 = vmul.f32 %v1598, %v1022
      %v1631 = vmul.f32 %v1599, %v1023
      %v1632 = vmul.f32 %v1600, %v1024
      %v1633 = vmul.f32 %v1601, %v1025
      %v1634 = vmul.f32 %v1602, %v1026
      %v1635 = vmul.f32 %v1603, %v1027
      %v1636 = vmul.f32 %v1604, %v1028
      %v1637 = vmul.f32 %v1605, %v1029
      %v1638 = vmul.f32 %v1606, %v1030
      %v1639 = vmul.f32 %v1607, %v1031
      %v1640 = vmul.f32 %v1608, %v1032
      %v1641 = vmul.f32 %v1609, %v1033
      %v1642 = vmul.f32 %v1610, %v1034
      %v1643 = vmul.f32 %v1611, %v1035
      %v1644 = vmul.f32 %v1612, %v1036
      %v1645 = vmul.f32 %v1613, %v1037
      %v1646 = vmul.f32 %v1614, %v1038
      %v1647 = vmul.f32 %v1615, %v1039
      %v1648 = vmul.f32 %v1616, %v1040
      %v1649 = vmul.f32 %v1617, %v1041
      %v1650 = vmul.f32 %v1618, %v1042
      %v1651 = vmul.f32 %v1619, %v1043
      %v1652 = vmul.f32 %v1620, %v1044
      %v1653 = vmul.f32 %v1621, %v1045
      %v1654 = vmul.f32 %v1622, %v1046
      %v1655 = vmul.f32 %v1623, %v1047
      %v1656 = vmul.f32 %v1624, %v1048
      %v1657 = vmul.f32 %v1625, %v1049
      %v1658 = vmul.f32 %v1626, %v1050
      %v1659 = vmul.f32 %v1627, %v1051
      %v1660 = vmul.f32 %v1628, %v1052
      %v1661 = vadd.f32 %v1629, -0.014264739
      %v1662 = vadd.f32 %v1630, -0.014264739
      %v1663 = vadd.f32 %v1631, -0.014264739
      %v1664 = vadd.f32 %v1632, -0.014264739
      %v1665 = vadd.f32 %v1633, -0.014264739
      %v1666 = vadd.f32 %v1634, -0.014264739
      %v1667 = vadd.f32 %v1635, -0.014264739
      %v1668 = vadd.f32 %v1636, -0.014264739
      %v1669 = vadd.f32 %v1637, -0.014264739
      %v1670 = vadd.f32 %v1638, -0.014264739
      %v1671 = vadd.f32 %v1639, -0.014264739
      %v1672 = vadd.f32 %v1640, -0.014264739
      %v1673 = vadd.f32 %v1641, -0.014264739
      %v1674 = vadd.f32 %v1642, -0.014264739
      %v1675 = vadd.f32 %v1643, -0.014264739
      %v1676 = vadd.f32 %v1644, -0.014264739
      %v1677 = vadd.f32 %v1645, -0.014264739
      %v1678 = vadd.f32 %v1646, -0.014264739
      %v1679 = vadd.f32 %v1647, -0.014264739
      %v1680 = vadd.f32 %v1648, -0.014264739
      %v1681 = vadd.f32 %v1649, -0.014264739
      %v1682 = vadd.f32 %v1650, -0.014264739
      %v1683 = vadd.f32 %v1651, -0.014264739
      %v1684 = vadd.f32 %v1652, -0.014264739
      %v1685 = vadd.f32 %v1653, -0.014264739
      %v1686 = vadd.f32 %v1654, -0.014264739
      %v1687 = vadd.f32 %v1655, -0.014264739
      %v1688 = vadd.f32 %v1656, -0.014264739
      %v1689 = vadd.f32 %v1657, -0.014264739
      %v1690 = vadd.f32 %v1658, -0.014264739
      %v1691 = vadd.f32 %v1659, -0.014264739
      %v1692 = vadd.f32 %v1660, -0.014264739
      %v1693 = vmul.f32 %v989, %v1405
      %v1694 = vmul.f32 %v990, %v1406
      %v1695 = vmul.f32 %v991, %v1407
      %v1696 = vmul.f32 %v992, %v1408
      %v1697 = vmul.f32 %v993, %v1409
      %v1698 = vmul.f32 %v994, %v1410
      %v1699 = vmul.f32 %v995, %v1411
      %v1700 = vmul.f32 %v996, %v1412
      %v1701 = vmul.f32 %v997, %v1413
      %v1702 = vmul.f32 %v998, %v1414
      %v1703 = vmul.f32 %v999, %v1415
      %v1704 = vmul.f32 %v1000, %v1416
      %v1705 = vmul.f32 %v1001, %v1417
      %v1706 = vmul.f32 %v1002, %v1418
      %v1707 = vmul.f32 %v1003, %v1419
      %v1708 = vmul.f32 %v1004, %v1420
      %v1709 = vmul.f32 %v1005, %v1421
      %v1710 = vmul.f32 %v1006, %v1422
      %v1711 = vmul.f32 %v1007, %v1423
      %v1712 = vmul.f32 %v1008, %v1424
      %v1713 = vmul.f32 %v1009, %v1425
      %v1714 = vmul.f32 %v1010, %v1426
      %v1715 = vmul.f32 %v1011, %v1427
      %v1716 = vmul.f32 %v1012, %v1428
      %v1717 = vmul.f32 %v1013, %v1429
      %v1718 = vmul.f32 %v1014, %v1430
      %v1719 = vmul.f32 %v1015, %v1431
      %v1720 = vmul.f32 %v1016, %v1432
      %v1721 = vmul.f32 %v1017, %v1433
      %v1722 = vmul.f32 %v1018, %v1434
      %v1723 = vmul.f32 %v1019, %v1435
      %v1724 = vmul.f32 %v1020, %v1436
      %v1725 = vrcp.pop %v1661
      %v1726 = vrcp.pop %v1662
      %v1727 = vrcp.pop %v1663
      %v1728 = vrcp.pop %v1664
      %v1729 = vrcp.pop %v1665
      %v1730 = vrcp.pop %v1666
      %v1731 = vrcp.pop %v1667
      %v1732 = vrcp.pop %v1668
      %v1733 = vrcp.pop %v1669
      %v1734 = vrcp.pop %v1670
      %v1735 = vrcp.pop %v1671
      %v1736 = vrcp.pop %v1672
      %v1737 = vrcp.pop %v1673
      %v1738 = vrcp.pop %v1674
      %v1739 = vrcp.pop %v1675
      %v1740 = vrcp.pop %v1676
      %v1741 = vrcp.pop %v1677
      %v1742 = vrcp.pop %v1678
      %v1743 = vrcp.pop %v1679
      %v1744 = vrcp.pop %v1680
      %v1745 = vrcp.pop %v1681
      %v1746 = vrcp.pop %v1682
      %v1747 = vrcp.pop %v1683
      %v1748 = vrcp.pop %v1684
      %v1749 = vrcp.pop %v1685
      %v1750 = vrcp.pop %v1686
      %v1751 = vrcp.pop %v1687
      %v1752 = vrcp.pop %v1688
      %v1753 = vrcp.pop %v1689
      %v1754 = vrcp.pop %v1690
      %v1755 = vrcp.pop %v1691
      %v1756 = vrcp.pop %v1692
      %v1757 = vmul.f32 %v1693, %v1725
      %v1758 = vmul.f32 %v1694, %v1726
      %v1759 = vmul.f32 %v1695, %v1727
      %v1760 = vmul.f32 %v1696, %v1728
      %v1761 = vmul.f32 %v1697, %v1729
      %v1762 = vmul.f32 %v1698, %v1730
      %v1763 = vmul.f32 %v1699, %v1731
      %v1764 = vmul.f32 %v1700, %v1732
      %v1765 = vmul.f32 %v1701, %v1733
      %v1766 = vmul.f32 %v1702, %v1734
      %v1767 = vmul.f32 %v1703, %v1735
      %v1768 = vmul.f32 %v1704, %v1736
      %v1769 = vmul.f32 %v1705, %v1737
      %v1770 = vmul.f32 %v1706, %v1738
      %v1771 = vmul.f32 %v1707, %v1739
      %v1772 = vmul.f32 %v1708, %v1740
      %v1773 = vmul.f32 %v1709, %v1741
      %v1774 = vmul.f32 %v1710, %v1742
      %v1775 = vmul.f32 %v1711, %v1743
      %v1776 = vmul.f32 %v1712, %v1744
      %v1777 = vmul.f32 %v1713, %v1745
      %v1778 = vmul.f32 %v1714, %v1746
      %v1779 = vmul.f32 %v1715, %v1747
      %v1780 = vmul.f32 %v1716, %v1748
      %v1781 = vmul.f32 %v1717, %v1749
      %v1782 = vmul.f32 %v1718, %v1750
      %v1783 = vmul.f32 %v1719, %v1751
      %v1784 = vmul.f32 %v1720, %v1752
      %v1785 = vmul.f32 %v1721, %v1753
      %v1786 = vmul.f32 %v1722, %v1754
      %v1787 = vmul.f32 %v1723, %v1755
      %v1788 = vmul.f32 %v1724, %v1756
      %v1789 = vadd.f32 %v1757, 1.0
      %v1790 = vadd.f32 %v1758, 1.0
      %v1791 = vadd.f32 %v1759, 1.0
      %v1792 = vadd.f32 %v1760, 1.0
      %v1793 = vadd.f32 %v1761, 1.0
      %v1794 = vadd.f32 %v1762, 1.0
      %v1795 = vadd.f32 %v1763, 1.0
      %v1796 = vadd.f32 %v1764, 1.0
      %v1797 = vadd.f32 %v1765, 1.0
      %v1798 = vadd.f32 %v1766, 1.0
      %v1799 = vadd.f32 %v1767, 1.0
      %v1800 = vadd.f32 %v1768, 1.0
      %v1801 = vadd.f32 %v1769, 1.0
      %v1802 = vadd.f32 %v1770, 1.0
      %v1803 = vadd.f32 %v1771, 1.0
      %v1804 = vadd.f32 %v1772, 1.0
      %v1805 = vadd.f32 %v1773, 1.0
      %v1806 = vadd.f32 %v1774, 1.0
      %v1807 = vadd.f32 %v1775, 1.0
      %v1808 = vadd.f32 %v1776, 1.0
      %v1809 = vadd.f32 %v1777, 1.0
      %v1810 = vadd.f32 %v1778, 1.0
      %v1811 = vadd.f32 %v1779, 1.0
      %v1812 = vadd.f32 %v1780, 1.0
      %v1813 = vadd.f32 %v1781, 1.0
      %v1814 = vadd.f32 %v1782, 1.0
      %v1815 = vadd.f32 %v1783, 1.0
      %v1816 = vadd.f32 %v1784, 1.0
      %v1817 = vadd.f32 %v1785, 1.0
      %v1818 = vadd.f32 %v1786, 1.0
      %v1819 = vadd.f32 %v1787, 1.0
      %v1820 = vadd.f32 %v1788, 1.0
      %v1821 = vmul.f32 %v893, %v1789
      %v1822 = vmul.f32 %v894, %v1790
      %v1823 = vmul.f32 %v895, %v1791
      %v1824 = vmul.f32 %v896, %v1792
      %v1825 = vmul.f32 %v897, %v1793
      %v1826 = vmul.f32 %v898, %v1794
      %v1827 = vmul.f32 %v899, %v1795
      %v1828 = vmul.f32 %v900, %v1796
      %v1829 = vmul.f32 %v901, %v1797
      %v1830 = vmul.f32 %v902, %v1798
      %v1831 = vmul.f32 %v903, %v1799
      %v1832 = vmul.f32 %v904, %v1800
      %v1833 = vmul.f32 %v905, %v1801
      %v1834 = vmul.f32 %v906, %v1802
      %v1835 = vmul.f32 %v907, %v1803
      %v1836 = vmul.f32 %v908, %v1804
      %v1837 = vmul.f32 %v909, %v1805
      %v1838 = vmul.f32 %v910, %v1806
      %v1839 = vmul.f32 %v911, %v1807
      %v1840 = vmul.f32 %v912, %v1808
      %v1841 = vmul.f32 %v913, %v1809
      %v1842 = vmul.f32 %v914, %v1810
      %v1843 = vmul.f32 %v915, %v1811
      %v1844 = vmul.f32 %v916, %v1812
      %v1845 = vmul.f32 %v917, %v1813
      %v1846 = vmul.f32 %v918, %v1814
      %v1847 = vmul.f32 %v919, %v1815
      %v1848 = vmul.f32 %v920, %v1816
      %v1849 = vmul.f32 %v921, %v1817
      %v1850 = vmul.f32 %v922, %v1818
      %v1851 = vmul.f32 %v923, %v1819
      %v1852 = vmul.f32 %v924, %v1820
      %v1853 = vld [vmem:[%s3] sm:$0xff]
      %v1854 = vld [vmem:[%s3 + $0x8] sm:$0xff]
      %v1855 = vld [vmem:[%s3 + $0x10] sm:$0xff]
      %v1856 = vld [vmem:[%s3 + $0x18] sm:$0xff]
      %v1857 = vld [vmem:[%s3 + $0x20] sm:$0xff]
      %v1858 = vld [vmem:[%s3 + $0x28] sm:$0xff]
      %v1859 = vld [vmem:[%s3 + $0x30] sm:$0xff]
      %v1860 = vld [vmem:[%s3 + $0x38] sm:$0xff]
      %v1861 = vld [vmem:[%s3 + $0x40] sm:$0xff]
      %v1862 = vld [vmem:[%s3 + $0x48] sm:$0xff]
      %v1863 = vld [vmem:[%s3 + $0x50] sm:$0xff]
      %v1864 = vld [vmem:[%s3 + $0x58] sm:$0xff]
      %v1865 = vld [vmem:[%s3 + $0x60] sm:$0xff]
      %v1866 = vld [vmem:[%s3 + $0x68] sm:$0xff]
      %v1867 = vld [vmem:[%s3 + $0x70] sm:$0xff]
      %v1868 = vld [vmem:[%s3 + $0x78] sm:$0xff]
      %v1869 = vld [vmem:[%s3 + $0x80] sm:$0xff]
      %v1870 = vld [vmem:[%s3 + $0x88] sm:$0xff]
      %v1871 = vld [vmem:[%s3 + $0x90] sm:$0xff]
      %v1872 = vld [vmem:[%s3 + $0x98] sm:$0xff]
      %v1873 = vld [vmem:[%s3 + $0xa0] sm:$0xff]
      %v1874 = vld [vmem:[%s3 + $0xa8] sm:$0xff]
      %v1875 = vld [vmem:[%s3 + $0xb0] sm:$0xff]
      %v1876 = vld [vmem:[%s3 + $0xb8] sm:$0xff]
      %v1877 = vld [vmem:[%s3 + $0xc0] sm:$0xff]
      %v1878 = vld [vmem:[%s3 + $0xc8] sm:$0xff]
      %v1879 = vld [vmem:[%s3 + $0xd0] sm:$0xff]
      %v1880 = vld [vmem:[%s3 + $0xd8] sm:$0xff]
      %v1881 = vld [vmem:[%s3 + $0xe0] sm:$0xff]
      %v1882 = vld [vmem:[%s3 + $0xe8] sm:$0xff]
      %v1883 = vld [vmem:[%s3 + $0xf0] sm:$0xff]
      %v1884 = vld [vmem:[%s3 + $0xf8] sm:$0xff]
      %v1885 = vld [vmem:[%s3 + $0x100] sm:$0xff]
      %v1886 = vld [vmem:[%s3 + $0x108] sm:$0xff]
      %v1887 = vld [vmem:[%s3 + $0x110] sm:$0xff]
      %v1888 = vld [vmem:[%s3 + $0x118] sm:$0xff]
      %v1889 = vld [vmem:[%s3 + $0x120] sm:$0xff]
      %v1890 = vld [vmem:[%s3 + $0x128] sm:$0xff]
      %v1891 = vld [vmem:[%s3 + $0x130] sm:$0xff]
      %v1892 = vld [vmem:[%s3 + $0x138] sm:$0xff]
      %v1893 = vld [vmem:[%s3 + $0x140] sm:$0xff]
      %v1894 = vld [vmem:[%s3 + $0x148] sm:$0xff]
      %v1895 = vld [vmem:[%s3 + $0x150] sm:$0xff]
      %v1896 = vld [vmem:[%s3 + $0x158] sm:$0xff]
      %v1897 = vld [vmem:[%s3 + $0x160] sm:$0xff]
      %v1898 = vld [vmem:[%s3 + $0x168] sm:$0xff]
      %v1899 = vld [vmem:[%s3 + $0x170] sm:$0xff]
      %v1900 = vld [vmem:[%s3 + $0x178] sm:$0xff]
      %v1901 = vld [vmem:[%s3 + $0x180] sm:$0xff]
      %v1902 = vld [vmem:[%s3 + $0x188] sm:$0xff]
      %v1903 = vld [vmem:[%s3 + $0x190] sm:$0xff]
      %v1904 = vld [vmem:[%s3 + $0x198] sm:$0xff]
      %v1905 = vld [vmem:[%s3 + $0x1a0] sm:$0xff]
      %v1906 = vld [vmem:[%s3 + $0x1a8] sm:$0xff]
      %v1907 = vld [vmem:[%s3 + $0x1b0] sm:$0xff]
      %v1908 = vld [vmem:[%s3 + $0x1b8] sm:$0xff]
      %v1909 = vld [vmem:[%s3 + $0x1c0] sm:$0xff]
      %v1910 = vld [vmem:[%s3 + $0x1c8] sm:$0xff]
      %v1911 = vld [vmem:[%s3 + $0x1d0] sm:$0xff]
      %v1912 = vld [vmem:[%s3 + $0x1d8] sm:$0xff]
      %v1913 = vld [vmem:[%s3 + $0x1e0] sm:$0xff]
      %v1914 = vld [vmem:[%s3 + $0x1e8] sm:$0xff]
      %v1915 = vld [vmem:[%s3 + $0x1f0] sm:$0xff]
      %v1916 = vld [vmem:[%s3 + $0x1f8] sm:$0xff]
      %v1917 = vld [vmem:[%s3 + $0x200] sm:$0xff]
      %v1918 = vld [vmem:[%s3 + $0x208] sm:$0xff]
      %v1919 = vld [vmem:[%s3 + $0x210] sm:$0xff]
      %v1920 = vld [vmem:[%s3 + $0x218] sm:$0xff]
      %v1921 = vld [vmem:[%s3 + $0x220] sm:$0xff]
      %v1922 = vld [vmem:[%s3 + $0x228] sm:$0xff]
      %v1923 = vld [vmem:[%s3 + $0x230] sm:$0xff]
      %v1924 = vld [vmem:[%s3 + $0x238] sm:$0xff]
      %v1925 = vld [vmem:[%s3 + $0x240] sm:$0xff]
      %v1926 = vld [vmem:[%s3 + $0x248] sm:$0xff]
      %v1927 = vld [vmem:[%s3 + $0x250] sm:$0xff]
      %v1928 = vld [vmem:[%s3 + $0x258] sm:$0xff]
      %v1929 = vld [vmem:[%s3 + $0x260] sm:$0xff]
      %v1930 = vld [vmem:[%s3 + $0x268] sm:$0xff]
      %v1931 = vld [vmem:[%s3 + $0x270] sm:$0xff]
      %v1932 = vld [vmem:[%s3 + $0x278] sm:$0xff]
      %v1933 = vld [vmem:[%s3 + $0x280] sm:$0xff]
      %v1934 = vld [vmem:[%s3 + $0x288] sm:$0xff]
      %v1935 = vld [vmem:[%s3 + $0x290] sm:$0xff]
      %v1936 = vld [vmem:[%s3 + $0x298] sm:$0xff]
      %v1937 = vld [vmem:[%s3 + $0x2a0] sm:$0xff]
      %v1938 = vld [vmem:[%s3 + $0x2a8] sm:$0xff]
      %v1939 = vld [vmem:[%s3 + $0x2b0] sm:$0xff]
      %v1940 = vld [vmem:[%s3 + $0x2b8] sm:$0xff]
      %v1941 = vld [vmem:[%s3 + $0x2c0] sm:$0xff]
      %v1942 = vld [vmem:[%s3 + $0x2c8] sm:$0xff]
      %v1943 = vld [vmem:[%s3 + $0x2d0] sm:$0xff]
      %v1944 = vld [vmem:[%s3 + $0x2d8] sm:$0xff]
      %v1945 = vld [vmem:[%s3 + $0x2e0] sm:$0xff]
      %v1946 = vld [vmem:[%s3 + $0x2e8] sm:$0xff]
      %v1947 = vld [vmem:[%s3 + $0x2f0] sm:$0xff]
      %v1948 = vld [vmem:[%s3 + $0x2f8] sm:$0xff]
      %v1949 = vld [vmem:[%s3 + $0x300] sm:$0xff]
      %v1950 = vld [vmem:[%s3 + $0x308] sm:$0xff]
      %v1951 = vld [vmem:[%s3 + $0x310] sm:$0xff]
      %v1952 = vld [vmem:[%s3 + $0x318] sm:$0xff]
      %v1953 = vld [vmem:[%s3 + $0x320] sm:$0xff]
      %v1954 = vld [vmem:[%s3 + $0x328] sm:$0xff]
      %v1955 = vld [vmem:[%s3 + $0x330] sm:$0xff]
      %v1956 = vld [vmem:[%s3 + $0x338] sm:$0xff]
      %v1957 = vld [vmem:[%s3 + $0x340] sm:$0xff]
      %v1958 = vld [vmem:[%s3 + $0x348] sm:$0xff]
      %v1959 = vld [vmem:[%s3 + $0x350] sm:$0xff]
      %v1960 = vld [vmem:[%s3 + $0x358] sm:$0xff]
      %v1961 = vld [vmem:[%s3 + $0x360] sm:$0xff]
      %v1962 = vld [vmem:[%s3 + $0x368] sm:$0xff]
      %v1963 = vld [vmem:[%s3 + $0x370] sm:$0xff]
      %v1964 = vld [vmem:[%s3 + $0x378] sm:$0xff]
      %v1965 = vld [vmem:[%s3 + $0x380] sm:$0xff]
      %v1966 = vld [vmem:[%s3 + $0x388] sm:$0xff]
      %v1967 = vld [vmem:[%s3 + $0x390] sm:$0xff]
      %v1968 = vld [vmem:[%s3 + $0x398] sm:$0xff]
      %v1969 = vld [vmem:[%s3 + $0x3a0] sm:$0xff]
      %v1970 = vld [vmem:[%s3 + $0x3a8] sm:$0xff]
      %v1971 = vld [vmem:[%s3 + $0x3b0] sm:$0xff]
      %v1972 = vld [vmem:[%s3 + $0x3b8] sm:$0xff]
      %v1973 = vld [vmem:[%s3 + $0x3c0] sm:$0xff]
      %v1974 = vld [vmem:[%s3 + $0x3c8] sm:$0xff]
      %v1975 = vld [vmem:[%s3 + $0x3d0] sm:$0xff]
      %v1976 = vld [vmem:[%s3 + $0x3d8] sm:$0xff]
      %v1977 = vld [vmem:[%s3 + $0x3e0] sm:$0xff]
      %v1978 = vld [vmem:[%s3 + $0x3e8] sm:$0xff]
      %v1979 = vld [vmem:[%s3 + $0x3f0] sm:$0xff]
      %v1980 = vld [vmem:[%s3 + $0x3f8] sm:$0xff]
      %v1981 = vld [vmem:[%s4] sm:$0x1]
      %v1983 = vlaneseq
      %v1984 = vshrl.u32 %v1983, 7
      %v1985 = vsub.s32 0, %v1984
      %v1986 = vrot.slane %v1981, %v1985
      %1988 = vmatprep.subr.mxu0 0.0
      %1989 = vmatpush1.msra.mxu0 %v1853
      %1990 = vmatprep.subr.mxu0 0.0
      %1991 = vmatpush1.msra.mxu0 %v1854
      %1992 = vmatprep.subr.mxu0 0.0
      %1993 = vmatpush1.msra.mxu0 %v1855
      %1994 = vmatprep.subr.mxu0 0.0
      %1995 = vmatpush1.msra.mxu0 %v1856
      %1996 = vmatprep.subr.mxu0 0.0
      %1997 = vmatpush1.msra.mxu0 %v1857
      %1998 = vmatprep.subr.mxu0 0.0
      %1999 = vmatpush1.msra.mxu0 %v1858
      %2000 = vmatprep.subr.mxu0 0.0
      %2001 = vmatpush1.msra.mxu0 %v1859
      %2002 = vmatprep.subr.mxu0 0.0
      %2003 = vmatpush1.msra.mxu0 %v1860
      %2004 = vmatprep.subr.mxu0 0.0
      %2005 = vmatpush1.msra.mxu0 %v1861
      %2006 = vmatprep.subr.mxu0 0.0
      %2007 = vmatpush1.msra.mxu0 %v1862
      %2008 = vmatprep.subr.mxu0 0.0
      %2009 = vmatpush1.msra.mxu0 %v1863
      %2010 = vmatprep.subr.mxu0 0.0
      %2011 = vmatpush1.msra.mxu0 %v1864
      %2012 = vmatprep.subr.mxu0 0.0
      %2013 = vmatpush1.msra.mxu0 %v1865
      %2014 = vmatprep.subr.mxu0 0.0
      %2015 = vmatpush1.msra.mxu0 %v1866
      %2016 = vmatprep.subr.mxu0 0.0
      %2017 = vmatpush1.msra.mxu0 %v1867
      %2018 = vmatprep.subr.mxu0 0.0
      %2019 = vmatpush1.msra.mxu0 %v1868
      %2020 = vmatprep.subr.mxu0 0.0
      %2021 = vmatpush1.msra.mxu0 %v1869
      %2022 = vmatprep.subr.mxu0 0.0
      %2023 = vmatpush1.msra.mxu0 %v1870
      %2024 = vmatprep.subr.mxu0 0.0
      %2025 = vmatpush1.msra.mxu0 %v1871
      %2026 = vmatprep.subr.mxu0 0.0
      %2027 = vmatpush1.msra.mxu0 %v1872
      %2028 = vmatprep.subr.mxu0 0.0
      %2029 = vmatpush1.msra.mxu0 %v1873
      %2030 = vmatprep.subr.mxu0 0.0
      %2031 = vmatpush1.msra.mxu0 %v1874
      %2032 = vmatprep.subr.mxu0 0.0
      %2033 = vmatpush1.msra.mxu0 %v1875
      %2034 = vmatprep.subr.mxu0 0.0
      %2035 = vmatpush1.msra.mxu0 %v1876
      %2036 = vmatprep.subr.mxu0 0.0
      %2037 = vmatpush1.msra.mxu0 %v1877
      %2038 = vmatprep.subr.mxu0 0.0
      %2039 = vmatpush1.msra.mxu0 %v1878
      %2040 = vmatprep.subr.mxu0 0.0
      %2041 = vmatpush1.msra.mxu0 %v1879
      %2042 = vmatprep.subr.mxu0 0.0
      %2043 = vmatpush1.msra.mxu0 %v1880
      %2044 = vmatprep.subr.mxu0 0.0
      %2045 = vmatpush1.msra.mxu0 %v1881
      %2046 = vmatprep.subr.mxu0 0.0
      %2047 = vmatpush1.msra.mxu0 %v1882
      %2048 = vmatprep.subr.mxu0 0.0
      %2049 = vmatpush1.msra.mxu0 %v1883
      %2050 = vmatprep.subr.mxu0 0.0
      %2051 = vmatpush1.msra.mxu0 %v1884
      %2052 = vmatprep.mubr.f32.mxu0 %v1822
      %2053 = vmatmul.mubr.f32.gmra.mrb[0].mxu0 %v1821
      %v2054 = vpop.f32.mrb[0].mxu0
      %v2055 = vadd.f32 %v1986, %v2054
      %v2056 = vpop.f32.mrb[0].mxu0
      %2057 = vmatprep.mubr.f32.mxu0 %v1830
      %2058 = vmatmul.mubr.f32.gmra.mrb[0].mxu0 %v1829
      %v2059 = vpop.f32.mrb[0].mxu0
      %v2060 = vadd.f32 %v1986, %v2059
      %v2061 = vpop.f32.mrb[0].mxu0
      %2062 = vmatprep.mubr.f32.mxu0 %v1838
      %2063 = vmatmul.mubr.f32.gmra.mrb[0].mxu0 %v1837
      %v2064 = vpop.f32.mrb[0].mxu0
      %v2065 = vadd.f32 %v1986, %v2064
      %v2066 = vpop.f32.mrb[0].mxu0
      %2067 = vmatprep.mubr.f32.mxu0 %v1846
      %2068 = vmatmul.mubr.f32.gmra.mrb[0].mxu0 %v1845
      %v2069 = vpop.f32.mrb[0].mxu0
      %v2070 = vadd.f32 %v1986, %v2069
      %v2071 = vpop.f32.mrb[0].mxu0
      %2072 = vdwg.mxu0
      %2073 = vmatprep.subr.mxu0 0.0
      %2074 = vmatpush1.msra.mxu0 %v1885
      %2075 = vmatprep.subr.mxu0 0.0
      %2076 = vmatpush1.msra.mxu0 %v1886
      %2077 = vmatprep.subr.mxu0 0.0
      %2078 = vmatpush1.msra.mxu0 %v1887
      %2079 = vmatprep.subr.mxu0 0.0
      %2080 = vmatpush1.msra.mxu0 %v1888
      %2081 = vmatprep.subr.mxu0 0.0
      %2082 = vmatpush1.msra.mxu0 %v1889
      %2083 = vmatprep.subr.mxu0 0.0
      %2084 = vmatpush1.msra.mxu0 %v1890
      %2085 = vmatprep.subr.mxu0 0.0
      %2086 = vmatpush1.msra.mxu0 %v1891
      %2087 = vmatprep.subr.mxu0 0.0
      %2088 = vmatpush1.msra.mxu0 %v1892
      %2089 = vmatprep.subr.mxu0 0.0
      %2090 = vmatpush1.msra.mxu0 %v1893
      %2091 = vmatprep.subr.mxu0 0.0
      %2092 = vmatpush1.msra.mxu0 %v1894
      %2093 = vmatprep.subr.mxu0 0.0
      %2094 = vmatpush1.msra.mxu0 %v1895
      %2095 = vmatprep.subr.mxu0 0.0
      %2096 = vmatpush1.msra.mxu0 %v1896
      %2097 = vmatprep.subr.mxu0 0.0
      %2098 = vmatpush1.msra.mxu0 %v1897
      %2099 = vmatprep.subr.mxu0 0.0
      %2100 = vmatpush1.msra.mxu0 %v1898
      %2101 = vmatprep.subr.mxu0 0.0
      %2102 = vmatpush1.msra.mxu0 %v1899
      %2103 = vmatprep.subr.mxu0 0.0
      %2104 = vmatpush1.msra.mxu0 %v1900
      %2105 = vmatprep.subr.mxu0 0.0
      %2106 = vmatpush1.msra.mxu0 %v1901
      %2107 = vmatprep.subr.mxu0 0.0
      %2108 = vmatpush1.msra.mxu0 %v1902
      %2109 = vmatprep.subr.mxu0 0.0
      %2110 = vmatpush1.msra.mxu0 %v1903
      %2111 = vmatprep.subr.mxu0 0.0
      %2112 = vmatpush1.msra.mxu0 %v1904
      %2113 = vmatprep.subr.mxu0 0.0
      %2114 = vmatpush1.msra.mxu0 %v1905
      %2115 = vmatprep.subr.mxu0 0.0
      %2116 = vmatpush1.msra.mxu0 %v1906
      %2117 = vmatprep.subr.mxu0 0.0
      %2118 = vmatpush1.msra.mxu0 %v1907
      %2119 = vmatprep.subr.mxu0 0.0
      %2120 = vmatpush1.msra.mxu0 %v1908
      %2121 = vmatprep.subr.mxu0 0.0
      %2122 = vmatpush1.msra.mxu0 %v1909
      %2123 = vmatprep.subr.mxu0 0.0
      %2124 = vmatpush1.msra.mxu0 %v1910
      %2125 = vmatprep.subr.mxu0 0.0
      %2126 = vmatpush1.msra.mxu0 %v1911
      %2127 = vmatprep.subr.mxu0 0.0
      %2128 = vmatpush1.msra.mxu0 %v1912
      %2129 = vmatprep.subr.mxu0 0.0
      %2130 = vmatpush1.msra.mxu0 %v1913
      %2131 = vmatprep.subr.mxu0 0.0
      %2132 = vmatpush1.msra.mxu0 %v1914
      %2133 = vmatprep.subr.mxu0 0.0
      %2134 = vmatpush1.msra.mxu0 %v1915
      %2135 = vmatprep.subr.mxu0 0.0
      %2136 = vmatpush1.msra.mxu0 %v1916
      %2137 = vmatprep.mubr.f32.mxu0 %v1824
      %2138 = vmatmul.mubr.f32.gmra.mrb[0].mxu0 %v1823
      %v2139 = vpop.f32.mrb[0].mxu0
      %v2140 = vadd.f32 %v2055, %v2139
      %v2141 = vpop.f32.mrb[0].mxu0
      %2142 = vmatprep.mubr.f32.mxu0 %v1832
      %2143 = vmatmul.mubr.f32.gmra.mrb[0].mxu0 %v1831
      %v2144 = vpop.f32.mrb[0].mxu0
      %v2145 = vadd.f32 %v2060, %v2144
      %v2146 = vpop.f32.mrb[0].mxu0
      %2147 = vmatprep.mubr.f32.mxu0 %v1840
      %2148 = vmatmul.mubr.f32.gmra.mrb[0].mxu0 %v1839
      %v2149 = vpop.f32.mrb[0].mxu0
      %v2150 = vadd.f32 %v2065, %v2149
      %v2151 = vpop.f32.mrb[0].mxu0
      %2152 = vmatprep.mubr.f32.mxu0 %v1848
      %2153 = vmatmul.mubr.f32.gmra.mrb[0].mxu0 %v1847
      %v2154 = vpop.f32.mrb[0].mxu0
      %v2155 = vadd.f32 %v2070, %v2154
      %v2156 = vpop.f32.mrb[0].mxu0
      %2157 = vdwg.mxu0
      %2158 = vmatprep.subr.mxu0 0.0
      %2159 = vmatpush1.msra.mxu0 %v1917
      %2160 = vmatprep.subr.mxu0 0.0
      %2161 = vmatpush1.msra.mxu0 %v1918
      %2162 = vmatprep.subr.mxu0 0.0
      %2163 = vmatpush1.msra.mxu0 %v1919
      %2164 = vmatprep.subr.mxu0 0.0
      %2165 = vmatpush1.msra.mxu0 %v1920
      %2166 = vmatprep.subr.mxu0 0.0
      %2167 = vmatpush1.msra.mxu0 %v1921
      %2168 = vmatprep.subr.mxu0 0.0
      %2169 = vmatpush1.msra.mxu0 %v1922
      %2170 = vmatprep.subr.mxu0 0.0
      %2171 = vmatpush1.msra.mxu0 %v1923
      %2172 = vmatprep.subr.mxu0 0.0
      %2173 = vmatpush1.msra.mxu0 %v1924
      %2174 = vmatprep.subr.mxu0 0.0
      %2175 = vmatpush1.msra.mxu0 %v1925
      %2176 = vmatprep.subr.mxu0 0.0
      %2177 = vmatpush1.msra.mxu0 %v1926
      %2178 = vmatprep.subr.mxu0 0.0
      %2179 = vmatpush1.msra.mxu0 %v1927
      %2180 = vmatprep.subr.mxu0 0.0
      %2181 = vmatpush1.msra.mxu0 %v1928
      %2182 = vmatprep.subr.mxu0 0.0
      %2183 = vmatpush1.msra.mxu0 %v1929
      %2184 = vmatprep.subr.mxu0 0.0
      %2185 = vmatpush1.msra.mxu0 %v1930
      %2186 = vmatprep.subr.mxu0 0.0
      %2187 = vmatpush1.msra.mxu0 %v1931
      %2188 = vmatprep.subr.mxu0 0.0
      %2189 = vmatpush1.msra.mxu0 %v1932
      %2190 = vmatprep.subr.mxu0 0.0
      %2191 = vmatpush1.msra.mxu0 %v1933
      %2192 = vmatprep.subr.mxu0 0.0
      %2193 = vmatpush1.msra.mxu0 %v1934
      %2194 = vmatprep.subr.mxu0 0.0
      %2195 = vmatpush1.msra.mxu0 %v1935
      %2196 = vmatprep.subr.mxu0 0.0
      %2197 = vmatpush1.msra.mxu0 %v1936
      %2198 = vmatprep.subr.mxu0 0.0
      %2199 = vmatpush1.msra.mxu0 %v1937
      %2200 = vmatprep.subr.mxu0 0.0
      %2201 = vmatpush1.msra.mxu0 %v1938
      %2202 = vmatprep.subr.mxu0 0.0
      %2203 = vmatpush1.msra.mxu0 %v1939
      %2204 = vmatprep.subr.mxu0 0.0
      %2205 = vmatpush1.msra.mxu0 %v1940
      %2206 = vmatprep.subr.mxu0 0.0
      %2207 = vmatpush1.msra.mxu0 %v1941
      %2208 = vmatprep.subr.mxu0 0.0
      %2209 = vmatpush1.msra.mxu0 %v1942
      %2210 = vmatprep.subr.mxu0 0.0
      %2211 = vmatpush1.msra.mxu0 %v1943
      %2212 = vmatprep.subr.mxu0 0.0
      %2213 = vmatpush1.msra.mxu0 %v1944
      %2214 = vmatprep.subr.mxu0 0.0
      %2215 = vmatpush1.msra.mxu0 %v1945
      %2216 = vmatprep.subr.mxu0 0.0
      %2217 = vmatpush1.msra.mxu0 %v1946
      %2218 = vmatprep.subr.mxu0 0.0
      %2219 = vmatpush1.msra.mxu0 %v1947
      %2220 = vmatprep.subr.mxu0 0.0
      %2221 = vmatpush1.msra.mxu0 %v1948
      %2222 = vmatprep.mubr.f32.mxu0 %v1826
      %2223 = vmatmul.mubr.f32.gmra.mrb[0].mxu0 %v1825
      %v2224 = vpop.f32.mrb[0].mxu0
      %v2225 = vadd.f32 %v2140, %v2224
      %v2226 = vpop.f32.mrb[0].mxu0
      %2227 = vmatprep.mubr.f32.mxu0 %v1834
      %2228 = vmatmul.mubr.f32.gmra.mrb[0].mxu0 %v1833
      %v2229 = vpop.f32.mrb[0].mxu0
      %v2230 = vadd.f32 %v2145, %v2229
      %v2231 = vpop.f32.mrb[0].mxu0
      %2232 = vmatprep.mubr.f32.mxu0 %v1842
      %2233 = vmatmul.mubr.f32.gmra.mrb[0].mxu0 %v1841
      %v2234 = vpop.f32.mrb[0].mxu0
      %v2235 = vadd.f32 %v2150, %v2234
      %v2236 = vpop.f32.mrb[0].mxu0
      %2237 = vmatprep.mubr.f32.mxu0 %v1850
      %2238 = vmatmul.mubr.f32.gmra.mrb[0].mxu0 %v1849
      %v2239 = vpop.f32.mrb[0].mxu0
      %v2240 = vadd.f32 %v2155, %v2239
      %v2241 = vpop.f32.mrb[0].mxu0
      %2242 = vdwg.mxu0
      %2243 = vmatprep.subr.mxu0 0.0
      %2244 = vmatpush1.msra.mxu0 %v1949
      %2245 = vmatprep.subr.mxu0 0.0
      %2246 = vmatpush1.msra.mxu0 %v1950
      %2247 = vmatprep.subr.mxu0 0.0
      %2248 = vmatpush1.msra.mxu0 %v1951
      %2249 = vmatprep.subr.mxu0 0.0
      %2250 = vmatpush1.msra.mxu0 %v1952
      %2251 = vmatprep.subr.mxu0 0.0
      %2252 = vmatpush1.msra.mxu0 %v1953
      %2253 = vmatprep.subr.mxu0 0.0
      %2254 = vmatpush1.msra.mxu0 %v1954
      %2255 = vmatprep.subr.mxu0 0.0
      %2256 = vmatpush1.msra.mxu0 %v1955
      %2257 = vmatprep.subr.mxu0 0.0
      %2258 = vmatpush1.msra.mxu0 %v1956
      %2259 = vmatprep.subr.mxu0 0.0
      %2260 = vmatpush1.msra.mxu0 %v1957
      %2261 = vmatprep.subr.mxu0 0.0
      %2262 = vmatpush1.msra.mxu0 %v1958
      %2263 = vmatprep.subr.mxu0 0.0
      %2264 = vmatpush1.msra.mxu0 %v1959
      %2265 = vmatprep.subr.mxu0 0.0
      %2266 = vmatpush1.msra.mxu0 %v1960
      %2267 = vmatprep.subr.mxu0 0.0
      %2268 = vmatpush1.msra.mxu0 %v1961
      %2269 = vmatprep.subr.mxu0 0.0
      %2270 = vmatpush1.msra.mxu0 %v1962
      %2271 = vmatprep.subr.mxu0 0.0
      %2272 = vmatpush1.msra.mxu0 %v1963
      %2273 = vmatprep.subr.mxu0 0.0
      %2274 = vmatpush1.msra.mxu0 %v1964
      %2275 = vmatprep.subr.mxu0 0.0
      %2276 = vmatpush1.msra.mxu0 %v1965
      %2277 = vmatprep.subr.mxu0 0.0
      %2278 = vmatpush1.msra.mxu0 %v1966
      %2279 = vmatprep.subr.mxu0 0.0
      %2280 = vmatpush1.msra.mxu0 %v1967
      %2281 = vmatprep.subr.mxu0 0.0
      %2282 = vmatpush1.msra.mxu0 %v1968
      %2283 = vmatprep.subr.mxu0 0.0
      %2284 = vmatpush1.msra.mxu0 %v1969
      %2285 = vmatprep.subr.mxu0 0.0
      %2286 = vmatpush1.msra.mxu0 %v1970
      %2287 = vmatprep.subr.mxu0 0.0
      %2288 = vmatpush1.msra.mxu0 %v1971
      %2289 = vmatprep.subr.mxu0 0.0
      %2290 = vmatpush1.msra.mxu0 %v1972
      %2291 = vmatprep.subr.mxu0 0.0
      %2292 = vmatpush1.msra.mxu0 %v1973
      %2293 = vmatprep.subr.mxu0 0.0
      %2294 = vmatpush1.msra.mxu0 %v1974
      %2295 = vmatprep.subr.mxu0 0.0
      %2296 = vmatpush1.msra.mxu0 %v1975
      %2297 = vmatprep.subr.mxu0 0.0
      %2298 = vmatpush1.msra.mxu0 %v1976
      %2299 = vmatprep.subr.mxu0 0.0
      %2300 = vmatpush1.msra.mxu0 %v1977
      %2301 = vmatprep.subr.mxu0 0.0
      %2302 = vmatpush1.msra.mxu0 %v1978
      %2303 = vmatprep.subr.mxu0 0.0
      %2304 = vmatpush1.msra.mxu0 %v1979
      %2305 = vmatprep.subr.mxu0 0.0
      %2306 = vmatpush1.msra.mxu0 %v1980
      %2307 = vmatprep.mubr.f32.mxu0 %v1828
      %2308 = vmatmul.mubr.f32.gmra.mrb[0].mxu0 %v1827
      %v2309 = vpop.f32.mrb[0].mxu0
      %v2310 = vadd.f32 %v2225, %v2309
      %v2311 = vpop.f32.mrb[0].mxu0
      %2312 = vmatprep.mubr.f32.mxu0 %v1836
      %2313 = vmatmul.mubr.f32.gmra.mrb[0].mxu0 %v1835
      %v2314 = vpop.f32.mrb[0].mxu0
      %v2315 = vadd.f32 %v2230, %v2314
      %v2316 = vpop.f32.mrb[0].mxu0
      %2317 = vmatprep.mubr.f32.mxu0 %v1844
      %2318 = vmatmul.mubr.f32.gmra.mrb[0].mxu0 %v1843
      %v2319 = vpop.f32.mrb[0].mxu0
      %v2320 = vadd.f32 %v2235, %v2319
      %v2321 = vpop.f32.mrb[0].mxu0
      %2322 = vmatprep.mubr.f32.mxu0 %v1852
      %2323 = vmatmul.mubr.f32.gmra.mrb[0].mxu0 %v1851
      %v2324 = vpop.f32.mrb[0].mxu0
      %v2325 = vadd.f32 %v2240, %v2324
      %v2326 = vpop.f32.mrb[0].mxu0
      %2327 = vdwg.mxu0
      %vm2328 = vcmask 64512
      %2329 = vst.msk [vmem:[%s229] sm:$0xff] %vm2328, %v2310
      %2330 = vst.msk [vmem:[%s229 + $0x8] sm:$0xff] %vm2328, %v2315
      %2331 = vst.msk [vmem:[%s229 + $0x10] sm:$0xff] %vm2328, %v2320
      %2332 = vst.msk [vmem:[%s229 + $0x18] sm:$0xff] %vm2328, %v2325
      %s2333 = smul.u32 4, %s16
      %p2334 = scmp.lt.s32.totalorder %s2333, 7
      %s2335 = scalar_select %p2334, %s2333, 7
      %s2336 = smul.addr %s2335, 8
      %s2337 = scalar_lea.vmem %s5, %s2336
      // Predicated region
      $region41: #{fno2d_forward.19} parent=39 // pred_check
        %p2338 = pneg %p144
      $region42: #{fno2d_forward.19} parent=39 // pred_check_branch
        %2340 = sbr.rel (%p2338) target = $region44
      $region43: #{fno2d_forward.19} parent=39 // pred_region
        %s2341 = smul.u32 4, %s16
      $region44: #{fno2d_forward.19} parent=39 // pred_fallthru
        _
    $region40: #{fno2d_forward.19} parent=5 // pred_fallthru
      _
    %p2342 = scmp.le.s32.totalorder 2, %s11
    // Predicated region
    $region45: #{fno2d_forward.19} parent=5 // pred_check
      %p2343 = pneg %p2342
    $region46: #{fno2d_forward.19} parent=5 // pred_check_branch
      %2345 = sbr.rel (%p2343) target = $region48
    $region47: #{fno2d_forward.19} parent=5 // pred_region
      %s2346 = ssub.s32 %s11, 2
      // Predicated region
      $region49: #{fno2d_forward.19} parent=47 // pred_check
        %p2347 = pneg %p150
      $region50: #{fno2d_forward.19} parent=47 // pred_check_branch
        %2349 = sbr.rel (%p2347) target = $region52
      $region51: #{fno2d_forward.19} parent=47 // pred_region
        %s2350 = smul.u32 4, %s17
        %p2351 = scmp.lt.s32.totalorder %s2350, 7
        %s2352 = scalar_select %p2351, %s2350, 7
        %s2353 = smul.addr %s2352, 8
        %s2354 = scalar_lea.vmem %s5, %s2353
      $region52: #{fno2d_forward.19} parent=47 // pred_fallthru
        _
    $region48: #{fno2d_forward.19} parent=5 // pred_fallthru
      _
  $region6: #{fno2d_forward.19} parent=0 // loop_footer
    %s15 = sadd.s32 1, %s11
  $region7: #{fno2d_forward.19} parent=0 // loop_footer_branch
    %10 = sbr.rel target = $region3
  $region8: #{fno2d_forward.19} parent=0 // loop_exit
    _

</llo_original>
